<compile_context>
chip_gen: v7x
topology: tpu7x:2x2x1
jax: 0.10.0
libtpu: 0.0.40
codegen_flags: <defaults>
</compile_context>

<pallas_src>
import jax
import jax.numpy as jnp
from jax.experimental import pallas as pl
from jax.experimental.pallas import tpu as pltpu

EPS = 1e-5
LANE = 128
_H1_OFF = 8          # sublane-tile-aligned column where the h1 interior starts


# ------------------------------ Pallas kernel ------------------------------ #

def _basic_block_kernel(x_ref, w1_ref, w2_ref, g1_ref, b1_ref, g2_ref, b2_ref,
                        out_ref, h1_ref):
    """Fused conv3x3+BN+ReLU -> conv3x3+BN+residual+ReLU (batch statistics)."""
    B, Hp2, Wp2, Cp = x_ref.shape
    H, W = Hp2 - 2, Wp2 - 2
    N = B * H * W
    inv_n = 1.0 / N

    def conv3x3(src_ref, w_ref, col0):
        # 9 shifted-window tap matmuls; bf16 operands on the MXU, f32 accum.
        acc = None
        for t in range(9):
            dy, dx = divmod(t, 3)
            win = src_ref[:, dy:dy + H, col0 + dx:col0 + dx + W, :]
            win = win.reshape(N, Cp).astype(jnp.bfloat16)
            p = jnp.dot(win, w_ref[t], preferred_element_type=jnp.float32)
            acc = p if acc is None else acc + p
        return acc

    def bn_scale_shift(y, g, b):
        # One-pass batch stats (biased variance), folded into scale/shift.
        mean = jnp.sum(y, axis=0, keepdims=True) * inv_n
        msq = jnp.sum(y * y, axis=0, keepdims=True) * inv_n
        var = msq - mean * mean
        scale = g * jax.lax.rsqrt(var + EPS)
        shift = b - mean * scale
        return scale, shift

    # ---- conv1 -> BN1 -> ReLU ----------------------------------------------
    y1 = conv3x3(x_ref, w1_ref, 0)
    s1, t1 = bn_scale_shift(y1, g1_ref[...], b1_ref[...])
    h1 = jnp.maximum(y1 * s1 + t1, 0.0)

    # Stage h1 in VMEM (spatially zero-padded) so conv2 reads shifted windows
    # straight from on-chip memory: no HBM round trip, no im2col blow-up.
    h1_ref[...] = jnp.zeros(h1_ref.shape, h1_ref.dtype)
    h1_ref[:, 1:1 + H, _H1_OFF:_H1_OFF + W, :] = (
        h1.reshape(B, H, W, Cp).astype(h1_ref.dtype))

    # ---- conv2 -> BN2 -> +residual -> ReLU -----------------------------------
    y2 = conv3x3(h1_ref, w2_ref, _H1_OFF - 1)
    s2, t2 = bn_scale_shift(y2, g2_ref[...], b2_ref[...])
    res = x_ref[:, 1:1 + H, 1:1 + W, :].reshape(N, Cp)
    out_ref[...] = jnp.maximum(y2 * s2 + t2 + res, 0.0).astype(out_ref.dtype)


# -------------------------------- JAX glue --------------------------------- #

def _round_up(x, m):
    return (x + m - 1) // m * m


def _conv_weight_to_taps(w, cp):
    """torch conv weight (Cout,Cin,3,3) -> (9, cp, cp) bf16 tap matrices."""
    cout, cin, _, _ = w.shape
    wt = jnp.transpose(w, (2, 3, 1, 0)).reshape(9, cin, cout)
    wt = jnp.pad(wt, ((0, 0), (0, cp - cin), (0, cp - cout)))
    return wt.astype(jnp.bfloat16)


def _pad_channel_vec(v, cp):
    return jnp.pad(v, (0, cp - v.shape[0])).reshape(1, cp).astype(jnp.float32)


@jax.jit
def basic_block_forward(x_nchw, params):
    """Pallas BasicBlock.forward (stride=1, no downsample), training-mode BN."""
    w1, g1, b1, w2, g2, b2 = params
    B, C, H, W = x_nchw.shape
    assert w1.shape[0] == C, "stride=1 / no-downsample requires planes == inplanes"
    Cp = _round_up(C, LANE)                 # lane-dense channel width
    N = B * H * W

    # NHWC, spatial zero-pad of 1 for the 3x3 halo, channel pad to 128-multiple.
    x = jnp.transpose(x_nchw, (0, 2, 3, 1)).astype(jnp.float32)
    x_pad = jnp.pad(x, ((0, 0), (1, 1), (1, 1), (0, Cp - C)))

    args = (x_pad,
            _conv_weight_to_taps(w1, Cp), _conv_weight_to_taps(w2, Cp),
            _pad_channel_vec(g1, Cp), _pad_channel_vec(b1, Cp),
            _pad_channel_vec(g2, Cp), _pad_channel_vec(b2, Cp))

    vmem = pl.BlockSpec(memory_space=pltpu.MemorySpace.VMEM)
    out = pl.pallas_call(
        _basic_block_kernel,
        out_shape=jax.ShapeDtypeStruct((N, Cp), jnp.float32),
        in_specs=[vmem] * len(args),
        out_specs=vmem,
        scratch_shapes=[
            pltpu.VMEM((B, H + 2, W + 2 * _H1_OFF, Cp), jnp.float32)],
        compiler_params=pltpu.CompilerParams(
            vmem_limit_bytes=32 * 1024 * 1024),
    )(*args)

    out = out.reshape(B, H, W, Cp)[..., :C]
    return jnp.transpose(out, (0, 3, 1, 2))        # back to NCHW


# ----------------------------- pure-JAX reference --------------------------- #

def _reference(x_nchw, params):
    w1, g1, b1, w2, g2, b2 = params

    def conv(x, w):
        return jax.lax.conv_general_dilated(
            x, w, window_strides=(1, 1), padding="SAME",
            dimension_numbers=("NCHW", "OIHW", "NCHW"),
            precision=jax.lax.Precision.HIGHEST)

    def bn(x, g, b):
        mean = jnp.mean(x, axis=(0, 2, 3), keepdims=True)
        var = jnp.mean((x - mean) ** 2, axis=(0, 2, 3), keepdims=True)
        return ((x - mean) * jax.lax.rsqrt(var + EPS)
                * g.reshape(1, -1, 1, 1) + b.reshape(1, -1, 1, 1))

    out = jax.nn.relu(bn(conv(x_nchw, w1), g1, b1))
    out = bn(conv(out, w2), g2, b2) + x_nchw
    return jax.nn.relu(out)


# ---------------------------------- main ------------------------------------ #

if __name__ == "__main__":
    # Smallest real ResNet BasicBlock width; inplanes == planes, stride=1.
    B, C, H, W = 2, 64, 16, 16
    key = jax.random.PRNGKey(0)
    kx, kw1, kw2, kg1, kb1, kg2, kb2 = jax.random.split(key, 7)

    x = jax.random.normal(kx, (B, C, H, W), jnp.float32)
    w1 = 0.1 * jax.random.normal(kw1, (C, C, 3, 3), jnp.float32)
    w2 = 0.1 * jax.random.normal(kw2, (C, C, 3, 3), jnp.float32)
    g1 = 1.0 + 0.1 * jax.random.normal(kg1, (C,), jnp.float32)
    b1 = 0.1 * jax.random.normal(kb1, (C,), jnp.float32)
    g2 = 1.0 + 0.1 * jax.random.normal(kg2, (C,), jnp.float32)
    b2 = 0.1 * jax.random.normal(kb2, (C,), jnp.float32)
    params = (w1, g1, b1, w2, g2, b2)

    out = jax.block_until_ready(basic_block_forward(x, params))
    ref = jax.block_until_ready(_reference(x, params))

    assert out.shape == (B, C, H, W), out.shape
    # Kernel uses bf16 MXU operands (f32 accumulation); compare against the
    # full-f32 reference with a bf16-appropriate tolerance.
    assert bool(jnp.allclose(out, ref, rtol=2e-2, atol=5e-2)), (
        float(jnp.max(jnp.abs(out - ref))))
    print("KERNEL_OK")
</pallas_src>

<mosaic_0001>
module attributes {stable_mosaic.version = 11 : i64} {
  func.func @_basic_block_kernel(%arg0: memref<2x18x18x128xf32, #tpu.memory_space<vmem>>, %arg1: memref<9x128x128xbf16, #tpu.memory_space<vmem>>, %arg2: memref<9x128x128xbf16, #tpu.memory_space<vmem>>, %arg3: memref<1x128xf32, #tpu.memory_space<vmem>>, %arg4: memref<1x128xf32, #tpu.memory_space<vmem>>, %arg5: memref<1x128xf32, #tpu.memory_space<vmem>>, %arg6: memref<1x128xf32, #tpu.memory_space<vmem>>, %arg7: memref<512x128xf32, #tpu.memory_space<vmem>>, %arg8: memref<2x18x32x128xf32, #tpu.memory_space<vmem>>) attributes {dimension_semantics = [], scalar_prefetch = 0 : i64, scratch_operands = 1 : i64, tpu.core_type = #tpu.core_type<tc>} {
    %c0 = arith.constant 0 : index
    %c0_0 = arith.constant 0 : index
    %c0_1 = arith.constant 0 : index
    %c0_2 = arith.constant 0 : index
    %0 = vector.load %arg0[%c0, %c0_0, %c0_1, %c0_2] : memref<2x18x18x128xf32, #tpu.memory_space<vmem>>, vector<2x16x16x128xf32>
    %1 = vector.shape_cast %0 : vector<2x16x16x128xf32> to vector<512x128xf32>
    %2 = arith.truncf %1 : vector<512x128xf32> to vector<512x128xbf16>
    %c0_3 = arith.constant 0 : index
    %c0_4 = arith.constant 0 : index
    %c0_5 = arith.constant 0 : index
    %3 = vector.load %arg1[%c0_3, %c0_4, %c0_5] : memref<9x128x128xbf16, #tpu.memory_space<vmem>>, vector<1x128x128xbf16>
    %4 = vector.shape_cast %3 : vector<1x128x128xbf16> to vector<128x128xbf16>
    %cst = arith.constant dense<0.000000e+00> : vector<512x128xf32>
    %5 = tpu.matmul %2, %4, %cst {dimension_numbers = #tpu.dot_dimension_numbers<[1], [0], [0], [1], [0, 0, 1, 1], [], []>} : vector<512x128xbf16>, vector<128x128xbf16>, vector<512x128xf32> -> vector<512x128xf32>
    %c0_6 = arith.constant 0 : index
    %c0_7 = arith.constant 0 : index
    %c1 = arith.constant 1 : index
    %c0_8 = arith.constant 0 : index
    %6 = vector.load %arg0[%c0_6, %c0_7, %c1, %c0_8] : memref<2x18x18x128xf32, #tpu.memory_space<vmem>>, vector<2x16x16x128xf32>
    %7 = vector.shape_cast %6 : vector<2x16x16x128xf32> to vector<512x128xf32>
    %8 = arith.truncf %7 : vector<512x128xf32> to vector<512x128xbf16>
    %c1_9 = arith.constant 1 : index
    %c0_10 = arith.constant 0 : index
    %c0_11 = arith.constant 0 : index
    %9 = vector.load %arg1[%c1_9, %c0_10, %c0_11] : memref<9x128x128xbf16, #tpu.memory_space<vmem>>, vector<1x128x128xbf16>
    %10 = vector.shape_cast %9 : vector<1x128x128xbf16> to vector<128x128xbf16>
    %cst_12 = arith.constant dense<0.000000e+00> : vector<512x128xf32>
    %11 = tpu.matmul %8, %10, %cst_12 {dimension_numbers = #tpu.dot_dimension_numbers<[1], [0], [0], [1], [0, 0, 1, 1], [], []>} : vector<512x128xbf16>, vector<128x128xbf16>, vector<512x128xf32> -> vector<512x128xf32>
    %12 = arith.addf %5, %11 : vector<512x128xf32>
    %c0_13 = arith.constant 0 : index
    %c0_14 = arith.constant 0 : index
    %c2 = arith.constant 2 : index
    %c0_15 = arith.constant 0 : index
    %13 = vector.load %arg0[%c0_13, %c0_14, %c2, %c0_15] : memref<2x18x18x128xf32, #tpu.memory_space<vmem>>, vector<2x16x16x128xf32>
    %14 = vector.shape_cast %13 : vector<2x16x16x128xf32> to vector<512x128xf32>
    %15 = arith.truncf %14 : vector<512x128xf32> to vector<512x128xbf16>
    %c2_16 = arith.constant 2 : index
    %c0_17 = arith.constant 0 : index
    %c0_18 = arith.constant 0 : index
    %16 = vector.load %arg1[%c2_16, %c0_17, %c0_18] : memref<9x128x128xbf16, #tpu.memory_space<vmem>>, vector<1x128x128xbf16>
    %17 = vector.shape_cast %16 : vector<1x128x128xbf16> to vector<128x128xbf16>
    %cst_19 = arith.constant dense<0.000000e+00> : vector<512x128xf32>
    %18 = tpu.matmul %15, %17, %cst_19 {dimension_numbers = #tpu.dot_dimension_numbers<[1], [0], [0], [1], [0, 0, 1, 1], [], []>} : vector<512x128xbf16>, vector<128x128xbf16>, vector<512x128xf32> -> vector<512x128xf32>
    %19 = arith.addf %12, %18 : vector<512x128xf32>
    %c0_20 = arith.constant 0 : index
    %c1_21 = arith.constant 1 : index
    %c0_22 = arith.constant 0 : index
    %c0_23 = arith.constant 0 : index
    %20 = vector.load %arg0[%c0_20, %c1_21, %c0_22, %c0_23] : memref<2x18x18x128xf32, #tpu.memory_space<vmem>>, vector<2x16x16x128xf32>
    %21 = vector.shape_cast %20 : vector<2x16x16x128xf32> to vector<512x128xf32>
    %22 = arith.truncf %21 : vector<512x128xf32> to vector<512x128xbf16>
    %c3 = arith.constant 3 : index
    %c0_24 = arith.constant 0 : index
    %c0_25 = arith.constant 0 : index
    %23 = vector.load %arg1[%c3, %c0_24, %c0_25] : memref<9x128x128xbf16, #tpu.memory_space<vmem>>, vector<1x128x128xbf16>
    %24 = vector.shape_cast %23 : vector<1x128x128xbf16> to vector<128x128xbf16>
    %cst_26 = arith.constant dense<0.000000e+00> : vector<512x128xf32>
    %25 = tpu.matmul %22, %24, %cst_26 {dimension_numbers = #tpu.dot_dimension_numbers<[1], [0], [0], [1], [0, 0, 1, 1], [], []>} : vector<512x128xbf16>, vector<128x128xbf16>, vector<512x128xf32> -> vector<512x128xf32>
    %26 = arith.addf %19, %25 : vector<512x128xf32>
    %c0_27 = arith.constant 0 : index
    %c1_28 = arith.constant 1 : index
    %c1_29 = arith.constant 1 : index
    %c0_30 = arith.constant 0 : index
    %27 = vector.load %arg0[%c0_27, %c1_28, %c1_29, %c0_30] : memref<2x18x18x128xf32, #tpu.memory_space<vmem>>, vector<2x16x16x128xf32>
    %28 = vector.shape_cast %27 : vector<2x16x16x128xf32> to vector<512x128xf32>
    %29 = arith.truncf %28 : vector<512x128xf32> to vector<512x128xbf16>
    %c4 = arith.constant 4 : index
    %c0_31 = arith.constant 0 : index
    %c0_32 = arith.constant 0 : index
    %30 = vector.load %arg1[%c4, %c0_31, %c0_32] : memref<9x128x128xbf16, #tpu.memory_space<vmem>>, vector<1x128x128xbf16>
    %31 = vector.shape_cast %30 : vector<1x128x128xbf16> to vector<128x128xbf16>
    %cst_33 = arith.constant dense<0.000000e+00> : vector<512x128xf32>
    %32 = tpu.matmul %29, %31, %cst_33 {dimension_numbers = #tpu.dot_dimension_numbers<[1], [0], [0], [1], [0, 0, 1, 1], [], []>} : vector<512x128xbf16>, vector<128x128xbf16>, vector<512x128xf32> -> vector<512x128xf32>
    %33 = arith.addf %26, %32 : vector<512x128xf32>
    %c0_34 = arith.constant 0 : index
    %c1_35 = arith.constant 1 : index
    %c2_36 = arith.constant 2 : index
    %c0_37 = arith.constant 0 : index
    %34 = vector.load %arg0[%c0_34, %c1_35, %c2_36, %c0_37] : memref<2x18x18x128xf32, #tpu.memory_space<vmem>>, vector<2x16x16x128xf32>
    %35 = vector.shape_cast %34 : vector<2x16x16x128xf32> to vector<512x128xf32>
    %36 = arith.truncf %35 : vector<512x128xf32> to vector<512x128xbf16>
    %c5 = arith.constant 5 : index
    %c0_38 = arith.constant 0 : index
    %c0_39 = arith.constant 0 : index
    %37 = vector.load %arg1[%c5, %c0_38, %c0_39] : memref<9x128x128xbf16, #tpu.memory_space<vmem>>, vector<1x128x128xbf16>
    %38 = vector.shape_cast %37 : vector<1x128x128xbf16> to vector<128x128xbf16>
    %cst_40 = arith.constant dense<0.000000e+00> : vector<512x128xf32>
    %39 = tpu.matmul %36, %38, %cst_40 {dimension_numbers = #tpu.dot_dimension_numbers<[1], [0], [0], [1], [0, 0, 1, 1], [], []>} : vector<512x128xbf16>, vector<128x128xbf16>, vector<512x128xf32> -> vector<512x128xf32>
    %40 = arith.addf %33, %39 : vector<512x128xf32>
    %c0_41 = arith.constant 0 : index
    %c2_42 = arith.constant 2 : index
    %c0_43 = arith.constant 0 : index
    %c0_44 = arith.constant 0 : index
    %41 = vector.load %arg0[%c0_41, %c2_42, %c0_43, %c0_44] : memref<2x18x18x128xf32, #tpu.memory_space<vmem>>, vector<2x16x16x128xf32>
    %42 = vector.shape_cast %41 : vector<2x16x16x128xf32> to vector<512x128xf32>
    %43 = arith.truncf %42 : vector<512x128xf32> to vector<512x128xbf16>
    %c6 = arith.constant 6 : index
    %c0_45 = arith.constant 0 : index
    %c0_46 = arith.constant 0 : index
    %44 = vector.load %arg1[%c6, %c0_45, %c0_46] : memref<9x128x128xbf16, #tpu.memory_space<vmem>>, vector<1x128x128xbf16>
    %45 = vector.shape_cast %44 : vector<1x128x128xbf16> to vector<128x128xbf16>
    %cst_47 = arith.constant dense<0.000000e+00> : vector<512x128xf32>
    %46 = tpu.matmul %43, %45, %cst_47 {dimension_numbers = #tpu.dot_dimension_numbers<[1], [0], [0], [1], [0, 0, 1, 1], [], []>} : vector<512x128xbf16>, vector<128x128xbf16>, vector<512x128xf32> -> vector<512x128xf32>
    %47 = arith.addf %40, %46 : vector<512x128xf32>
    %c0_48 = arith.constant 0 : index
    %c2_49 = arith.constant 2 : index
    %c1_50 = arith.constant 1 : index
    %c0_51 = arith.constant 0 : index
    %48 = vector.load %arg0[%c0_48, %c2_49, %c1_50, %c0_51] : memref<2x18x18x128xf32, #tpu.memory_space<vmem>>, vector<2x16x16x128xf32>
    %49 = vector.shape_cast %48 : vector<2x16x16x128xf32> to vector<512x128xf32>
    %50 = arith.truncf %49 : vector<512x128xf32> to vector<512x128xbf16>
    %c7 = arith.constant 7 : index
    %c0_52 = arith.constant 0 : index
    %c0_53 = arith.constant 0 : index
    %51 = vector.load %arg1[%c7, %c0_52, %c0_53] : memref<9x128x128xbf16, #tpu.memory_space<vmem>>, vector<1x128x128xbf16>
    %52 = vector.shape_cast %51 : vector<1x128x128xbf16> to vector<128x128xbf16>
    %cst_54 = arith.constant dense<0.000000e+00> : vector<512x128xf32>
    %53 = tpu.matmul %50, %52, %cst_54 {dimension_numbers = #tpu.dot_dimension_numbers<[1], [0], [0], [1], [0, 0, 1, 1], [], []>} : vector<512x128xbf16>, vector<128x128xbf16>, vector<512x128xf32> -> vector<512x128xf32>
    %54 = arith.addf %47, %53 : vector<512x128xf32>
    %c0_55 = arith.constant 0 : index
    %c2_56 = arith.constant 2 : index
    %c2_57 = arith.constant 2 : index
    %c0_58 = arith.constant 0 : index
    %55 = vector.load %arg0[%c0_55, %c2_56, %c2_57, %c0_58] : memref<2x18x18x128xf32, #tpu.memory_space<vmem>>, vector<2x16x16x128xf32>
    %56 = vector.shape_cast %55 : vector<2x16x16x128xf32> to vector<512x128xf32>
    %57 = arith.truncf %56 : vector<512x128xf32> to vector<512x128xbf16>
    %c8 = arith.constant 8 : index
    %c0_59 = arith.constant 0 : index
    %c0_60 = arith.constant 0 : index
    %58 = vector.load %arg1[%c8, %c0_59, %c0_60] : memref<9x128x128xbf16, #tpu.memory_space<vmem>>, vector<1x128x128xbf16>
    %59 = vector.shape_cast %58 : vector<1x128x128xbf16> to vector<128x128xbf16>
    %cst_61 = arith.constant dense<0.000000e+00> : vector<512x128xf32>
    %60 = tpu.matmul %57, %59, %cst_61 {dimension_numbers = #tpu.dot_dimension_numbers<[1], [0], [0], [1], [0, 0, 1, 1], [], []>} : vector<512x128xbf16>, vector<128x128xbf16>, vector<512x128xf32> -> vector<512x128xf32>
    %61 = arith.addf %54, %60 : vector<512x128xf32>
    %c0_62 = arith.constant 0 : index
    %c0_63 = arith.constant 0 : index
    %62 = vector.load %arg3[%c0_62, %c0_63] : memref<1x128xf32, #tpu.memory_space<vmem>>, vector<1x128xf32>
    %c0_64 = arith.constant 0 : index
    %c0_65 = arith.constant 0 : index
    %63 = vector.load %arg4[%c0_64, %c0_65] : memref<1x128xf32, #tpu.memory_space<vmem>>, vector<1x128xf32>
    %cst_66 = arith.constant dense<0.000000e+00> : vector<128xf32>
    %64 = vector.multi_reduction <add>, %61, %cst_66 [0] : vector<512x128xf32> to vector<128xf32>
    %65 = vector.shape_cast %64 : vector<128xf32> to vector<1x128xf32>
    %cst_67 = arith.constant 0.001953125 : f32
    %66 = vector.broadcast %cst_67 : f32 to vector<1x128xf32>
    %67 = arith.mulf %65, %66 : vector<1x128xf32>
    %68 = arith.mulf %61, %61 : vector<512x128xf32>
    %cst_68 = arith.constant dense<0.000000e+00> : vector<128xf32>
    %69 = vector.multi_reduction <add>, %68, %cst_68 [0] : vector<512x128xf32> to vector<128xf32>
    %70 = vector.shape_cast %69 : vector<128xf32> to vector<1x128xf32>
    %cst_69 = arith.constant 0.001953125 : f32
    %71 = vector.broadcast %cst_69 : f32 to vector<1x128xf32>
    %72 = arith.mulf %70, %71 : vector<1x128xf32>
    %73 = arith.mulf %67, %67 : vector<1x128xf32>
    %74 = arith.subf %72, %73 : vector<1x128xf32>
    %cst_70 = arith.constant 9.99999974E-6 : f32
    %75 = vector.broadcast %cst_70 : f32 to vector<1x128xf32>
    %76 = arith.addf %74, %75 : vector<1x128xf32>
    %77 = math.rsqrt %76 : vector<1x128xf32>
    %78 = arith.mulf %62, %77 : vector<1x128xf32>
    %79 = arith.mulf %67, %78 : vector<1x128xf32>
    %80 = arith.subf %63, %79 : vector<1x128xf32>
    %81 = vector.broadcast %78 : vector<1x128xf32> to vector<512x128xf32>
    %82 = arith.mulf %61, %81 : vector<512x128xf32>
    %83 = vector.broadcast %80 : vector<1x128xf32> to vector<512x128xf32>
    %84 = arith.addf %82, %83 : vector<512x128xf32>
    %cst_71 = arith.constant 0.000000e+00 : f32
    %85 = vector.broadcast %cst_71 : f32 to vector<512x128xf32>
    %86 = arith.maximumf %84, %85 : vector<512x128xf32>
    %cst_72 = arith.constant 0.000000e+00 : f32
    %87 = vector.broadcast %cst_72 : f32 to vector<2x18x32x128xf32>
    %c0_73 = arith.constant 0 : index
    %c0_74 = arith.constant 0 : index
    %c0_75 = arith.constant 0 : index
    %c0_76 = arith.constant 0 : index
    %88 = vector.load %arg8[%c0_73, %c0_74, %c0_75, %c0_76] : memref<2x18x32x128xf32, #tpu.memory_space<vmem>>, vector<2x18x32x128xf32>
    tpu.vector_store %arg8[%c0_73, %c0_74, %c0_75, %c0_76], %87 {strides = array<i32>} : memref<2x18x32x128xf32, #tpu.memory_space<vmem>>, vector<2x18x32x128xf32>,
    %89 = vector.shape_cast %86 : vector<512x128xf32> to vector<2x16x16x128xf32>
    %c0_77 = arith.constant 0 : index
    %c1_78 = arith.constant 1 : index
    %c8_79 = arith.constant 8 : index
    %c0_80 = arith.constant 0 : index
    %90 = vector.load %arg8[%c0_77, %c1_78, %c8_79, %c0_80] : memref<2x18x32x128xf32, #tpu.memory_space<vmem>>, vector<2x16x16x128xf32>
    tpu.vector_store %arg8[%c0_77, %c1_78, %c8_79, %c0_80], %89 {strides = array<i32>} : memref<2x18x32x128xf32, #tpu.memory_space<vmem>>, vector<2x16x16x128xf32>,
    %c0_81 = arith.constant 0 : index
    %c0_82 = arith.constant 0 : index
    %c7_83 = arith.constant 7 : index
    %c0_84 = arith.constant 0 : index
    %91 = vector.load %arg8[%c0_81, %c0_82, %c7_83, %c0_84] : memref<2x18x32x128xf32, #tpu.memory_space<vmem>>, vector<2x16x16x128xf32>
    %92 = vector.shape_cast %91 : vector<2x16x16x128xf32> to vector<512x128xf32>
    %93 = arith.truncf %92 : vector<512x128xf32> to vector<512x128xbf16>
    %c0_85 = arith.constant 0 : index
    %c0_86 = arith.constant 0 : index
    %c0_87 = arith.constant 0 : index
    %94 = vector.load %arg2[%c0_85, %c0_86, %c0_87] : memref<9x128x128xbf16, #tpu.memory_space<vmem>>, vector<1x128x128xbf16>
    %95 = vector.shape_cast %94 : vector<1x128x128xbf16> to vector<128x128xbf16>
    %cst_88 = arith.constant dense<0.000000e+00> : vector<512x128xf32>
    %96 = tpu.matmul %93, %95, %cst_88 {dimension_numbers = #tpu.dot_dimension_numbers<[1], [0], [0], [1], [0, 0, 1, 1], [], []>} : vector<512x128xbf16>, vector<128x128xbf16>, vector<512x128xf32> -> vector<512x128xf32>
    %c0_89 = arith.constant 0 : index
    %c0_90 = arith.constant 0 : index
    %c8_91 = arith.constant 8 : index
    %c0_92 = arith.constant 0 : index
    %97 = vector.load %arg8[%c0_89, %c0_90, %c8_91, %c0_92] : memref<2x18x32x128xf32, #tpu.memory_space<vmem>>, vector<2x16x16x128xf32>
    %98 = vector.shape_cast %97 : vector<2x16x16x128xf32> to vector<512x128xf32>
    %99 = arith.truncf %98 : vector<512x128xf32> to vector<512x128xbf16>
    %c1_93 = arith.constant 1 : index
    %c0_94 = arith.constant 0 : index
    %c0_95 = arith.constant 0 : index
    %100 = vector.load %arg2[%c1_93, %c0_94, %c0_95] : memref<9x128x128xbf16, #tpu.memory_space<vmem>>, vector<1x128x128xbf16>
    %101 = vector.shape_cast %100 : vector<1x128x128xbf16> to vector<128x128xbf16>
    %cst_96 = arith.constant dense<0.000000e+00> : vector<512x128xf32>
    %102 = tpu.matmul %99, %101, %cst_96 {dimension_numbers = #tpu.dot_dimension_numbers<[1], [0], [0], [1], [0, 0, 1, 1], [], []>} : vector<512x128xbf16>, vector<128x128xbf16>, vector<512x128xf32> -> vector<512x128xf32>
    %103 = arith.addf %96, %102 : vector<512x128xf32>
    %c0_97 = arith.constant 0 : index
    %c0_98 = arith.constant 0 : index
    %c9 = arith.constant 9 : index
    %c0_99 = arith.constant 0 : index
    %104 = vector.load %arg8[%c0_97, %c0_98, %c9, %c0_99] : memref<2x18x32x128xf32, #tpu.memory_space<vmem>>, vector<2x16x16x128xf32>
    %105 = vector.shape_cast %104 : vector<2x16x16x128xf32> to vector<512x128xf32>
    %106 = arith.truncf %105 : vector<512x128xf32> to vector<512x128xbf16>
    %c2_100 = arith.constant 2 : index
    %c0_101 = arith.constant 0 : index
    %c0_102 = arith.constant 0 : index
    %107 = vector.load %arg2[%c2_100, %c0_101, %c0_102] : memref<9x128x128xbf16, #tpu.memory_space<vmem>>, vector<1x128x128xbf16>
    %108 = vector.shape_cast %107 : vector<1x128x128xbf16> to vector<128x128xbf16>
    %cst_103 = arith.constant dense<0.000000e+00> : vector<512x128xf32>
    %109 = tpu.matmul %106, %108, %cst_103 {dimension_numbers = #tpu.dot_dimension_numbers<[1], [0], [0], [1], [0, 0, 1, 1], [], []>} : vector<512x128xbf16>, vector<128x128xbf16>, vector<512x128xf32> -> vector<512x128xf32>
    %110 = arith.addf %103, %109 : vector<512x128xf32>
    %c0_104 = arith.constant 0 : index
    %c1_105 = arith.constant 1 : index
    %c7_106 = arith.constant 7 : index
    %c0_107 = arith.constant 0 : index
    %111 = vector.load %arg8[%c0_104, %c1_105, %c7_106, %c0_107] : memref<2x18x32x128xf32, #tpu.memory_space<vmem>>, vector<2x16x16x128xf32>
    %112 = vector.shape_cast %111 : vector<2x16x16x128xf32> to vector<512x128xf32>
    %113 = arith.truncf %112 : vector<512x128xf32> to vector<512x128xbf16>
    %c3_108 = arith.constant 3 : index
    %c0_109 = arith.constant 0 : index
    %c0_110 = arith.constant 0 : index
    %114 = vector.load %arg2[%c3_108, %c0_109, %c0_110] : memref<9x128x128xbf16, #tpu.memory_space<vmem>>, vector<1x128x128xbf16>
    %115 = vector.shape_cast %114 : vector<1x128x128xbf16> to vector<128x128xbf16>
    %cst_111 = arith.constant dense<0.000000e+00> : vector<512x128xf32>
    %116 = tpu.matmul %113, %115, %cst_111 {dimension_numbers = #tpu.dot_dimension_numbers<[1], [0], [0], [1], [0, 0, 1, 1], [], []>} : vector<512x128xbf16>, vector<128x128xbf16>, vector<512x128xf32> -> vector<512x128xf32>
    %117 = arith.addf %110, %116 : vector<512x128xf32>
    %c0_112 = arith.constant 0 : index
    %c1_113 = arith.constant 1 : index
    %c8_114 = arith.constant 8 : index
    %c0_115 = arith.constant 0 : index
    %118 = vector.load %arg8[%c0_112, %c1_113, %c8_114, %c0_115] : memref<2x18x32x128xf32, #tpu.memory_space<vmem>>, vector<2x16x16x128xf32>
    %119 = vector.shape_cast %118 : vector<2x16x16x128xf32> to vector<512x128xf32>
    %120 = arith.truncf %119 : vector<512x128xf32> to vector<512x128xbf16>
    %c4_116 = arith.constant 4 : index
    %c0_117 = arith.constant 0 : index
    %c0_118 = arith.constant 0 : index
    %121 = vector.load %arg2[%c4_116, %c0_117, %c0_118] : memref<9x128x128xbf16, #tpu.memory_space<vmem>>, vector<1x128x128xbf16>
    %122 = vector.shape_cast %121 : vector<1x128x128xbf16> to vector<128x128xbf16>
    %cst_119 = arith.constant dense<0.000000e+00> : vector<512x128xf32>
    %123 = tpu.matmul %120, %122, %cst_119 {dimension_numbers = #tpu.dot_dimension_numbers<[1], [0], [0], [1], [0, 0, 1, 1], [], []>} : vector<512x128xbf16>, vector<128x128xbf16>, vector<512x128xf32> -> vector<512x128xf32>
    %124 = arith.addf %117, %123 : vector<512x128xf32>
    %c0_120 = arith.constant 0 : index
    %c1_121 = arith.constant 1 : index
    %c9_122 = arith.constant 9 : index
    %c0_123 = arith.constant 0 : index
    %125 = vector.load %arg8[%c0_120, %c1_121, %c9_122, %c0_123] : memref<2x18x32x128xf32, #tpu.memory_space<vmem>>, vector<2x16x16x128xf32>
    %126 = vector.shape_cast %125 : vector<2x16x16x128xf32> to vector<512x128xf32>
    %127 = arith.truncf %126 : vector<512x128xf32> to vector<512x128xbf16>
    %c5_124 = arith.constant 5 : index
    %c0_125 = arith.constant 0 : index
    %c0_126 = arith.constant 0 : index
    %128 = vector.load %arg2[%c5_124, %c0_125, %c0_126] : memref<9x128x128xbf16, #tpu.memory_space<vmem>>, vector<1x128x128xbf16>
    %129 = vector.shape_cast %128 : vector<1x128x128xbf16> to vector<128x128xbf16>
    %cst_127 = arith.constant dense<0.000000e+00> : vector<512x128xf32>
    %130 = tpu.matmul %127, %129, %cst_127 {dimension_numbers = #tpu.dot_dimension_numbers<[1], [0], [0], [1], [0, 0, 1, 1], [], []>} : vector<512x128xbf16>, vector<128x128xbf16>, vector<512x128xf32> -> vector<512x128xf32>
    %131 = arith.addf %124, %130 : vector<512x128xf32>
    %c0_128 = arith.constant 0 : index
    %c2_129 = arith.constant 2 : index
    %c7_130 = arith.constant 7 : index
    %c0_131 = arith.constant 0 : index
    %132 = vector.load %arg8[%c0_128, %c2_129, %c7_130, %c0_131] : memref<2x18x32x128xf32, #tpu.memory_space<vmem>>, vector<2x16x16x128xf32>
    %133 = vector.shape_cast %132 : vector<2x16x16x128xf32> to vector<512x128xf32>
    %134 = arith.truncf %133 : vector<512x128xf32> to vector<512x128xbf16>
    %c6_132 = arith.constant 6 : index
    %c0_133 = arith.constant 0 : index
    %c0_134 = arith.constant 0 : index
    %135 = vector.load %arg2[%c6_132, %c0_133, %c0_134] : memref<9x128x128xbf16, #tpu.memory_space<vmem>>, vector<1x128x128xbf16>
    %136 = vector.shape_cast %135 : vector<1x128x128xbf16> to vector<128x128xbf16>
    %cst_135 = arith.constant dense<0.000000e+00> : vector<512x128xf32>
    %137 = tpu.matmul %134, %136, %cst_135 {dimension_numbers = #tpu.dot_dimension_numbers<[1], [0], [0], [1], [0, 0, 1, 1], [], []>} : vector<512x128xbf16>, vector<128x128xbf16>, vector<512x128xf32> -> vector<512x128xf32>
    %138 = arith.addf %131, %137 : vector<512x128xf32>
    %c0_136 = arith.constant 0 : index
    %c2_137 = arith.constant 2 : index
    %c8_138 = arith.constant 8 : index
    %c0_139 = arith.constant 0 : index
    %139 = vector.load %arg8[%c0_136, %c2_137, %c8_138, %c0_139] : memref<2x18x32x128xf32, #tpu.memory_space<vmem>>, vector<2x16x16x128xf32>
    %140 = vector.shape_cast %139 : vector<2x16x16x128xf32> to vector<512x128xf32>
    %141 = arith.truncf %140 : vector<512x128xf32> to vector<512x128xbf16>
    %c7_140 = arith.constant 7 : index
    %c0_141 = arith.constant 0 : index
    %c0_142 = arith.constant 0 : index
    %142 = vector.load %arg2[%c7_140, %c0_141, %c0_142] : memref<9x128x128xbf16, #tpu.memory_space<vmem>>, vector<1x128x128xbf16>
    %143 = vector.shape_cast %142 : vector<1x128x128xbf16> to vector<128x128xbf16>
    %cst_143 = arith.constant dense<0.000000e+00> : vector<512x128xf32>
    %144 = tpu.matmul %141, %143, %cst_143 {dimension_numbers = #tpu.dot_dimension_numbers<[1], [0], [0], [1], [0, 0, 1, 1], [], []>} : vector<512x128xbf16>, vector<128x128xbf16>, vector<512x128xf32> -> vector<512x128xf32>
    %145 = arith.addf %138, %144 : vector<512x128xf32>
    %c0_144 = arith.constant 0 : index
    %c2_145 = arith.constant 2 : index
    %c9_146 = arith.constant 9 : index
    %c0_147 = arith.constant 0 : index
    %146 = vector.load %arg8[%c0_144, %c2_145, %c9_146, %c0_147] : memref<2x18x32x128xf32, #tpu.memory_space<vmem>>, vector<2x16x16x128xf32>
    %147 = vector.shape_cast %146 : vector<2x16x16x128xf32> to vector<512x128xf32>
    %148 = arith.truncf %147 : vector<512x128xf32> to vector<512x128xbf16>
    %c8_148 = arith.constant 8 : index
    %c0_149 = arith.constant 0 : index
    %c0_150 = arith.constant 0 : index
    %149 = vector.load %arg2[%c8_148, %c0_149, %c0_150] : memref<9x128x128xbf16, #tpu.memory_space<vmem>>, vector<1x128x128xbf16>
    %150 = vector.shape_cast %149 : vector<1x128x128xbf16> to vector<128x128xbf16>
    %cst_151 = arith.constant dense<0.000000e+00> : vector<512x128xf32>
    %151 = tpu.matmul %148, %150, %cst_151 {dimension_numbers = #tpu.dot_dimension_numbers<[1], [0], [0], [1], [0, 0, 1, 1], [], []>} : vector<512x128xbf16>, vector<128x128xbf16>, vector<512x128xf32> -> vector<512x128xf32>
    %152 = arith.addf %145, %151 : vector<512x128xf32>
    %c0_152 = arith.constant 0 : index
    %c0_153 = arith.constant 0 : index
    %153 = vector.load %arg5[%c0_152, %c0_153] : memref<1x128xf32, #tpu.memory_space<vmem>>, vector<1x128xf32>
    %c0_154 = arith.constant 0 : index
    %c0_155 = arith.constant 0 : index
    %154 = vector.load %arg6[%c0_154, %c0_155] : memref<1x128xf32, #tpu.memory_space<vmem>>, vector<1x128xf32>
    %cst_156 = arith.constant dense<0.000000e+00> : vector<128xf32>
    %155 = vector.multi_reduction <add>, %152, %cst_156 [0] : vector<512x128xf32> to vector<128xf32>
    %156 = vector.shape_cast %155 : vector<128xf32> to vector<1x128xf32>
    %cst_157 = arith.constant 0.001953125 : f32
    %157 = vector.broadcast %cst_157 : f32 to vector<1x128xf32>
    %158 = arith.mulf %156, %157 : vector<1x128xf32>
    %159 = arith.mulf %152, %152 : vector<512x128xf32>
    %cst_158 = arith.constant dense<0.000000e+00> : vector<128xf32>
    %160 = vector.multi_reduction <add>, %159, %cst_158 [0] : vector<512x128xf32> to vector<128xf32>
    %161 = vector.shape_cast %160 : vector<128xf32> to vector<1x128xf32>
    %cst_159 = arith.constant 0.001953125 : f32
    %162 = vector.broadcast %cst_159 : f32 to vector<1x128xf32>
    %163 = arith.mulf %161, %162 : vector<1x128xf32>
    %164 = arith.mulf %158, %158 : vector<1x128xf32>
    %165 = arith.subf %163, %164 : vector<1x128xf32>
    %cst_160 = arith.constant 9.99999974E-6 : f32
    %166 = vector.broadcast %cst_160 : f32 to vector<1x128xf32>
    %167 = arith.addf %165, %166 : vector<1x128xf32>
    %168 = math.rsqrt %167 : vector<1x128xf32>
    %169 = arith.mulf %153, %168 : vector<1x128xf32>
    %170 = arith.mulf %158, %169 : vector<1x128xf32>
    %171 = arith.subf %154, %170 : vector<1x128xf32>
    %c0_161 = arith.constant 0 : index
    %c1_162 = arith.constant 1 : index
    %c1_163 = arith.constant 1 : index
    %c0_164 = arith.constant 0 : index
    %172 = vector.load %arg0[%c0_161, %c1_162, %c1_163, %c0_164] : memref<2x18x18x128xf32, #tpu.memory_space<vmem>>, vector<2x16x16x128xf32>
    %173 = vector.shape_cast %172 : vector<2x16x16x128xf32> to vector<512x128xf32>
    %174 = vector.broadcast %169 : vector<1x128xf32> to vector<512x128xf32>
    %175 = arith.mulf %152, %174 : vector<512x128xf32>
    %176 = vector.broadcast %171 : vector<1x128xf32> to vector<512x128xf32>
    %177 = arith.addf %175, %176 : vector<512x128xf32>
    %178 = arith.addf %177, %173 : vector<512x128xf32>
    %cst_165 = arith.constant 0.000000e+00 : f32
    %179 = vector.broadcast %cst_165 : f32 to vector<512x128xf32>
    %180 = arith.maximumf %178, %179 : vector<512x128xf32>
    %c0_166 = arith.constant 0 : index
    %c0_167 = arith.constant 0 : index
    %181 = vector.load %arg7[%c0_166, %c0_167] : memref<512x128xf32, #tpu.memory_space<vmem>>, vector<512x128xf32>
    tpu.vector_store %arg7[%c0_166, %c0_167], %180 {strides = array<i32>} : memref<512x128xf32, #tpu.memory_space<vmem>>, vector<512x128xf32>,
    return
  }
}

</mosaic_0001>

<llo_original>
// kernel: basic_block_forward.1
$region0: #{basic_block_forward.1}
  #allocation0 [shape = 'u32[]', space=smem, size = 0x4, offset = 0x4, fixed_abs, tag = 'smem constant byte address 0x4 - core index']
  #allocation1 [shape = 'u32[144,128]{1,0:T(1,128)}', space=vmem, size = 0x12000, scoped, tag = 'internal scratch']
  #allocation2 [shape = 'f32[2,18,32,128]{3,2,1,0:T(8,128)}', space=vmem, size = 0x90000, scoped, tag = 'scratch operand']
  %s0 = inlined_call_operand.vmem [shape: f32[2,18,18,128], index: 0, kind: input, shape index: {}]
  %s1 = inlined_call_operand.vmem [shape: bf16[9,128,128], index: 1, kind: input, shape index: {}]
  %s2 = inlined_call_operand.vmem [shape: bf16[9,128,128], index: 2, kind: input, shape index: {}]
  %s3 = inlined_call_operand.vmem [shape: f32[1,128], index: 3, kind: input, shape index: {}]
  %s4 = inlined_call_operand.vmem [shape: f32[1,128], index: 4, kind: input, shape index: {}]
  %s5 = inlined_call_operand.vmem [shape: f32[1,128], index: 5, kind: input, shape index: {}]
  %s6 = inlined_call_operand.vmem [shape: f32[1,128], index: 6, kind: input, shape index: {}]
  %s7 = inlined_call_operand.vmem [shape: f32[512,128], index: 7, kind: output, shape index: {}]
  %s8 = sld [smem:[#allocation0]]
  $region38: #{basic_block_forward.1} parent=0
    _
  %s10 = ssub.s32 1, %s8
  %s11 = scalar_select 0, %s10, %s8
  // Predicated region
  $region2: #{basic_block_forward.1} parent=0 // pred_check
    _
  $region3: #{basic_block_forward.1} parent=0 // pred_check_branch
    %13 = sbr.rel (0) target = $region5
  $region4: #{basic_block_forward.1} parent=0 // pred_region
    _
  $region5: #{basic_block_forward.1} parent=0 // pred_fallthru
    _
  // Predicated region
  $region6: #{basic_block_forward.1} parent=0 // pred_check
    _
  $region7: #{basic_block_forward.1} parent=0 // pred_check_branch
    %15 = sbr.rel (0) target = $region9
  $region8: #{basic_block_forward.1} parent=0 // pred_region
    _
  $region9: #{basic_block_forward.1} parent=0 // pred_fallthru
    _
  // Predicated region
  $region10: #{basic_block_forward.1} parent=0 // pred_check
    _
  $region11: #{basic_block_forward.1} parent=0 // pred_check_branch
    %17 = sbr.rel (0) target = $region13
  $region12: #{basic_block_forward.1} parent=0 // pred_region
    _
  $region13: #{basic_block_forward.1} parent=0 // pred_fallthru
    _
  // Predicated region
  $region14: #{basic_block_forward.1} parent=0 // pred_check
    _
  $region15: #{basic_block_forward.1} parent=0 // pred_check_branch
    %19 = sbr.rel (0) target = $region17
  $region16: #{basic_block_forward.1} parent=0 // pred_region
    _
  $region17: #{basic_block_forward.1} parent=0 // pred_fallthru
    _
  // Predicated region
  $region18: #{basic_block_forward.1} parent=0 // pred_check
    _
  $region19: #{basic_block_forward.1} parent=0 // pred_check_branch
    %21 = sbr.rel (0) target = $region21
  $region20: #{basic_block_forward.1} parent=0 // pred_region
    _
  $region21: #{basic_block_forward.1} parent=0 // pred_fallthru
    _
  // Predicated region
  $region22: #{basic_block_forward.1} parent=0 // pred_check
    _
  $region23: #{basic_block_forward.1} parent=0 // pred_check_branch
    %23 = sbr.rel (0) target = $region25
  $region24: #{basic_block_forward.1} parent=0 // pred_region
    _
  $region25: #{basic_block_forward.1} parent=0 // pred_fallthru
    _
  // Predicated region
  $region26: #{basic_block_forward.1} parent=0 // pred_check
    _
  $region27: #{basic_block_forward.1} parent=0 // pred_check_branch
    %25 = sbr.rel (0) target = $region29
  $region28: #{basic_block_forward.1} parent=0 // pred_region
    _
  $region29: #{basic_block_forward.1} parent=0 // pred_fallthru
    _
  %v27 = vld [vmem:[%s0] sm:$0xff]
  %v28 = vld [vmem:[%s0 + $0x8] sm:$0xff]
  %v29 = vld [vmem:[%s0 + $0x18] sm:$0xff]
  %v30 = vld [vmem:[%s0 + $0x20] sm:$0xff]
  %v31 = vld [vmem:[%s0 + $0x30] sm:$0xff]
  %v32 = vld [vmem:[%s0 + $0x38] sm:$0xff]
  %v33 = vld [vmem:[%s0 + $0x48] sm:$0xff]
  %v34 = vld [vmem:[%s0 + $0x50] sm:$0xff]
  %v35 = vld [vmem:[%s0 + $0x60] sm:$0xff]
  %v36 = vld [vmem:[%s0 + $0x68] sm:$0xff]
  %v37 = vld [vmem:[%s0 + $0x78] sm:$0xff]
  %v38 = vld [vmem:[%s0 + $0x80] sm:$0xff]
  %v39 = vld [vmem:[%s0 + $0x90] sm:$0xff]
  %v40 = vld [vmem:[%s0 + $0x98] sm:$0xff]
  %v41 = vld [vmem:[%s0 + $0xa8] sm:$0xff]
  %v42 = vld [vmem:[%s0 + $0xb0] sm:$0xff]
  %v43 = vld [vmem:[%s0 + $0xc0] sm:$0xff]
  %v44 = vld [vmem:[%s0 + $0xc8] sm:$0xff]
  %v45 = vld [vmem:[%s0 + $0xd8] sm:$0xff]
  %v46 = vld [vmem:[%s0 + $0xe0] sm:$0xff]
  %v47 = vld [vmem:[%s0 + $0xf0] sm:$0xff]
  %v48 = vld [vmem:[%s0 + $0xf8] sm:$0xff]
  %v49 = vld [vmem:[%s0 + $0x108] sm:$0xff]
  %v50 = vld [vmem:[%s0 + $0x110] sm:$0xff]
  %v51 = vld [vmem:[%s0 + $0x120] sm:$0xff]
  %v52 = vld [vmem:[%s0 + $0x128] sm:$0xff]
  %v53 = vld [vmem:[%s0 + $0x138] sm:$0xff]
  %v54 = vld [vmem:[%s0 + $0x140] sm:$0xff]
  %v55 = vld [vmem:[%s0 + $0x150] sm:$0xff]
  %v56 = vld [vmem:[%s0 + $0x158] sm:$0xff]
  %v57 = vld [vmem:[%s0 + $0x168] sm:$0xff]
  %v58 = vld [vmem:[%s0 + $0x170] sm:$0xff]
  %v59 = vld [vmem:[%s0 + $0x1b0] sm:$0xff]
  %v60 = vld [vmem:[%s0 + $0x1b8] sm:$0xff]
  %v61 = vld [vmem:[%s0 + $0x1c8] sm:$0xff]
  %v62 = vld [vmem:[%s0 + $0x1d0] sm:$0xff]
  %v63 = vld [vmem:[%s0 + $0x1e0] sm:$0xff]
  %v64 = vld [vmem:[%s0 + $0x1e8] sm:$0xff]
  %v65 = vld [vmem:[%s0 + $0x1f8] sm:$0xff]
  %v66 = vld [vmem:[%s0 + $0x200] sm:$0xff]
  %v67 = vld [vmem:[%s0 + $0x210] sm:$0xff]
  %v68 = vld [vmem:[%s0 + $0x218] sm:$0xff]
  %v69 = vld [vmem:[%s0 + $0x228] sm:$0xff]
  %v70 = vld [vmem:[%s0 + $0x230] sm:$0xff]
  %v71 = vld [vmem:[%s0 + $0x240] sm:$0xff]
  %v72 = vld [vmem:[%s0 + $0x248] sm:$0xff]
  %v73 = vld [vmem:[%s0 + $0x258] sm:$0xff]
  %v74 = vld [vmem:[%s0 + $0x260] sm:$0xff]
  %v75 = vld [vmem:[%s0 + $0x270] sm:$0xff]
  %v76 = vld [vmem:[%s0 + $0x278] sm:$0xff]
  %v77 = vld [vmem:[%s0 + $0x288] sm:$0xff]
  %v78 = vld [vmem:[%s0 + $0x290] sm:$0xff]
  %v79 = vld [vmem:[%s0 + $0x2a0] sm:$0xff]
  %v80 = vld [vmem:[%s0 + $0x2a8] sm:$0xff]
  %v81 = vld [vmem:[%s0 + $0x2b8] sm:$0xff]
  %v82 = vld [vmem:[%s0 + $0x2c0] sm:$0xff]
  %v83 = vld [vmem:[%s0 + $0x2d0] sm:$0xff]
  %v84 = vld [vmem:[%s0 + $0x2d8] sm:$0xff]
  %v85 = vld [vmem:[%s0 + $0x2e8] sm:$0xff]
  %v86 = vld [vmem:[%s0 + $0x2f0] sm:$0xff]
  %v87 = vld [vmem:[%s0 + $0x300] sm:$0xff]
  %v88 = vld [vmem:[%s0 + $0x308] sm:$0xff]
  %v89 = vld [vmem:[%s0 + $0x318] sm:$0xff]
  %v90 = vld [vmem:[%s0 + $0x320] sm:$0xff]
  %v91 = vpack.c.bf16 %v28, %v27
  %v92 = vpack.c.bf16 %v30, %v29
  %v93 = vpack.c.bf16 %v32, %v31
  %v94 = vpack.c.bf16 %v34, %v33
  %v95 = vpack.c.bf16 %v36, %v35
  %v96 = vpack.c.bf16 %v38, %v37
  %v97 = vpack.c.bf16 %v40, %v39
  %v98 = vpack.c.bf16 %v42, %v41
  %v99 = vpack.c.bf16 %v44, %v43
  %v100 = vpack.c.bf16 %v46, %v45
  %v101 = vpack.c.bf16 %v48, %v47
  %v102 = vpack.c.bf16 %v50, %v49
  %v103 = vpack.c.bf16 %v52, %v51
  %v104 = vpack.c.bf16 %v54, %v53
  %v105 = vpack.c.bf16 %v56, %v55
  %v106 = vpack.c.bf16 %v58, %v57
  %v107 = vpack.c.bf16 %v60, %v59
  %v108 = vpack.c.bf16 %v62, %v61
  %v109 = vpack.c.bf16 %v64, %v63
  %v110 = vpack.c.bf16 %v66, %v65
  %v111 = vpack.c.bf16 %v68, %v67
  %v112 = vpack.c.bf16 %v70, %v69
  %v113 = vpack.c.bf16 %v72, %v71
  %v114 = vpack.c.bf16 %v74, %v73
  %v115 = vpack.c.bf16 %v76, %v75
  %v116 = vpack.c.bf16 %v78, %v77
  %v117 = vpack.c.bf16 %v80, %v79
  %v118 = vpack.c.bf16 %v82, %v81
  %v119 = vpack.c.bf16 %v84, %v83
  %v120 = vpack.c.bf16 %v86, %v85
  %v121 = vpack.c.bf16 %v88, %v87
  %v122 = vpack.c.bf16 %v90, %v89
  %v123 = vld [vmem:[%s1] sm:$0xf]
  %v124 = vld [vmem:[%s1 + $0x4] sm:$0xf]
  %v125 = vld [vmem:[%s1 + $0x8] sm:$0xf]
  %v126 = vld [vmem:[%s1 + $0xc] sm:$0xf]
  %v127 = vld [vmem:[%s1 + $0x10] sm:$0xf]
  %v128 = vld [vmem:[%s1 + $0x14] sm:$0xf]
  %v129 = vld [vmem:[%s1 + $0x18] sm:$0xf]
  %v130 = vld [vmem:[%s1 + $0x1c] sm:$0xf]
  %v131 = vld [vmem:[%s1 + $0x20] sm:$0xf]
  %v132 = vld [vmem:[%s1 + $0x24] sm:$0xf]
  %v133 = vld [vmem:[%s1 + $0x28] sm:$0xf]
  %v134 = vld [vmem:[%s1 + $0x2c] sm:$0xf]
  %v135 = vld [vmem:[%s1 + $0x30] sm:$0xf]
  %v136 = vld [vmem:[%s1 + $0x34] sm:$0xf]
  %v137 = vld [vmem:[%s1 + $0x38] sm:$0xf]
  %v138 = vld [vmem:[%s1 + $0x3c] sm:$0xf]
  %v139 = vld [vmem:[%s0 + $0x1] sm:$0xff]
  %v140 = vld [vmem:[%s0 + $0x9] sm:$0xff]
  %v141 = vld [vmem:[%s0 + $0x19] sm:$0xff]
  %v142 = vld [vmem:[%s0 + $0x21] sm:$0xff]
  %v143 = vld [vmem:[%s0 + $0x31] sm:$0xff]
  %v144 = vld [vmem:[%s0 + $0x39] sm:$0xff]
  %v145 = vld [vmem:[%s0 + $0x49] sm:$0xff]
  %v146 = vld [vmem:[%s0 + $0x51] sm:$0xff]
  %v147 = vld [vmem:[%s0 + $0x61] sm:$0xff]
  %v148 = vld [vmem:[%s0 + $0x69] sm:$0xff]
  %v149 = vld [vmem:[%s0 + $0x79] sm:$0xff]
  %v150 = vld [vmem:[%s0 + $0x81] sm:$0xff]
  %v151 = vld [vmem:[%s0 + $0x91] sm:$0xff]
  %v152 = vld [vmem:[%s0 + $0x99] sm:$0xff]
  %v153 = vld [vmem:[%s0 + $0xa9] sm:$0xff]
  %v154 = vld [vmem:[%s0 + $0xb1] sm:$0xff]
  %v155 = vld [vmem:[%s0 + $0xc1] sm:$0xff]
  %v156 = vld [vmem:[%s0 + $0xc9] sm:$0xff]
  %v157 = vld [vmem:[%s0 + $0xd9] sm:$0xff]
  %v158 = vld [vmem:[%s0 + $0xe1] sm:$0xff]
  %v159 = vld [vmem:[%s0 + $0xf1] sm:$0xff]
  %v160 = vld [vmem:[%s0 + $0xf9] sm:$0xff]
  %v161 = vld [vmem:[%s0 + $0x109] sm:$0xff]
  %v162 = vld [vmem:[%s0 + $0x111] sm:$0xff]
  %v163 = vld [vmem:[%s0 + $0x121] sm:$0xff]
  %v164 = vld [vmem:[%s0 + $0x129] sm:$0xff]
  %v165 = vld [vmem:[%s0 + $0x139] sm:$0xff]
  %v166 = vld [vmem:[%s0 + $0x141] sm:$0xff]
  %v167 = vld [vmem:[%s0 + $0x151] sm:$0xff]
  %v168 = vld [vmem:[%s0 + $0x159] sm:$0xff]
  %v169 = vld [vmem:[%s0 + $0x169] sm:$0xff]
  %v170 = vld [vmem:[%s0 + $0x171] sm:$0xff]
  %v171 = vld [vmem:[%s0 + $0x1b1] sm:$0xff]
  %v172 = vld [vmem:[%s0 + $0x1b9] sm:$0xff]
  %v173 = vld [vmem:[%s0 + $0x1c9] sm:$0xff]
  %v174 = vld [vmem:[%s0 + $0x1d1] sm:$0xff]
  %v175 = vld [vmem:[%s0 + $0x1e1] sm:$0xff]
  %v176 = vld [vmem:[%s0 + $0x1e9] sm:$0xff]
  %v177 = vld [vmem:[%s0 + $0x1f9] sm:$0xff]
  %v178 = vld [vmem:[%s0 + $0x201] sm:$0xff]
  %v179 = vld [vmem:[%s0 + $0x211] sm:$0xff]
  %v180 = vld [vmem:[%s0 + $0x219] sm:$0xff]
  %v181 = vld [vmem:[%s0 + $0x229] sm:$0xff]
  %v182 = vld [vmem:[%s0 + $0x231] sm:$0xff]
  %v183 = vld [vmem:[%s0 + $0x241] sm:$0xff]
  %v184 = vld [vmem:[%s0 + $0x249] sm:$0xff]
  %v185 = vld [vmem:[%s0 + $0x259] sm:$0xff]
  %v186 = vld [vmem:[%s0 + $0x261] sm:$0xff]
  %v187 = vld [vmem:[%s0 + $0x271] sm:$0xff]
  %v188 = vld [vmem:[%s0 + $0x279] sm:$0xff]
  %v189 = vld [vmem:[%s0 + $0x289] sm:$0xff]
  %v190 = vld [vmem:[%s0 + $0x291] sm:$0xff]
  %v191 = vld [vmem:[%s0 + $0x2a1] sm:$0xff]
  %v192 = vld [vmem:[%s0 + $0x2a9] sm:$0xff]
  %v193 = vld [vmem:[%s0 + $0x2b9] sm:$0xff]
  %v194 = vld [vmem:[%s0 + $0x2c1] sm:$0xff]
  %v195 = vld [vmem:[%s0 + $0x2d1] sm:$0xff]
  %v196 = vld [vmem:[%s0 + $0x2d9] sm:$0xff]
  %v197 = vld [vmem:[%s0 + $0x2e9] sm:$0xff]
  %v198 = vld [vmem:[%s0 + $0x2f1] sm:$0xff]
  %v199 = vld [vmem:[%s0 + $0x301] sm:$0xff]
  %v200 = vld [vmem:[%s0 + $0x309] sm:$0xff]
  %v201 = vld [vmem:[%s0 + $0x319] sm:$0xff]
  %v202 = vld [vmem:[%s0 + $0x321] sm:$0xff]
  %v203 = vpack.c.bf16 %v140, %v139
  %v204 = vpack.c.bf16 %v142, %v141
  %v205 = vpack.c.bf16 %v144, %v143
  %v206 = vpack.c.bf16 %v146, %v145
  %v207 = vpack.c.bf16 %v148, %v147
  %v208 = vpack.c.bf16 %v150, %v149
  %v209 = vpack.c.bf16 %v152, %v151
  %v210 = vpack.c.bf16 %v154, %v153
  %v211 = vpack.c.bf16 %v156, %v155
  %v212 = vpack.c.bf16 %v158, %v157
  %v213 = vpack.c.bf16 %v160, %v159
  %v214 = vpack.c.bf16 %v162, %v161
  %v215 = vpack.c.bf16 %v164, %v163
  %v216 = vpack.c.bf16 %v166, %v165
  %v217 = vpack.c.bf16 %v168, %v167
  %v218 = vpack.c.bf16 %v170, %v169
  %v219 = vpack.c.bf16 %v172, %v171
  %v220 = vpack.c.bf16 %v174, %v173
  %v221 = vpack.c.bf16 %v176, %v175
  %v222 = vpack.c.bf16 %v178, %v177
  %v223 = vpack.c.bf16 %v180, %v179
  %v224 = vpack.c.bf16 %v182, %v181
  %v225 = vpack.c.bf16 %v184, %v183
  %v226 = vpack.c.bf16 %v186, %v185
  %v227 = vpack.c.bf16 %v188, %v187
  %v228 = vpack.c.bf16 %v190, %v189
  %v229 = vpack.c.bf16 %v192, %v191
  %v230 = vpack.c.bf16 %v194, %v193
  %v231 = vpack.c.bf16 %v196, %v195
  %v232 = vpack.c.bf16 %v198, %v197
  %v233 = vpack.c.bf16 %v200, %v199
  %v234 = vpack.c.bf16 %v202, %v201
  %s235 = scalar_lea.vmem %s1, 64
  %v236 = vld [vmem:[%s235] sm:$0xf]
  %v237 = vld [vmem:[%s235 + $0x4] sm:$0xf]
  %v238 = vld [vmem:[%s235 + $0x8] sm:$0xf]
  %v239 = vld [vmem:[%s235 + $0xc] sm:$0xf]
  %v240 = vld [vmem:[%s235 + $0x10] sm:$0xf]
  %v241 = vld [vmem:[%s235 + $0x14] sm:$0xf]
  %v242 = vld [vmem:[%s235 + $0x18] sm:$0xf]
  %v243 = vld [vmem:[%s235 + $0x1c] sm:$0xf]
  %v244 = vld [vmem:[%s235 + $0x20] sm:$0xf]
  %v245 = vld [vmem:[%s235 + $0x24] sm:$0xf]
  %v246 = vld [vmem:[%s235 + $0x28] sm:$0xf]
  %v247 = vld [vmem:[%s235 + $0x2c] sm:$0xf]
  %v248 = vld [vmem:[%s235 + $0x30] sm:$0xf]
  %v249 = vld [vmem:[%s235 + $0x34] sm:$0xf]
  %v250 = vld [vmem:[%s235 + $0x38] sm:$0xf]
  %v251 = vld [vmem:[%s235 + $0x3c] sm:$0xf]
  %v268 = vunpack.c.l.b16 %v236
  %v269 = vunpack.c.l.b16 %v237
  %v270 = vunpack.c.l.b16 %v238
  %v271 = vunpack.c.l.b16 %v239
  %v272 = vunpack.c.l.b16 %v240
  %v273 = vunpack.c.l.b16 %v241
  %v274 = vunpack.c.l.b16 %v242
  %v275 = vunpack.c.l.b16 %v243
  %v276 = vunpack.c.l.b16 %v244
  %v277 = vunpack.c.l.b16 %v245
  %v278 = vunpack.c.l.b16 %v246
  %v279 = vunpack.c.l.b16 %v247
  %v280 = vunpack.c.l.b16 %v248
  %v281 = vunpack.c.l.b16 %v249
  %v282 = vunpack.c.l.b16 %v250
  %v283 = vunpack.c.l.b16 %v251
  %v284 = vpack.c.b16 %v269, %v268
  %v285 = vpack.c.b16 %v271, %v270
  %v286 = vpack.c.b16 %v273, %v272
  %v287 = vpack.c.b16 %v275, %v274
  %v288 = vpack.c.b16 %v277, %v276
  %v289 = vpack.c.b16 %v279, %v278
  %v290 = vpack.c.b16 %v281, %v280
  %v291 = vpack.c.b16 %v283, %v282
  %300 = vmatprep.subr.bf16.mxu0 0
  %301 = vmatpush1.bf16.msra.mxu0 %v284
  %302 = vmatprep.subr.bf16.mxu0 0
  %303 = vmatpush1.bf16.msra.mxu0 %v285
  %304 = vmatprep.subr.bf16.mxu0 0
  %305 = vmatpush1.bf16.msra.mxu0 %v286
  %306 = vmatprep.subr.bf16.mxu0 0
  %307 = vmatpush1.bf16.msra.mxu0 %v287
  %308 = vmatprep.subr.bf16.mxu0 0
  %309 = vmatpush1.bf16.msra.mxu0 %v288
  %310 = vmatprep.subr.bf16.mxu0 0
  %311 = vmatpush1.bf16.msra.mxu0 %v289
  %312 = vmatprep.subr.bf16.mxu0 0
  %313 = vmatpush1.bf16.msra.mxu0 %v290
  %314 = vmatprep.subr.bf16.mxu0 0
  %315 = vmatpush1.bf16.msra.mxu0 %v291
  %316 = vmatprep.subr.bf16.mxu0 0
  %317 = vmatpush1.bf16.msra.mxu0 0
  %318 = vmatprep.subr.bf16.mxu0 0
  %319 = vmatpush1.bf16.msra.mxu0 0
  %320 = vmatprep.subr.bf16.mxu0 0
  %321 = vmatpush1.bf16.msra.mxu0 0
  %322 = vmatprep.subr.bf16.mxu0 0
  %323 = vmatpush1.bf16.msra.mxu0 0
  %324 = vmatprep.subr.bf16.mxu0 0
  %325 = vmatpush1.bf16.msra.mxu0 0
  %326 = vmatprep.subr.bf16.mxu0 0
  %327 = vmatpush1.bf16.msra.mxu0 0
  %328 = vmatprep.subr.bf16.mxu0 0
  %329 = vmatpush1.bf16.msra.mxu0 0
  %330 = vmatprep.subr.bf16.mxu0 0
  %331 = vmatpush1.bf16.msra.mxu0 0
  %332 = vmatprep.mubr.bf16.mxu0 0
  %333 = vmatmul.mubr.bf16.gmra.mrb[0].mxu0 %v203
  %v334 = vpop.f32.mrb[0].mxu0
  %v335 = vadd.f32 0.0, %v334
  %v336 = vpop.f32.mrb[0].mxu0
  %v337 = vpop.f32.mrb[0].mxu0
  %v338 = vadd.f32 0.0, %v337
  %v339 = vpop.f32.mrb[0].mxu0
  %340 = vmatprep.mubr.bf16.mxu0 0
  %341 = vmatmul.mubr.bf16.gmra.mrb[0].mxu0 %v204
  %v342 = vpop.f32.mrb[0].mxu0
  %v343 = vadd.f32 0.0, %v342
  %v344 = vpop.f32.mrb[0].mxu0
  %v345 = vpop.f32.mrb[0].mxu0
  %v346 = vadd.f32 0.0, %v345
  %v347 = vpop.f32.mrb[0].mxu0
  %348 = vmatprep.mubr.bf16.mxu0 0
  %349 = vmatmul.mubr.bf16.gmra.mrb[0].mxu0 %v205
  %v350 = vpop.f32.mrb[0].mxu0
  %v351 = vadd.f32 0.0, %v350
  %v352 = vpop.f32.mrb[0].mxu0
  %v353 = vpop.f32.mrb[0].mxu0
  %v354 = vadd.f32 0.0, %v353
  %v355 = vpop.f32.mrb[0].mxu0
  %356 = vmatprep.mubr.bf16.mxu0 0
  %357 = vmatmul.mubr.bf16.gmra.mrb[0].mxu0 %v206
  %v358 = vpop.f32.mrb[0].mxu0
  %v359 = vadd.f32 0.0, %v358
  %v360 = vpop.f32.mrb[0].mxu0
  %v361 = vpop.f32.mrb[0].mxu0
  %v362 = vadd.f32 0.0, %v361
  %v363 = vpop.f32.mrb[0].mxu0
  %364 = vmatprep.mubr.bf16.mxu0 0
  %365 = vmatmul.mubr.bf16.gmra.mrb[0].mxu0 %v207
  %v366 = vpop.f32.mrb[0].mxu0
  %v367 = vadd.f32 0.0, %v366
  %v368 = vpop.f32.mrb[0].mxu0
  %v369 = vpop.f32.mrb[0].mxu0
  %v370 = vadd.f32 0.0, %v369
  %v371 = vpop.f32.mrb[0].mxu0
  %372 = vmatprep.mubr.bf16.mxu0 0
  %373 = vmatmul.mubr.bf16.gmra.mrb[0].mxu0 %v208
  %v374 = vpop.f32.mrb[0].mxu0
  %v375 = vadd.f32 0.0, %v374
  %v376 = vpop.f32.mrb[0].mxu0
  %v377 = vpop.f32.mrb[0].mxu0
  %v378 = vadd.f32 0.0, %v377
  %v379 = vpop.f32.mrb[0].mxu0
  %380 = vmatprep.mubr.bf16.mxu0 0
  %381 = vmatmul.mubr.bf16.gmra.mrb[0].mxu0 %v209
  %v382 = vpop.f32.mrb[0].mxu0
  %v383 = vadd.f32 0.0, %v382
  %v384 = vpop.f32.mrb[0].mxu0
  %v385 = vpop.f32.mrb[0].mxu0
  %v386 = vadd.f32 0.0, %v385
  %v387 = vpop.f32.mrb[0].mxu0
  %388 = vmatprep.mubr.bf16.mxu0 0
  %389 = vmatmul.mubr.bf16.gmra.mrb[0].mxu0 %v210
  %v390 = vpop.f32.mrb[0].mxu0
  %v391 = vadd.f32 0.0, %v390
  %v392 = vpop.f32.mrb[0].mxu0
  %v393 = vpop.f32.mrb[0].mxu0
  %v394 = vadd.f32 0.0, %v393
  %v395 = vpop.f32.mrb[0].mxu0
  %396 = vmatprep.mubr.bf16.mxu0 0
  %397 = vmatmul.mubr.bf16.gmra.mrb[0].mxu0 %v211
  %v398 = vpop.f32.mrb[0].mxu0
  %v399 = vadd.f32 0.0, %v398
  %v400 = vpop.f32.mrb[0].mxu0
  %v401 = vpop.f32.mrb[0].mxu0
  %v402 = vadd.f32 0.0, %v401
  %v403 = vpop.f32.mrb[0].mxu0
  %404 = vmatprep.mubr.bf16.mxu0 0
  %405 = vmatmul.mubr.bf16.gmra.mrb[0].mxu0 %v212
  %v406 = vpop.f32.mrb[0].mxu0
  %v407 = vadd.f32 0.0, %v406
  %v408 = vpop.f32.mrb[0].mxu0
  %v409 = vpop.f32.mrb[0].mxu0
  %v410 = vadd.f32 0.0, %v409
  %v411 = vpop.f32.mrb[0].mxu0
  %412 = vmatprep.mubr.bf16.mxu0 0
  %413 = vmatmul.mubr.bf16.gmra.mrb[0].mxu0 %v213
  %v414 = vpop.f32.mrb[0].mxu0
  %v415 = vadd.f32 0.0, %v414
  %v416 = vpop.f32.mrb[0].mxu0
  %v417 = vpop.f32.mrb[0].mxu0
  %v418 = vadd.f32 0.0, %v417
  %v419 = vpop.f32.mrb[0].mxu0
  %420 = vmatprep.mubr.bf16.mxu0 0
  %421 = vmatmul.mubr.bf16.gmra.mrb[0].mxu0 %v214
  %v422 = vpop.f32.mrb[0].mxu0
  %v423 = vadd.f32 0.0, %v422
  %v424 = vpop.f32.mrb[0].mxu0
  %v425 = vpop.f32.mrb[0].mxu0
  %v426 = vadd.f32 0.0, %v425
  %v427 = vpop.f32.mrb[0].mxu0
  %428 = vmatprep.mubr.bf16.mxu0 0
  %429 = vmatmul.mubr.bf16.gmra.mrb[0].mxu0 %v215
  %v430 = vpop.f32.mrb[0].mxu0
  %v431 = vadd.f32 0.0, %v430
  %v432 = vpop.f32.mrb[0].mxu0
  %v433 = vpop.f32.mrb[0].mxu0
  %v434 = vadd.f32 0.0, %v433
  %v435 = vpop.f32.mrb[0].mxu0
  %436 = vmatprep.mubr.bf16.mxu0 0
  %437 = vmatmul.mubr.bf16.gmra.mrb[0].mxu0 %v216
  %v438 = vpop.f32.mrb[0].mxu0
  %v439 = vadd.f32 0.0, %v438
  %v440 = vpop.f32.mrb[0].mxu0
  %v441 = vpop.f32.mrb[0].mxu0
  %v442 = vadd.f32 0.0, %v441
  %v443 = vpop.f32.mrb[0].mxu0
  %444 = vmatprep.mubr.bf16.mxu0 0
  %445 = vmatmul.mubr.bf16.gmra.mrb[0].mxu0 %v217
  %v446 = vpop.f32.mrb[0].mxu0
  %v447 = vadd.f32 0.0, %v446
  %v448 = vpop.f32.mrb[0].mxu0
  %v449 = vpop.f32.mrb[0].mxu0
  %v450 = vadd.f32 0.0, %v449
  %v451 = vpop.f32.mrb[0].mxu0
  %452 = vmatprep.mubr.bf16.mxu0 0
  %453 = vmatmul.mubr.bf16.gmra.mrb[0].mxu0 %v218
  %v454 = vpop.f32.mrb[0].mxu0
  %v455 = vadd.f32 0.0, %v454
  %v456 = vpop.f32.mrb[0].mxu0
  %v457 = vpop.f32.mrb[0].mxu0
  %v458 = vadd.f32 0.0, %v457
  %v459 = vpop.f32.mrb[0].mxu0
  %460 = vmatprep.mubr.bf16.mxu0 0
  %461 = vmatmul.mubr.bf16.gmra.mrb[0].mxu0 %v219
  %v462 = vpop.f32.mrb[0].mxu0
  %v463 = vadd.f32 0.0, %v462
  %v464 = vpop.f32.mrb[0].mxu0
  %v465 = vpop.f32.mrb[0].mxu0
  %v466 = vadd.f32 0.0, %v465
  %v467 = vpop.f32.mrb[0].mxu0
  %468 = vmatprep.mubr.bf16.mxu0 0
  %469 = vmatmul.mubr.bf16.gmra.mrb[0].mxu0 %v220
  %v470 = vpop.f32.mrb[0].mxu0
  %v471 = vadd.f32 0.0, %v470
  %v472 = vpop.f32.mrb[0].mxu0
  %v473 = vpop.f32.mrb[0].mxu0
  %v474 = vadd.f32 0.0, %v473
  %v475 = vpop.f32.mrb[0].mxu0
  %476 = vmatprep.mubr.bf16.mxu0 0
  %477 = vmatmul.mubr.bf16.gmra.mrb[0].mxu0 %v221
  %v478 = vpop.f32.mrb[0].mxu0
  %v479 = vadd.f32 0.0, %v478
  %v480 = vpop.f32.mrb[0].mxu0
  %v481 = vpop.f32.mrb[0].mxu0
  %v482 = vadd.f32 0.0, %v481
  %v483 = vpop.f32.mrb[0].mxu0
  %484 = vmatprep.mubr.bf16.mxu0 0
  %485 = vmatmul.mubr.bf16.gmra.mrb[0].mxu0 %v222
  %v486 = vpop.f32.mrb[0].mxu0
  %v487 = vadd.f32 0.0, %v486
  %v488 = vpop.f32.mrb[0].mxu0
  %v489 = vpop.f32.mrb[0].mxu0
  %v490 = vadd.f32 0.0, %v489
  %v491 = vpop.f32.mrb[0].mxu0
  %492 = vmatprep.mubr.bf16.mxu0 0
  %493 = vmatmul.mubr.bf16.gmra.mrb[0].mxu0 %v223
  %v494 = vpop.f32.mrb[0].mxu0
  %v495 = vadd.f32 0.0, %v494
  %v496 = vpop.f32.mrb[0].mxu0
  %v497 = vpop.f32.mrb[0].mxu0
  %v498 = vadd.f32 0.0, %v497
  %v499 = vpop.f32.mrb[0].mxu0
  %500 = vmatprep.mubr.bf16.mxu0 0
  %501 = vmatmul.mubr.bf16.gmra.mrb[0].mxu0 %v224
  %v502 = vpop.f32.mrb[0].mxu0
  %v503 = vadd.f32 0.0, %v502
  %v504 = vpop.f32.mrb[0].mxu0
  %v505 = vpop.f32.mrb[0].mxu0
  %v506 = vadd.f32 0.0, %v505
  %v507 = vpop.f32.mrb[0].mxu0
  %508 = vmatprep.mubr.bf16.mxu0 0
  %509 = vmatmul.mubr.bf16.gmra.mrb[0].mxu0 %v225
  %v510 = vpop.f32.mrb[0].mxu0
  %v511 = vadd.f32 0.0, %v510
  %v512 = vpop.f32.mrb[0].mxu0
  %v513 = vpop.f32.mrb[0].mxu0
  %v514 = vadd.f32 0.0, %v513
  %v515 = vpop.f32.mrb[0].mxu0
  %516 = vmatprep.mubr.bf16.mxu0 0
  %517 = vmatmul.mubr.bf16.gmra.mrb[0].mxu0 %v226
  %v518 = vpop.f32.mrb[0].mxu0
  %v519 = vadd.f32 0.0, %v518
  %v520 = vpop.f32.mrb[0].mxu0
  %v521 = vpop.f32.mrb[0].mxu0
  %v522 = vadd.f32 0.0, %v521
  %v523 = vpop.f32.mrb[0].mxu0
  %524 = vmatprep.mubr.bf16.mxu0 0
  %525 = vmatmul.mubr.bf16.gmra.mrb[0].mxu0 %v227
  %v526 = vpop.f32.mrb[0].mxu0
  %v527 = vadd.f32 0.0, %v526
  %v528 = vpop.f32.mrb[0].mxu0
  %v529 = vpop.f32.mrb[0].mxu0
  %v530 = vadd.f32 0.0, %v529
  %v531 = vpop.f32.mrb[0].mxu0
  %532 = vmatprep.mubr.bf16.mxu0 0
  %533 = vmatmul.mubr.bf16.gmra.mrb[0].mxu0 %v228
  %v534 = vpop.f32.mrb[0].mxu0
  %v535 = vadd.f32 0.0, %v534
  %v536 = vpop.f32.mrb[0].mxu0
  %v537 = vpop.f32.mrb[0].mxu0
  %v538 = vadd.f32 0.0, %v537
  %v539 = vpop.f32.mrb[0].mxu0
  %540 = vmatprep.mubr.bf16.mxu0 0
  %541 = vmatmul.mubr.bf16.gmra.mrb[0].mxu0 %v229
  %v542 = vpop.f32.mrb[0].mxu0
  %v543 = vadd.f32 0.0, %v542
  %v544 = vpop.f32.mrb[0].mxu0
  %v545 = vpop.f32.mrb[0].mxu0
  %v546 = vadd.f32 0.0, %v545
  %v547 = vpop.f32.mrb[0].mxu0
  %548 = vmatprep.mubr.bf16.mxu0 0
  %549 = vmatmul.mubr.bf16.gmra.mrb[0].mxu0 %v230
  %v550 = vpop.f32.mrb[0].mxu0
  %v551 = vadd.f32 0.0, %v550
  %v552 = vpop.f32.mrb[0].mxu0
  %v553 = vpop.f32.mrb[0].mxu0
  %v554 = vadd.f32 0.0, %v553
  %v555 = vpop.f32.mrb[0].mxu0
  %556 = vmatprep.mubr.bf16.mxu0 0
  %557 = vmatmul.mubr.bf16.gmra.mrb[0].mxu0 %v231
  %v558 = vpop.f32.mrb[0].mxu0
  %v559 = vadd.f32 0.0, %v558
  %v560 = vpop.f32.mrb[0].mxu0
  %v561 = vpop.f32.mrb[0].mxu0
  %v562 = vadd.f32 0.0, %v561
  %v563 = vpop.f32.mrb[0].mxu0
  %564 = vmatprep.mubr.bf16.mxu0 0
  %565 = vmatmul.mubr.bf16.gmra.mrb[0].mxu0 %v232
  %v566 = vpop.f32.mrb[0].mxu0
  %v567 = vadd.f32 0.0, %v566
  %v568 = vpop.f32.mrb[0].mxu0
  %v569 = vpop.f32.mrb[0].mxu0
  %v570 = vadd.f32 0.0, %v569
  %v571 = vpop.f32.mrb[0].mxu0
  %572 = vmatprep.mubr.bf16.mxu0 0
  %573 = vmatmul.mubr.bf16.gmra.mrb[0].mxu0 %v233
  %v574 = vpop.f32.mrb[0].mxu0
  %v575 = vadd.f32 0.0, %v574
  %v576 = vpop.f32.mrb[0].mxu0
  %v577 = vpop.f32.mrb[0].mxu0
  %v578 = vadd.f32 0.0, %v577
  %v579 = vpop.f32.mrb[0].mxu0
  %580 = vmatprep.mubr.bf16.mxu0 0
  %581 = vmatmul.mubr.bf16.gmra.mrb[0].mxu0 %v234
  %v582 = vpop.f32.mrb[0].mxu0
  %v583 = vadd.f32 0.0, %v582
  %v584 = vpop.f32.mrb[0].mxu0
  %v585 = vpop.f32.mrb[0].mxu0
  %v586 = vadd.f32 0.0, %v585
  %v587 = vpop.f32.mrb[0].mxu0
  %588 = vdwg.mxu0
  %v605 = vunpack.c.l.b16 %v123
  %v606 = vunpack.c.l.b16 %v124
  %v607 = vunpack.c.l.b16 %v125
  %v608 = vunpack.c.l.b16 %v126
  %v609 = vunpack.c.l.b16 %v127
  %v610 = vunpack.c.l.b16 %v128
  %v611 = vunpack.c.l.b16 %v129
  %v612 = vunpack.c.l.b16 %v130
  %v613 = vunpack.c.l.b16 %v131
  %v614 = vunpack.c.l.b16 %v132
  %v615 = vunpack.c.l.b16 %v133
  %v616 = vunpack.c.l.b16 %v134
  %v617 = vunpack.c.l.b16 %v135
  %v618 = vunpack.c.l.b16 %v136
  %v619 = vunpack.c.l.b16 %v137
  %v620 = vunpack.c.l.b16 %v138
  %v621 = vpack.c.b16 %v606, %v605
  %v622 = vpack.c.b16 %v608, %v607
  %v623 = vpack.c.b16 %v610, %v609
  %v624 = vpack.c.b16 %v612, %v611
  %v625 = vpack.c.b16 %v614, %v613
  %v626 = vpack.c.b16 %v616, %v615
  %v627 = vpack.c.b16 %v618, %v617
  %v628 = vpack.c.b16 %v620, %v619
  %637 = vmatprep.subr.bf16.mxu0 0
  %638 = vmatpush1.bf16.msra.mxu0 %v621
  %639 = vmatprep.subr.bf16.mxu0 0
  %640 = vmatpush1.bf16.msra.mxu0 %v622
  %641 = vmatprep.subr.bf16.mxu0 0
  %642 = vmatpush1.bf16.msra.mxu0 %v623
  %643 = vmatprep.subr.bf16.mxu0 0
  %644 = vmatpush1.bf16.msra.mxu0 %v624
  %645 = vmatprep.subr.bf16.mxu0 0
  %646 = vmatpush1.bf16.msra.mxu0 %v625
  %647 = vmatprep.subr.bf16.mxu0 0
  %648 = vmatpush1.bf16.msra.mxu0 %v626
  %649 = vmatprep.subr.bf16.mxu0 0
  %650 = vmatpush1.bf16.msra.mxu0 %v627
  %651 = vmatprep.subr.bf16.mxu0 0
  %652 = vmatpush1.bf16.msra.mxu0 %v628
  %653 = vmatprep.subr.bf16.mxu0 0
  %654 = vmatpush1.bf16.msra.mxu0 0
  %655 = vmatprep.subr.bf16.mxu0 0
  %656 = vmatpush1.bf16.msra.mxu0 0
  %657 = vmatprep.subr.bf16.mxu0 0
  %658 = vmatpush1.bf16.msra.mxu0 0
  %659 = vmatprep.subr.bf16.mxu0 0
  %660 = vmatpush1.bf16.msra.mxu0 0
  %661 = vmatprep.subr.bf16.mxu0 0
  %662 = vmatpush1.bf16.msra.mxu0 0
  %663 = vmatprep.subr.bf16.mxu0 0
  %664 = vmatpush1.bf16.msra.mxu0 0
  %665 = vmatprep.subr.bf16.mxu0 0
  %666 = vmatpush1.bf16.msra.mxu0 0
  %667 = vmatprep.subr.bf16.mxu0 0
  %668 = vmatpush1.bf16.msra.mxu0 0
  %669 = vmatprep.mubr.bf16.mxu0 0
  %670 = vmatmul.mubr.bf16.gmra.mrb[0].mxu0 %v91
  %v671 = vpop.f32.mrb[0].mxu0
  %v672 = vadd.f32 %v335, %v671
  %v673 = vpop.f32.mrb[0].mxu0
  %v674 = vpop.f32.mrb[0].mxu0
  %v675 = vadd.f32 %v338, %v674
  %v676 = vpop.f32.mrb[0].mxu0
  %677 = vmatprep.mubr.bf16.mxu0 0
  %678 = vmatmul.mubr.bf16.gmra.mrb[0].mxu0 %v92
  %v679 = vpop.f32.mrb[0].mxu0
  %v680 = vadd.f32 %v343, %v679
  %v681 = vpop.f32.mrb[0].mxu0
  %v682 = vpop.f32.mrb[0].mxu0
  %v683 = vadd.f32 %v346, %v682
  %v684 = vpop.f32.mrb[0].mxu0
  %685 = vmatprep.mubr.bf16.mxu0 0
  %686 = vmatmul.mubr.bf16.gmra.mrb[0].mxu0 %v93
  %v687 = vpop.f32.mrb[0].mxu0
  %v688 = vadd.f32 %v351, %v687
  %v689 = vpop.f32.mrb[0].mxu0
  %v690 = vpop.f32.mrb[0].mxu0
  %v691 = vadd.f32 %v354, %v690
  %v692 = vpop.f32.mrb[0].mxu0
  %693 = vmatprep.mubr.bf16.mxu0 0
  %694 = vmatmul.mubr.bf16.gmra.mrb[0].mxu0 %v94
  %v695 = vpop.f32.mrb[0].mxu0
  %v696 = vadd.f32 %v359, %v695
  %v697 = vpop.f32.mrb[0].mxu0
  %v698 = vpop.f32.mrb[0].mxu0
  %v699 = vadd.f32 %v362, %v698
  %v700 = vpop.f32.mrb[0].mxu0
  %701 = vmatprep.mubr.bf16.mxu0 0
  %702 = vmatmul.mubr.bf16.gmra.mrb[0].mxu0 %v95
  %v703 = vpop.f32.mrb[0].mxu0
  %v704 = vadd.f32 %v367, %v703
  %v705 = vpop.f32.mrb[0].mxu0
  %v706 = vpop.f32.mrb[0].mxu0
  %v707 = vadd.f32 %v370, %v706
  %v708 = vpop.f32.mrb[0].mxu0
  %709 = vmatprep.mubr.bf16.mxu0 0
  %710 = vmatmul.mubr.bf16.gmra.mrb[0].mxu0 %v96
  %v711 = vpop.f32.mrb[0].mxu0
  %v712 = vadd.f32 %v375, %v711
  %v713 = vpop.f32.mrb[0].mxu0
  %v714 = vpop.f32.mrb[0].mxu0
  %v715 = vadd.f32 %v378, %v714
  %v716 = vpop.f32.mrb[0].mxu0
  %717 = vmatprep.mubr.bf16.mxu0 0
  %718 = vmatmul.mubr.bf16.gmra.mrb[0].mxu0 %v97
  %v719 = vpop.f32.mrb[0].mxu0
  %v720 = vadd.f32 %v383, %v719
  %v721 = vpop.f32.mrb[0].mxu0
  %v722 = vpop.f32.mrb[0].mxu0
  %v723 = vadd.f32 %v386, %v722
  %v724 = vpop.f32.mrb[0].mxu0
  %725 = vmatprep.mubr.bf16.mxu0 0
  %726 = vmatmul.mubr.bf16.gmra.mrb[0].mxu0 %v98
  %v727 = vpop.f32.mrb[0].mxu0
  %v728 = vadd.f32 %v391, %v727
  %v729 = vpop.f32.mrb[0].mxu0
  %v730 = vpop.f32.mrb[0].mxu0
  %v731 = vadd.f32 %v394, %v730
  %v732 = vpop.f32.mrb[0].mxu0
  %733 = vmatprep.mubr.bf16.mxu0 0
  %734 = vmatmul.mubr.bf16.gmra.mrb[0].mxu0 %v99
  %v735 = vpop.f32.mrb[0].mxu0
  %v736 = vadd.f32 %v399, %v735
  %v737 = vpop.f32.mrb[0].mxu0
  %v738 = vpop.f32.mrb[0].mxu0
  %v739 = vadd.f32 %v402, %v738
  %v740 = vpop.f32.mrb[0].mxu0
  %741 = vmatprep.mubr.bf16.mxu0 0
  %742 = vmatmul.mubr.bf16.gmra.mrb[0].mxu0 %v100
  %v743 = vpop.f32.mrb[0].mxu0
  %v744 = vadd.f32 %v407, %v743
  %v745 = vpop.f32.mrb[0].mxu0
  %v746 = vpop.f32.mrb[0].mxu0
  %v747 = vadd.f32 %v410, %v746
  %v748 = vpop.f32.mrb[0].mxu0
  %749 = vmatprep.mubr.bf16.mxu0 0
  %750 = vmatmul.mubr.bf16.gmra.mrb[0].mxu0 %v101
  %v751 = vpop.f32.mrb[0].mxu0
  %v752 = vadd.f32 %v415, %v751
  %v753 = vpop.f32.mrb[0].mxu0
  %v754 = vpop.f32.mrb[0].mxu0
  %v755 = vadd.f32 %v418, %v754
  %v756 = vpop.f32.mrb[0].mxu0
  %757 = vmatprep.mubr.bf16.mxu0 0
  %758 = vmatmul.mubr.bf16.gmra.mrb[0].mxu0 %v102
  %v759 = vpop.f32.mrb[0].mxu0
  %v760 = vadd.f32 %v423, %v759
  %v761 = vpop.f32.mrb[0].mxu0
  %v762 = vpop.f32.mrb[0].mxu0
  %v763 = vadd.f32 %v426, %v762
  %v764 = vpop.f32.mrb[0].mxu0
  %765 = vmatprep.mubr.bf16.mxu0 0
  %766 = vmatmul.mubr.bf16.gmra.mrb[0].mxu0 %v103
  %v767 = vpop.f32.mrb[0].mxu0
  %v768 = vadd.f32 %v431, %v767
  %v769 = vpop.f32.mrb[0].mxu0
  %v770 = vpop.f32.mrb[0].mxu0
  %v771 = vadd.f32 %v434, %v770
  %v772 = vpop.f32.mrb[0].mxu0
  %773 = vmatprep.mubr.bf16.mxu0 0
  %774 = vmatmul.mubr.bf16.gmra.mrb[0].mxu0 %v104
  %v775 = vpop.f32.mrb[0].mxu0
  %v776 = vadd.f32 %v439, %v775
  %v777 = vpop.f32.mrb[0].mxu0
  %v778 = vpop.f32.mrb[0].mxu0
  %v779 = vadd.f32 %v442, %v778
  %v780 = vpop.f32.mrb[0].mxu0
  %781 = vmatprep.mubr.bf16.mxu0 0
  %782 = vmatmul.mubr.bf16.gmra.mrb[0].mxu0 %v105
  %v783 = vpop.f32.mrb[0].mxu0
  %v784 = vadd.f32 %v447, %v783
  %v785 = vpop.f32.mrb[0].mxu0
  %v786 = vpop.f32.mrb[0].mxu0
  %v787 = vadd.f32 %v450, %v786
  %v788 = vpop.f32.mrb[0].mxu0
  %789 = vmatprep.mubr.bf16.mxu0 0
  %790 = vmatmul.mubr.bf16.gmra.mrb[0].mxu0 %v106
  %v791 = vpop.f32.mrb[0].mxu0
  %v792 = vadd.f32 %v455, %v791
  %v793 = vpop.f32.mrb[0].mxu0
  %v794 = vpop.f32.mrb[0].mxu0
  %v795 = vadd.f32 %v458, %v794
  %v796 = vpop.f32.mrb[0].mxu0
  %797 = vmatprep.mubr.bf16.mxu0 0
  %798 = vmatmul.mubr.bf16.gmra.mrb[0].mxu0 %v107
  %v799 = vpop.f32.mrb[0].mxu0
  %v800 = vadd.f32 %v463, %v799
  %v801 = vpop.f32.mrb[0].mxu0
  %v802 = vpop.f32.mrb[0].mxu0
  %v803 = vadd.f32 %v466, %v802
  %v804 = vpop.f32.mrb[0].mxu0
  %805 = vmatprep.mubr.bf16.mxu0 0
  %806 = vmatmul.mubr.bf16.gmra.mrb[0].mxu0 %v108
  %v807 = vpop.f32.mrb[0].mxu0
  %v808 = vadd.f32 %v471, %v807
  %v809 = vpop.f32.mrb[0].mxu0
  %v810 = vpop.f32.mrb[0].mxu0
  %v811 = vadd.f32 %v474, %v810
  %v812 = vpop.f32.mrb[0].mxu0
  %813 = vmatprep.mubr.bf16.mxu0 0
  %814 = vmatmul.mubr.bf16.gmra.mrb[0].mxu0 %v109
  %v815 = vpop.f32.mrb[0].mxu0
  %v816 = vadd.f32 %v479, %v815
  %v817 = vpop.f32.mrb[0].mxu0
  %v818 = vpop.f32.mrb[0].mxu0
  %v819 = vadd.f32 %v482, %v818
  %v820 = vpop.f32.mrb[0].mxu0
  %821 = vmatprep.mubr.bf16.mxu0 0
  %822 = vmatmul.mubr.bf16.gmra.mrb[0].mxu0 %v110
  %v823 = vpop.f32.mrb[0].mxu0
  %v824 = vadd.f32 %v487, %v823
  %v825 = vpop.f32.mrb[0].mxu0
  %v826 = vpop.f32.mrb[0].mxu0
  %v827 = vadd.f32 %v490, %v826
  %v828 = vpop.f32.mrb[0].mxu0
  %829 = vmatprep.mubr.bf16.mxu0 0
  %830 = vmatmul.mubr.bf16.gmra.mrb[0].mxu0 %v111
  %v831 = vpop.f32.mrb[0].mxu0
  %v832 = vadd.f32 %v495, %v831
  %v833 = vpop.f32.mrb[0].mxu0
  %v834 = vpop.f32.mrb[0].mxu0
  %v835 = vadd.f32 %v498, %v834
  %v836 = vpop.f32.mrb[0].mxu0
  %837 = vmatprep.mubr.bf16.mxu0 0
  %838 = vmatmul.mubr.bf16.gmra.mrb[0].mxu0 %v112
  %v839 = vpop.f32.mrb[0].mxu0
  %v840 = vadd.f32 %v503, %v839
  %v841 = vpop.f32.mrb[0].mxu0
  %v842 = vpop.f32.mrb[0].mxu0
  %v843 = vadd.f32 %v506, %v842
  %v844 = vpop.f32.mrb[0].mxu0
  %845 = vmatprep.mubr.bf16.mxu0 0
  %846 = vmatmul.mubr.bf16.gmra.mrb[0].mxu0 %v113
  %v847 = vpop.f32.mrb[0].mxu0
  %v848 = vadd.f32 %v511, %v847
  %v849 = vpop.f32.mrb[0].mxu0
  %v850 = vpop.f32.mrb[0].mxu0
  %v851 = vadd.f32 %v514, %v850
  %v852 = vpop.f32.mrb[0].mxu0
  %853 = vmatprep.mubr.bf16.mxu0 0
  %854 = vmatmul.mubr.bf16.gmra.mrb[0].mxu0 %v114
  %v855 = vpop.f32.mrb[0].mxu0
  %v856 = vadd.f32 %v519, %v855
  %v857 = vpop.f32.mrb[0].mxu0
  %v858 = vpop.f32.mrb[0].mxu0
  %v859 = vadd.f32 %v522, %v858
  %v860 = vpop.f32.mrb[0].mxu0
  %861 = vmatprep.mubr.bf16.mxu0 0
  %862 = vmatmul.mubr.bf16.gmra.mrb[0].mxu0 %v115
  %v863 = vpop.f32.mrb[0].mxu0
  %v864 = vadd.f32 %v527, %v863
  %v865 = vpop.f32.mrb[0].mxu0
  %v866 = vpop.f32.mrb[0].mxu0
  %v867 = vadd.f32 %v530, %v866
  %v868 = vpop.f32.mrb[0].mxu0
  %869 = vmatprep.mubr.bf16.mxu0 0
  %870 = vmatmul.mubr.bf16.gmra.mrb[0].mxu0 %v116
  %v871 = vpop.f32.mrb[0].mxu0
  %v872 = vadd.f32 %v535, %v871
  %v873 = vpop.f32.mrb[0].mxu0
  %v874 = vpop.f32.mrb[0].mxu0
  %v875 = vadd.f32 %v538, %v874
  %v876 = vpop.f32.mrb[0].mxu0
  %877 = vmatprep.mubr.bf16.mxu0 0
  %878 = vmatmul.mubr.bf16.gmra.mrb[0].mxu0 %v117
  %v879 = vpop.f32.mrb[0].mxu0
  %v880 = vadd.f32 %v543, %v879
  %v881 = vpop.f32.mrb[0].mxu0
  %v882 = vpop.f32.mrb[0].mxu0
  %v883 = vadd.f32 %v546, %v882
  %v884 = vpop.f32.mrb[0].mxu0
  %885 = vmatprep.mubr.bf16.mxu0 0
  %886 = vmatmul.mubr.bf16.gmra.mrb[0].mxu0 %v118
  %v887 = vpop.f32.mrb[0].mxu0
  %v888 = vadd.f32 %v551, %v887
  %v889 = vpop.f32.mrb[0].mxu0
  %v890 = vpop.f32.mrb[0].mxu0
  %v891 = vadd.f32 %v554, %v890
  %v892 = vpop.f32.mrb[0].mxu0
  %893 = vmatprep.mubr.bf16.mxu0 0
  %894 = vmatmul.mubr.bf16.gmra.mrb[0].mxu0 %v119
  %v895 = vpop.f32.mrb[0].mxu0
  %v896 = vadd.f32 %v559, %v895
  %v897 = vpop.f32.mrb[0].mxu0
  %v898 = vpop.f32.mrb[0].mxu0
  %v899 = vadd.f32 %v562, %v898
  %v900 = vpop.f32.mrb[0].mxu0
  %901 = vmatprep.mubr.bf16.mxu0 0
  %902 = vmatmul.mubr.bf16.gmra.mrb[0].mxu0 %v120
  %v903 = vpop.f32.mrb[0].mxu0
  %v904 = vadd.f32 %v567, %v903
  %v905 = vpop.f32.mrb[0].mxu0
  %v906 = vpop.f32.mrb[0].mxu0
  %v907 = vadd.f32 %v570, %v906
  %v908 = vpop.f32.mrb[0].mxu0
  %909 = vmatprep.mubr.bf16.mxu0 0
  %910 = vmatmul.mubr.bf16.gmra.mrb[0].mxu0 %v121
  %v911 = vpop.f32.mrb[0].mxu0
  %v912 = vadd.f32 %v575, %v911
  %v913 = vpop.f32.mrb[0].mxu0
  %v914 = vpop.f32.mrb[0].mxu0
  %v915 = vadd.f32 %v578, %v914
  %v916 = vpop.f32.mrb[0].mxu0
  %917 = vmatprep.mubr.bf16.mxu0 0
  %918 = vmatmul.mubr.bf16.gmra.mrb[0].mxu0 %v122
  %v919 = vpop.f32.mrb[0].mxu0
  %v920 = vadd.f32 %v583, %v919
  %v921 = vpop.f32.mrb[0].mxu0
  %v922 = vpop.f32.mrb[0].mxu0
  %v923 = vadd.f32 %v586, %v922
  %v924 = vpop.f32.mrb[0].mxu0
  %925 = vdwg.mxu0
  %v926 = vld [vmem:[%s0 + $0x2] sm:$0xff]
  %v927 = vld [vmem:[%s0 + $0xa] sm:$0xff]
  %v928 = vld [vmem:[%s0 + $0x1a] sm:$0xff]
  %v929 = vld [vmem:[%s0 + $0x22] sm:$0xff]
  %v930 = vld [vmem:[%s0 + $0x32] sm:$0xff]
  %v931 = vld [vmem:[%s0 + $0x3a] sm:$0xff]
  %v932 = vld [vmem:[%s0 + $0x4a] sm:$0xff]
  %v933 = vld [vmem:[%s0 + $0x52] sm:$0xff]
  %v934 = vld [vmem:[%s0 + $0x62] sm:$0xff]
  %v935 = vld [vmem:[%s0 + $0x6a] sm:$0xff]
  %v936 = vld [vmem:[%s0 + $0x7a] sm:$0xff]
  %v937 = vld [vmem:[%s0 + $0x82] sm:$0xff]
  %v938 = vld [vmem:[%s0 + $0x92] sm:$0xff]
  %v939 = vld [vmem:[%s0 + $0x9a] sm:$0xff]
  %v940 = vld [vmem:[%s0 + $0xaa] sm:$0xff]
  %v941 = vld [vmem:[%s0 + $0xb2] sm:$0xff]
  %v942 = vld [vmem:[%s0 + $0xc2] sm:$0xff]
  %v943 = vld [vmem:[%s0 + $0xca] sm:$0xff]
  %v944 = vld [vmem:[%s0 + $0xda] sm:$0xff]
  %v945 = vld [vmem:[%s0 + $0xe2] sm:$0xff]
  %v946 = vld [vmem:[%s0 + $0xf2] sm:$0xff]
  %v947 = vld [vmem:[%s0 + $0xfa] sm:$0xff]
  %v948 = vld [vmem:[%s0 + $0x10a] sm:$0xff]
  %v949 = vld [vmem:[%s0 + $0x112] sm:$0xff]
  %v950 = vld [vmem:[%s0 + $0x122] sm:$0xff]
  %v951 = vld [vmem:[%s0 + $0x12a] sm:$0xff]
  %v952 = vld [vmem:[%s0 + $0x13a] sm:$0xff]
  %v953 = vld [vmem:[%s0 + $0x142] sm:$0xff]
  %v954 = vld [vmem:[%s0 + $0x152] sm:$0xff]
  %v955 = vld [vmem:[%s0 + $0x15a] sm:$0xff]
  %v956 = vld [vmem:[%s0 + $0x16a] sm:$0xff]
  %v957 = vld [vmem:[%s0 + $0x172] sm:$0xff]
  %v958 = vld [vmem:[%s0 + $0x1b2] sm:$0xff]
  %v959 = vld [vmem:[%s0 + $0x1ba] sm:$0xff]
  %v960 = vld [vmem:[%s0 + $0x1ca] sm:$0xff]
  %v961 = vld [vmem:[%s0 + $0x1d2] sm:$0xff]
  %v962 = vld [vmem:[%s0 + $0x1e2] sm:$0xff]
  %v963 = vld [vmem:[%s0 + $0x1ea] sm:$0xff]
  %v964 = vld [vmem:[%s0 + $0x1fa] sm:$0xff]
  %v965 = vld [vmem:[%s0 + $0x202] sm:$0xff]
  %v966 = vld [vmem:[%s0 + $0x212] sm:$0xff]
  %v967 = vld [vmem:[%s0 + $0x21a] sm:$0xff]
  %v968 = vld [vmem:[%s0 + $0x22a] sm:$0xff]
  %v969 = vld [vmem:[%s0 + $0x232] sm:$0xff]
  %v970 = vld [vmem:[%s0 + $0x242] sm:$0xff]
  %v971 = vld [vmem:[%s0 + $0x24a] sm:$0xff]
  %v972 = vld [vmem:[%s0 + $0x25a] sm:$0xff]
  %v973 = vld [vmem:[%s0 + $0x262] sm:$0xff]
  %v974 = vld [vmem:[%s0 + $0x272] sm:$0xff]
  %v975 = vld [vmem:[%s0 + $0x27a] sm:$0xff]
  %v976 = vld [vmem:[%s0 + $0x28a] sm:$0xff]
  %v977 = vld [vmem:[%s0 + $0x292] sm:$0xff]
  %v978 = vld [vmem:[%s0 + $0x2a2] sm:$0xff]
  %v979 = vld [vmem:[%s0 + $0x2aa] sm:$0xff]
  %v980 = vld [vmem:[%s0 + $0x2ba] sm:$0xff]
  %v981 = vld [vmem:[%s0 + $0x2c2] sm:$0xff]
  %v982 = vld [vmem:[%s0 + $0x2d2] sm:$0xff]
  %v983 = vld [vmem:[%s0 + $0x2da] sm:$0xff]
  %v984 = vld [vmem:[%s0 + $0x2ea] sm:$0xff]
  %v985 = vld [vmem:[%s0 + $0x2f2] sm:$0xff]
  %v986 = vld [vmem:[%s0 + $0x302] sm:$0xff]
  %v987 = vld [vmem:[%s0 + $0x30a] sm:$0xff]
  %v988 = vld [vmem:[%s0 + $0x31a] sm:$0xff]
  %v989 = vld [vmem:[%s0 + $0x322] sm:$0xff]
  %v990 = vpack.c.bf16 %v927, %v926
  %v991 = vpack.c.bf16 %v929, %v928
  %v992 = vpack.c.bf16 %v931, %v930
  %v993 = vpack.c.bf16 %v933, %v932
  %v994 = vpack.c.bf16 %v935, %v934
  %v995 = vpack.c.bf16 %v937, %v936
  %v996 = vpack.c.bf16 %v939, %v938
  %v997 = vpack.c.bf16 %v941, %v940
  %v998 = vpack.c.bf16 %v943, %v942
  %v999 = vpack.c.bf16 %v945, %v944
  %v1000 = vpack.c.bf16 %v947, %v946
  %v1001 = vpack.c.bf16 %v949, %v948
  %v1002 = vpack.c.bf16 %v951, %v950
  %v1003 = vpack.c.bf16 %v953, %v952
  %v1004 = vpack.c.bf16 %v955, %v954
  %v1005 = vpack.c.bf16 %v957, %v956
  %v1006 = vpack.c.bf16 %v959, %v958
  %v1007 = vpack.c.bf16 %v961, %v960
  %v1008 = vpack.c.bf16 %v963, %v962
  %v1009 = vpack.c.bf16 %v965, %v964
  %v1010 = vpack.c.bf16 %v967, %v966
  %v1011 = vpack.c.bf16 %v969, %v968
  %v1012 = vpack.c.bf16 %v971, %v970
  %v1013 = vpack.c.bf16 %v973, %v972
  %v1014 = vpack.c.bf16 %v975, %v974
  %v1015 = vpack.c.bf16 %v977, %v976
  %v1016 = vpack.c.bf16 %v979, %v978
  %v1017 = vpack.c.bf16 %v981, %v980
  %v1018 = vpack.c.bf16 %v983, %v982
  %v1019 = vpack.c.bf16 %v985, %v984
  %v1020 = vpack.c.bf16 %v987, %v986
  %v1021 = vpack.c.bf16 %v989, %v988
  %s1022 = scalar_lea.vmem %s1, 128
  %v1023 = vld [vmem:[%s1022] sm:$0xf]
  %v1024 = vld [vmem:[%s1022 + $0x4] sm:$0xf]
  %v1025 = vld [vmem:[%s1022 + $0x8] sm:$0xf]
  %v1026 = vld [vmem:[%s1022 + $0xc] sm:$0xf]
  %v1027 = vld [vmem:[%s1022 + $0x10] sm:$0xf]
  %v1028 = vld [vmem:[%s1022 + $0x14] sm:$0xf]
  %v1029 = vld [vmem:[%s1022 + $0x18] sm:$0xf]
  %v1030 = vld [vmem:[%s1022 + $0x1c] sm:$0xf]
  %v1031 = vld [vmem:[%s1022 + $0x20] sm:$0xf]
  %v1032 = vld [vmem:[%s1022 + $0x24] sm:$0xf]
  %v1033 = vld [vmem:[%s1022 + $0x28] sm:$0xf]
  %v1034 = vld [vmem:[%s1022 + $0x2c] sm:$0xf]
  %v1035 = vld [vmem:[%s1022 + $0x30] sm:$0xf]
  %v1036 = vld [vmem:[%s1022 + $0x34] sm:$0xf]
  %v1037 = vld [vmem:[%s1022 + $0x38] sm:$0xf]
  %v1038 = vld [vmem:[%s1022 + $0x3c] sm:$0xf]
  %v1055 = vunpack.c.l.b16 %v1023
  %v1056 = vunpack.c.l.b16 %v1024
  %v1057 = vunpack.c.l.b16 %v1025
  %v1058 = vunpack.c.l.b16 %v1026
  %v1059 = vunpack.c.l.b16 %v1027
  %v1060 = vunpack.c.l.b16 %v1028
  %v1061 = vunpack.c.l.b16 %v1029
  %v1062 = vunpack.c.l.b16 %v1030
  %v1063 = vunpack.c.l.b16 %v1031
  %v1064 = vunpack.c.l.b16 %v1032
  %v1065 = vunpack.c.l.b16 %v1033
  %v1066 = vunpack.c.l.b16 %v1034
  %v1067 = vunpack.c.l.b16 %v1035
  %v1068 = vunpack.c.l.b16 %v1036
  %v1069 = vunpack.c.l.b16 %v1037
  %v1070 = vunpack.c.l.b16 %v1038
  %v1071 = vpack.c.b16 %v1056, %v1055
  %v1072 = vpack.c.b16 %v1058, %v1057
  %v1073 = vpack.c.b16 %v1060, %v1059
  %v1074 = vpack.c.b16 %v1062, %v1061
  %v1075 = vpack.c.b16 %v1064, %v1063
  %v1076 = vpack.c.b16 %v1066, %v1065
  %v1077 = vpack.c.b16 %v1068, %v1067
  %v1078 = vpack.c.b16 %v1070, %v1069
  %1087 = vmatprep.subr.bf16.mxu0 0
  %1088 = vmatpush1.bf16.msra.mxu0 %v1071
  %1089 = vmatprep.subr.bf16.mxu0 0
  %1090 = vmatpush1.bf16.msra.mxu0 %v1072
  %1091 = vmatprep.subr.bf16.mxu0 0
  %1092 = vmatpush1.bf16.msra.mxu0 %v1073
  %1093 = vmatprep.subr.bf16.mxu0 0
  %1094 = vmatpush1.bf16.msra.mxu0 %v1074
  %1095 = vmatprep.subr.bf16.mxu0 0
  %1096 = vmatpush1.bf16.msra.mxu0 %v1075
  %1097 = vmatprep.subr.bf16.mxu0 0
  %1098 = vmatpush1.bf16.msra.mxu0 %v1076
  %1099 = vmatprep.subr.bf16.mxu0 0
  %1100 = vmatpush1.bf16.msra.mxu0 %v1077
  %1101 = vmatprep.subr.bf16.mxu0 0
  %1102 = vmatpush1.bf16.msra.mxu0 %v1078
  %1103 = vmatprep.subr.bf16.mxu0 0
  %1104 = vmatpush1.bf16.msra.mxu0 0
  %1105 = vmatprep.subr.bf16.mxu0 0
  %1106 = vmatpush1.bf16.msra.mxu0 0
  %1107 = vmatprep.subr.bf16.mxu0 0
  %1108 = vmatpush1.bf16.msra.mxu0 0
  %1109 = vmatprep.subr.bf16.mxu0 0
  %1110 = vmatpush1.bf16.msra.mxu0 0
  %1111 = vmatprep.subr.bf16.mxu0 0
  %1112 = vmatpush1.bf16.msra.mxu0 0
  %1113 = vmatprep.subr.bf16.mxu0 0
  %1114 = vmatpush1.bf16.msra.mxu0 0
  %1115 = vmatprep.subr.bf16.mxu0 0
  %1116 = vmatpush1.bf16.msra.mxu0 0
  %1117 = vmatprep.subr.bf16.mxu0 0
  %1118 = vmatpush1.bf16.msra.mxu0 0
  %1119 = vmatprep.mubr.bf16.mxu0 0
  %1120 = vmatmul.mubr.bf16.gmra.mrb[0].mxu0 %v990
  %v1121 = vpop.f32.mrb[0].mxu0
  %v1122 = vadd.f32 0.0, %v1121
  %v1123 = vpop.f32.mrb[0].mxu0
  %v1124 = vpop.f32.mrb[0].mxu0
  %v1125 = vadd.f32 0.0, %v1124
  %v1126 = vpop.f32.mrb[0].mxu0
  %1127 = vmatprep.mubr.bf16.mxu0 0
  %1128 = vmatmul.mubr.bf16.gmra.mrb[0].mxu0 %v991
  %v1129 = vpop.f32.mrb[0].mxu0
  %v1130 = vadd.f32 0.0, %v1129
  %v1131 = vpop.f32.mrb[0].mxu0
  %v1132 = vpop.f32.mrb[0].mxu0
  %v1133 = vadd.f32 0.0, %v1132
  %v1134 = vpop.f32.mrb[0].mxu0
  %1135 = vmatprep.mubr.bf16.mxu0 0
  %1136 = vmatmul.mubr.bf16.gmra.mrb[0].mxu0 %v992
  %v1137 = vpop.f32.mrb[0].mxu0
  %v1138 = vadd.f32 0.0, %v1137
  %v1139 = vpop.f32.mrb[0].mxu0
  %v1140 = vpop.f32.mrb[0].mxu0
  %v1141 = vadd.f32 0.0, %v1140
  %v1142 = vpop.f32.mrb[0].mxu0
  %1143 = vmatprep.mubr.bf16.mxu0 0
  %1144 = vmatmul.mubr.bf16.gmra.mrb[0].mxu0 %v993
  %v1145 = vpop.f32.mrb[0].mxu0
  %v1146 = vadd.f32 0.0, %v1145
  %v1147 = vpop.f32.mrb[0].mxu0
  %v1148 = vpop.f32.mrb[0].mxu0
  %v1149 = vadd.f32 0.0, %v1148
  %v1150 = vpop.f32.mrb[0].mxu0
  %1151 = vmatprep.mubr.bf16.mxu0 0
  %1152 = vmatmul.mubr.bf16.gmra.mrb[0].mxu0 %v994
  %v1153 = vpop.f32.mrb[0].mxu0
  %v1154 = vadd.f32 0.0, %v1153
  %v1155 = vpop.f32.mrb[0].mxu0
  %v1156 = vpop.f32.mrb[0].mxu0
  %v1157 = vadd.f32 0.0, %v1156
  %v1158 = vpop.f32.mrb[0].mxu0
  %1159 = vmatprep.mubr.bf16.mxu0 0
  %1160 = vmatmul.mubr.bf16.gmra.mrb[0].mxu0 %v995
  %v1161 = vpop.f32.mrb[0].mxu0
  %v1162 = vadd.f32 0.0, %v1161
  %v1163 = vpop.f32.mrb[0].mxu0
  %v1164 = vpop.f32.mrb[0].mxu0
  %v1165 = vadd.f32 0.0, %v1164
  %v1166 = vpop.f32.mrb[0].mxu0
  %1167 = vmatprep.mubr.bf16.mxu0 0
  %1168 = vmatmul.mubr.bf16.gmra.mrb[0].mxu0 %v996
  %v1169 = vpop.f32.mrb[0].mxu0
  %v1170 = vadd.f32 0.0, %v1169
  %v1171 = vpop.f32.mrb[0].mxu0
  %v1172 = vpop.f32.mrb[0].mxu0
  %v1173 = vadd.f32 0.0, %v1172
  %v1174 = vpop.f32.mrb[0].mxu0
  %1175 = vmatprep.mubr.bf16.mxu0 0
  %1176 = vmatmul.mubr.bf16.gmra.mrb[0].mxu0 %v997
  %v1177 = vpop.f32.mrb[0].mxu0
  %v1178 = vadd.f32 0.0, %v1177
  %v1179 = vpop.f32.mrb[0].mxu0
  %v1180 = vpop.f32.mrb[0].mxu0
  %v1181 = vadd.f32 0.0, %v1180
  %v1182 = vpop.f32.mrb[0].mxu0
  %1183 = vmatprep.mubr.bf16.mxu0 0
  %1184 = vmatmul.mubr.bf16.gmra.mrb[0].mxu0 %v998
  %v1185 = vpop.f32.mrb[0].mxu0
  %v1186 = vadd.f32 0.0, %v1185
  %v1187 = vpop.f32.mrb[0].mxu0
  %v1188 = vpop.f32.mrb[0].mxu0
  %v1189 = vadd.f32 0.0, %v1188
  %v1190 = vpop.f32.mrb[0].mxu0
  %1191 = vmatprep.mubr.bf16.mxu0 0
  %1192 = vmatmul.mubr.bf16.gmra.mrb[0].mxu0 %v999
  %v1193 = vpop.f32.mrb[0].mxu0
  %v1194 = vadd.f32 0.0, %v1193
  %v1195 = vpop.f32.mrb[0].mxu0
  %v1196 = vpop.f32.mrb[0].mxu0
  %v1197 = vadd.f32 0.0, %v1196
  %v1198 = vpop.f32.mrb[0].mxu0
  %1199 = vmatprep.mubr.bf16.mxu0 0
  %1200 = vmatmul.mubr.bf16.gmra.mrb[0].mxu0 %v1000
  %v1201 = vpop.f32.mrb[0].mxu0
  %v1202 = vadd.f32 0.0, %v1201
  %v1203 = vpop.f32.mrb[0].mxu0
  %v1204 = vpop.f32.mrb[0].mxu0
  %v1205 = vadd.f32 0.0, %v1204
  %v1206 = vpop.f32.mrb[0].mxu0
  %1207 = vmatprep.mubr.bf16.mxu0 0
  %1208 = vmatmul.mubr.bf16.gmra.mrb[0].mxu0 %v1001
  %v1209 = vpop.f32.mrb[0].mxu0
  %v1210 = vadd.f32 0.0, %v1209
  %v1211 = vpop.f32.mrb[0].mxu0
  %v1212 = vpop.f32.mrb[0].mxu0
  %v1213 = vadd.f32 0.0, %v1212
  %v1214 = vpop.f32.mrb[0].mxu0
  %1215 = vmatprep.mubr.bf16.mxu0 0
  %1216 = vmatmul.mubr.bf16.gmra.mrb[0].mxu0 %v1002
  %v1217 = vpop.f32.mrb[0].mxu0
  %v1218 = vadd.f32 0.0, %v1217
  %v1219 = vpop.f32.mrb[0].mxu0
  %v1220 = vpop.f32.mrb[0].mxu0
  %v1221 = vadd.f32 0.0, %v1220
  %v1222 = vpop.f32.mrb[0].mxu0
  %1223 = vmatprep.mubr.bf16.mxu0 0
  %1224 = vmatmul.mubr.bf16.gmra.mrb[0].mxu0 %v1003
  %v1225 = vpop.f32.mrb[0].mxu0
  %v1226 = vadd.f32 0.0, %v1225
  %v1227 = vpop.f32.mrb[0].mxu0
  %v1228 = vpop.f32.mrb[0].mxu0
  %v1229 = vadd.f32 0.0, %v1228
  %v1230 = vpop.f32.mrb[0].mxu0
  %1231 = vmatprep.mubr.bf16.mxu0 0
  %1232 = vmatmul.mubr.bf16.gmra.mrb[0].mxu0 %v1004
  %v1233 = vpop.f32.mrb[0].mxu0
  %v1234 = vadd.f32 0.0, %v1233
  %v1235 = vpop.f32.mrb[0].mxu0
  %v1236 = vpop.f32.mrb[0].mxu0
  %v1237 = vadd.f32 0.0, %v1236
  %v1238 = vpop.f32.mrb[0].mxu0
  %1239 = vmatprep.mubr.bf16.mxu0 0
  %1240 = vmatmul.mubr.bf16.gmra.mrb[0].mxu0 %v1005
  %v1241 = vpop.f32.mrb[0].mxu0
  %v1242 = vadd.f32 0.0, %v1241
  %v1243 = vpop.f32.mrb[0].mxu0
  %v1244 = vpop.f32.mrb[0].mxu0
  %v1245 = vadd.f32 0.0, %v1244
  %v1246 = vpop.f32.mrb[0].mxu0
  %1247 = vmatprep.mubr.bf16.mxu0 0
  %1248 = vmatmul.mubr.bf16.gmra.mrb[0].mxu0 %v1006
  %v1249 = vpop.f32.mrb[0].mxu0
  %v1250 = vadd.f32 0.0, %v1249
  %v1251 = vpop.f32.mrb[0].mxu0
  %v1252 = vpop.f32.mrb[0].mxu0
  %v1253 = vadd.f32 0.0, %v1252
  %v1254 = vpop.f32.mrb[0].mxu0
  %1255 = vmatprep.mubr.bf16.mxu0 0
  %1256 = vmatmul.mubr.bf16.gmra.mrb[0].mxu0 %v1007
  %v1257 = vpop.f32.mrb[0].mxu0
  %v1258 = vadd.f32 0.0, %v1257
  %v1259 = vpop.f32.mrb[0].mxu0
  %v1260 = vpop.f32.mrb[0].mxu0
  %v1261 = vadd.f32 0.0, %v1260
  %v1262 = vpop.f32.mrb[0].mxu0
  %1263 = vmatprep.mubr.bf16.mxu0 0
  %1264 = vmatmul.mubr.bf16.gmra.mrb[0].mxu0 %v1008
  %v1265 = vpop.f32.mrb[0].mxu0
  %v1266 = vadd.f32 0.0, %v1265
  %v1267 = vpop.f32.mrb[0].mxu0
  %v1268 = vpop.f32.mrb[0].mxu0
  %v1269 = vadd.f32 0.0, %v1268
  %v1270 = vpop.f32.mrb[0].mxu0
  %1271 = vmatprep.mubr.bf16.mxu0 0
  %1272 = vmatmul.mubr.bf16.gmra.mrb[0].mxu0 %v1009
  %v1273 = vpop.f32.mrb[0].mxu0
  %v1274 = vadd.f32 0.0, %v1273
  %v1275 = vpop.f32.mrb[0].mxu0
  %v1276 = vpop.f32.mrb[0].mxu0
  %v1277 = vadd.f32 0.0, %v1276
  %v1278 = vpop.f32.mrb[0].mxu0
  %1279 = vmatprep.mubr.bf16.mxu0 0
  %1280 = vmatmul.mubr.bf16.gmra.mrb[0].mxu0 %v1010
  %v1281 = vpop.f32.mrb[0].mxu0
  %v1282 = vadd.f32 0.0, %v1281
  %v1283 = vpop.f32.mrb[0].mxu0
  %v1284 = vpop.f32.mrb[0].mxu0
  %v1285 = vadd.f32 0.0, %v1284
  %v1286 = vpop.f32.mrb[0].mxu0
  %1287 = vmatprep.mubr.bf16.mxu0 0
  %1288 = vmatmul.mubr.bf16.gmra.mrb[0].mxu0 %v1011
  %v1289 = vpop.f32.mrb[0].mxu0
  %v1290 = vadd.f32 0.0, %v1289
  %v1291 = vpop.f32.mrb[0].mxu0
  %v1292 = vpop.f32.mrb[0].mxu0
  %v1293 = vadd.f32 0.0, %v1292
  %v1294 = vpop.f32.mrb[0].mxu0
  %1295 = vmatprep.mubr.bf16.mxu0 0
  %1296 = vmatmul.mubr.bf16.gmra.mrb[0].mxu0 %v1012
  %v1297 = vpop.f32.mrb[0].mxu0
  %v1298 = vadd.f32 0.0, %v1297
  %v1299 = vpop.f32.mrb[0].mxu0
  %v1300 = vpop.f32.mrb[0].mxu0
  %v1301 = vadd.f32 0.0, %v1300
  %v1302 = vpop.f32.mrb[0].mxu0
  %1303 = vmatprep.mubr.bf16.mxu0 0
  %1304 = vmatmul.mubr.bf16.gmra.mrb[0].mxu0 %v1013
  %v1305 = vpop.f32.mrb[0].mxu0
  %v1306 = vadd.f32 0.0, %v1305
  %v1307 = vpop.f32.mrb[0].mxu0
  %v1308 = vpop.f32.mrb[0].mxu0
  %v1309 = vadd.f32 0.0, %v1308
  %v1310 = vpop.f32.mrb[0].mxu0
  %1311 = vmatprep.mubr.bf16.mxu0 0
  %1312 = vmatmul.mubr.bf16.gmra.mrb[0].mxu0 %v1014
  %v1313 = vpop.f32.mrb[0].mxu0
  %v1314 = vadd.f32 0.0, %v1313
  %v1315 = vpop.f32.mrb[0].mxu0
  %v1316 = vpop.f32.mrb[0].mxu0
  %v1317 = vadd.f32 0.0, %v1316
  %v1318 = vpop.f32.mrb[0].mxu0
  %1319 = vmatprep.mubr.bf16.mxu0 0
  %1320 = vmatmul.mubr.bf16.gmra.mrb[0].mxu0 %v1015
  %v1321 = vpop.f32.mrb[0].mxu0
  %v1322 = vadd.f32 0.0, %v1321
  %v1323 = vpop.f32.mrb[0].mxu0
  %v1324 = vpop.f32.mrb[0].mxu0
  %v1325 = vadd.f32 0.0, %v1324
  %v1326 = vpop.f32.mrb[0].mxu0
  %1327 = vmatprep.mubr.bf16.mxu0 0
  %1328 = vmatmul.mubr.bf16.gmra.mrb[0].mxu0 %v1016
  %v1329 = vpop.f32.mrb[0].mxu0
  %v1330 = vadd.f32 0.0, %v1329
  %v1331 = vpop.f32.mrb[0].mxu0
  %v1332 = vpop.f32.mrb[0].mxu0
  %v1333 = vadd.f32 0.0, %v1332
  %v1334 = vpop.f32.mrb[0].mxu0
  %1335 = vmatprep.mubr.bf16.mxu0 0
  %1336 = vmatmul.mubr.bf16.gmra.mrb[0].mxu0 %v1017
  %v1337 = vpop.f32.mrb[0].mxu0
  %v1338 = vadd.f32 0.0, %v1337
  %v1339 = vpop.f32.mrb[0].mxu0
  %v1340 = vpop.f32.mrb[0].mxu0
  %v1341 = vadd.f32 0.0, %v1340
  %v1342 = vpop.f32.mrb[0].mxu0
  %1343 = vmatprep.mubr.bf16.mxu0 0
  %1344 = vmatmul.mubr.bf16.gmra.mrb[0].mxu0 %v1018
  %v1345 = vpop.f32.mrb[0].mxu0
  %v1346 = vadd.f32 0.0, %v1345
  %v1347 = vpop.f32.mrb[0].mxu0
  %v1348 = vpop.f32.mrb[0].mxu0
  %v1349 = vadd.f32 0.0, %v1348
  %v1350 = vpop.f32.mrb[0].mxu0
  %1351 = vmatprep.mubr.bf16.mxu0 0
  %1352 = vmatmul.mubr.bf16.gmra.mrb[0].mxu0 %v1019
  %v1353 = vpop.f32.mrb[0].mxu0
  %v1354 = vadd.f32 0.0, %v1353
  %v1355 = vpop.f32.mrb[0].mxu0
  %v1356 = vpop.f32.mrb[0].mxu0
  %v1357 = vadd.f32 0.0, %v1356
  %v1358 = vpop.f32.mrb[0].mxu0
  %1359 = vmatprep.mubr.bf16.mxu0 0
  %1360 = vmatmul.mubr.bf16.gmra.mrb[0].mxu0 %v1020
  %v1361 = vpop.f32.mrb[0].mxu0
  %v1362 = vadd.f32 0.0, %v1361
  %v1363 = vpop.f32.mrb[0].mxu0
  %v1364 = vpop.f32.mrb[0].mxu0
  %v1365 = vadd.f32 0.0, %v1364
  %v1366 = vpop.f32.mrb[0].mxu0
  %1367 = vmatprep.mubr.bf16.mxu0 0
  %1368 = vmatmul.mubr.bf16.gmra.mrb[0].mxu0 %v1021
  %v1369 = vpop.f32.mrb[0].mxu0
  %v1370 = vadd.f32 0.0, %v1369
  %v1371 = vpop.f32.mrb[0].mxu0
  %v1372 = vpop.f32.mrb[0].mxu0
  %v1373 = vadd.f32 0.0, %v1372
  %v1374 = vpop.f32.mrb[0].mxu0
  %1375 = vdwg.mxu0
  %v1376 = vadd.f32 %v672, %v1122
  %v1377 = vadd.f32 %v675, %v1125
  %v1378 = vadd.f32 %v680, %v1130
  %v1379 = vadd.f32 %v683, %v1133
  %v1380 = vadd.f32 %v688, %v1138
  %v1381 = vadd.f32 %v691, %v1141
  %v1382 = vadd.f32 %v696, %v1146
  %v1383 = vadd.f32 %v699, %v1149
  %v1384 = vadd.f32 %v704, %v1154
  %v1385 = vadd.f32 %v707, %v1157
  %v1386 = vadd.f32 %v712, %v1162
  %v1387 = vadd.f32 %v715, %v1165
  %v1388 = vadd.f32 %v720, %v1170
  %v1389 = vadd.f32 %v723, %v1173
  %v1390 = vadd.f32 %v728, %v1178
  %v1391 = vadd.f32 %v731, %v1181
  %v1392 = vadd.f32 %v736, %v1186
  %v1393 = vadd.f32 %v739, %v1189
  %v1394 = vadd.f32 %v744, %v1194
  %v1395 = vadd.f32 %v747, %v1197
  %v1396 = vadd.f32 %v752, %v1202
  %v1397 = vadd.f32 %v755, %v1205
  %v1398 = vadd.f32 %v760, %v1210
  %v1399 = vadd.f32 %v763, %v1213
  %v1400 = vadd.f32 %v768, %v1218
  %v1401 = vadd.f32 %v771, %v1221
  %v1402 = vadd.f32 %v776, %v1226
  %v1403 = vadd.f32 %v779, %v1229
  %v1404 = vadd.f32 %v784, %v1234
  %v1405 = vadd.f32 %v787, %v1237
  %v1406 = vadd.f32 %v792, %v1242
  %v1407 = vadd.f32 %v795, %v1245
  %v1408 = vadd.f32 %v800, %v1250
  %v1409 = vadd.f32 %v803, %v1253
  %v1410 = vadd.f32 %v808, %v1258
  %v1411 = vadd.f32 %v811, %v1261
  %v1412 = vadd.f32 %v816, %v1266
  %v1413 = vadd.f32 %v819, %v1269
  %v1414 = vadd.f32 %v824, %v1274
  %v1415 = vadd.f32 %v827, %v1277
  %v1416 = vadd.f32 %v832, %v1282
  %v1417 = vadd.f32 %v835, %v1285
  %v1418 = vadd.f32 %v840, %v1290
  %v1419 = vadd.f32 %v843, %v1293
  %v1420 = vadd.f32 %v848, %v1298
  %v1421 = vadd.f32 %v851, %v1301
  %v1422 = vadd.f32 %v856, %v1306
  %v1423 = vadd.f32 %v859, %v1309
  %v1424 = vadd.f32 %v864, %v1314
  %v1425 = vadd.f32 %v867, %v1317
  %v1426 = vadd.f32 %v872, %v1322
  %v1427 = vadd.f32 %v875, %v1325
  %v1428 = vadd.f32 %v880, %v1330
  %v1429 = vadd.f32 %v883, %v1333
  %v1430 = vadd.f32 %v888, %v1338
  %v1431 = vadd.f32 %v891, %v1341
  %v1432 = vadd.f32 %v896, %v1346
  %v1433 = vadd.f32 %v899, %v1349
  %v1434 = vadd.f32 %v904, %v1354
  %v1435 = vadd.f32 %v907, %v1357
  %v1436 = vadd.f32 %v912, %v1362
  %v1437 = vadd.f32 %v915, %v1365
  %v1438 = vadd.f32 %v920, %v1370
  %v1439 = vadd.f32 %v923, %v1373
  %s1440 = scalar_lea.vmem %s0, 24
  %v1441 = vld [vmem:[%s1440] sm:$0xff]
  %v1442 = vld [vmem:[%s1440 + $0x8] sm:$0xff]
  %v1443 = vld [vmem:[%s1440 + $0x18] sm:$0xff]
  %v1444 = vld [vmem:[%s1440 + $0x20] sm:$0xff]
  %v1445 = vld [vmem:[%s1440 + $0x30] sm:$0xff]
  %v1446 = vld [vmem:[%s1440 + $0x38] sm:$0xff]
  %v1447 = vld [vmem:[%s1440 + $0x48] sm:$0xff]
  %v1448 = vld [vmem:[%s1440 + $0x50] sm:$0xff]
  %v1449 = vld [vmem:[%s1440 + $0x60] sm:$0xff]
  %v1450 = vld [vmem:[%s1440 + $0x68] sm:$0xff]
  %v1451 = vld [vmem:[%s1440 + $0x78] sm:$0xff]
  %v1452 = vld [vmem:[%s1440 + $0x80] sm:$0xff]
  %v1453 = vld [vmem:[%s1440 + $0x90] sm:$0xff]
  %v1454 = vld [vmem:[%s1440 + $0x98] sm:$0xff]
  %v1455 = vld [vmem:[%s1440 + $0xa8] sm:$0xff]
  %v1456 = vld [vmem:[%s1440 + $0xb0] sm:$0xff]
  %v1457 = vld [vmem:[%s1440 + $0xc0] sm:$0xff]
  %v1458 = vld [vmem:[%s1440 + $0xc8] sm:$0xff]
  %v1459 = vld [vmem:[%s1440 + $0xd8] sm:$0xff]
  %v1460 = vld [vmem:[%s1440 + $0xe0] sm:$0xff]
  %v1461 = vld [vmem:[%s1440 + $0xf0] sm:$0xff]
  %v1462 = vld [vmem:[%s1440 + $0xf8] sm:$0xff]
  %v1463 = vld [vmem:[%s1440 + $0x108] sm:$0xff]
  %v1464 = vld [vmem:[%s1440 + $0x110] sm:$0xff]
  %v1465 = vld [vmem:[%s1440 + $0x120] sm:$0xff]
  %v1466 = vld [vmem:[%s1440 + $0x128] sm:$0xff]
  %v1467 = vld [vmem:[%s1440 + $0x138] sm:$0xff]
  %v1468 = vld [vmem:[%s1440 + $0x140] sm:$0xff]
  %v1469 = vld [vmem:[%s1440 + $0x150] sm:$0xff]
  %v1470 = vld [vmem:[%s1440 + $0x158] sm:$0xff]
  %v1471 = vld [vmem:[%s1440 + $0x168] sm:$0xff]
  %v1472 = vld [vmem:[%s1440 + $0x170] sm:$0xff]
  %v1473 = vld [vmem:[%s1440 + $0x1b0] sm:$0xff]
  %v1474 = vld [vmem:[%s1440 + $0x1b8] sm:$0xff]
  %v1475 = vld [vmem:[%s1440 + $0x1c8] sm:$0xff]
  %v1476 = vld [vmem:[%s1440 + $0x1d0] sm:$0xff]
  %v1477 = vld [vmem:[%s1440 + $0x1e0] sm:$0xff]
  %v1478 = vld [vmem:[%s1440 + $0x1e8] sm:$0xff]
  %v1479 = vld [vmem:[%s1440 + $0x1f8] sm:$0xff]
  %v1480 = vld [vmem:[%s1440 + $0x200] sm:$0xff]
  %v1481 = vld [vmem:[%s1440 + $0x210] sm:$0xff]
  %v1482 = vld [vmem:[%s1440 + $0x218] sm:$0xff]
  %v1483 = vld [vmem:[%s1440 + $0x228] sm:$0xff]
  %v1484 = vld [vmem:[%s1440 + $0x230] sm:$0xff]
  %v1485 = vld [vmem:[%s1440 + $0x240] sm:$0xff]
  %v1486 = vld [vmem:[%s1440 + $0x248] sm:$0xff]
  %v1487 = vld [vmem:[%s1440 + $0x258] sm:$0xff]
  %v1488 = vld [vmem:[%s1440 + $0x260] sm:$0xff]
  %v1489 = vld [vmem:[%s1440 + $0x270] sm:$0xff]
  %v1490 = vld [vmem:[%s1440 + $0x278] sm:$0xff]
  %v1491 = vld [vmem:[%s1440 + $0x288] sm:$0xff]
  %v1492 = vld [vmem:[%s1440 + $0x290] sm:$0xff]
  %v1493 = vld [vmem:[%s1440 + $0x2a0] sm:$0xff]
  %v1494 = vld [vmem:[%s1440 + $0x2a8] sm:$0xff]
  %v1495 = vld [vmem:[%s1440 + $0x2b8] sm:$0xff]
  %v1496 = vld [vmem:[%s1440 + $0x2c0] sm:$0xff]
  %v1497 = vld [vmem:[%s1440 + $0x2d0] sm:$0xff]
  %v1498 = vld [vmem:[%s1440 + $0x2d8] sm:$0xff]
  %v1499 = vld [vmem:[%s1440 + $0x2e8] sm:$0xff]
  %v1500 = vld [vmem:[%s1440 + $0x2f0] sm:$0xff]
  %v1501 = vld [vmem:[%s1440 + $0x300] sm:$0xff]
  %v1502 = vld [vmem:[%s1440 + $0x308] sm:$0xff]
  %v1503 = vld [vmem:[%s1440 + $0x318] sm:$0xff]
  %v1504 = vld [vmem:[%s1440 + $0x320] sm:$0xff]
  %v1505 = vpack.c.bf16 %v1442, %v1441
  %v1506 = vpack.c.bf16 %v1444, %v1443
  %v1507 = vpack.c.bf16 %v1446, %v1445
  %v1508 = vpack.c.bf16 %v1448, %v1447
  %v1509 = vpack.c.bf16 %v1450, %v1449
  %v1510 = vpack.c.bf16 %v1452, %v1451
  %v1511 = vpack.c.bf16 %v1454, %v1453
  %v1512 = vpack.c.bf16 %v1456, %v1455
  %v1513 = vpack.c.bf16 %v1458, %v1457
  %v1514 = vpack.c.bf16 %v1460, %v1459
  %v1515 = vpack.c.bf16 %v1462, %v1461
  %v1516 = vpack.c.bf16 %v1464, %v1463
  %v1517 = vpack.c.bf16 %v1466, %v1465
  %v1518 = vpack.c.bf16 %v1468, %v1467
  %v1519 = vpack.c.bf16 %v1470, %v1469
  %v1520 = vpack.c.bf16 %v1472, %v1471
  %v1521 = vpack.c.bf16 %v1474, %v1473
  %v1522 = vpack.c.bf16 %v1476, %v1475
  %v1523 = vpack.c.bf16 %v1478, %v1477
  %v1524 = vpack.c.bf16 %v1480, %v1479
  %v1525 = vpack.c.bf16 %v1482, %v1481
  %v1526 = vpack.c.bf16 %v1484, %v1483
  %v1527 = vpack.c.bf16 %v1486, %v1485
  %v1528 = vpack.c.bf16 %v1488, %v1487
  %v1529 = vpack.c.bf16 %v1490, %v1489
  %v1530 = vpack.c.bf16 %v1492, %v1491
  %v1531 = vpack.c.bf16 %v1494, %v1493
  %v1532 = vpack.c.bf16 %v1496, %v1495
  %v1533 = vpack.c.bf16 %v1498, %v1497
  %v1534 = vpack.c.bf16 %v1500, %v1499
  %v1535 = vpack.c.bf16 %v1502, %v1501
  %v1536 = vpack.c.bf16 %v1504, %v1503
  %s1537 = scalar_lea.vmem %s1, 192
  %v1538 = vld [vmem:[%s1537] sm:$0xf]
  %v1539 = vld [vmem:[%s1537 + $0x4] sm:$0xf]
  %v1540 = vld [vmem:[%s1537 + $0x8] sm:$0xf]
  %v1541 = vld [vmem:[%s1537 + $0xc] sm:$0xf]
  %v1542 = vld [vmem:[%s1537 + $0x10] sm:$0xf]
  %v1543 = vld [vmem:[%s1537 + $0x14] sm:$0xf]
  %v1544 = vld [vmem:[%s1537 + $0x18] sm:$0xf]
  %v1545 = vld [vmem:[%s1537 + $0x1c] sm:$0xf]
  %v1546 = vld [vmem:[%s1537 + $0x20] sm:$0xf]
  %v1547 = vld [vmem:[%s1537 + $0x24] sm:$0xf]
  %v1548 = vld [vmem:[%s1537 + $0x28] sm:$0xf]
  %v1549 = vld [vmem:[%s1537 + $0x2c] sm:$0xf]
  %v1550 = vld [vmem:[%s1537 + $0x30] sm:$0xf]
  %v1551 = vld [vmem:[%s1537 + $0x34] sm:$0xf]
  %v1552 = vld [vmem:[%s1537 + $0x38] sm:$0xf]
  %v1553 = vld [vmem:[%s1537 + $0x3c] sm:$0xf]
  %v1570 = vunpack.c.l.b16 %v1538
  %v1571 = vunpack.c.l.b16 %v1539
  %v1572 = vunpack.c.l.b16 %v1540
  %v1573 = vunpack.c.l.b16 %v1541
  %v1574 = vunpack.c.l.b16 %v1542
  %v1575 = vunpack.c.l.b16 %v1543
  %v1576 = vunpack.c.l.b16 %v1544
  %v1577 = vunpack.c.l.b16 %v1545
  %v1578 = vunpack.c.l.b16 %v1546
  %v1579 = vunpack.c.l.b16 %v1547
  %v1580 = vunpack.c.l.b16 %v1548
  %v1581 = vunpack.c.l.b16 %v1549
  %v1582 = vunpack.c.l.b16 %v1550
  %v1583 = vunpack.c.l.b16 %v1551
  %v1584 = vunpack.c.l.b16 %v1552
  %v1585 = vunpack.c.l.b16 %v1553
  %v1586 = vpack.c.b16 %v1571, %v1570
  %v1587 = vpack.c.b16 %v1573, %v1572
  %v1588 = vpack.c.b16 %v1575, %v1574
  %v1589 = vpack.c.b16 %v1577, %v1576
  %v1590 = vpack.c.b16 %v1579, %v1578
  %v1591 = vpack.c.b16 %v1581, %v1580
  %v1592 = vpack.c.b16 %v1583, %v1582
  %v1593 = vpack.c.b16 %v1585, %v1584
  %1602 = vmatprep.subr.bf16.mxu0 0
  %1603 = vmatpush1.bf16.msra.mxu0 %v1586
  %1604 = vmatprep.subr.bf16.mxu0 0
  %1605 = vmatpush1.bf16.msra.mxu0 %v1587
  %1606 = vmatprep.subr.bf16.mxu0 0
  %1607 = vmatpush1.bf16.msra.mxu0 %v1588
  %1608 = vmatprep.subr.bf16.mxu0 0
  %1609 = vmatpush1.bf16.msra.mxu0 %v1589
  %1610 = vmatprep.subr.bf16.mxu0 0
  %1611 = vmatpush1.bf16.msra.mxu0 %v1590
  %1612 = vmatprep.subr.bf16.mxu0 0
  %1613 = vmatpush1.bf16.msra.mxu0 %v1591
  %1614 = vmatprep.subr.bf16.mxu0 0
  %1615 = vmatpush1.bf16.msra.mxu0 %v1592
  %1616 = vmatprep.subr.bf16.mxu0 0
  %1617 = vmatpush1.bf16.msra.mxu0 %v1593
  %1618 = vmatprep.subr.bf16.mxu0 0
  %1619 = vmatpush1.bf16.msra.mxu0 0
  %1620 = vmatprep.subr.bf16.mxu0 0
  %1621 = vmatpush1.bf16.msra.mxu0 0
  %1622 = vmatprep.subr.bf16.mxu0 0
  %1623 = vmatpush1.bf16.msra.mxu0 0
  %1624 = vmatprep.subr.bf16.mxu0 0
  %1625 = vmatpush1.bf16.msra.mxu0 0
  %1626 = vmatprep.subr.bf16.mxu0 0
  %1627 = vmatpush1.bf16.msra.mxu0 0
  %1628 = vmatprep.subr.bf16.mxu0 0
  %1629 = vmatpush1.bf16.msra.mxu0 0
  %1630 = vmatprep.subr.bf16.mxu0 0
  %1631 = vmatpush1.bf16.msra.mxu0 0
  %1632 = vmatprep.subr.bf16.mxu0 0
  %1633 = vmatpush1.bf16.msra.mxu0 0
  %1634 = vmatprep.mubr.bf16.mxu0 0
  %1635 = vmatmul.mubr.bf16.gmra.mrb[0].mxu0 %v1505
  %v1636 = vpop.f32.mrb[0].mxu0
  %v1637 = vadd.f32 0.0, %v1636
  %v1638 = vpop.f32.mrb[0].mxu0
  %v1639 = vpop.f32.mrb[0].mxu0
  %v1640 = vadd.f32 0.0, %v1639
  %v1641 = vpop.f32.mrb[0].mxu0
  %1642 = vmatprep.mubr.bf16.mxu0 0
  %1643 = vmatmul.mubr.bf16.gmra.mrb[0].mxu0 %v1506
  %v1644 = vpop.f32.mrb[0].mxu0
  %v1645 = vadd.f32 0.0, %v1644
  %v1646 = vpop.f32.mrb[0].mxu0
  %v1647 = vpop.f32.mrb[0].mxu0
  %v1648 = vadd.f32 0.0, %v1647
  %v1649 = vpop.f32.mrb[0].mxu0
  %1650 = vmatprep.mubr.bf16.mxu0 0
  %1651 = vmatmul.mubr.bf16.gmra.mrb[0].mxu0 %v1507
  %v1652 = vpop.f32.mrb[0].mxu0
  %v1653 = vadd.f32 0.0, %v1652
  %v1654 = vpop.f32.mrb[0].mxu0
  %v1655 = vpop.f32.mrb[0].mxu0
  %v1656 = vadd.f32 0.0, %v1655
  %v1657 = vpop.f32.mrb[0].mxu0
  %1658 = vmatprep.mubr.bf16.mxu0 0
  %1659 = vmatmul.mubr.bf16.gmra.mrb[0].mxu0 %v1508
  %v1660 = vpop.f32.mrb[0].mxu0
  %v1661 = vadd.f32 0.0, %v1660
  %v1662 = vpop.f32.mrb[0].mxu0
  %v1663 = vpop.f32.mrb[0].mxu0
  %v1664 = vadd.f32 0.0, %v1663
  %v1665 = vpop.f32.mrb[0].mxu0
  %1666 = vmatprep.mubr.bf16.mxu0 0
  %1667 = vmatmul.mubr.bf16.gmra.mrb[0].mxu0 %v1509
  %v1668 = vpop.f32.mrb[0].mxu0
  %v1669 = vadd.f32 0.0, %v1668
  %v1670 = vpop.f32.mrb[0].mxu0
  %v1671 = vpop.f32.mrb[0].mxu0
  %v1672 = vadd.f32 0.0, %v1671
  %v1673 = vpop.f32.mrb[0].mxu0
  %1674 = vmatprep.mubr.bf16.mxu0 0
  %1675 = vmatmul.mubr.bf16.gmra.mrb[0].mxu0 %v1510
  %v1676 = vpop.f32.mrb[0].mxu0
  %v1677 = vadd.f32 0.0, %v1676
  %v1678 = vpop.f32.mrb[0].mxu0
  %v1679 = vpop.f32.mrb[0].mxu0
  %v1680 = vadd.f32 0.0, %v1679
  %v1681 = vpop.f32.mrb[0].mxu0
  %1682 = vmatprep.mubr.bf16.mxu0 0
  %1683 = vmatmul.mubr.bf16.gmra.mrb[0].mxu0 %v1511
  %v1684 = vpop.f32.mrb[0].mxu0
  %v1685 = vadd.f32 0.0, %v1684
  %v1686 = vpop.f32.mrb[0].mxu0
  %v1687 = vpop.f32.mrb[0].mxu0
  %v1688 = vadd.f32 0.0, %v1687
  %v1689 = vpop.f32.mrb[0].mxu0
  %1690 = vmatprep.mubr.bf16.mxu0 0
  %1691 = vmatmul.mubr.bf16.gmra.mrb[0].mxu0 %v1512
  %v1692 = vpop.f32.mrb[0].mxu0
  %v1693 = vadd.f32 0.0, %v1692
  %v1694 = vpop.f32.mrb[0].mxu0
  %v1695 = vpop.f32.mrb[0].mxu0
  %v1696 = vadd.f32 0.0, %v1695
  %v1697 = vpop.f32.mrb[0].mxu0
  %1698 = vmatprep.mubr.bf16.mxu0 0
  %1699 = vmatmul.mubr.bf16.gmra.mrb[0].mxu0 %v1513
  %v1700 = vpop.f32.mrb[0].mxu0
  %v1701 = vadd.f32 0.0, %v1700
  %v1702 = vpop.f32.mrb[0].mxu0
  %v1703 = vpop.f32.mrb[0].mxu0
  %v1704 = vadd.f32 0.0, %v1703
  %v1705 = vpop.f32.mrb[0].mxu0
  %1706 = vmatprep.mubr.bf16.mxu0 0
  %1707 = vmatmul.mubr.bf16.gmra.mrb[0].mxu0 %v1514
  %v1708 = vpop.f32.mrb[0].mxu0
  %v1709 = vadd.f32 0.0, %v1708
  %v1710 = vpop.f32.mrb[0].mxu0
  %v1711 = vpop.f32.mrb[0].mxu0
  %v1712 = vadd.f32 0.0, %v1711
  %v1713 = vpop.f32.mrb[0].mxu0
  %1714 = vmatprep.mubr.bf16.mxu0 0
  %1715 = vmatmul.mubr.bf16.gmra.mrb[0].mxu0 %v1515
  %v1716 = vpop.f32.mrb[0].mxu0
  %v1717 = vadd.f32 0.0, %v1716
  %v1718 = vpop.f32.mrb[0].mxu0
  %v1719 = vpop.f32.mrb[0].mxu0
  %v1720 = vadd.f32 0.0, %v1719
  %v1721 = vpop.f32.mrb[0].mxu0
  %1722 = vmatprep.mubr.bf16.mxu0 0
  %1723 = vmatmul.mubr.bf16.gmra.mrb[0].mxu0 %v1516
  %v1724 = vpop.f32.mrb[0].mxu0
  %v1725 = vadd.f32 0.0, %v1724
  %v1726 = vpop.f32.mrb[0].mxu0
  %v1727 = vpop.f32.mrb[0].mxu0
  %v1728 = vadd.f32 0.0, %v1727
  %v1729 = vpop.f32.mrb[0].mxu0
  %1730 = vmatprep.mubr.bf16.mxu0 0
  %1731 = vmatmul.mubr.bf16.gmra.mrb[0].mxu0 %v1517
  %v1732 = vpop.f32.mrb[0].mxu0
  %v1733 = vadd.f32 0.0, %v1732
  %v1734 = vpop.f32.mrb[0].mxu0
  %v1735 = vpop.f32.mrb[0].mxu0
  %v1736 = vadd.f32 0.0, %v1735
  %v1737 = vpop.f32.mrb[0].mxu0
  %1738 = vmatprep.mubr.bf16.mxu0 0
  %1739 = vmatmul.mubr.bf16.gmra.mrb[0].mxu0 %v1518
  %v1740 = vpop.f32.mrb[0].mxu0
  %v1741 = vadd.f32 0.0, %v1740
  %v1742 = vpop.f32.mrb[0].mxu0
  %v1743 = vpop.f32.mrb[0].mxu0
  %v1744 = vadd.f32 0.0, %v1743
  %v1745 = vpop.f32.mrb[0].mxu0
  %1746 = vmatprep.mubr.bf16.mxu0 0
  %1747 = vmatmul.mubr.bf16.gmra.mrb[0].mxu0 %v1519
  %v1748 = vpop.f32.mrb[0].mxu0
  %v1749 = vadd.f32 0.0, %v1748
  %v1750 = vpop.f32.mrb[0].mxu0
  %v1751 = vpop.f32.mrb[0].mxu0
  %v1752 = vadd.f32 0.0, %v1751
  %v1753 = vpop.f32.mrb[0].mxu0
  %1754 = vmatprep.mubr.bf16.mxu0 0
  %1755 = vmatmul.mubr.bf16.gmra.mrb[0].mxu0 %v1520
  %v1756 = vpop.f32.mrb[0].mxu0
  %v1757 = vadd.f32 0.0, %v1756
  %v1758 = vpop.f32.mrb[0].mxu0
  %v1759 = vpop.f32.mrb[0].mxu0
  %v1760 = vadd.f32 0.0, %v1759
  %v1761 = vpop.f32.mrb[0].mxu0
  %1762 = vmatprep.mubr.bf16.mxu0 0
  %1763 = vmatmul.mubr.bf16.gmra.mrb[0].mxu0 %v1521
  %v1764 = vpop.f32.mrb[0].mxu0
  %v1765 = vadd.f32 0.0, %v1764
  %v1766 = vpop.f32.mrb[0].mxu0
  %v1767 = vpop.f32.mrb[0].mxu0
  %v1768 = vadd.f32 0.0, %v1767
  %v1769 = vpop.f32.mrb[0].mxu0
  %1770 = vmatprep.mubr.bf16.mxu0 0
  %1771 = vmatmul.mubr.bf16.gmra.mrb[0].mxu0 %v1522
  %v1772 = vpop.f32.mrb[0].mxu0
  %v1773 = vadd.f32 0.0, %v1772
  %v1774 = vpop.f32.mrb[0].mxu0
  %v1775 = vpop.f32.mrb[0].mxu0
  %v1776 = vadd.f32 0.0, %v1775
  %v1777 = vpop.f32.mrb[0].mxu0
  %1778 = vmatprep.mubr.bf16.mxu0 0
  %1779 = vmatmul.mubr.bf16.gmra.mrb[0].mxu0 %v1523
  %v1780 = vpop.f32.mrb[0].mxu0
  %v1781 = vadd.f32 0.0, %v1780
  %v1782 = vpop.f32.mrb[0].mxu0
  %v1783 = vpop.f32.mrb[0].mxu0
  %v1784 = vadd.f32 0.0, %v1783
  %v1785 = vpop.f32.mrb[0].mxu0
  %1786 = vmatprep.mubr.bf16.mxu0 0
  %1787 = vmatmul.mubr.bf16.gmra.mrb[0].mxu0 %v1524
  %v1788 = vpop.f32.mrb[0].mxu0
  %v1789 = vadd.f32 0.0, %v1788
  %v1790 = vpop.f32.mrb[0].mxu0
  %v1791 = vpop.f32.mrb[0].mxu0
  %v1792 = vadd.f32 0.0, %v1791
  %v1793 = vpop.f32.mrb[0].mxu0
  %1794 = vmatprep.mubr.bf16.mxu0 0
  %1795 = vmatmul.mubr.bf16.gmra.mrb[0].mxu0 %v1525
  %v1796 = vpop.f32.mrb[0].mxu0
  %v1797 = vadd.f32 0.0, %v1796
  %v1798 = vpop.f32.mrb[0].mxu0
  %v1799 = vpop.f32.mrb[0].mxu0
  %v1800 = vadd.f32 0.0, %v1799
  %v1801 = vpop.f32.mrb[0].mxu0
  %1802 = vmatprep.mubr.bf16.mxu0 0
  %1803 = vmatmul.mubr.bf16.gmra.mrb[0].mxu0 %v1526
  %v1804 = vpop.f32.mrb[0].mxu0
  %v1805 = vadd.f32 0.0, %v1804
  %v1806 = vpop.f32.mrb[0].mxu0
  %v1807 = vpop.f32.mrb[0].mxu0
  %v1808 = vadd.f32 0.0, %v1807
  %v1809 = vpop.f32.mrb[0].mxu0
  %1810 = vmatprep.mubr.bf16.mxu0 0
  %1811 = vmatmul.mubr.bf16.gmra.mrb[0].mxu0 %v1527
  %v1812 = vpop.f32.mrb[0].mxu0
  %v1813 = vadd.f32 0.0, %v1812
  %v1814 = vpop.f32.mrb[0].mxu0
  %v1815 = vpop.f32.mrb[0].mxu0
  %v1816 = vadd.f32 0.0, %v1815
  %v1817 = vpop.f32.mrb[0].mxu0
  %1818 = vmatprep.mubr.bf16.mxu0 0
  %1819 = vmatmul.mubr.bf16.gmra.mrb[0].mxu0 %v1528
  %v1820 = vpop.f32.mrb[0].mxu0
  %v1821 = vadd.f32 0.0, %v1820
  %v1822 = vpop.f32.mrb[0].mxu0
  %v1823 = vpop.f32.mrb[0].mxu0
  %v1824 = vadd.f32 0.0, %v1823
  %v1825 = vpop.f32.mrb[0].mxu0
  %1826 = vmatprep.mubr.bf16.mxu0 0
  %1827 = vmatmul.mubr.bf16.gmra.mrb[0].mxu0 %v1529
  %v1828 = vpop.f32.mrb[0].mxu0
  %v1829 = vadd.f32 0.0, %v1828
  %v1830 = vpop.f32.mrb[0].mxu0
  %v1831 = vpop.f32.mrb[0].mxu0
  %v1832 = vadd.f32 0.0, %v1831
  %v1833 = vpop.f32.mrb[0].mxu0
  %1834 = vmatprep.mubr.bf16.mxu0 0
  %1835 = vmatmul.mubr.bf16.gmra.mrb[0].mxu0 %v1530
  %v1836 = vpop.f32.mrb[0].mxu0
  %v1837 = vadd.f32 0.0, %v1836
  %v1838 = vpop.f32.mrb[0].mxu0
  %v1839 = vpop.f32.mrb[0].mxu0
  %v1840 = vadd.f32 0.0, %v1839
  %v1841 = vpop.f32.mrb[0].mxu0
  %1842 = vmatprep.mubr.bf16.mxu0 0
  %1843 = vmatmul.mubr.bf16.gmra.mrb[0].mxu0 %v1531
  %v1844 = vpop.f32.mrb[0].mxu0
  %v1845 = vadd.f32 0.0, %v1844
  %v1846 = vpop.f32.mrb[0].mxu0
  %v1847 = vpop.f32.mrb[0].mxu0
  %v1848 = vadd.f32 0.0, %v1847
  %v1849 = vpop.f32.mrb[0].mxu0
  %1850 = vmatprep.mubr.bf16.mxu0 0
  %1851 = vmatmul.mubr.bf16.gmra.mrb[0].mxu0 %v1532
  %v1852 = vpop.f32.mrb[0].mxu0
  %v1853 = vadd.f32 0.0, %v1852
  %v1854 = vpop.f32.mrb[0].mxu0
  %v1855 = vpop.f32.mrb[0].mxu0
  %v1856 = vadd.f32 0.0, %v1855
  %v1857 = vpop.f32.mrb[0].mxu0
  %1858 = vmatprep.mubr.bf16.mxu0 0
  %1859 = vmatmul.mubr.bf16.gmra.mrb[0].mxu0 %v1533
  %v1860 = vpop.f32.mrb[0].mxu0
  %v1861 = vadd.f32 0.0, %v1860
  %v1862 = vpop.f32.mrb[0].mxu0
  %v1863 = vpop.f32.mrb[0].mxu0
  %v1864 = vadd.f32 0.0, %v1863
  %v1865 = vpop.f32.mrb[0].mxu0
  %1866 = vmatprep.mubr.bf16.mxu0 0
  %1867 = vmatmul.mubr.bf16.gmra.mrb[0].mxu0 %v1534
  %v1868 = vpop.f32.mrb[0].mxu0
  %v1869 = vadd.f32 0.0, %v1868
  %v1870 = vpop.f32.mrb[0].mxu0
  %v1871 = vpop.f32.mrb[0].mxu0
  %v1872 = vadd.f32 0.0, %v1871
  %v1873 = vpop.f32.mrb[0].mxu0
  %1874 = vmatprep.mubr.bf16.mxu0 0
  %1875 = vmatmul.mubr.bf16.gmra.mrb[0].mxu0 %v1535
  %v1876 = vpop.f32.mrb[0].mxu0
  %v1877 = vadd.f32 0.0, %v1876
  %v1878 = vpop.f32.mrb[0].mxu0
  %v1879 = vpop.f32.mrb[0].mxu0
  %v1880 = vadd.f32 0.0, %v1879
  %v1881 = vpop.f32.mrb[0].mxu0
  %1882 = vmatprep.mubr.bf16.mxu0 0
  %1883 = vmatmul.mubr.bf16.gmra.mrb[0].mxu0 %v1536
  %v1884 = vpop.f32.mrb[0].mxu0
  %v1885 = vadd.f32 0.0, %v1884
  %v1886 = vpop.f32.mrb[0].mxu0
  %v1887 = vpop.f32.mrb[0].mxu0
  %v1888 = vadd.f32 0.0, %v1887
  %v1889 = vpop.f32.mrb[0].mxu0
  %1890 = vdwg.mxu0
  %v1891 = vadd.f32 %v1376, %v1637
  %v1892 = vadd.f32 %v1377, %v1640
  %v1893 = vadd.f32 %v1378, %v1645
  %v1894 = vadd.f32 %v1379, %v1648
  %v1895 = vadd.f32 %v1380, %v1653
  %v1896 = vadd.f32 %v1381, %v1656
  %v1897 = vadd.f32 %v1382, %v1661
  %v1898 = vadd.f32 %v1383, %v1664
  %v1899 = vadd.f32 %v1384, %v1669
  %v1900 = vadd.f32 %v1385, %v1672
  %v1901 = vadd.f32 %v1386, %v1677
  %v1902 = vadd.f32 %v1387, %v1680
  %v1903 = vadd.f32 %v1388, %v1685
  %v1904 = vadd.f32 %v1389, %v1688
  %v1905 = vadd.f32 %v1390, %v1693
  %v1906 = vadd.f32 %v1391, %v1696
  %v1907 = vadd.f32 %v1392, %v1701
  %v1908 = vadd.f32 %v1393, %v1704
  %v1909 = vadd.f32 %v1394, %v1709
  %v1910 = vadd.f32 %v1395, %v1712
  %v1911 = vadd.f32 %v1396, %v1717
  %v1912 = vadd.f32 %v1397, %v1720
  %v1913 = vadd.f32 %v1398, %v1725
  %v1914 = vadd.f32 %v1399, %v1728
  %v1915 = vadd.f32 %v1400, %v1733
  %v1916 = vadd.f32 %v1401, %v1736
  %v1917 = vadd.f32 %v1402, %v1741
  %v1918 = vadd.f32 %v1403, %v1744
  %v1919 = vadd.f32 %v1404, %v1749
  %v1920 = vadd.f32 %v1405, %v1752
  %v1921 = vadd.f32 %v1406, %v1757
  %v1922 = vadd.f32 %v1407, %v1760
  %v1923 = vadd.f32 %v1408, %v1765
  %v1924 = vadd.f32 %v1409, %v1768
  %v1925 = vadd.f32 %v1410, %v1773
  %v1926 = vadd.f32 %v1411, %v1776
  %v1927 = vadd.f32 %v1412, %v1781
  %v1928 = vadd.f32 %v1413, %v1784
  %v1929 = vadd.f32 %v1414, %v1789
  %v1930 = vadd.f32 %v1415, %v1792
  %v1931 = vadd.f32 %v1416, %v1797
  %v1932 = vadd.f32 %v1417, %v1800
  %v1933 = vadd.f32 %v1418, %v1805
  %v1934 = vadd.f32 %v1419, %v1808
  %v1935 = vadd.f32 %v1420, %v1813
  %v1936 = vadd.f32 %v1421, %v1816
  %v1937 = vadd.f32 %v1422, %v1821
  %v1938 = vadd.f32 %v1423, %v1824
  %v1939 = vadd.f32 %v1424, %v1829
  %v1940 = vadd.f32 %v1425, %v1832
  %v1941 = vadd.f32 %v1426, %v1837
  %v1942 = vadd.f32 %v1427, %v1840
  %v1943 = vadd.f32 %v1428, %v1845
  %v1944 = vadd.f32 %v1429, %v1848
  %v1945 = vadd.f32 %v1430, %v1853
  %v1946 = vadd.f32 %v1431, %v1856
  %v1947 = vadd.f32 %v1432, %v1861
  %v1948 = vadd.f32 %v1433, %v1864
  %v1949 = vadd.f32 %v1434, %v1869
  %v1950 = vadd.f32 %v1435, %v1872
  %v1951 = vadd.f32 %v1436, %v1877
  %v1952 = vadd.f32 %v1437, %v1880
  %v1953 = vadd.f32 %v1438, %v1885
  %v1954 = vadd.f32 %v1439, %v1888
  %v1955 = vld [vmem:[%s1440 + $0x1] sm:$0xff]
  %v1956 = vld [vmem:[%s1440 + $0x9] sm:$0xff]
  %v1957 = vld [vmem:[%s1440 + $0x19] sm:$0xff]
  %v1958 = vld [vmem:[%s1440 + $0x21] sm:$0xff]
  %v1959 = vld [vmem:[%s1440 + $0x31] sm:$0xff]
  %v1960 = vld [vmem:[%s1440 + $0x39] sm:$0xff]
  %v1961 = vld [vmem:[%s1440 + $0x49] sm:$0xff]
  %v1962 = vld [vmem:[%s1440 + $0x51] sm:$0xff]
  %v1963 = vld [vmem:[%s1440 + $0x61] sm:$0xff]
  %v1964 = vld [vmem:[%s1440 + $0x69] sm:$0xff]
  %v1965 = vld [vmem:[%s1440 + $0x79] sm:$0xff]
  %v1966 = vld [vmem:[%s1440 + $0x81] sm:$0xff]
  %v1967 = vld [vmem:[%s1440 + $0x91] sm:$0xff]
  %v1968 = vld [vmem:[%s1440 + $0x99] sm:$0xff]
  %v1969 = vld [vmem:[%s1440 + $0xa9] sm:$0xff]
  %v1970 = vld [vmem:[%s1440 + $0xb1] sm:$0xff]
  %v1971 = vld [vmem:[%s1440 + $0xc1] sm:$0xff]
  %v1972 = vld [vmem:[%s1440 + $0xc9] sm:$0xff]
  %v1973 = vld [vmem:[%s1440 + $0xd9] sm:$0xff]
  %v1974 = vld [vmem:[%s1440 + $0xe1] sm:$0xff]
  %v1975 = vld [vmem:[%s1440 + $0xf1] sm:$0xff]
  %v1976 = vld [vmem:[%s1440 + $0xf9] sm:$0xff]
  %v1977 = vld [vmem:[%s1440 + $0x109] sm:$0xff]
  %v1978 = vld [vmem:[%s1440 + $0x111] sm:$0xff]
  %v1979 = vld [vmem:[%s1440 + $0x121] sm:$0xff]
  %v1980 = vld [vmem:[%s1440 + $0x129] sm:$0xff]
  %v1981 = vld [vmem:[%s1440 + $0x139] sm:$0xff]
  %v1982 = vld [vmem:[%s1440 + $0x141] sm:$0xff]
  %v1983 = vld [vmem:[%s1440 + $0x151] sm:$0xff]
  %v1984 = vld [vmem:[%s1440 + $0x159] sm:$0xff]
  %v1985 = vld [vmem:[%s1440 + $0x169] sm:$0xff]
  %v1986 = vld [vmem:[%s1440 + $0x171] sm:$0xff]
  %v1987 = vld [vmem:[%s1440 + $0x1b1] sm:$0xff]
  %v1988 = vld [vmem:[%s1440 + $0x1b9] sm:$0xff]
  %v1989 = vld [vmem:[%s1440 + $0x1c9] sm:$0xff]
  %v1990 = vld [vmem:[%s1440 + $0x1d1] sm:$0xff]
  %v1991 = vld [vmem:[%s1440 + $0x1e1] sm:$0xff]
  %v1992 = vld [vmem:[%s1440 + $0x1e9] sm:$0xff]
  %v1993 = vld [vmem:[%s1440 + $0x1f9] sm:$0xff]
  %v1994 = vld [vmem:[%s1440 + $0x201] sm:$0xff]
  %v1995 = vld [vmem:[%s1440 + $0x211] sm:$0xff]
  %v1996 = vld [vmem:[%s1440 + $0x219] sm:$0xff]
  %v1997 = vld [vmem:[%s1440 + $0x229] sm:$0xff]
  %v1998 = vld [vmem:[%s1440 + $0x231] sm:$0xff]
  %v1999 = vld [vmem:[%s1440 + $0x241] sm:$0xff]
  %v2000 = vld [vmem:[%s1440 + $0x249] sm:$0xff]
  %v2001 = vld [vmem:[%s1440 + $0x259] sm:$0xff]
  %v2002 = vld [vmem:[%s1440 + $0x261] sm:$0xff]
  %v2003 = vld [vmem:[%s1440 + $0x271] sm:$0xff]
  %v2004 = vld [vmem:[%s1440 + $0x279] sm:$0xff]
  %v2005 = vld [vmem:[%s1440 + $0x289] sm:$0xff]
  %v2006 = vld [vmem:[%s1440 + $0x291] sm:$0xff]
  %v2007 = vld [vmem:[%s1440 + $0x2a1] sm:$0xff]
  %v2008 = vld [vmem:[%s1440 + $0x2a9] sm:$0xff]
  %v2009 = vld [vmem:[%s1440 + $0x2b9] sm:$0xff]
  %v2010 = vld [vmem:[%s1440 + $0x2c1] sm:$0xff]
  %v2011 = vld [vmem:[%s1440 + $0x2d1] sm:$0xff]
  %v2012 = vld [vmem:[%s1440 + $0x2d9] sm:$0xff]
  %v2013 = vld [vmem:[%s1440 + $0x2e9] sm:$0xff]
  %v2014 = vld [vmem:[%s1440 + $0x2f1] sm:$0xff]
  %v2015 = vld [vmem:[%s1440 + $0x301] sm:$0xff]
  %v2016 = vld [vmem:[%s1440 + $0x309] sm:$0xff]
  %v2017 = vld [vmem:[%s1440 + $0x319] sm:$0xff]
  %v2018 = vld [vmem:[%s1440 + $0x321] sm:$0xff]
  %v2019 = vpack.c.bf16 %v1956, %v1955
  %v2020 = vpack.c.bf16 %v1958, %v1957
  %v2021 = vpack.c.bf16 %v1960, %v1959
  %v2022 = vpack.c.bf16 %v1962, %v1961
  %v2023 = vpack.c.bf16 %v1964, %v1963
  %v2024 = vpack.c.bf16 %v1966, %v1965
  %v2025 = vpack.c.bf16 %v1968, %v1967
  %v2026 = vpack.c.bf16 %v1970, %v1969
  %v2027 = vpack.c.bf16 %v1972, %v1971
  %v2028 = vpack.c.bf16 %v1974, %v1973
  %v2029 = vpack.c.bf16 %v1976, %v1975
  %v2030 = vpack.c.bf16 %v1978, %v1977
  %v2031 = vpack.c.bf16 %v1980, %v1979
  %v2032 = vpack.c.bf16 %v1982, %v1981
  %v2033 = vpack.c.bf16 %v1984, %v1983
  %v2034 = vpack.c.bf16 %v1986, %v1985
  %v2035 = vpack.c.bf16 %v1988, %v1987
  %v2036 = vpack.c.bf16 %v1990, %v1989
  %v2037 = vpack.c.bf16 %v1992, %v1991
  %v2038 = vpack.c.bf16 %v1994, %v1993
  %v2039 = vpack.c.bf16 %v1996, %v1995
  %v2040 = vpack.c.bf16 %v1998, %v1997
  %v2041 = vpack.c.bf16 %v2000, %v1999
  %v2042 = vpack.c.bf16 %v2002, %v2001
  %v2043 = vpack.c.bf16 %v2004, %v2003
  %v2044 = vpack.c.bf16 %v2006, %v2005
  %v2045 = vpack.c.bf16 %v2008, %v2007
  %v2046 = vpack.c.bf16 %v2010, %v2009
  %v2047 = vpack.c.bf16 %v2012, %v2011
  %v2048 = vpack.c.bf16 %v2014, %v2013
  %v2049 = vpack.c.bf16 %v2016, %v2015
  %v2050 = vpack.c.bf16 %v2018, %v2017
  %s2051 = scalar_lea.vmem %s1, 256
  %v2052 = vld [vmem:[%s2051] sm:$0xf]
  %v2053 = vld [vmem:[%s2051 + $0x4] sm:$0xf]
  %v2054 = vld [vmem:[%s2051 + $0x8] sm:$0xf]
  %v2055 = vld [vmem:[%s2051 + $0xc] sm:$0xf]
  %v2056 = vld [vmem:[%s2051 + $0x10] sm:$0xf]
  %v2057 = vld [vmem:[%s2051 + $0x14] sm:$0xf]
  %v2058 = vld [vmem:[%s2051 + $0x18] sm:$0xf]
  %v2059 = vld [vmem:[%s2051 + $0x1c] sm:$0xf]
  %v2060 = vld [vmem:[%s2051 + $0x20] sm:$0xf]
  %v2061 = vld [vmem:[%s2051 + $0x24] sm:$0xf]
  %v2062 = vld [vmem:[%s2051 + $0x28] sm:$0xf]
  %v2063 = vld [vmem:[%s2051 + $0x2c] sm:$0xf]
  %v2064 = vld [vmem:[%s2051 + $0x30] sm:$0xf]
  %v2065 = vld [vmem:[%s2051 + $0x34] sm:$0xf]
  %v2066 = vld [vmem:[%s2051 + $0x38] sm:$0xf]
  %v2067 = vld [vmem:[%s2051 + $0x3c] sm:$0xf]
  %v2084 = vunpack.c.l.b16 %v2052
  %v2085 = vunpack.c.l.b16 %v2053
  %v2086 = vunpack.c.l.b16 %v2054
  %v2087 = vunpack.c.l.b16 %v2055
  %v2088 = vunpack.c.l.b16 %v2056
  %v2089 = vunpack.c.l.b16 %v2057
  %v2090 = vunpack.c.l.b16 %v2058
  %v2091 = vunpack.c.l.b16 %v2059
  %v2092 = vunpack.c.l.b16 %v2060
  %v2093 = vunpack.c.l.b16 %v2061
  %v2094 = vunpack.c.l.b16 %v2062
  %v2095 = vunpack.c.l.b16 %v2063
  %v2096 = vunpack.c.l.b16 %v2064
  %v2097 = vunpack.c.l.b16 %v2065
  %v2098 = vunpack.c.l.b16 %v2066
  %v2099 = vunpack.c.l.b16 %v2067
  %v2100 = vpack.c.b16 %v2085, %v2084
  %v2101 = vpack.c.b16 %v2087, %v2086
  %v2102 = vpack.c.b16 %v2089, %v2088
  %v2103 = vpack.c.b16 %v2091, %v2090
  %v2104 = vpack.c.b16 %v2093, %v2092
  %v2105 = vpack.c.b16 %v2095, %v2094
  %v2106 = vpack.c.b16 %v2097, %v2096
  %v2107 = vpack.c.b16 %v2099, %v2098
  %2116 = vmatprep.subr.bf16.mxu0 0
  %2117 = vmatpush1.bf16.msra.mxu0 %v2100
  %2118 = vmatprep.subr.bf16.mxu0 0
  %2119 = vmatpush1.bf16.msra.mxu0 %v2101
  %2120 = vmatprep.subr.bf16.mxu0 0
  %2121 = vmatpush1.bf16.msra.mxu0 %v2102
  %2122 = vmatprep.subr.bf16.mxu0 0
  %2123 = vmatpush1.bf16.msra.mxu0 %v2103
  %2124 = vmatprep.subr.bf16.mxu0 0
  %2125 = vmatpush1.bf16.msra.mxu0 %v2104
  %2126 = vmatprep.subr.bf16.mxu0 0
  %2127 = vmatpush1.bf16.msra.mxu0 %v2105
  %2128 = vmatprep.subr.bf16.mxu0 0
  %2129 = vmatpush1.bf16.msra.mxu0 %v2106
  %2130 = vmatprep.subr.bf16.mxu0 0
  %2131 = vmatpush1.bf16.msra.mxu0 %v2107
  %2132 = vmatprep.subr.bf16.mxu0 0
  %2133 = vmatpush1.bf16.msra.mxu0 0
  %2134 = vmatprep.subr.bf16.mxu0 0
  %2135 = vmatpush1.bf16.msra.mxu0 0
  %2136 = vmatprep.subr.bf16.mxu0 0
  %2137 = vmatpush1.bf16.msra.mxu0 0
  %2138 = vmatprep.subr.bf16.mxu0 0
  %2139 = vmatpush1.bf16.msra.mxu0 0
  %2140 = vmatprep.subr.bf16.mxu0 0
  %2141 = vmatpush1.bf16.msra.mxu0 0
  %2142 = vmatprep.subr.bf16.mxu0 0
  %2143 = vmatpush1.bf16.msra.mxu0 0
  %2144 = vmatprep.subr.bf16.mxu0 0
  %2145 = vmatpush1.bf16.msra.mxu0 0
  %2146 = vmatprep.subr.bf16.mxu0 0
  %2147 = vmatpush1.bf16.msra.mxu0 0
  %2148 = vmatprep.mubr.bf16.mxu0 0
  %2149 = vmatmul.mubr.bf16.gmra.mrb[0].mxu0 %v2019
  %v2150 = vpop.f32.mrb[0].mxu0
  %v2151 = vadd.f32 0.0, %v2150
  %v2152 = vpop.f32.mrb[0].mxu0
  %v2153 = vpop.f32.mrb[0].mxu0
  %v2154 = vadd.f32 0.0, %v2153
  %v2155 = vpop.f32.mrb[0].mxu0
  %2156 = vmatprep.mubr.bf16.mxu0 0
  %2157 = vmatmul.mubr.bf16.gmra.mrb[0].mxu0 %v2020
  %v2158 = vpop.f32.mrb[0].mxu0
  %v2159 = vadd.f32 0.0, %v2158
  %v2160 = vpop.f32.mrb[0].mxu0
  %v2161 = vpop.f32.mrb[0].mxu0
  %v2162 = vadd.f32 0.0, %v2161
  %v2163 = vpop.f32.mrb[0].mxu0
  %2164 = vmatprep.mubr.bf16.mxu0 0
  %2165 = vmatmul.mubr.bf16.gmra.mrb[0].mxu0 %v2021
  %v2166 = vpop.f32.mrb[0].mxu0
  %v2167 = vadd.f32 0.0, %v2166
  %v2168 = vpop.f32.mrb[0].mxu0
  %v2169 = vpop.f32.mrb[0].mxu0
  %v2170 = vadd.f32 0.0, %v2169
  %v2171 = vpop.f32.mrb[0].mxu0
  %2172 = vmatprep.mubr.bf16.mxu0 0
  %2173 = vmatmul.mubr.bf16.gmra.mrb[0].mxu0 %v2022
  %v2174 = vpop.f32.mrb[0].mxu0
  %v2175 = vadd.f32 0.0, %v2174
  %v2176 = vpop.f32.mrb[0].mxu0
  %v2177 = vpop.f32.mrb[0].mxu0
  %v2178 = vadd.f32 0.0, %v2177
  %v2179 = vpop.f32.mrb[0].mxu0
  %2180 = vmatprep.mubr.bf16.mxu0 0
  %2181 = vmatmul.mubr.bf16.gmra.mrb[0].mxu0 %v2023
  %v2182 = vpop.f32.mrb[0].mxu0
  %v2183 = vadd.f32 0.0, %v2182
  %v2184 = vpop.f32.mrb[0].mxu0
  %v2185 = vpop.f32.mrb[0].mxu0
  %v2186 = vadd.f32 0.0, %v2185
  %v2187 = vpop.f32.mrb[0].mxu0
  %2188 = vmatprep.mubr.bf16.mxu0 0
  %2189 = vmatmul.mubr.bf16.gmra.mrb[0].mxu0 %v2024
  %v2190 = vpop.f32.mrb[0].mxu0
  %v2191 = vadd.f32 0.0, %v2190
  %v2192 = vpop.f32.mrb[0].mxu0
  %v2193 = vpop.f32.mrb[0].mxu0
  %v2194 = vadd.f32 0.0, %v2193
  %v2195 = vpop.f32.mrb[0].mxu0
  %2196 = vmatprep.mubr.bf16.mxu0 0
  %2197 = vmatmul.mubr.bf16.gmra.mrb[0].mxu0 %v2025
  %v2198 = vpop.f32.mrb[0].mxu0
  %v2199 = vadd.f32 0.0, %v2198
  %v2200 = vpop.f32.mrb[0].mxu0
  %v2201 = vpop.f32.mrb[0].mxu0
  %v2202 = vadd.f32 0.0, %v2201
  %v2203 = vpop.f32.mrb[0].mxu0
  %2204 = vmatprep.mubr.bf16.mxu0 0
  %2205 = vmatmul.mubr.bf16.gmra.mrb[0].mxu0 %v2026
  %v2206 = vpop.f32.mrb[0].mxu0
  %v2207 = vadd.f32 0.0, %v2206
  %v2208 = vpop.f32.mrb[0].mxu0
  %v2209 = vpop.f32.mrb[0].mxu0
  %v2210 = vadd.f32 0.0, %v2209
  %v2211 = vpop.f32.mrb[0].mxu0
  %2212 = vmatprep.mubr.bf16.mxu0 0
  %2213 = vmatmul.mubr.bf16.gmra.mrb[0].mxu0 %v2027
  %v2214 = vpop.f32.mrb[0].mxu0
  %v2215 = vadd.f32 0.0, %v2214
  %v2216 = vpop.f32.mrb[0].mxu0
  %v2217 = vpop.f32.mrb[0].mxu0
  %v2218 = vadd.f32 0.0, %v2217
  %v2219 = vpop.f32.mrb[0].mxu0
  %2220 = vmatprep.mubr.bf16.mxu0 0
  %2221 = vmatmul.mubr.bf16.gmra.mrb[0].mxu0 %v2028
  %v2222 = vpop.f32.mrb[0].mxu0
  %v2223 = vadd.f32 0.0, %v2222
  %v2224 = vpop.f32.mrb[0].mxu0
  %v2225 = vpop.f32.mrb[0].mxu0
  %v2226 = vadd.f32 0.0, %v2225
  %v2227 = vpop.f32.mrb[0].mxu0
  %2228 = vmatprep.mubr.bf16.mxu0 0
  %2229 = vmatmul.mubr.bf16.gmra.mrb[0].mxu0 %v2029
  %v2230 = vpop.f32.mrb[0].mxu0
  %v2231 = vadd.f32 0.0, %v2230
  %v2232 = vpop.f32.mrb[0].mxu0
  %v2233 = vpop.f32.mrb[0].mxu0
  %v2234 = vadd.f32 0.0, %v2233
  %v2235 = vpop.f32.mrb[0].mxu0
  %2236 = vmatprep.mubr.bf16.mxu0 0
  %2237 = vmatmul.mubr.bf16.gmra.mrb[0].mxu0 %v2030
  %v2238 = vpop.f32.mrb[0].mxu0
  %v2239 = vadd.f32 0.0, %v2238
  %v2240 = vpop.f32.mrb[0].mxu0
  %v2241 = vpop.f32.mrb[0].mxu0
  %v2242 = vadd.f32 0.0, %v2241
  %v2243 = vpop.f32.mrb[0].mxu0
  %2244 = vmatprep.mubr.bf16.mxu0 0
  %2245 = vmatmul.mubr.bf16.gmra.mrb[0].mxu0 %v2031
  %v2246 = vpop.f32.mrb[0].mxu0
  %v2247 = vadd.f32 0.0, %v2246
  %v2248 = vpop.f32.mrb[0].mxu0
  %v2249 = vpop.f32.mrb[0].mxu0
  %v2250 = vadd.f32 0.0, %v2249
  %v2251 = vpop.f32.mrb[0].mxu0
  %2252 = vmatprep.mubr.bf16.mxu0 0
  %2253 = vmatmul.mubr.bf16.gmra.mrb[0].mxu0 %v2032
  %v2254 = vpop.f32.mrb[0].mxu0
  %v2255 = vadd.f32 0.0, %v2254
  %v2256 = vpop.f32.mrb[0].mxu0
  %v2257 = vpop.f32.mrb[0].mxu0
  %v2258 = vadd.f32 0.0, %v2257
  %v2259 = vpop.f32.mrb[0].mxu0
  %2260 = vmatprep.mubr.bf16.mxu0 0
  %2261 = vmatmul.mubr.bf16.gmra.mrb[0].mxu0 %v2033
  %v2262 = vpop.f32.mrb[0].mxu0
  %v2263 = vadd.f32 0.0, %v2262
  %v2264 = vpop.f32.mrb[0].mxu0
  %v2265 = vpop.f32.mrb[0].mxu0
  %v2266 = vadd.f32 0.0, %v2265
  %v2267 = vpop.f32.mrb[0].mxu0
  %2268 = vmatprep.mubr.bf16.mxu0 0
  %2269 = vmatmul.mubr.bf16.gmra.mrb[0].mxu0 %v2034
  %v2270 = vpop.f32.mrb[0].mxu0
  %v2271 = vadd.f32 0.0, %v2270
  %v2272 = vpop.f32.mrb[0].mxu0
  %v2273 = vpop.f32.mrb[0].mxu0
  %v2274 = vadd.f32 0.0, %v2273
  %v2275 = vpop.f32.mrb[0].mxu0
  %2276 = vmatprep.mubr.bf16.mxu0 0
  %2277 = vmatmul.mubr.bf16.gmra.mrb[0].mxu0 %v2035
  %v2278 = vpop.f32.mrb[0].mxu0
  %v2279 = vadd.f32 0.0, %v2278
  %v2280 = vpop.f32.mrb[0].mxu0
  %v2281 = vpop.f32.mrb[0].mxu0
  %v2282 = vadd.f32 0.0, %v2281
  %v2283 = vpop.f32.mrb[0].mxu0
  %2284 = vmatprep.mubr.bf16.mxu0 0
  %2285 = vmatmul.mubr.bf16.gmra.mrb[0].mxu0 %v2036
  %v2286 = vpop.f32.mrb[0].mxu0
  %v2287 = vadd.f32 0.0, %v2286
  %v2288 = vpop.f32.mrb[0].mxu0
  %v2289 = vpop.f32.mrb[0].mxu0
  %v2290 = vadd.f32 0.0, %v2289
  %v2291 = vpop.f32.mrb[0].mxu0
  %2292 = vmatprep.mubr.bf16.mxu0 0
  %2293 = vmatmul.mubr.bf16.gmra.mrb[0].mxu0 %v2037
  %v2294 = vpop.f32.mrb[0].mxu0
  %v2295 = vadd.f32 0.0, %v2294
  %v2296 = vpop.f32.mrb[0].mxu0
  %v2297 = vpop.f32.mrb[0].mxu0
  %v2298 = vadd.f32 0.0, %v2297
  %v2299 = vpop.f32.mrb[0].mxu0
  %2300 = vmatprep.mubr.bf16.mxu0 0
  %2301 = vmatmul.mubr.bf16.gmra.mrb[0].mxu0 %v2038
  %v2302 = vpop.f32.mrb[0].mxu0
  %v2303 = vadd.f32 0.0, %v2302
  %v2304 = vpop.f32.mrb[0].mxu0
  %v2305 = vpop.f32.mrb[0].mxu0
  %v2306 = vadd.f32 0.0, %v2305
  %v2307 = vpop.f32.mrb[0].mxu0
  %2308 = vmatprep.mubr.bf16.mxu0 0
  %2309 = vmatmul.mubr.bf16.gmra.mrb[0].mxu0 %v2039
  %v2310 = vpop.f32.mrb[0].mxu0
  %v2311 = vadd.f32 0.0, %v2310
  %v2312 = vpop.f32.mrb[0].mxu0
  %v2313 = vpop.f32.mrb[0].mxu0
  %v2314 = vadd.f32 0.0, %v2313
  %v2315 = vpop.f32.mrb[0].mxu0
  %2316 = vmatprep.mubr.bf16.mxu0 0
  %2317 = vmatmul.mubr.bf16.gmra.mrb[0].mxu0 %v2040
  %v2318 = vpop.f32.mrb[0].mxu0
  %v2319 = vadd.f32 0.0, %v2318
  %v2320 = vpop.f32.mrb[0].mxu0
  %v2321 = vpop.f32.mrb[0].mxu0
  %v2322 = vadd.f32 0.0, %v2321
  %v2323 = vpop.f32.mrb[0].mxu0
  %2324 = vmatprep.mubr.bf16.mxu0 0
  %2325 = vmatmul.mubr.bf16.gmra.mrb[0].mxu0 %v2041
  %v2326 = vpop.f32.mrb[0].mxu0
  %v2327 = vadd.f32 0.0, %v2326
  %v2328 = vpop.f32.mrb[0].mxu0
  %v2329 = vpop.f32.mrb[0].mxu0
  %v2330 = vadd.f32 0.0, %v2329
  %v2331 = vpop.f32.mrb[0].mxu0
  %2332 = vmatprep.mubr.bf16.mxu0 0
  %2333 = vmatmul.mubr.bf16.gmra.mrb[0].mxu0 %v2042
  %v2334 = vpop.f32.mrb[0].mxu0
  %v2335 = vadd.f32 0.0, %v2334
  %v2336 = vpop.f32.mrb[0].mxu0
  %v2337 = vpop.f32.mrb[0].mxu0
  %v2338 = vadd.f32 0.0, %v2337
  %v2339 = vpop.f32.mrb[0].mxu0
  %2340 = vmatprep.mubr.bf16.mxu0 0
  %2341 = vmatmul.mubr.bf16.gmra.mrb[0].mxu0 %v2043
  %v2342 = vpop.f32.mrb[0].mxu0
  %v2343 = vadd.f32 0.0, %v2342
  %v2344 = vpop.f32.mrb[0].mxu0
  %v2345 = vpop.f32.mrb[0].mxu0
  %v2346 = vadd.f32 0.0, %v2345
  %v2347 = vpop.f32.mrb[0].mxu0
  %2348 = vmatprep.mubr.bf16.mxu0 0
  %2349 = vmatmul.mubr.bf16.gmra.mrb[0].mxu0 %v2044
  %v2350 = vpop.f32.mrb[0].mxu0
  %v2351 = vadd.f32 0.0, %v2350
  %v2352 = vpop.f32.mrb[0].mxu0
  %v2353 = vpop.f32.mrb[0].mxu0
  %v2354 = vadd.f32 0.0, %v2353
  %v2355 = vpop.f32.mrb[0].mxu0
  %2356 = vmatprep.mubr.bf16.mxu0 0
  %2357 = vmatmul.mubr.bf16.gmra.mrb[0].mxu0 %v2045
  %v2358 = vpop.f32.mrb[0].mxu0
  %v2359 = vadd.f32 0.0, %v2358
  %v2360 = vpop.f32.mrb[0].mxu0
  %v2361 = vpop.f32.mrb[0].mxu0
  %v2362 = vadd.f32 0.0, %v2361
  %v2363 = vpop.f32.mrb[0].mxu0
  %2364 = vmatprep.mubr.bf16.mxu0 0
  %2365 = vmatmul.mubr.bf16.gmra.mrb[0].mxu0 %v2046
  %v2366 = vpop.f32.mrb[0].mxu0
  %v2367 = vadd.f32 0.0, %v2366
  %v2368 = vpop.f32.mrb[0].mxu0
  %v2369 = vpop.f32.mrb[0].mxu0
  %v2370 = vadd.f32 0.0, %v2369
  %v2371 = vpop.f32.mrb[0].mxu0
  %2372 = vmatprep.mubr.bf16.mxu0 0
  %2373 = vmatmul.mubr.bf16.gmra.mrb[0].mxu0 %v2047
  %v2374 = vpop.f32.mrb[0].mxu0
  %v2375 = vadd.f32 0.0, %v2374
  %v2376 = vpop.f32.mrb[0].mxu0
  %v2377 = vpop.f32.mrb[0].mxu0
  %v2378 = vadd.f32 0.0, %v2377
  %v2379 = vpop.f32.mrb[0].mxu0
  %2380 = vmatprep.mubr.bf16.mxu0 0
  %2381 = vmatmul.mubr.bf16.gmra.mrb[0].mxu0 %v2048
  %v2382 = vpop.f32.mrb[0].mxu0
  %v2383 = vadd.f32 0.0, %v2382
  %v2384 = vpop.f32.mrb[0].mxu0
  %v2385 = vpop.f32.mrb[0].mxu0
  %v2386 = vadd.f32 0.0, %v2385
  %v2387 = vpop.f32.mrb[0].mxu0
  %2388 = vmatprep.mubr.bf16.mxu0 0
  %2389 = vmatmul.mubr.bf16.gmra.mrb[0].mxu0 %v2049
  %v2390 = vpop.f32.mrb[0].mxu0
  %v2391 = vadd.f32 0.0, %v2390
  %v2392 = vpop.f32.mrb[0].mxu0
  %v2393 = vpop.f32.mrb[0].mxu0
  %v2394 = vadd.f32 0.0, %v2393
  %v2395 = vpop.f32.mrb[0].mxu0
  %2396 = vmatprep.mubr.bf16.mxu0 0
  %2397 = vmatmul.mubr.bf16.gmra.mrb[0].mxu0 %v2050
  %v2398 = vpop.f32.mrb[0].mxu0
  %v2399 = vadd.f32 0.0, %v2398
  %v2400 = vpop.f32.mrb[0].mxu0
  %v2401 = vpop.f32.mrb[0].mxu0
  %v2402 = vadd.f32 0.0, %v2401
  %v2403 = vpop.f32.mrb[0].mxu0
  %2404 = vdwg.mxu0
  %v2405 = vadd.f32 %v1891, %v2151
  %v2406 = vadd.f32 %v1892, %v2154
  %v2407 = vadd.f32 %v1893, %v2159
  %v2408 = vadd.f32 %v1894, %v2162
  %v2409 = vadd.f32 %v1895, %v2167
  %v2410 = vadd.f32 %v1896, %v2170
  %v2411 = vadd.f32 %v1897, %v2175
  %v2412 = vadd.f32 %v1898, %v2178
  %v2413 = vadd.f32 %v1899, %v2183
  %v2414 = vadd.f32 %v1900, %v2186
  %v2415 = vadd.f32 %v1901, %v2191
  %v2416 = vadd.f32 %v1902, %v2194
  %v2417 = vadd.f32 %v1903, %v2199
  %v2418 = vadd.f32 %v1904, %v2202
  %v2419 = vadd.f32 %v1905, %v2207
  %v2420 = vadd.f32 %v1906, %v2210
  %v2421 = vadd.f32 %v1907, %v2215
  %v2422 = vadd.f32 %v1908, %v2218
  %v2423 = vadd.f32 %v1909, %v2223
  %v2424 = vadd.f32 %v1910, %v2226
  %v2425 = vadd.f32 %v1911, %v2231
  %v2426 = vadd.f32 %v1912, %v2234
  %v2427 = vadd.f32 %v1913, %v2239
  %v2428 = vadd.f32 %v1914, %v2242
  %v2429 = vadd.f32 %v1915, %v2247
  %v2430 = vadd.f32 %v1916, %v2250
  %v2431 = vadd.f32 %v1917, %v2255
  %v2432 = vadd.f32 %v1918, %v2258
  %v2433 = vadd.f32 %v1919, %v2263
  %v2434 = vadd.f32 %v1920, %v2266
  %v2435 = vadd.f32 %v1921, %v2271
  %v2436 = vadd.f32 %v1922, %v2274
  %v2437 = vadd.f32 %v1923, %v2279
  %v2438 = vadd.f32 %v1924, %v2282
  %v2439 = vadd.f32 %v1925, %v2287
  %v2440 = vadd.f32 %v1926, %v2290
  %v2441 = vadd.f32 %v1927, %v2295
  %v2442 = vadd.f32 %v1928, %v2298
  %v2443 = vadd.f32 %v1929, %v2303
  %v2444 = vadd.f32 %v1930, %v2306
  %v2445 = vadd.f32 %v1931, %v2311
  %v2446 = vadd.f32 %v1932, %v2314
  %v2447 = vadd.f32 %v1933, %v2319
  %v2448 = vadd.f32 %v1934, %v2322
  %v2449 = vadd.f32 %v1935, %v2327
  %v2450 = vadd.f32 %v1936, %v2330
  %v2451 = vadd.f32 %v1937, %v2335
  %v2452 = vadd.f32 %v1938, %v2338
  %v2453 = vadd.f32 %v1939, %v2343
  %v2454 = vadd.f32 %v1940, %v2346
  %v2455 = vadd.f32 %v1941, %v2351
  %v2456 = vadd.f32 %v1942, %v2354
  %v2457 = vadd.f32 %v1943, %v2359
  %v2458 = vadd.f32 %v1944, %v2362
  %v2459 = vadd.f32 %v1945, %v2367
  %v2460 = vadd.f32 %v1946, %v2370
  %v2461 = vadd.f32 %v1947, %v2375
  %v2462 = vadd.f32 %v1948, %v2378
  %v2463 = vadd.f32 %v1949, %v2383
  %v2464 = vadd.f32 %v1950, %v2386
  %v2465 = vadd.f32 %v1951, %v2391
  %v2466 = vadd.f32 %v1952, %v2394
  %v2467 = vadd.f32 %v1953, %v2399
  %v2468 = vadd.f32 %v1954, %v2402
  %v2469 = vld [vmem:[%s1440 + $0x2] sm:$0xff]
  %v2470 = vld [vmem:[%s1440 + $0xa] sm:$0xff]
  %v2471 = vld [vmem:[%s1440 + $0x1a] sm:$0xff]
  %v2472 = vld [vmem:[%s1440 + $0x22] sm:$0xff]
  %v2473 = vld [vmem:[%s1440 + $0x32] sm:$0xff]
  %v2474 = vld [vmem:[%s1440 + $0x3a] sm:$0xff]
  %v2475 = vld [vmem:[%s1440 + $0x4a] sm:$0xff]
  %v2476 = vld [vmem:[%s1440 + $0x52] sm:$0xff]
  %v2477 = vld [vmem:[%s1440 + $0x62] sm:$0xff]
  %v2478 = vld [vmem:[%s1440 + $0x6a] sm:$0xff]
  %v2479 = vld [vmem:[%s1440 + $0x7a] sm:$0xff]
  %v2480 = vld [vmem:[%s1440 + $0x82] sm:$0xff]
  %v2481 = vld [vmem:[%s1440 + $0x92] sm:$0xff]
  %v2482 = vld [vmem:[%s1440 + $0x9a] sm:$0xff]
  %v2483 = vld [vmem:[%s1440 + $0xaa] sm:$0xff]
  %v2484 = vld [vmem:[%s1440 + $0xb2] sm:$0xff]
  %v2485 = vld [vmem:[%s1440 + $0xc2] sm:$0xff]
  %v2486 = vld [vmem:[%s1440 + $0xca] sm:$0xff]
  %v2487 = vld [vmem:[%s1440 + $0xda] sm:$0xff]
  %v2488 = vld [vmem:[%s1440 + $0xe2] sm:$0xff]
  %v2489 = vld [vmem:[%s1440 + $0xf2] sm:$0xff]
  %v2490 = vld [vmem:[%s1440 + $0xfa] sm:$0xff]
  %v2491 = vld [vmem:[%s1440 + $0x10a] sm:$0xff]
  %v2492 = vld [vmem:[%s1440 + $0x112] sm:$0xff]
  %v2493 = vld [vmem:[%s1440 + $0x122] sm:$0xff]
  %v2494 = vld [vmem:[%s1440 + $0x12a] sm:$0xff]
  %v2495 = vld [vmem:[%s1440 + $0x13a] sm:$0xff]
  %v2496 = vld [vmem:[%s1440 + $0x142] sm:$0xff]
  %v2497 = vld [vmem:[%s1440 + $0x152] sm:$0xff]
  %v2498 = vld [vmem:[%s1440 + $0x15a] sm:$0xff]
  %v2499 = vld [vmem:[%s1440 + $0x16a] sm:$0xff]
  %v2500 = vld [vmem:[%s1440 + $0x172] sm:$0xff]
  %v2501 = vld [vmem:[%s1440 + $0x1b2] sm:$0xff]
  %v2502 = vld [vmem:[%s1440 + $0x1ba] sm:$0xff]
  %v2503 = vld [vmem:[%s1440 + $0x1ca] sm:$0xff]
  %v2504 = vld [vmem:[%s1440 + $0x1d2] sm:$0xff]
  %v2505 = vld [vmem:[%s1440 + $0x1e2] sm:$0xff]
  %v2506 = vld [vmem:[%s1440 + $0x1ea] sm:$0xff]
  %v2507 = vld [vmem:[%s1440 + $0x1fa] sm:$0xff]
  %v2508 = vld [vmem:[%s1440 + $0x202] sm:$0xff]
  %v2509 = vld [vmem:[%s1440 + $0x212] sm:$0xff]
  %v2510 = vld [vmem:[%s1440 + $0x21a] sm:$0xff]
  %v2511 = vld [vmem:[%s1440 + $0x22a] sm:$0xff]
  %v2512 = vld [vmem:[%s1440 + $0x232] sm:$0xff]
  %v2513 = vld [vmem:[%s1440 + $0x242] sm:$0xff]
  %v2514 = vld [vmem:[%s1440 + $0x24a] sm:$0xff]
  %v2515 = vld [vmem:[%s1440 + $0x25a] sm:$0xff]
  %v2516 = vld [vmem:[%s1440 + $0x262] sm:$0xff]
  %v2517 = vld [vmem:[%s1440 + $0x272] sm:$0xff]
  %v2518 = vld [vmem:[%s1440 + $0x27a] sm:$0xff]
  %v2519 = vld [vmem:[%s1440 + $0x28a] sm:$0xff]
  %v2520 = vld [vmem:[%s1440 + $0x292] sm:$0xff]
  %v2521 = vld [vmem:[%s1440 + $0x2a2] sm:$0xff]
  %v2522 = vld [vmem:[%s1440 + $0x2aa] sm:$0xff]
  %v2523 = vld [vmem:[%s1440 + $0x2ba] sm:$0xff]
  %v2524 = vld [vmem:[%s1440 + $0x2c2] sm:$0xff]
  %v2525 = vld [vmem:[%s1440 + $0x2d2] sm:$0xff]
  %v2526 = vld [vmem:[%s1440 + $0x2da] sm:$0xff]
  %v2527 = vld [vmem:[%s1440 + $0x2ea] sm:$0xff]
  %v2528 = vld [vmem:[%s1440 + $0x2f2] sm:$0xff]
  %v2529 = vld [vmem:[%s1440 + $0x302] sm:$0xff]
  %v2530 = vld [vmem:[%s1440 + $0x30a] sm:$0xff]
  %v2531 = vld [vmem:[%s1440 + $0x31a] sm:$0xff]
  %v2532 = vld [vmem:[%s1440 + $0x322] sm:$0xff]
  %v2533 = vpack.c.bf16 %v2470, %v2469
  %v2534 = vpack.c.bf16 %v2472, %v2471
  %v2535 = vpack.c.bf16 %v2474, %v2473
  %v2536 = vpack.c.bf16 %v2476, %v2475
  %v2537 = vpack.c.bf16 %v2478, %v2477
  %v2538 = vpack.c.bf16 %v2480, %v2479
  %v2539 = vpack.c.bf16 %v2482, %v2481
  %v2540 = vpack.c.bf16 %v2484, %v2483
  %v2541 = vpack.c.bf16 %v2486, %v2485
  %v2542 = vpack.c.bf16 %v2488, %v2487
  %v2543 = vpack.c.bf16 %v2490, %v2489
  %v2544 = vpack.c.bf16 %v2492, %v2491
  %v2545 = vpack.c.bf16 %v2494, %v2493
  %v2546 = vpack.c.bf16 %v2496, %v2495
  %v2547 = vpack.c.bf16 %v2498, %v2497
  %v2548 = vpack.c.bf16 %v2500, %v2499
  %v2549 = vpack.c.bf16 %v2502, %v2501
  %v2550 = vpack.c.bf16 %v2504, %v2503
  %v2551 = vpack.c.bf16 %v2506, %v2505
  %v2552 = vpack.c.bf16 %v2508, %v2507
  %v2553 = vpack.c.bf16 %v2510, %v2509
  %v2554 = vpack.c.bf16 %v2512, %v2511
  %v2555 = vpack.c.bf16 %v2514, %v2513
  %v2556 = vpack.c.bf16 %v2516, %v2515
  %v2557 = vpack.c.bf16 %v2518, %v2517
  %v2558 = vpack.c.bf16 %v2520, %v2519
  %v2559 = vpack.c.bf16 %v2522, %v2521
  %v2560 = vpack.c.bf16 %v2524, %v2523
  %v2561 = vpack.c.bf16 %v2526, %v2525
  %v2562 = vpack.c.bf16 %v2528, %v2527
  %v2563 = vpack.c.bf16 %v2530, %v2529
  %v2564 = vpack.c.bf16 %v2532, %v2531
  %s2565 = scalar_lea.vmem %s1, 320
  %v2566 = vld [vmem:[%s2565] sm:$0xf]
  %v2567 = vld [vmem:[%s2565 + $0x4] sm:$0xf]
  %v2568 = vld [vmem:[%s2565 + $0x8] sm:$0xf]
  %v2569 = vld [vmem:[%s2565 + $0xc] sm:$0xf]
  %v2570 = vld [vmem:[%s2565 + $0x10] sm:$0xf]
  %v2571 = vld [vmem:[%s2565 + $0x14] sm:$0xf]
  %v2572 = vld [vmem:[%s2565 + $0x18] sm:$0xf]
  %v2573 = vld [vmem:[%s2565 + $0x1c] sm:$0xf]
  %v2574 = vld [vmem:[%s2565 + $0x20] sm:$0xf]
  %v2575 = vld [vmem:[%s2565 + $0x24] sm:$0xf]
  %v2576 = vld [vmem:[%s2565 + $0x28] sm:$0xf]
  %v2577 = vld [vmem:[%s2565 + $0x2c] sm:$0xf]
  %v2578 = vld [vmem:[%s2565 + $0x30] sm:$0xf]
  %v2579 = vld [vmem:[%s2565 + $0x34] sm:$0xf]
  %v2580 = vld [vmem:[%s2565 + $0x38] sm:$0xf]
  %v2581 = vld [vmem:[%s2565 + $0x3c] sm:$0xf]
  %v2598 = vunpack.c.l.b16 %v2566
  %v2599 = vunpack.c.l.b16 %v2567
  %v2600 = vunpack.c.l.b16 %v2568
  %v2601 = vunpack.c.l.b16 %v2569
  %v2602 = vunpack.c.l.b16 %v2570
  %v2603 = vunpack.c.l.b16 %v2571
  %v2604 = vunpack.c.l.b16 %v2572
  %v2605 = vunpack.c.l.b16 %v2573
  %v2606 = vunpack.c.l.b16 %v2574
  %v2607 = vunpack.c.l.b16 %v2575
  %v2608 = vunpack.c.l.b16 %v2576
  %v2609 = vunpack.c.l.b16 %v2577
  %v2610 = vunpack.c.l.b16 %v2578
  %v2611 = vunpack.c.l.b16 %v2579
  %v2612 = vunpack.c.l.b16 %v2580
  %v2613 = vunpack.c.l.b16 %v2581
  %v2614 = vpack.c.b16 %v2599, %v2598
  %v2615 = vpack.c.b16 %v2601, %v2600
  %v2616 = vpack.c.b16 %v2603, %v2602
  %v2617 = vpack.c.b16 %v2605, %v2604
  %v2618 = vpack.c.b16 %v2607, %v2606
  %v2619 = vpack.c.b16 %v2609, %v2608
  %v2620 = vpack.c.b16 %v2611, %v2610
  %v2621 = vpack.c.b16 %v2613, %v2612
  %2630 = vmatprep.subr.bf16.mxu0 0
  %2631 = vmatpush1.bf16.msra.mxu0 %v2614
  %2632 = vmatprep.subr.bf16.mxu0 0
  %2633 = vmatpush1.bf16.msra.mxu0 %v2615
  %2634 = vmatprep.subr.bf16.mxu0 0
  %2635 = vmatpush1.bf16.msra.mxu0 %v2616
  %2636 = vmatprep.subr.bf16.mxu0 0
  %2637 = vmatpush1.bf16.msra.mxu0 %v2617
  %2638 = vmatprep.subr.bf16.mxu0 0
  %2639 = vmatpush1.bf16.msra.mxu0 %v2618
  %2640 = vmatprep.subr.bf16.mxu0 0
  %2641 = vmatpush1.bf16.msra.mxu0 %v2619
  %2642 = vmatprep.subr.bf16.mxu0 0
  %2643 = vmatpush1.bf16.msra.mxu0 %v2620
  %2644 = vmatprep.subr.bf16.mxu0 0
  %2645 = vmatpush1.bf16.msra.mxu0 %v2621
  %2646 = vmatprep.subr.bf16.mxu0 0
  %2647 = vmatpush1.bf16.msra.mxu0 0
  %2648 = vmatprep.subr.bf16.mxu0 0
  %2649 = vmatpush1.bf16.msra.mxu0 0
  %2650 = vmatprep.subr.bf16.mxu0 0
  %2651 = vmatpush1.bf16.msra.mxu0 0
  %2652 = vmatprep.subr.bf16.mxu0 0
  %2653 = vmatpush1.bf16.msra.mxu0 0
  %2654 = vmatprep.subr.bf16.mxu0 0
  %2655 = vmatpush1.bf16.msra.mxu0 0
  %2656 = vmatprep.subr.bf16.mxu0 0
  %2657 = vmatpush1.bf16.msra.mxu0 0
  %2658 = vmatprep.subr.bf16.mxu0 0
  %2659 = vmatpush1.bf16.msra.mxu0 0
  %2660 = vmatprep.subr.bf16.mxu0 0
  %2661 = vmatpush1.bf16.msra.mxu0 0
  %2662 = vmatprep.mubr.bf16.mxu0 0
  %2663 = vmatmul.mubr.bf16.gmra.mrb[0].mxu0 %v2533
  %v2664 = vpop.f32.mrb[0].mxu0
  %v2665 = vadd.f32 0.0, %v2664
  %v2666 = vpop.f32.mrb[0].mxu0
  %v2667 = vpop.f32.mrb[0].mxu0
  %v2668 = vadd.f32 0.0, %v2667
  %v2669 = vpop.f32.mrb[0].mxu0
  %2670 = vmatprep.mubr.bf16.mxu0 0
  %2671 = vmatmul.mubr.bf16.gmra.mrb[0].mxu0 %v2534
  %v2672 = vpop.f32.mrb[0].mxu0
  %v2673 = vadd.f32 0.0, %v2672
  %v2674 = vpop.f32.mrb[0].mxu0
  %v2675 = vpop.f32.mrb[0].mxu0
  %v2676 = vadd.f32 0.0, %v2675
  %v2677 = vpop.f32.mrb[0].mxu0
  %2678 = vmatprep.mubr.bf16.mxu0 0
  %2679 = vmatmul.mubr.bf16.gmra.mrb[0].mxu0 %v2535
  %v2680 = vpop.f32.mrb[0].mxu0
  %v2681 = vadd.f32 0.0, %v2680
  %v2682 = vpop.f32.mrb[0].mxu0
  %v2683 = vpop.f32.mrb[0].mxu0
  %v2684 = vadd.f32 0.0, %v2683
  %v2685 = vpop.f32.mrb[0].mxu0
  %2686 = vmatprep.mubr.bf16.mxu0 0
  %2687 = vmatmul.mubr.bf16.gmra.mrb[0].mxu0 %v2536
  %v2688 = vpop.f32.mrb[0].mxu0
  %v2689 = vadd.f32 0.0, %v2688
  %v2690 = vpop.f32.mrb[0].mxu0
  %v2691 = vpop.f32.mrb[0].mxu0
  %v2692 = vadd.f32 0.0, %v2691
  %v2693 = vpop.f32.mrb[0].mxu0
  %2694 = vmatprep.mubr.bf16.mxu0 0
  %2695 = vmatmul.mubr.bf16.gmra.mrb[0].mxu0 %v2537
  %v2696 = vpop.f32.mrb[0].mxu0
  %v2697 = vadd.f32 0.0, %v2696
  %v2698 = vpop.f32.mrb[0].mxu0
  %v2699 = vpop.f32.mrb[0].mxu0
  %v2700 = vadd.f32 0.0, %v2699
  %v2701 = vpop.f32.mrb[0].mxu0
  %2702 = vmatprep.mubr.bf16.mxu0 0
  %2703 = vmatmul.mubr.bf16.gmra.mrb[0].mxu0 %v2538
  %v2704 = vpop.f32.mrb[0].mxu0
  %v2705 = vadd.f32 0.0, %v2704
  %v2706 = vpop.f32.mrb[0].mxu0
  %v2707 = vpop.f32.mrb[0].mxu0
  %v2708 = vadd.f32 0.0, %v2707
  %v2709 = vpop.f32.mrb[0].mxu0
  %2710 = vmatprep.mubr.bf16.mxu0 0
  %2711 = vmatmul.mubr.bf16.gmra.mrb[0].mxu0 %v2539
  %v2712 = vpop.f32.mrb[0].mxu0
  %v2713 = vadd.f32 0.0, %v2712
  %v2714 = vpop.f32.mrb[0].mxu0
  %v2715 = vpop.f32.mrb[0].mxu0
  %v2716 = vadd.f32 0.0, %v2715
  %v2717 = vpop.f32.mrb[0].mxu0
  %2718 = vmatprep.mubr.bf16.mxu0 0
  %2719 = vmatmul.mubr.bf16.gmra.mrb[0].mxu0 %v2540
  %v2720 = vpop.f32.mrb[0].mxu0
  %v2721 = vadd.f32 0.0, %v2720
  %v2722 = vpop.f32.mrb[0].mxu0
  %v2723 = vpop.f32.mrb[0].mxu0
  %v2724 = vadd.f32 0.0, %v2723
  %v2725 = vpop.f32.mrb[0].mxu0
  %2726 = vmatprep.mubr.bf16.mxu0 0
  %2727 = vmatmul.mubr.bf16.gmra.mrb[0].mxu0 %v2541
  %v2728 = vpop.f32.mrb[0].mxu0
  %v2729 = vadd.f32 0.0, %v2728
  %v2730 = vpop.f32.mrb[0].mxu0
  %v2731 = vpop.f32.mrb[0].mxu0
  %v2732 = vadd.f32 0.0, %v2731
  %v2733 = vpop.f32.mrb[0].mxu0
  %2734 = vmatprep.mubr.bf16.mxu0 0
  %2735 = vmatmul.mubr.bf16.gmra.mrb[0].mxu0 %v2542
  %v2736 = vpop.f32.mrb[0].mxu0
  %v2737 = vadd.f32 0.0, %v2736
  %v2738 = vpop.f32.mrb[0].mxu0
  %v2739 = vpop.f32.mrb[0].mxu0
  %v2740 = vadd.f32 0.0, %v2739
  %v2741 = vpop.f32.mrb[0].mxu0
  %2742 = vmatprep.mubr.bf16.mxu0 0
  %2743 = vmatmul.mubr.bf16.gmra.mrb[0].mxu0 %v2543
  %v2744 = vpop.f32.mrb[0].mxu0
  %v2745 = vadd.f32 0.0, %v2744
  %v2746 = vpop.f32.mrb[0].mxu0
  %v2747 = vpop.f32.mrb[0].mxu0
  %v2748 = vadd.f32 0.0, %v2747
  %v2749 = vpop.f32.mrb[0].mxu0
  %2750 = vmatprep.mubr.bf16.mxu0 0
  %2751 = vmatmul.mubr.bf16.gmra.mrb[0].mxu0 %v2544
  %v2752 = vpop.f32.mrb[0].mxu0
  %v2753 = vadd.f32 0.0, %v2752
  %v2754 = vpop.f32.mrb[0].mxu0
  %v2755 = vpop.f32.mrb[0].mxu0
  %v2756 = vadd.f32 0.0, %v2755
  %v2757 = vpop.f32.mrb[0].mxu0
  %2758 = vmatprep.mubr.bf16.mxu0 0
  %2759 = vmatmul.mubr.bf16.gmra.mrb[0].mxu0 %v2545
  %v2760 = vpop.f32.mrb[0].mxu0
  %v2761 = vadd.f32 0.0, %v2760
  %v2762 = vpop.f32.mrb[0].mxu0
  %v2763 = vpop.f32.mrb[0].mxu0
  %v2764 = vadd.f32 0.0, %v2763
  %v2765 = vpop.f32.mrb[0].mxu0
  %2766 = vmatprep.mubr.bf16.mxu0 0
  %2767 = vmatmul.mubr.bf16.gmra.mrb[0].mxu0 %v2546
  %v2768 = vpop.f32.mrb[0].mxu0
  %v2769 = vadd.f32 0.0, %v2768
  %v2770 = vpop.f32.mrb[0].mxu0
  %v2771 = vpop.f32.mrb[0].mxu0
  %v2772 = vadd.f32 0.0, %v2771
  %v2773 = vpop.f32.mrb[0].mxu0
  %2774 = vmatprep.mubr.bf16.mxu0 0
  %2775 = vmatmul.mubr.bf16.gmra.mrb[0].mxu0 %v2547
  %v2776 = vpop.f32.mrb[0].mxu0
  %v2777 = vadd.f32 0.0, %v2776
  %v2778 = vpop.f32.mrb[0].mxu0
  %v2779 = vpop.f32.mrb[0].mxu0
  %v2780 = vadd.f32 0.0, %v2779
  %v2781 = vpop.f32.mrb[0].mxu0
  %2782 = vmatprep.mubr.bf16.mxu0 0
  %2783 = vmatmul.mubr.bf16.gmra.mrb[0].mxu0 %v2548
  %v2784 = vpop.f32.mrb[0].mxu0
  %v2785 = vadd.f32 0.0, %v2784
  %v2786 = vpop.f32.mrb[0].mxu0
  %v2787 = vpop.f32.mrb[0].mxu0
  %v2788 = vadd.f32 0.0, %v2787
  %v2789 = vpop.f32.mrb[0].mxu0
  %2790 = vmatprep.mubr.bf16.mxu0 0
  %2791 = vmatmul.mubr.bf16.gmra.mrb[0].mxu0 %v2549
  %v2792 = vpop.f32.mrb[0].mxu0
  %v2793 = vadd.f32 0.0, %v2792
  %v2794 = vpop.f32.mrb[0].mxu0
  %v2795 = vpop.f32.mrb[0].mxu0
  %v2796 = vadd.f32 0.0, %v2795
  %v2797 = vpop.f32.mrb[0].mxu0
  %2798 = vmatprep.mubr.bf16.mxu0 0
  %2799 = vmatmul.mubr.bf16.gmra.mrb[0].mxu0 %v2550
  %v2800 = vpop.f32.mrb[0].mxu0
  %v2801 = vadd.f32 0.0, %v2800
  %v2802 = vpop.f32.mrb[0].mxu0
  %v2803 = vpop.f32.mrb[0].mxu0
  %v2804 = vadd.f32 0.0, %v2803
  %v2805 = vpop.f32.mrb[0].mxu0
  %2806 = vmatprep.mubr.bf16.mxu0 0
  %2807 = vmatmul.mubr.bf16.gmra.mrb[0].mxu0 %v2551
  %v2808 = vpop.f32.mrb[0].mxu0
  %v2809 = vadd.f32 0.0, %v2808
  %v2810 = vpop.f32.mrb[0].mxu0
  %v2811 = vpop.f32.mrb[0].mxu0
  %v2812 = vadd.f32 0.0, %v2811
  %v2813 = vpop.f32.mrb[0].mxu0
  %2814 = vmatprep.mubr.bf16.mxu0 0
  %2815 = vmatmul.mubr.bf16.gmra.mrb[0].mxu0 %v2552
  %v2816 = vpop.f32.mrb[0].mxu0
  %v2817 = vadd.f32 0.0, %v2816
  %v2818 = vpop.f32.mrb[0].mxu0
  %v2819 = vpop.f32.mrb[0].mxu0
  %v2820 = vadd.f32 0.0, %v2819
  %v2821 = vpop.f32.mrb[0].mxu0
  %2822 = vmatprep.mubr.bf16.mxu0 0
  %2823 = vmatmul.mubr.bf16.gmra.mrb[0].mxu0 %v2553
  %v2824 = vpop.f32.mrb[0].mxu0
  %v2825 = vadd.f32 0.0, %v2824
  %v2826 = vpop.f32.mrb[0].mxu0
  %v2827 = vpop.f32.mrb[0].mxu0
  %v2828 = vadd.f32 0.0, %v2827
  %v2829 = vpop.f32.mrb[0].mxu0
  %2830 = vmatprep.mubr.bf16.mxu0 0
  %2831 = vmatmul.mubr.bf16.gmra.mrb[0].mxu0 %v2554
  %v2832 = vpop.f32.mrb[0].mxu0
  %v2833 = vadd.f32 0.0, %v2832
  %v2834 = vpop.f32.mrb[0].mxu0
  %v2835 = vpop.f32.mrb[0].mxu0
  %v2836 = vadd.f32 0.0, %v2835
  %v2837 = vpop.f32.mrb[0].mxu0
  %2838 = vmatprep.mubr.bf16.mxu0 0
  %2839 = vmatmul.mubr.bf16.gmra.mrb[0].mxu0 %v2555
  %v2840 = vpop.f32.mrb[0].mxu0
  %v2841 = vadd.f32 0.0, %v2840
  %v2842 = vpop.f32.mrb[0].mxu0
  %v2843 = vpop.f32.mrb[0].mxu0
  %v2844 = vadd.f32 0.0, %v2843
  %v2845 = vpop.f32.mrb[0].mxu0
  %2846 = vmatprep.mubr.bf16.mxu0 0
  %2847 = vmatmul.mubr.bf16.gmra.mrb[0].mxu0 %v2556
  %v2848 = vpop.f32.mrb[0].mxu0
  %v2849 = vadd.f32 0.0, %v2848
  %v2850 = vpop.f32.mrb[0].mxu0
  %v2851 = vpop.f32.mrb[0].mxu0
  %v2852 = vadd.f32 0.0, %v2851
  %v2853 = vpop.f32.mrb[0].mxu0
  %2854 = vmatprep.mubr.bf16.mxu0 0
  %2855 = vmatmul.mubr.bf16.gmra.mrb[0].mxu0 %v2557
  %v2856 = vpop.f32.mrb[0].mxu0
  %v2857 = vadd.f32 0.0, %v2856
  %v2858 = vpop.f32.mrb[0].mxu0
  %v2859 = vpop.f32.mrb[0].mxu0
  %v2860 = vadd.f32 0.0, %v2859
  %v2861 = vpop.f32.mrb[0].mxu0
  %2862 = vmatprep.mubr.bf16.mxu0 0
  %2863 = vmatmul.mubr.bf16.gmra.mrb[0].mxu0 %v2558
  %v2864 = vpop.f32.mrb[0].mxu0
  %v2865 = vadd.f32 0.0, %v2864
  %v2866 = vpop.f32.mrb[0].mxu0
  %v2867 = vpop.f32.mrb[0].mxu0
  %v2868 = vadd.f32 0.0, %v2867
  %v2869 = vpop.f32.mrb[0].mxu0
  %2870 = vmatprep.mubr.bf16.mxu0 0
  %2871 = vmatmul.mubr.bf16.gmra.mrb[0].mxu0 %v2559
  %v2872 = vpop.f32.mrb[0].mxu0
  %v2873 = vadd.f32 0.0, %v2872
  %v2874 = vpop.f32.mrb[0].mxu0
  %v2875 = vpop.f32.mrb[0].mxu0
  %v2876 = vadd.f32 0.0, %v2875
  %v2877 = vpop.f32.mrb[0].mxu0
  %2878 = vmatprep.mubr.bf16.mxu0 0
  %2879 = vmatmul.mubr.bf16.gmra.mrb[0].mxu0 %v2560
  %v2880 = vpop.f32.mrb[0].mxu0
  %v2881 = vadd.f32 0.0, %v2880
  %v2882 = vpop.f32.mrb[0].mxu0
  %v2883 = vpop.f32.mrb[0].mxu0
  %v2884 = vadd.f32 0.0, %v2883
  %v2885 = vpop.f32.mrb[0].mxu0
  %2886 = vmatprep.mubr.bf16.mxu0 0
  %2887 = vmatmul.mubr.bf16.gmra.mrb[0].mxu0 %v2561
  %v2888 = vpop.f32.mrb[0].mxu0
  %v2889 = vadd.f32 0.0, %v2888
  %v2890 = vpop.f32.mrb[0].mxu0
  %v2891 = vpop.f32.mrb[0].mxu0
  %v2892 = vadd.f32 0.0, %v2891
  %v2893 = vpop.f32.mrb[0].mxu0
  %2894 = vmatprep.mubr.bf16.mxu0 0
  %2895 = vmatmul.mubr.bf16.gmra.mrb[0].mxu0 %v2562
  %v2896 = vpop.f32.mrb[0].mxu0
  %v2897 = vadd.f32 0.0, %v2896
  %v2898 = vpop.f32.mrb[0].mxu0
  %v2899 = vpop.f32.mrb[0].mxu0
  %v2900 = vadd.f32 0.0, %v2899
  %v2901 = vpop.f32.mrb[0].mxu0
  %2902 = vmatprep.mubr.bf16.mxu0 0
  %2903 = vmatmul.mubr.bf16.gmra.mrb[0].mxu0 %v2563
  %v2904 = vpop.f32.mrb[0].mxu0
  %v2905 = vadd.f32 0.0, %v2904
  %v2906 = vpop.f32.mrb[0].mxu0
  %v2907 = vpop.f32.mrb[0].mxu0
  %v2908 = vadd.f32 0.0, %v2907
  %v2909 = vpop.f32.mrb[0].mxu0
  %2910 = vmatprep.mubr.bf16.mxu0 0
  %2911 = vmatmul.mubr.bf16.gmra.mrb[0].mxu0 %v2564
  %v2912 = vpop.f32.mrb[0].mxu0
  %v2913 = vadd.f32 0.0, %v2912
  %v2914 = vpop.f32.mrb[0].mxu0
  %v2915 = vpop.f32.mrb[0].mxu0
  %v2916 = vadd.f32 0.0, %v2915
  %v2917 = vpop.f32.mrb[0].mxu0
  %2918 = vdwg.mxu0
  %v2919 = vadd.f32 %v2405, %v2665
  %v2920 = vadd.f32 %v2406, %v2668
  %v2921 = vadd.f32 %v2407, %v2673
  %v2922 = vadd.f32 %v2408, %v2676
  %v2923 = vadd.f32 %v2409, %v2681
  %v2924 = vadd.f32 %v2410, %v2684
  %v2925 = vadd.f32 %v2411, %v2689
  %v2926 = vadd.f32 %v2412, %v2692
  %v2927 = vadd.f32 %v2413, %v2697
  %v2928 = vadd.f32 %v2414, %v2700
  %v2929 = vadd.f32 %v2415, %v2705
  %v2930 = vadd.f32 %v2416, %v2708
  %v2931 = vadd.f32 %v2417, %v2713
  %v2932 = vadd.f32 %v2418, %v2716
  %v2933 = vadd.f32 %v2419, %v2721
  %v2934 = vadd.f32 %v2420, %v2724
  %v2935 = vadd.f32 %v2421, %v2729
  %v2936 = vadd.f32 %v2422, %v2732
  %v2937 = vadd.f32 %v2423, %v2737
  %v2938 = vadd.f32 %v2424, %v2740
  %v2939 = vadd.f32 %v2425, %v2745
  %v2940 = vadd.f32 %v2426, %v2748
  %v2941 = vadd.f32 %v2427, %v2753
  %v2942 = vadd.f32 %v2428, %v2756
  %v2943 = vadd.f32 %v2429, %v2761
  %v2944 = vadd.f32 %v2430, %v2764
  %v2945 = vadd.f32 %v2431, %v2769
  %v2946 = vadd.f32 %v2432, %v2772
  %v2947 = vadd.f32 %v2433, %v2777
  %v2948 = vadd.f32 %v2434, %v2780
  %v2949 = vadd.f32 %v2435, %v2785
  %v2950 = vadd.f32 %v2436, %v2788
  %v2951 = vadd.f32 %v2437, %v2793
  %v2952 = vadd.f32 %v2438, %v2796
  %v2953 = vadd.f32 %v2439, %v2801
  %v2954 = vadd.f32 %v2440, %v2804
  %v2955 = vadd.f32 %v2441, %v2809
  %v2956 = vadd.f32 %v2442, %v2812
  %v2957 = vadd.f32 %v2443, %v2817
  %v2958 = vadd.f32 %v2444, %v2820
  %v2959 = vadd.f32 %v2445, %v2825
  %v2960 = vadd.f32 %v2446, %v2828
  %v2961 = vadd.f32 %v2447, %v2833
  %v2962 = vadd.f32 %v2448, %v2836
  %v2963 = vadd.f32 %v2449, %v2841
  %v2964 = vadd.f32 %v2450, %v2844
  %v2965 = vadd.f32 %v2451, %v2849
  %v2966 = vadd.f32 %v2452, %v2852
  %v2967 = vadd.f32 %v2453, %v2857
  %v2968 = vadd.f32 %v2454, %v2860
  %v2969 = vadd.f32 %v2455, %v2865
  %v2970 = vadd.f32 %v2456, %v2868
  %v2971 = vadd.f32 %v2457, %v2873
  %v2972 = vadd.f32 %v2458, %v2876
  %v2973 = vadd.f32 %v2459, %v2881
  %v2974 = vadd.f32 %v2460, %v2884
  %v2975 = vadd.f32 %v2461, %v2889
  %v2976 = vadd.f32 %v2462, %v2892
  %v2977 = vadd.f32 %v2463, %v2897
  %v2978 = vadd.f32 %v2464, %v2900
  %v2979 = vadd.f32 %v2465, %v2905
  %v2980 = vadd.f32 %v2466, %v2908
  %v2981 = vadd.f32 %v2467, %v2913
  %v2982 = vadd.f32 %v2468, %v2916
  %s2983 = scalar_lea.vmem %s0, 48
  %v2984 = vld [vmem:[%s2983] sm:$0xff]
  %v2985 = vld [vmem:[%s2983 + $0x8] sm:$0xff]
  %v2986 = vld [vmem:[%s2983 + $0x18] sm:$0xff]
  %v2987 = vld [vmem:[%s2983 + $0x20] sm:$0xff]
  %v2988 = vld [vmem:[%s2983 + $0x30] sm:$0xff]
  %v2989 = vld [vmem:[%s2983 + $0x38] sm:$0xff]
  %v2990 = vld [vmem:[%s2983 + $0x48] sm:$0xff]
  %v2991 = vld [vmem:[%s2983 + $0x50] sm:$0xff]
  %v2992 = vld [vmem:[%s2983 + $0x60] sm:$0xff]
  %v2993 = vld [vmem:[%s2983 + $0x68] sm:$0xff]
  %v2994 = vld [vmem:[%s2983 + $0x78] sm:$0xff]
  %v2995 = vld [vmem:[%s2983 + $0x80] sm:$0xff]
  %v2996 = vld [vmem:[%s2983 + $0x90] sm:$0xff]
  %v2997 = vld [vmem:[%s2983 + $0x98] sm:$0xff]
  %v2998 = vld [vmem:[%s2983 + $0xa8] sm:$0xff]
  %v2999 = vld [vmem:[%s2983 + $0xb0] sm:$0xff]
  %v3000 = vld [vmem:[%s2983 + $0xc0] sm:$0xff]
  %v3001 = vld [vmem:[%s2983 + $0xc8] sm:$0xff]
  %v3002 = vld [vmem:[%s2983 + $0xd8] sm:$0xff]
  %v3003 = vld [vmem:[%s2983 + $0xe0] sm:$0xff]
  %v3004 = vld [vmem:[%s2983 + $0xf0] sm:$0xff]
  %v3005 = vld [vmem:[%s2983 + $0xf8] sm:$0xff]
  %v3006 = vld [vmem:[%s2983 + $0x108] sm:$0xff]
  %v3007 = vld [vmem:[%s2983 + $0x110] sm:$0xff]
  %v3008 = vld [vmem:[%s2983 + $0x120] sm:$0xff]
  %v3009 = vld [vmem:[%s2983 + $0x128] sm:$0xff]
  %v3010 = vld [vmem:[%s2983 + $0x138] sm:$0xff]
  %v3011 = vld [vmem:[%s2983 + $0x140] sm:$0xff]
  %v3012 = vld [vmem:[%s2983 + $0x150] sm:$0xff]
  %v3013 = vld [vmem:[%s2983 + $0x158] sm:$0xff]
  %v3014 = vld [vmem:[%s2983 + $0x168] sm:$0xff]
  %v3015 = vld [vmem:[%s2983 + $0x170] sm:$0xff]
  %v3016 = vld [vmem:[%s2983 + $0x1b0] sm:$0xff]
  %v3017 = vld [vmem:[%s2983 + $0x1b8] sm:$0xff]
  %v3018 = vld [vmem:[%s2983 + $0x1c8] sm:$0xff]
  %v3019 = vld [vmem:[%s2983 + $0x1d0] sm:$0xff]
  %v3020 = vld [vmem:[%s2983 + $0x1e0] sm:$0xff]
  %v3021 = vld [vmem:[%s2983 + $0x1e8] sm:$0xff]
  %v3022 = vld [vmem:[%s2983 + $0x1f8] sm:$0xff]
  %v3023 = vld [vmem:[%s2983 + $0x200] sm:$0xff]
  %v3024 = vld [vmem:[%s2983 + $0x210] sm:$0xff]
  %v3025 = vld [vmem:[%s2983 + $0x218] sm:$0xff]
  %v3026 = vld [vmem:[%s2983 + $0x228] sm:$0xff]
  %v3027 = vld [vmem:[%s2983 + $0x230] sm:$0xff]
  %v3028 = vld [vmem:[%s2983 + $0x240] sm:$0xff]
  %v3029 = vld [vmem:[%s2983 + $0x248] sm:$0xff]
  %v3030 = vld [vmem:[%s2983 + $0x258] sm:$0xff]
  %v3031 = vld [vmem:[%s2983 + $0x260] sm:$0xff]
  %v3032 = vld [vmem:[%s2983 + $0x270] sm:$0xff]
  %v3033 = vld [vmem:[%s2983 + $0x278] sm:$0xff]
  %v3034 = vld [vmem:[%s2983 + $0x288] sm:$0xff]
  %v3035 = vld [vmem:[%s2983 + $0x290] sm:$0xff]
  %v3036 = vld [vmem:[%s2983 + $0x2a0] sm:$0xff]
  %v3037 = vld [vmem:[%s2983 + $0x2a8] sm:$0xff]
  %v3038 = vld [vmem:[%s2983 + $0x2b8] sm:$0xff]
  %v3039 = vld [vmem:[%s2983 + $0x2c0] sm:$0xff]
  %v3040 = vld [vmem:[%s2983 + $0x2d0] sm:$0xff]
  %v3041 = vld [vmem:[%s2983 + $0x2d8] sm:$0xff]
  %v3042 = vld [vmem:[%s2983 + $0x2e8] sm:$0xff]
  %v3043 = vld [vmem:[%s2983 + $0x2f0] sm:$0xff]
  %v3044 = vld [vmem:[%s2983 + $0x300] sm:$0xff]
  %v3045 = vld [vmem:[%s2983 + $0x308] sm:$0xff]
  %v3046 = vld [vmem:[%s2983 + $0x318] sm:$0xff]
  %v3047 = vld [vmem:[%s2983 + $0x320] sm:$0xff]
  %v3048 = vpack.c.bf16 %v2985, %v2984
  %v3049 = vpack.c.bf16 %v2987, %v2986
  %v3050 = vpack.c.bf16 %v2989, %v2988
  %v3051 = vpack.c.bf16 %v2991, %v2990
  %v3052 = vpack.c.bf16 %v2993, %v2992
  %v3053 = vpack.c.bf16 %v2995, %v2994
  %v3054 = vpack.c.bf16 %v2997, %v2996
  %v3055 = vpack.c.bf16 %v2999, %v2998
  %v3056 = vpack.c.bf16 %v3001, %v3000
  %v3057 = vpack.c.bf16 %v3003, %v3002
  %v3058 = vpack.c.bf16 %v3005, %v3004
  %v3059 = vpack.c.bf16 %v3007, %v3006
  %v3060 = vpack.c.bf16 %v3009, %v3008
  %v3061 = vpack.c.bf16 %v3011, %v3010
  %v3062 = vpack.c.bf16 %v3013, %v3012
  %v3063 = vpack.c.bf16 %v3015, %v3014
  %v3064 = vpack.c.bf16 %v3017, %v3016
  %v3065 = vpack.c.bf16 %v3019, %v3018
  %v3066 = vpack.c.bf16 %v3021, %v3020
  %v3067 = vpack.c.bf16 %v3023, %v3022
  %v3068 = vpack.c.bf16 %v3025, %v3024
  %v3069 = vpack.c.bf16 %v3027, %v3026
  %v3070 = vpack.c.bf16 %v3029, %v3028
  %v3071 = vpack.c.bf16 %v3031, %v3030
  %v3072 = vpack.c.bf16 %v3033, %v3032
  %v3073 = vpack.c.bf16 %v3035, %v3034
  %v3074 = vpack.c.bf16 %v3037, %v3036
  %v3075 = vpack.c.bf16 %v3039, %v3038
  %v3076 = vpack.c.bf16 %v3041, %v3040
  %v3077 = vpack.c.bf16 %v3043, %v3042
  %v3078 = vpack.c.bf16 %v3045, %v3044
  %v3079 = vpack.c.bf16 %v3047, %v3046
  %s3080 = scalar_lea.vmem %s1, 384
  %v3081 = vld [vmem:[%s3080] sm:$0xf]
  %v3082 = vld [vmem:[%s3080 + $0x4] sm:$0xf]
  %v3083 = vld [vmem:[%s3080 + $0x8] sm:$0xf]
  %v3084 = vld [vmem:[%s3080 + $0xc] sm:$0xf]
  %v3085 = vld [vmem:[%s3080 + $0x10] sm:$0xf]
  %v3086 = vld [vmem:[%s3080 + $0x14] sm:$0xf]
  %v3087 = vld [vmem:[%s3080 + $0x18] sm:$0xf]
  %v3088 = vld [vmem:[%s3080 + $0x1c] sm:$0xf]
  %v3089 = vld [vmem:[%s3080 + $0x20] sm:$0xf]
  %v3090 = vld [vmem:[%s3080 + $0x24] sm:$0xf]
  %v3091 = vld [vmem:[%s3080 + $0x28] sm:$0xf]
  %v3092 = vld [vmem:[%s3080 + $0x2c] sm:$0xf]
  %v3093 = vld [vmem:[%s3080 + $0x30] sm:$0xf]
  %v3094 = vld [vmem:[%s3080 + $0x34] sm:$0xf]
  %v3095 = vld [vmem:[%s3080 + $0x38] sm:$0xf]
  %v3096 = vld [vmem:[%s3080 + $0x3c] sm:$0xf]
  %v3113 = vunpack.c.l.b16 %v3081
  %v3114 = vunpack.c.l.b16 %v3082
  %v3115 = vunpack.c.l.b16 %v3083
  %v3116 = vunpack.c.l.b16 %v3084
  %v3117 = vunpack.c.l.b16 %v3085
  %v3118 = vunpack.c.l.b16 %v3086
  %v3119 = vunpack.c.l.b16 %v3087
  %v3120 = vunpack.c.l.b16 %v3088
  %v3121 = vunpack.c.l.b16 %v3089
  %v3122 = vunpack.c.l.b16 %v3090
  %v3123 = vunpack.c.l.b16 %v3091
  %v3124 = vunpack.c.l.b16 %v3092
  %v3125 = vunpack.c.l.b16 %v3093
  %v3126 = vunpack.c.l.b16 %v3094
  %v3127 = vunpack.c.l.b16 %v3095
  %v3128 = vunpack.c.l.b16 %v3096
  %v3129 = vpack.c.b16 %v3114, %v3113
  %v3130 = vpack.c.b16 %v3116, %v3115
  %v3131 = vpack.c.b16 %v3118, %v3117
  %v3132 = vpack.c.b16 %v3120, %v3119
  %v3133 = vpack.c.b16 %v3122, %v3121
  %v3134 = vpack.c.b16 %v3124, %v3123
  %v3135 = vpack.c.b16 %v3126, %v3125
  %v3136 = vpack.c.b16 %v3128, %v3127
  %3145 = vmatprep.subr.bf16.mxu0 0
  %3146 = vmatpush1.bf16.msra.mxu0 %v3129
  %3147 = vmatprep.subr.bf16.mxu0 0
  %3148 = vmatpush1.bf16.msra.mxu0 %v3130
  %3149 = vmatprep.subr.bf16.mxu0 0
  %3150 = vmatpush1.bf16.msra.mxu0 %v3131
  %3151 = vmatprep.subr.bf16.mxu0 0
  %3152 = vmatpush1.bf16.msra.mxu0 %v3132
  %3153 = vmatprep.subr.bf16.mxu0 0
  %3154 = vmatpush1.bf16.msra.mxu0 %v3133
  %3155 = vmatprep.subr.bf16.mxu0 0
  %3156 = vmatpush1.bf16.msra.mxu0 %v3134
  %3157 = vmatprep.subr.bf16.mxu0 0
  %3158 = vmatpush1.bf16.msra.mxu0 %v3135
  %3159 = vmatprep.subr.bf16.mxu0 0
  %3160 = vmatpush1.bf16.msra.mxu0 %v3136
  %3161 = vmatprep.subr.bf16.mxu0 0
  %3162 = vmatpush1.bf16.msra.mxu0 0
  %3163 = vmatprep.subr.bf16.mxu0 0
  %3164 = vmatpush1.bf16.msra.mxu0 0
  %3165 = vmatprep.subr.bf16.mxu0 0
  %3166 = vmatpush1.bf16.msra.mxu0 0
  %3167 = vmatprep.subr.bf16.mxu0 0
  %3168 = vmatpush1.bf16.msra.mxu0 0
  %3169 = vmatprep.subr.bf16.mxu0 0
  %3170 = vmatpush1.bf16.msra.mxu0 0
  %3171 = vmatprep.subr.bf16.mxu0 0
  %3172 = vmatpush1.bf16.msra.mxu0 0
  %3173 = vmatprep.subr.bf16.mxu0 0
  %3174 = vmatpush1.bf16.msra.mxu0 0
  %3175 = vmatprep.subr.bf16.mxu0 0
  %3176 = vmatpush1.bf16.msra.mxu0 0
  %3177 = vmatprep.mubr.bf16.mxu0 0
  %3178 = vmatmul.mubr.bf16.gmra.mrb[0].mxu0 %v3048
  %v3179 = vpop.f32.mrb[0].mxu0
  %v3180 = vadd.f32 0.0, %v3179
  %v3181 = vpop.f32.mrb[0].mxu0
  %v3182 = vpop.f32.mrb[0].mxu0
  %v3183 = vadd.f32 0.0, %v3182
  %v3184 = vpop.f32.mrb[0].mxu0
  %3185 = vmatprep.mubr.bf16.mxu0 0
  %3186 = vmatmul.mubr.bf16.gmra.mrb[0].mxu0 %v3049
  %v3187 = vpop.f32.mrb[0].mxu0
  %v3188 = vadd.f32 0.0, %v3187
  %v3189 = vpop.f32.mrb[0].mxu0
  %v3190 = vpop.f32.mrb[0].mxu0
  %v3191 = vadd.f32 0.0, %v3190
  %v3192 = vpop.f32.mrb[0].mxu0
  %3193 = vmatprep.mubr.bf16.mxu0 0
  %3194 = vmatmul.mubr.bf16.gmra.mrb[0].mxu0 %v3050
  %v3195 = vpop.f32.mrb[0].mxu0
  %v3196 = vadd.f32 0.0, %v3195
  %v3197 = vpop.f32.mrb[0].mxu0
  %v3198 = vpop.f32.mrb[0].mxu0
  %v3199 = vadd.f32 0.0, %v3198
  %v3200 = vpop.f32.mrb[0].mxu0
  %3201 = vmatprep.mubr.bf16.mxu0 0
  %3202 = vmatmul.mubr.bf16.gmra.mrb[0].mxu0 %v3051
  %v3203 = vpop.f32.mrb[0].mxu0
  %v3204 = vadd.f32 0.0, %v3203
  %v3205 = vpop.f32.mrb[0].mxu0
  %v3206 = vpop.f32.mrb[0].mxu0
  %v3207 = vadd.f32 0.0, %v3206
  %v3208 = vpop.f32.mrb[0].mxu0
  %3209 = vmatprep.mubr.bf16.mxu0 0
  %3210 = vmatmul.mubr.bf16.gmra.mrb[0].mxu0 %v3052
  %v3211 = vpop.f32.mrb[0].mxu0
  %v3212 = vadd.f32 0.0, %v3211
  %v3213 = vpop.f32.mrb[0].mxu0
  %v3214 = vpop.f32.mrb[0].mxu0
  %v3215 = vadd.f32 0.0, %v3214
  %v3216 = vpop.f32.mrb[0].mxu0
  %3217 = vmatprep.mubr.bf16.mxu0 0
  %3218 = vmatmul.mubr.bf16.gmra.mrb[0].mxu0 %v3053
  %v3219 = vpop.f32.mrb[0].mxu0
  %v3220 = vadd.f32 0.0, %v3219
  %v3221 = vpop.f32.mrb[0].mxu0
  %v3222 = vpop.f32.mrb[0].mxu0
  %v3223 = vadd.f32 0.0, %v3222
  %v3224 = vpop.f32.mrb[0].mxu0
  %3225 = vmatprep.mubr.bf16.mxu0 0
  %3226 = vmatmul.mubr.bf16.gmra.mrb[0].mxu0 %v3054
  %v3227 = vpop.f32.mrb[0].mxu0
  %v3228 = vadd.f32 0.0, %v3227
  %v3229 = vpop.f32.mrb[0].mxu0
  %v3230 = vpop.f32.mrb[0].mxu0
  %v3231 = vadd.f32 0.0, %v3230
  %v3232 = vpop.f32.mrb[0].mxu0
  %3233 = vmatprep.mubr.bf16.mxu0 0
  %3234 = vmatmul.mubr.bf16.gmra.mrb[0].mxu0 %v3055
  %v3235 = vpop.f32.mrb[0].mxu0
  %v3236 = vadd.f32 0.0, %v3235
  %v3237 = vpop.f32.mrb[0].mxu0
  %v3238 = vpop.f32.mrb[0].mxu0
  %v3239 = vadd.f32 0.0, %v3238
  %v3240 = vpop.f32.mrb[0].mxu0
  %3241 = vmatprep.mubr.bf16.mxu0 0
  %3242 = vmatmul.mubr.bf16.gmra.mrb[0].mxu0 %v3056
  %v3243 = vpop.f32.mrb[0].mxu0
  %v3244 = vadd.f32 0.0, %v3243
  %v3245 = vpop.f32.mrb[0].mxu0
  %v3246 = vpop.f32.mrb[0].mxu0
  %v3247 = vadd.f32 0.0, %v3246
  %v3248 = vpop.f32.mrb[0].mxu0
  %3249 = vmatprep.mubr.bf16.mxu0 0
  %3250 = vmatmul.mubr.bf16.gmra.mrb[0].mxu0 %v3057
  %v3251 = vpop.f32.mrb[0].mxu0
  %v3252 = vadd.f32 0.0, %v3251
  %v3253 = vpop.f32.mrb[0].mxu0
  %v3254 = vpop.f32.mrb[0].mxu0
  %v3255 = vadd.f32 0.0, %v3254
  %v3256 = vpop.f32.mrb[0].mxu0
  %3257 = vmatprep.mubr.bf16.mxu0 0
  %3258 = vmatmul.mubr.bf16.gmra.mrb[0].mxu0 %v3058
  %v3259 = vpop.f32.mrb[0].mxu0
  %v3260 = vadd.f32 0.0, %v3259
  %v3261 = vpop.f32.mrb[0].mxu0
  %v3262 = vpop.f32.mrb[0].mxu0
  %v3263 = vadd.f32 0.0, %v3262
  %v3264 = vpop.f32.mrb[0].mxu0
  %3265 = vmatprep.mubr.bf16.mxu0 0
  %3266 = vmatmul.mubr.bf16.gmra.mrb[0].mxu0 %v3059
  %v3267 = vpop.f32.mrb[0].mxu0
  %v3268 = vadd.f32 0.0, %v3267
  %v3269 = vpop.f32.mrb[0].mxu0
  %v3270 = vpop.f32.mrb[0].mxu0
  %v3271 = vadd.f32 0.0, %v3270
  %v3272 = vpop.f32.mrb[0].mxu0
  %3273 = vmatprep.mubr.bf16.mxu0 0
  %3274 = vmatmul.mubr.bf16.gmra.mrb[0].mxu0 %v3060
  %v3275 = vpop.f32.mrb[0].mxu0
  %v3276 = vadd.f32 0.0, %v3275
  %v3277 = vpop.f32.mrb[0].mxu0
  %v3278 = vpop.f32.mrb[0].mxu0
  %v3279 = vadd.f32 0.0, %v3278
  %v3280 = vpop.f32.mrb[0].mxu0
  %3281 = vmatprep.mubr.bf16.mxu0 0
  %3282 = vmatmul.mubr.bf16.gmra.mrb[0].mxu0 %v3061
  %v3283 = vpop.f32.mrb[0].mxu0
  %v3284 = vadd.f32 0.0, %v3283
  %v3285 = vpop.f32.mrb[0].mxu0
  %v3286 = vpop.f32.mrb[0].mxu0
  %v3287 = vadd.f32 0.0, %v3286
  %v3288 = vpop.f32.mrb[0].mxu0
  %3289 = vmatprep.mubr.bf16.mxu0 0
  %3290 = vmatmul.mubr.bf16.gmra.mrb[0].mxu0 %v3062
  %v3291 = vpop.f32.mrb[0].mxu0
  %v3292 = vadd.f32 0.0, %v3291
  %v3293 = vpop.f32.mrb[0].mxu0
  %v3294 = vpop.f32.mrb[0].mxu0
  %v3295 = vadd.f32 0.0, %v3294
  %v3296 = vpop.f32.mrb[0].mxu0
  %3297 = vmatprep.mubr.bf16.mxu0 0
  %3298 = vmatmul.mubr.bf16.gmra.mrb[0].mxu0 %v3063
  %v3299 = vpop.f32.mrb[0].mxu0
  %v3300 = vadd.f32 0.0, %v3299
  %v3301 = vpop.f32.mrb[0].mxu0
  %v3302 = vpop.f32.mrb[0].mxu0
  %v3303 = vadd.f32 0.0, %v3302
  %v3304 = vpop.f32.mrb[0].mxu0
  %3305 = vmatprep.mubr.bf16.mxu0 0
  %3306 = vmatmul.mubr.bf16.gmra.mrb[0].mxu0 %v3064
  %v3307 = vpop.f32.mrb[0].mxu0
  %v3308 = vadd.f32 0.0, %v3307
  %v3309 = vpop.f32.mrb[0].mxu0
  %v3310 = vpop.f32.mrb[0].mxu0
  %v3311 = vadd.f32 0.0, %v3310
  %v3312 = vpop.f32.mrb[0].mxu0
  %3313 = vmatprep.mubr.bf16.mxu0 0
  %3314 = vmatmul.mubr.bf16.gmra.mrb[0].mxu0 %v3065
  %v3315 = vpop.f32.mrb[0].mxu0
  %v3316 = vadd.f32 0.0, %v3315
  %v3317 = vpop.f32.mrb[0].mxu0
  %v3318 = vpop.f32.mrb[0].mxu0
  %v3319 = vadd.f32 0.0, %v3318
  %v3320 = vpop.f32.mrb[0].mxu0
  %3321 = vmatprep.mubr.bf16.mxu0 0
  %3322 = vmatmul.mubr.bf16.gmra.mrb[0].mxu0 %v3066
  %v3323 = vpop.f32.mrb[0].mxu0
  %v3324 = vadd.f32 0.0, %v3323
  %v3325 = vpop.f32.mrb[0].mxu0
  %v3326 = vpop.f32.mrb[0].mxu0
  %v3327 = vadd.f32 0.0, %v3326
  %v3328 = vpop.f32.mrb[0].mxu0
  %3329 = vmatprep.mubr.bf16.mxu0 0
  %3330 = vmatmul.mubr.bf16.gmra.mrb[0].mxu0 %v3067
  %v3331 = vpop.f32.mrb[0].mxu0
  %v3332 = vadd.f32 0.0, %v3331
  %v3333 = vpop.f32.mrb[0].mxu0
  %v3334 = vpop.f32.mrb[0].mxu0
  %v3335 = vadd.f32 0.0, %v3334
  %v3336 = vpop.f32.mrb[0].mxu0
  %3337 = vmatprep.mubr.bf16.mxu0 0
  %3338 = vmatmul.mubr.bf16.gmra.mrb[0].mxu0 %v3068
  %v3339 = vpop.f32.mrb[0].mxu0
  %v3340 = vadd.f32 0.0, %v3339
  %v3341 = vpop.f32.mrb[0].mxu0
  %v3342 = vpop.f32.mrb[0].mxu0
  %v3343 = vadd.f32 0.0, %v3342
  %v3344 = vpop.f32.mrb[0].mxu0
  %3345 = vmatprep.mubr.bf16.mxu0 0
  %3346 = vmatmul.mubr.bf16.gmra.mrb[0].mxu0 %v3069
  %v3347 = vpop.f32.mrb[0].mxu0
  %v3348 = vadd.f32 0.0, %v3347
  %v3349 = vpop.f32.mrb[0].mxu0
  %v3350 = vpop.f32.mrb[0].mxu0
  %v3351 = vadd.f32 0.0, %v3350
  %v3352 = vpop.f32.mrb[0].mxu0
  %3353 = vmatprep.mubr.bf16.mxu0 0
  %3354 = vmatmul.mubr.bf16.gmra.mrb[0].mxu0 %v3070
  %v3355 = vpop.f32.mrb[0].mxu0
  %v3356 = vadd.f32 0.0, %v3355
  %v3357 = vpop.f32.mrb[0].mxu0
  %v3358 = vpop.f32.mrb[0].mxu0
  %v3359 = vadd.f32 0.0, %v3358
  %v3360 = vpop.f32.mrb[0].mxu0
  %3361 = vmatprep.mubr.bf16.mxu0 0
  %3362 = vmatmul.mubr.bf16.gmra.mrb[0].mxu0 %v3071
  %v3363 = vpop.f32.mrb[0].mxu0
  %v3364 = vadd.f32 0.0, %v3363
  %v3365 = vpop.f32.mrb[0].mxu0
  %v3366 = vpop.f32.mrb[0].mxu0
  %v3367 = vadd.f32 0.0, %v3366
  %v3368 = vpop.f32.mrb[0].mxu0
  %3369 = vmatprep.mubr.bf16.mxu0 0
  %3370 = vmatmul.mubr.bf16.gmra.mrb[0].mxu0 %v3072
  %v3371 = vpop.f32.mrb[0].mxu0
  %v3372 = vadd.f32 0.0, %v3371
  %v3373 = vpop.f32.mrb[0].mxu0
  %v3374 = vpop.f32.mrb[0].mxu0
  %v3375 = vadd.f32 0.0, %v3374
  %v3376 = vpop.f32.mrb[0].mxu0
  %3377 = vmatprep.mubr.bf16.mxu0 0
  %3378 = vmatmul.mubr.bf16.gmra.mrb[0].mxu0 %v3073
  %v3379 = vpop.f32.mrb[0].mxu0
  %v3380 = vadd.f32 0.0, %v3379
  %v3381 = vpop.f32.mrb[0].mxu0
  %v3382 = vpop.f32.mrb[0].mxu0
  %v3383 = vadd.f32 0.0, %v3382
  %v3384 = vpop.f32.mrb[0].mxu0
  %3385 = vmatprep.mubr.bf16.mxu0 0
  %3386 = vmatmul.mubr.bf16.gmra.mrb[0].mxu0 %v3074
  %v3387 = vpop.f32.mrb[0].mxu0
  %v3388 = vadd.f32 0.0, %v3387
  %v3389 = vpop.f32.mrb[0].mxu0
  %v3390 = vpop.f32.mrb[0].mxu0
  %v3391 = vadd.f32 0.0, %v3390
  %v3392 = vpop.f32.mrb[0].mxu0
  %3393 = vmatprep.mubr.bf16.mxu0 0
  %3394 = vmatmul.mubr.bf16.gmra.mrb[0].mxu0 %v3075
  %v3395 = vpop.f32.mrb[0].mxu0
  %v3396 = vadd.f32 0.0, %v3395
  %v3397 = vpop.f32.mrb[0].mxu0
  %v3398 = vpop.f32.mrb[0].mxu0
  %v3399 = vadd.f32 0.0, %v3398
  %v3400 = vpop.f32.mrb[0].mxu0
  %3401 = vmatprep.mubr.bf16.mxu0 0
  %3402 = vmatmul.mubr.bf16.gmra.mrb[0].mxu0 %v3076
  %v3403 = vpop.f32.mrb[0].mxu0
  %v3404 = vadd.f32 0.0, %v3403
  %v3405 = vpop.f32.mrb[0].mxu0
  %v3406 = vpop.f32.mrb[0].mxu0
  %v3407 = vadd.f32 0.0, %v3406
  %v3408 = vpop.f32.mrb[0].mxu0
  %3409 = vmatprep.mubr.bf16.mxu0 0
  %3410 = vmatmul.mubr.bf16.gmra.mrb[0].mxu0 %v3077
  %v3411 = vpop.f32.mrb[0].mxu0
  %v3412 = vadd.f32 0.0, %v3411
  %v3413 = vpop.f32.mrb[0].mxu0
  %v3414 = vpop.f32.mrb[0].mxu0
  %v3415 = vadd.f32 0.0, %v3414
  %v3416 = vpop.f32.mrb[0].mxu0
  %3417 = vmatprep.mubr.bf16.mxu0 0
  %3418 = vmatmul.mubr.bf16.gmra.mrb[0].mxu0 %v3078
  %v3419 = vpop.f32.mrb[0].mxu0
  %v3420 = vadd.f32 0.0, %v3419
  %v3421 = vpop.f32.mrb[0].mxu0
  %v3422 = vpop.f32.mrb[0].mxu0
  %v3423 = vadd.f32 0.0, %v3422
  %v3424 = vpop.f32.mrb[0].mxu0
  %3425 = vmatprep.mubr.bf16.mxu0 0
  %3426 = vmatmul.mubr.bf16.gmra.mrb[0].mxu0 %v3079
  %v3427 = vpop.f32.mrb[0].mxu0
  %v3428 = vadd.f32 0.0, %v3427
  %v3429 = vpop.f32.mrb[0].mxu0
  %v3430 = vpop.f32.mrb[0].mxu0
  %v3431 = vadd.f32 0.0, %v3430
  %v3432 = vpop.f32.mrb[0].mxu0
  %3433 = vdwg.mxu0
  %v3434 = vadd.f32 %v2919, %v3180
  %v3435 = vadd.f32 %v2920, %v3183
  %v3436 = vadd.f32 %v2921, %v3188
  %v3437 = vadd.f32 %v2922, %v3191
  %v3438 = vadd.f32 %v2923, %v3196
  %v3439 = vadd.f32 %v2924, %v3199
  %v3440 = vadd.f32 %v2925, %v3204
  %v3441 = vadd.f32 %v2926, %v3207
  %v3442 = vadd.f32 %v2927, %v3212
  %v3443 = vadd.f32 %v2928, %v3215
  %v3444 = vadd.f32 %v2929, %v3220
  %v3445 = vadd.f32 %v2930, %v3223
  %v3446 = vadd.f32 %v2931, %v3228
  %v3447 = vadd.f32 %v2932, %v3231
  %v3448 = vadd.f32 %v2933, %v3236
  %v3449 = vadd.f32 %v2934, %v3239
  %v3450 = vadd.f32 %v2935, %v3244
  %v3451 = vadd.f32 %v2936, %v3247
  %v3452 = vadd.f32 %v2937, %v3252
  %v3453 = vadd.f32 %v2938, %v3255
  %v3454 = vadd.f32 %v2939, %v3260
  %v3455 = vadd.f32 %v2940, %v3263
  %v3456 = vadd.f32 %v2941, %v3268
  %v3457 = vadd.f32 %v2942, %v3271
  %v3458 = vadd.f32 %v2943, %v3276
  %v3459 = vadd.f32 %v2944, %v3279
  %v3460 = vadd.f32 %v2945, %v3284
  %v3461 = vadd.f32 %v2946, %v3287
  %v3462 = vadd.f32 %v2947, %v3292
  %v3463 = vadd.f32 %v2948, %v3295
  %v3464 = vadd.f32 %v2949, %v3300
  %v3465 = vadd.f32 %v2950, %v3303
  %v3466 = vadd.f32 %v2951, %v3308
  %v3467 = vadd.f32 %v2952, %v3311
  %v3468 = vadd.f32 %v2953, %v3316
  %v3469 = vadd.f32 %v2954, %v3319
  %v3470 = vadd.f32 %v2955, %v3324
  %v3471 = vadd.f32 %v2956, %v3327
  %v3472 = vadd.f32 %v2957, %v3332
  %v3473 = vadd.f32 %v2958, %v3335
  %v3474 = vadd.f32 %v2959, %v3340
  %v3475 = vadd.f32 %v2960, %v3343
  %v3476 = vadd.f32 %v2961, %v3348
  %v3477 = vadd.f32 %v2962, %v3351
  %v3478 = vadd.f32 %v2963, %v3356
  %v3479 = vadd.f32 %v2964, %v3359
  %v3480 = vadd.f32 %v2965, %v3364
  %v3481 = vadd.f32 %v2966, %v3367
  %v3482 = vadd.f32 %v2967, %v3372
  %v3483 = vadd.f32 %v2968, %v3375
  %v3484 = vadd.f32 %v2969, %v3380
  %v3485 = vadd.f32 %v2970, %v3383
  %v3486 = vadd.f32 %v2971, %v3388
  %v3487 = vadd.f32 %v2972, %v3391
  %v3488 = vadd.f32 %v2973, %v3396
  %v3489 = vadd.f32 %v2974, %v3399
  %v3490 = vadd.f32 %v2975, %v3404
  %v3491 = vadd.f32 %v2976, %v3407
  %v3492 = vadd.f32 %v2977, %v3412
  %v3493 = vadd.f32 %v2978, %v3415
  %v3494 = vadd.f32 %v2979, %v3420
  %v3495 = vadd.f32 %v2980, %v3423
  %v3496 = vadd.f32 %v2981, %v3428
  %v3497 = vadd.f32 %v2982, %v3431
  %v3498 = vld [vmem:[%s2983 + $0x1] sm:$0xff]
  %v3499 = vld [vmem:[%s2983 + $0x9] sm:$0xff]
  %v3500 = vld [vmem:[%s2983 + $0x19] sm:$0xff]
  %v3501 = vld [vmem:[%s2983 + $0x21] sm:$0xff]
  %v3502 = vld [vmem:[%s2983 + $0x31] sm:$0xff]
  %v3503 = vld [vmem:[%s2983 + $0x39] sm:$0xff]
  %v3504 = vld [vmem:[%s2983 + $0x49] sm:$0xff]
  %v3505 = vld [vmem:[%s2983 + $0x51] sm:$0xff]
  %v3506 = vld [vmem:[%s2983 + $0x61] sm:$0xff]
  %v3507 = vld [vmem:[%s2983 + $0x69] sm:$0xff]
  %v3508 = vld [vmem:[%s2983 + $0x79] sm:$0xff]
  %v3509 = vld [vmem:[%s2983 + $0x81] sm:$0xff]
  %v3510 = vld [vmem:[%s2983 + $0x91] sm:$0xff]
  %v3511 = vld [vmem:[%s2983 + $0x99] sm:$0xff]
  %v3512 = vld [vmem:[%s2983 + $0xa9] sm:$0xff]
  %v3513 = vld [vmem:[%s2983 + $0xb1] sm:$0xff]
  %v3514 = vld [vmem:[%s2983 + $0xc1] sm:$0xff]
  %v3515 = vld [vmem:[%s2983 + $0xc9] sm:$0xff]
  %v3516 = vld [vmem:[%s2983 + $0xd9] sm:$0xff]
  %v3517 = vld [vmem:[%s2983 + $0xe1] sm:$0xff]
  %v3518 = vld [vmem:[%s2983 + $0xf1] sm:$0xff]
  %v3519 = vld [vmem:[%s2983 + $0xf9] sm:$0xff]
  %v3520 = vld [vmem:[%s2983 + $0x109] sm:$0xff]
  %v3521 = vld [vmem:[%s2983 + $0x111] sm:$0xff]
  %v3522 = vld [vmem:[%s2983 + $0x121] sm:$0xff]
  %v3523 = vld [vmem:[%s2983 + $0x129] sm:$0xff]
  %v3524 = vld [vmem:[%s2983 + $0x139] sm:$0xff]
  %v3525 = vld [vmem:[%s2983 + $0x141] sm:$0xff]
  %v3526 = vld [vmem:[%s2983 + $0x151] sm:$0xff]
  %v3527 = vld [vmem:[%s2983 + $0x159] sm:$0xff]
  %v3528 = vld [vmem:[%s2983 + $0x169] sm:$0xff]
  %v3529 = vld [vmem:[%s2983 + $0x171] sm:$0xff]
  %v3530 = vld [vmem:[%s2983 + $0x1b1] sm:$0xff]
  %v3531 = vld [vmem:[%s2983 + $0x1b9] sm:$0xff]
  %v3532 = vld [vmem:[%s2983 + $0x1c9] sm:$0xff]
  %v3533 = vld [vmem:[%s2983 + $0x1d1] sm:$0xff]
  %v3534 = vld [vmem:[%s2983 + $0x1e1] sm:$0xff]
  %v3535 = vld [vmem:[%s2983 + $0x1e9] sm:$0xff]
  %v3536 = vld [vmem:[%s2983 + $0x1f9] sm:$0xff]
  %v3537 = vld [vmem:[%s2983 + $0x201] sm:$0xff]
  %v3538 = vld [vmem:[%s2983 + $0x211] sm:$0xff]
  %v3539 = vld [vmem:[%s2983 + $0x219] sm:$0xff]
  %v3540 = vld [vmem:[%s2983 + $0x229] sm:$0xff]
  %v3541 = vld [vmem:[%s2983 + $0x231] sm:$0xff]
  %v3542 = vld [vmem:[%s2983 + $0x241] sm:$0xff]
  %v3543 = vld [vmem:[%s2983 + $0x249] sm:$0xff]
  %v3544 = vld [vmem:[%s2983 + $0x259] sm:$0xff]
  %v3545 = vld [vmem:[%s2983 + $0x261] sm:$0xff]
  %v3546 = vld [vmem:[%s2983 + $0x271] sm:$0xff]
  %v3547 = vld [vmem:[%s2983 + $0x279] sm:$0xff]
  %v3548 = vld [vmem:[%s2983 + $0x289] sm:$0xff]
  %v3549 = vld [vmem:[%s2983 + $0x291] sm:$0xff]
  %v3550 = vld [vmem:[%s2983 + $0x2a1] sm:$0xff]
  %v3551 = vld [vmem:[%s2983 + $0x2a9] sm:$0xff]
  %v3552 = vld [vmem:[%s2983 + $0x2b9] sm:$0xff]
  %v3553 = vld [vmem:[%s2983 + $0x2c1] sm:$0xff]
  %v3554 = vld [vmem:[%s2983 + $0x2d1] sm:$0xff]
  %v3555 = vld [vmem:[%s2983 + $0x2d9] sm:$0xff]
  %v3556 = vld [vmem:[%s2983 + $0x2e9] sm:$0xff]
  %v3557 = vld [vmem:[%s2983 + $0x2f1] sm:$0xff]
  %v3558 = vld [vmem:[%s2983 + $0x301] sm:$0xff]
  %v3559 = vld [vmem:[%s2983 + $0x309] sm:$0xff]
  %v3560 = vld [vmem:[%s2983 + $0x319] sm:$0xff]
  %v3561 = vld [vmem:[%s2983 + $0x321] sm:$0xff]
  %v3562 = vpack.c.bf16 %v3499, %v3498
  %v3563 = vpack.c.bf16 %v3501, %v3500
  %v3564 = vpack.c.bf16 %v3503, %v3502
  %v3565 = vpack.c.bf16 %v3505, %v3504
  %v3566 = vpack.c.bf16 %v3507, %v3506
  %v3567 = vpack.c.bf16 %v3509, %v3508
  %v3568 = vpack.c.bf16 %v3511, %v3510
  %v3569 = vpack.c.bf16 %v3513, %v3512
  %v3570 = vpack.c.bf16 %v3515, %v3514
  %v3571 = vpack.c.bf16 %v3517, %v3516
  %v3572 = vpack.c.bf16 %v3519, %v3518
  %v3573 = vpack.c.bf16 %v3521, %v3520
  %v3574 = vpack.c.bf16 %v3523, %v3522
  %v3575 = vpack.c.bf16 %v3525, %v3524
  %v3576 = vpack.c.bf16 %v3527, %v3526
  %v3577 = vpack.c.bf16 %v3529, %v3528
  %v3578 = vpack.c.bf16 %v3531, %v3530
  %v3579 = vpack.c.bf16 %v3533, %v3532
  %v3580 = vpack.c.bf16 %v3535, %v3534
  %v3581 = vpack.c.bf16 %v3537, %v3536
  %v3582 = vpack.c.bf16 %v3539, %v3538
  %v3583 = vpack.c.bf16 %v3541, %v3540
  %v3584 = vpack.c.bf16 %v3543, %v3542
  %v3585 = vpack.c.bf16 %v3545, %v3544
  %v3586 = vpack.c.bf16 %v3547, %v3546
  %v3587 = vpack.c.bf16 %v3549, %v3548
  %v3588 = vpack.c.bf16 %v3551, %v3550
  %v3589 = vpack.c.bf16 %v3553, %v3552
  %v3590 = vpack.c.bf16 %v3555, %v3554
  %v3591 = vpack.c.bf16 %v3557, %v3556
  %v3592 = vpack.c.bf16 %v3559, %v3558
  %v3593 = vpack.c.bf16 %v3561, %v3560
  %s3594 = scalar_lea.vmem %s1, 448
  %v3595 = vld [vmem:[%s3594] sm:$0xf]
  %v3596 = vld [vmem:[%s3594 + $0x4] sm:$0xf]
  %v3597 = vld [vmem:[%s3594 + $0x8] sm:$0xf]
  %v3598 = vld [vmem:[%s3594 + $0xc] sm:$0xf]
  %v3599 = vld [vmem:[%s3594 + $0x10] sm:$0xf]
  %v3600 = vld [vmem:[%s3594 + $0x14] sm:$0xf]
  %v3601 = vld [vmem:[%s3594 + $0x18] sm:$0xf]
  %v3602 = vld [vmem:[%s3594 + $0x1c] sm:$0xf]
  %v3603 = vld [vmem:[%s3594 + $0x20] sm:$0xf]
  %v3604 = vld [vmem:[%s3594 + $0x24] sm:$0xf]
  %v3605 = vld [vmem:[%s3594 + $0x28] sm:$0xf]
  %v3606 = vld [vmem:[%s3594 + $0x2c] sm:$0xf]
  %v3607 = vld [vmem:[%s3594 + $0x30] sm:$0xf]
  %v3608 = vld [vmem:[%s3594 + $0x34] sm:$0xf]
  %v3609 = vld [vmem:[%s3594 + $0x38] sm:$0xf]
  %v3610 = vld [vmem:[%s3594 + $0x3c] sm:$0xf]
  %v3627 = vunpack.c.l.b16 %v3595
  %v3628 = vunpack.c.l.b16 %v3596
  %v3629 = vunpack.c.l.b16 %v3597
  %v3630 = vunpack.c.l.b16 %v3598
  %v3631 = vunpack.c.l.b16 %v3599
  %v3632 = vunpack.c.l.b16 %v3600
  %v3633 = vunpack.c.l.b16 %v3601
  %v3634 = vunpack.c.l.b16 %v3602
  %v3635 = vunpack.c.l.b16 %v3603
  %v3636 = vunpack.c.l.b16 %v3604
  %v3637 = vunpack.c.l.b16 %v3605
  %v3638 = vunpack.c.l.b16 %v3606
  %v3639 = vunpack.c.l.b16 %v3607
  %v3640 = vunpack.c.l.b16 %v3608
  %v3641 = vunpack.c.l.b16 %v3609
  %v3642 = vunpack.c.l.b16 %v3610
  %v3643 = vpack.c.b16 %v3628, %v3627
  %v3644 = vpack.c.b16 %v3630, %v3629
  %v3645 = vpack.c.b16 %v3632, %v3631
  %v3646 = vpack.c.b16 %v3634, %v3633
  %v3647 = vpack.c.b16 %v3636, %v3635
  %v3648 = vpack.c.b16 %v3638, %v3637
  %v3649 = vpack.c.b16 %v3640, %v3639
  %v3650 = vpack.c.b16 %v3642, %v3641
  %3659 = vmatprep.subr.bf16.mxu0 0
  %3660 = vmatpush1.bf16.msra.mxu0 %v3643
  %3661 = vmatprep.subr.bf16.mxu0 0
  %3662 = vmatpush1.bf16.msra.mxu0 %v3644
  %3663 = vmatprep.subr.bf16.mxu0 0
  %3664 = vmatpush1.bf16.msra.mxu0 %v3645
  %3665 = vmatprep.subr.bf16.mxu0 0
  %3666 = vmatpush1.bf16.msra.mxu0 %v3646
  %3667 = vmatprep.subr.bf16.mxu0 0
  %3668 = vmatpush1.bf16.msra.mxu0 %v3647
  %3669 = vmatprep.subr.bf16.mxu0 0
  %3670 = vmatpush1.bf16.msra.mxu0 %v3648
  %3671 = vmatprep.subr.bf16.mxu0 0
  %3672 = vmatpush1.bf16.msra.mxu0 %v3649
  %3673 = vmatprep.subr.bf16.mxu0 0
  %3674 = vmatpush1.bf16.msra.mxu0 %v3650
  %3675 = vmatprep.subr.bf16.mxu0 0
  %3676 = vmatpush1.bf16.msra.mxu0 0
  %3677 = vmatprep.subr.bf16.mxu0 0
  %3678 = vmatpush1.bf16.msra.mxu0 0
  %3679 = vmatprep.subr.bf16.mxu0 0
  %3680 = vmatpush1.bf16.msra.mxu0 0
  %3681 = vmatprep.subr.bf16.mxu0 0
  %3682 = vmatpush1.bf16.msra.mxu0 0
  %3683 = vmatprep.subr.bf16.mxu0 0
  %3684 = vmatpush1.bf16.msra.mxu0 0
  %3685 = vmatprep.subr.bf16.mxu0 0
  %3686 = vmatpush1.bf16.msra.mxu0 0
  %3687 = vmatprep.subr.bf16.mxu0 0
  %3688 = vmatpush1.bf16.msra.mxu0 0
  %3689 = vmatprep.subr.bf16.mxu0 0
  %3690 = vmatpush1.bf16.msra.mxu0 0
  %3691 = vmatprep.mubr.bf16.mxu0 0
  %3692 = vmatmul.mubr.bf16.gmra.mrb[0].mxu0 %v3562
  %v3693 = vpop.f32.mrb[0].mxu0
  %v3694 = vadd.f32 0.0, %v3693
  %v3695 = vpop.f32.mrb[0].mxu0
  %v3696 = vpop.f32.mrb[0].mxu0
  %v3697 = vadd.f32 0.0, %v3696
  %v3698 = vpop.f32.mrb[0].mxu0
  %3699 = vmatprep.mubr.bf16.mxu0 0
  %3700 = vmatmul.mubr.bf16.gmra.mrb[0].mxu0 %v3563
  %v3701 = vpop.f32.mrb[0].mxu0
  %v3702 = vadd.f32 0.0, %v3701
  %v3703 = vpop.f32.mrb[0].mxu0
  %v3704 = vpop.f32.mrb[0].mxu0
  %v3705 = vadd.f32 0.0, %v3704
  %v3706 = vpop.f32.mrb[0].mxu0
  %3707 = vmatprep.mubr.bf16.mxu0 0
  %3708 = vmatmul.mubr.bf16.gmra.mrb[0].mxu0 %v3564
  %v3709 = vpop.f32.mrb[0].mxu0
  %v3710 = vadd.f32 0.0, %v3709
  %v3711 = vpop.f32.mrb[0].mxu0
  %v3712 = vpop.f32.mrb[0].mxu0
  %v3713 = vadd.f32 0.0, %v3712
  %v3714 = vpop.f32.mrb[0].mxu0
  %3715 = vmatprep.mubr.bf16.mxu0 0
  %3716 = vmatmul.mubr.bf16.gmra.mrb[0].mxu0 %v3565
  %v3717 = vpop.f32.mrb[0].mxu0
  %v3718 = vadd.f32 0.0, %v3717
  %v3719 = vpop.f32.mrb[0].mxu0
  %v3720 = vpop.f32.mrb[0].mxu0
  %v3721 = vadd.f32 0.0, %v3720
  %v3722 = vpop.f32.mrb[0].mxu0
  %3723 = vmatprep.mubr.bf16.mxu0 0
  %3724 = vmatmul.mubr.bf16.gmra.mrb[0].mxu0 %v3566
  %v3725 = vpop.f32.mrb[0].mxu0
  %v3726 = vadd.f32 0.0, %v3725
  %v3727 = vpop.f32.mrb[0].mxu0
  %v3728 = vpop.f32.mrb[0].mxu0
  %v3729 = vadd.f32 0.0, %v3728
  %v3730 = vpop.f32.mrb[0].mxu0
  %3731 = vmatprep.mubr.bf16.mxu0 0
  %3732 = vmatmul.mubr.bf16.gmra.mrb[0].mxu0 %v3567
  %v3733 = vpop.f32.mrb[0].mxu0
  %v3734 = vadd.f32 0.0, %v3733
  %v3735 = vpop.f32.mrb[0].mxu0
  %v3736 = vpop.f32.mrb[0].mxu0
  %v3737 = vadd.f32 0.0, %v3736
  %v3738 = vpop.f32.mrb[0].mxu0
  %3739 = vmatprep.mubr.bf16.mxu0 0
  %3740 = vmatmul.mubr.bf16.gmra.mrb[0].mxu0 %v3568
  %v3741 = vpop.f32.mrb[0].mxu0
  %v3742 = vadd.f32 0.0, %v3741
  %v3743 = vpop.f32.mrb[0].mxu0
  %v3744 = vpop.f32.mrb[0].mxu0
  %v3745 = vadd.f32 0.0, %v3744
  %v3746 = vpop.f32.mrb[0].mxu0
  %3747 = vmatprep.mubr.bf16.mxu0 0
  %3748 = vmatmul.mubr.bf16.gmra.mrb[0].mxu0 %v3569
  %v3749 = vpop.f32.mrb[0].mxu0
  %v3750 = vadd.f32 0.0, %v3749
  %v3751 = vpop.f32.mrb[0].mxu0
  %v3752 = vpop.f32.mrb[0].mxu0
  %v3753 = vadd.f32 0.0, %v3752
  %v3754 = vpop.f32.mrb[0].mxu0
  %3755 = vmatprep.mubr.bf16.mxu0 0
  %3756 = vmatmul.mubr.bf16.gmra.mrb[0].mxu0 %v3570
  %v3757 = vpop.f32.mrb[0].mxu0
  %v3758 = vadd.f32 0.0, %v3757
  %v3759 = vpop.f32.mrb[0].mxu0
  %v3760 = vpop.f32.mrb[0].mxu0
  %v3761 = vadd.f32 0.0, %v3760
  %v3762 = vpop.f32.mrb[0].mxu0
  %3763 = vmatprep.mubr.bf16.mxu0 0
  %3764 = vmatmul.mubr.bf16.gmra.mrb[0].mxu0 %v3571
  %v3765 = vpop.f32.mrb[0].mxu0
  %v3766 = vadd.f32 0.0, %v3765
  %v3767 = vpop.f32.mrb[0].mxu0
  %v3768 = vpop.f32.mrb[0].mxu0
  %v3769 = vadd.f32 0.0, %v3768
  %v3770 = vpop.f32.mrb[0].mxu0
  %3771 = vmatprep.mubr.bf16.mxu0 0
  %3772 = vmatmul.mubr.bf16.gmra.mrb[0].mxu0 %v3572
  %v3773 = vpop.f32.mrb[0].mxu0
  %v3774 = vadd.f32 0.0, %v3773
  %v3775 = vpop.f32.mrb[0].mxu0
  %v3776 = vpop.f32.mrb[0].mxu0
  %v3777 = vadd.f32 0.0, %v3776
  %v3778 = vpop.f32.mrb[0].mxu0
  %3779 = vmatprep.mubr.bf16.mxu0 0
  %3780 = vmatmul.mubr.bf16.gmra.mrb[0].mxu0 %v3573
  %v3781 = vpop.f32.mrb[0].mxu0
  %v3782 = vadd.f32 0.0, %v3781
  %v3783 = vpop.f32.mrb[0].mxu0
  %v3784 = vpop.f32.mrb[0].mxu0
  %v3785 = vadd.f32 0.0, %v3784
  %v3786 = vpop.f32.mrb[0].mxu0
  %3787 = vmatprep.mubr.bf16.mxu0 0
  %3788 = vmatmul.mubr.bf16.gmra.mrb[0].mxu0 %v3574
  %v3789 = vpop.f32.mrb[0].mxu0
  %v3790 = vadd.f32 0.0, %v3789
  %v3791 = vpop.f32.mrb[0].mxu0
  %v3792 = vpop.f32.mrb[0].mxu0
  %v3793 = vadd.f32 0.0, %v3792
  %v3794 = vpop.f32.mrb[0].mxu0
  %3795 = vmatprep.mubr.bf16.mxu0 0
  %3796 = vmatmul.mubr.bf16.gmra.mrb[0].mxu0 %v3575
  %v3797 = vpop.f32.mrb[0].mxu0
  %v3798 = vadd.f32 0.0, %v3797
  %v3799 = vpop.f32.mrb[0].mxu0
  %v3800 = vpop.f32.mrb[0].mxu0
  %v3801 = vadd.f32 0.0, %v3800
  %v3802 = vpop.f32.mrb[0].mxu0
  %3803 = vmatprep.mubr.bf16.mxu0 0
  %3804 = vmatmul.mubr.bf16.gmra.mrb[0].mxu0 %v3576
  %v3805 = vpop.f32.mrb[0].mxu0
  %v3806 = vadd.f32 0.0, %v3805
  %v3807 = vpop.f32.mrb[0].mxu0
  %v3808 = vpop.f32.mrb[0].mxu0
  %v3809 = vadd.f32 0.0, %v3808
  %v3810 = vpop.f32.mrb[0].mxu0
  %3811 = vmatprep.mubr.bf16.mxu0 0
  %3812 = vmatmul.mubr.bf16.gmra.mrb[0].mxu0 %v3577
  %v3813 = vpop.f32.mrb[0].mxu0
  %v3814 = vadd.f32 0.0, %v3813
  %v3815 = vpop.f32.mrb[0].mxu0
  %v3816 = vpop.f32.mrb[0].mxu0
  %v3817 = vadd.f32 0.0, %v3816
  %v3818 = vpop.f32.mrb[0].mxu0
  %3819 = vmatprep.mubr.bf16.mxu0 0
  %3820 = vmatmul.mubr.bf16.gmra.mrb[0].mxu0 %v3578
  %v3821 = vpop.f32.mrb[0].mxu0
  %v3822 = vadd.f32 0.0, %v3821
  %v3823 = vpop.f32.mrb[0].mxu0
  %v3824 = vpop.f32.mrb[0].mxu0
  %v3825 = vadd.f32 0.0, %v3824
  %v3826 = vpop.f32.mrb[0].mxu0
  %3827 = vmatprep.mubr.bf16.mxu0 0
  %3828 = vmatmul.mubr.bf16.gmra.mrb[0].mxu0 %v3579
  %v3829 = vpop.f32.mrb[0].mxu0
  %v3830 = vadd.f32 0.0, %v3829
  %v3831 = vpop.f32.mrb[0].mxu0
  %v3832 = vpop.f32.mrb[0].mxu0
  %v3833 = vadd.f32 0.0, %v3832
  %v3834 = vpop.f32.mrb[0].mxu0
  %3835 = vmatprep.mubr.bf16.mxu0 0
  %3836 = vmatmul.mubr.bf16.gmra.mrb[0].mxu0 %v3580
  %v3837 = vpop.f32.mrb[0].mxu0
  %v3838 = vadd.f32 0.0, %v3837
  %v3839 = vpop.f32.mrb[0].mxu0
  %v3840 = vpop.f32.mrb[0].mxu0
  %v3841 = vadd.f32 0.0, %v3840
  %v3842 = vpop.f32.mrb[0].mxu0
  %3843 = vmatprep.mubr.bf16.mxu0 0
  %3844 = vmatmul.mubr.bf16.gmra.mrb[0].mxu0 %v3581
  %v3845 = vpop.f32.mrb[0].mxu0
  %v3846 = vadd.f32 0.0, %v3845
  %v3847 = vpop.f32.mrb[0].mxu0
  %v3848 = vpop.f32.mrb[0].mxu0
  %v3849 = vadd.f32 0.0, %v3848
  %v3850 = vpop.f32.mrb[0].mxu0
  %3851 = vmatprep.mubr.bf16.mxu0 0
  %3852 = vmatmul.mubr.bf16.gmra.mrb[0].mxu0 %v3582
  %v3853 = vpop.f32.mrb[0].mxu0
  %v3854 = vadd.f32 0.0, %v3853
  %v3855 = vpop.f32.mrb[0].mxu0
  %v3856 = vpop.f32.mrb[0].mxu0
  %v3857 = vadd.f32 0.0, %v3856
  %v3858 = vpop.f32.mrb[0].mxu0
  %3859 = vmatprep.mubr.bf16.mxu0 0
  %3860 = vmatmul.mubr.bf16.gmra.mrb[0].mxu0 %v3583
  %v3861 = vpop.f32.mrb[0].mxu0
  %v3862 = vadd.f32 0.0, %v3861
  %v3863 = vpop.f32.mrb[0].mxu0
  %v3864 = vpop.f32.mrb[0].mxu0
  %v3865 = vadd.f32 0.0, %v3864
  %v3866 = vpop.f32.mrb[0].mxu0
  %3867 = vmatprep.mubr.bf16.mxu0 0
  %3868 = vmatmul.mubr.bf16.gmra.mrb[0].mxu0 %v3584
  %v3869 = vpop.f32.mrb[0].mxu0
  %v3870 = vadd.f32 0.0, %v3869
  %v3871 = vpop.f32.mrb[0].mxu0
  %v3872 = vpop.f32.mrb[0].mxu0
  %v3873 = vadd.f32 0.0, %v3872
  %v3874 = vpop.f32.mrb[0].mxu0
  %3875 = vmatprep.mubr.bf16.mxu0 0
  %3876 = vmatmul.mubr.bf16.gmra.mrb[0].mxu0 %v3585
  %v3877 = vpop.f32.mrb[0].mxu0
  %v3878 = vadd.f32 0.0, %v3877
  %v3879 = vpop.f32.mrb[0].mxu0
  %v3880 = vpop.f32.mrb[0].mxu0
  %v3881 = vadd.f32 0.0, %v3880
  %v3882 = vpop.f32.mrb[0].mxu0
  %3883 = vmatprep.mubr.bf16.mxu0 0
  %3884 = vmatmul.mubr.bf16.gmra.mrb[0].mxu0 %v3586
  %v3885 = vpop.f32.mrb[0].mxu0
  %v3886 = vadd.f32 0.0, %v3885
  %v3887 = vpop.f32.mrb[0].mxu0
  %v3888 = vpop.f32.mrb[0].mxu0
  %v3889 = vadd.f32 0.0, %v3888
  %v3890 = vpop.f32.mrb[0].mxu0
  %3891 = vmatprep.mubr.bf16.mxu0 0
  %3892 = vmatmul.mubr.bf16.gmra.mrb[0].mxu0 %v3587
  %v3893 = vpop.f32.mrb[0].mxu0
  %v3894 = vadd.f32 0.0, %v3893
  %v3895 = vpop.f32.mrb[0].mxu0
  %v3896 = vpop.f32.mrb[0].mxu0
  %v3897 = vadd.f32 0.0, %v3896
  %v3898 = vpop.f32.mrb[0].mxu0
  %3899 = vmatprep.mubr.bf16.mxu0 0
  %3900 = vmatmul.mubr.bf16.gmra.mrb[0].mxu0 %v3588
  %v3901 = vpop.f32.mrb[0].mxu0
  %v3902 = vadd.f32 0.0, %v3901
  %v3903 = vpop.f32.mrb[0].mxu0
  %v3904 = vpop.f32.mrb[0].mxu0
  %v3905 = vadd.f32 0.0, %v3904
  %v3906 = vpop.f32.mrb[0].mxu0
  %3907 = vmatprep.mubr.bf16.mxu0 0
  %3908 = vmatmul.mubr.bf16.gmra.mrb[0].mxu0 %v3589
  %v3909 = vpop.f32.mrb[0].mxu0
  %v3910 = vadd.f32 0.0, %v3909
  %v3911 = vpop.f32.mrb[0].mxu0
  %v3912 = vpop.f32.mrb[0].mxu0
  %v3913 = vadd.f32 0.0, %v3912
  %v3914 = vpop.f32.mrb[0].mxu0
  %3915 = vmatprep.mubr.bf16.mxu0 0
  %3916 = vmatmul.mubr.bf16.gmra.mrb[0].mxu0 %v3590
  %v3917 = vpop.f32.mrb[0].mxu0
  %v3918 = vadd.f32 0.0, %v3917
  %v3919 = vpop.f32.mrb[0].mxu0
  %v3920 = vpop.f32.mrb[0].mxu0
  %v3921 = vadd.f32 0.0, %v3920
  %v3922 = vpop.f32.mrb[0].mxu0
  %3923 = vmatprep.mubr.bf16.mxu0 0
  %3924 = vmatmul.mubr.bf16.gmra.mrb[0].mxu0 %v3591
  %v3925 = vpop.f32.mrb[0].mxu0
  %v3926 = vadd.f32 0.0, %v3925
  %v3927 = vpop.f32.mrb[0].mxu0
  %v3928 = vpop.f32.mrb[0].mxu0
  %v3929 = vadd.f32 0.0, %v3928
  %v3930 = vpop.f32.mrb[0].mxu0
  %3931 = vmatprep.mubr.bf16.mxu0 0
  %3932 = vmatmul.mubr.bf16.gmra.mrb[0].mxu0 %v3592
  %v3933 = vpop.f32.mrb[0].mxu0
  %v3934 = vadd.f32 0.0, %v3933
  %v3935 = vpop.f32.mrb[0].mxu0
  %v3936 = vpop.f32.mrb[0].mxu0
  %v3937 = vadd.f32 0.0, %v3936
  %v3938 = vpop.f32.mrb[0].mxu0
  %3939 = vmatprep.mubr.bf16.mxu0 0
  %3940 = vmatmul.mubr.bf16.gmra.mrb[0].mxu0 %v3593
  %v3941 = vpop.f32.mrb[0].mxu0
  %v3942 = vadd.f32 0.0, %v3941
  %v3943 = vpop.f32.mrb[0].mxu0
  %v3944 = vpop.f32.mrb[0].mxu0
  %v3945 = vadd.f32 0.0, %v3944
  %v3946 = vpop.f32.mrb[0].mxu0
  %3947 = vdwg.mxu0
  %v3948 = vadd.f32 %v3434, %v3694
  %v3949 = vadd.f32 %v3435, %v3697
  %v3950 = vadd.f32 %v3436, %v3702
  %v3951 = vadd.f32 %v3437, %v3705
  %v3952 = vadd.f32 %v3438, %v3710
  %v3953 = vadd.f32 %v3439, %v3713
  %v3954 = vadd.f32 %v3440, %v3718
  %v3955 = vadd.f32 %v3441, %v3721
  %v3956 = vadd.f32 %v3442, %v3726
  %v3957 = vadd.f32 %v3443, %v3729
  %v3958 = vadd.f32 %v3444, %v3734
  %v3959 = vadd.f32 %v3445, %v3737
  %v3960 = vadd.f32 %v3446, %v3742
  %v3961 = vadd.f32 %v3447, %v3745
  %v3962 = vadd.f32 %v3448, %v3750
  %v3963 = vadd.f32 %v3449, %v3753
  %v3964 = vadd.f32 %v3450, %v3758
  %v3965 = vadd.f32 %v3451, %v3761
  %v3966 = vadd.f32 %v3452, %v3766
  %v3967 = vadd.f32 %v3453, %v3769
  %v3968 = vadd.f32 %v3454, %v3774
  %v3969 = vadd.f32 %v3455, %v3777
  %v3970 = vadd.f32 %v3456, %v3782
  %v3971 = vadd.f32 %v3457, %v3785
  %v3972 = vadd.f32 %v3458, %v3790
  %v3973 = vadd.f32 %v3459, %v3793
  %v3974 = vadd.f32 %v3460, %v3798
  %v3975 = vadd.f32 %v3461, %v3801
  %v3976 = vadd.f32 %v3462, %v3806
  %v3977 = vadd.f32 %v3463, %v3809
  %v3978 = vadd.f32 %v3464, %v3814
  %v3979 = vadd.f32 %v3465, %v3817
  %v3980 = vadd.f32 %v3466, %v3822
  %v3981 = vadd.f32 %v3467, %v3825
  %v3982 = vadd.f32 %v3468, %v3830
  %v3983 = vadd.f32 %v3469, %v3833
  %v3984 = vadd.f32 %v3470, %v3838
  %v3985 = vadd.f32 %v3471, %v3841
  %v3986 = vadd.f32 %v3472, %v3846
  %v3987 = vadd.f32 %v3473, %v3849
  %v3988 = vadd.f32 %v3474, %v3854
  %v3989 = vadd.f32 %v3475, %v3857
  %v3990 = vadd.f32 %v3476, %v3862
  %v3991 = vadd.f32 %v3477, %v3865
  %v3992 = vadd.f32 %v3478, %v3870
  %v3993 = vadd.f32 %v3479, %v3873
  %v3994 = vadd.f32 %v3480, %v3878
  %v3995 = vadd.f32 %v3481, %v3881
  %v3996 = vadd.f32 %v3482, %v3886
  %v3997 = vadd.f32 %v3483, %v3889
  %v3998 = vadd.f32 %v3484, %v3894
  %v3999 = vadd.f32 %v3485, %v3897
  %v4000 = vadd.f32 %v3486, %v3902
  %v4001 = vadd.f32 %v3487, %v3905
  %v4002 = vadd.f32 %v3488, %v3910
  %v4003 = vadd.f32 %v3489, %v3913
  %v4004 = vadd.f32 %v3490, %v3918
  %v4005 = vadd.f32 %v3491, %v3921
  %v4006 = vadd.f32 %v3492, %v3926
  %v4007 = vadd.f32 %v3493, %v3929
  %v4008 = vadd.f32 %v3494, %v3934
  %v4009 = vadd.f32 %v3495, %v3937
  %v4010 = vadd.f32 %v3496, %v3942
  %v4011 = vadd.f32 %v3497, %v3945
  %v4012 = vld [vmem:[%s2983 + $0x2] sm:$0xff]
  %v4013 = vld [vmem:[%s2983 + $0xa] sm:$0xff]
  %v4014 = vld [vmem:[%s2983 + $0x1a] sm:$0xff]
  %v4015 = vld [vmem:[%s2983 + $0x22] sm:$0xff]
  %v4016 = vld [vmem:[%s2983 + $0x32] sm:$0xff]
  %v4017 = vld [vmem:[%s2983 + $0x3a] sm:$0xff]
  %v4018 = vld [vmem:[%s2983 + $0x4a] sm:$0xff]
  %v4019 = vld [vmem:[%s2983 + $0x52] sm:$0xff]
  %v4020 = vld [vmem:[%s2983 + $0x62] sm:$0xff]
  %v4021 = vld [vmem:[%s2983 + $0x6a] sm:$0xff]
  %v4022 = vld [vmem:[%s2983 + $0x7a] sm:$0xff]
  %v4023 = vld [vmem:[%s2983 + $0x82] sm:$0xff]
  %v4024 = vld [vmem:[%s2983 + $0x92] sm:$0xff]
  %v4025 = vld [vmem:[%s2983 + $0x9a] sm:$0xff]
  %v4026 = vld [vmem:[%s2983 + $0xaa] sm:$0xff]
  %v4027 = vld [vmem:[%s2983 + $0xb2] sm:$0xff]
  %v4028 = vld [vmem:[%s2983 + $0xc2] sm:$0xff]
  %v4029 = vld [vmem:[%s2983 + $0xca] sm:$0xff]
  %v4030 = vld [vmem:[%s2983 + $0xda] sm:$0xff]
  %v4031 = vld [vmem:[%s2983 + $0xe2] sm:$0xff]
  %v4032 = vld [vmem:[%s2983 + $0xf2] sm:$0xff]
  %v4033 = vld [vmem:[%s2983 + $0xfa] sm:$0xff]
  %v4034 = vld [vmem:[%s2983 + $0x10a] sm:$0xff]
  %v4035 = vld [vmem:[%s2983 + $0x112] sm:$0xff]
  %v4036 = vld [vmem:[%s2983 + $0x122] sm:$0xff]
  %v4037 = vld [vmem:[%s2983 + $0x12a] sm:$0xff]
  %v4038 = vld [vmem:[%s2983 + $0x13a] sm:$0xff]
  %v4039 = vld [vmem:[%s2983 + $0x142] sm:$0xff]
  %v4040 = vld [vmem:[%s2983 + $0x152] sm:$0xff]
  %v4041 = vld [vmem:[%s2983 + $0x15a] sm:$0xff]
  %v4042 = vld [vmem:[%s2983 + $0x16a] sm:$0xff]
  %v4043 = vld [vmem:[%s2983 + $0x172] sm:$0xff]
  %v4044 = vld [vmem:[%s2983 + $0x1b2] sm:$0xff]
  %v4045 = vld [vmem:[%s2983 + $0x1ba] sm:$0xff]
  %v4046 = vld [vmem:[%s2983 + $0x1ca] sm:$0xff]
  %v4047 = vld [vmem:[%s2983 + $0x1d2] sm:$0xff]
  %v4048 = vld [vmem:[%s2983 + $0x1e2] sm:$0xff]
  %v4049 = vld [vmem:[%s2983 + $0x1ea] sm:$0xff]
  %v4050 = vld [vmem:[%s2983 + $0x1fa] sm:$0xff]
  %v4051 = vld [vmem:[%s2983 + $0x202] sm:$0xff]
  %v4052 = vld [vmem:[%s2983 + $0x212] sm:$0xff]
  %v4053 = vld [vmem:[%s2983 + $0x21a] sm:$0xff]
  %v4054 = vld [vmem:[%s2983 + $0x22a] sm:$0xff]
  %v4055 = vld [vmem:[%s2983 + $0x232] sm:$0xff]
  %v4056 = vld [vmem:[%s2983 + $0x242] sm:$0xff]
  %v4057 = vld [vmem:[%s2983 + $0x24a] sm:$0xff]
  %v4058 = vld [vmem:[%s2983 + $0x25a] sm:$0xff]
  %v4059 = vld [vmem:[%s2983 + $0x262] sm:$0xff]
  %v4060 = vld [vmem:[%s2983 + $0x272] sm:$0xff]
  %v4061 = vld [vmem:[%s2983 + $0x27a] sm:$0xff]
  %v4062 = vld [vmem:[%s2983 + $0x28a] sm:$0xff]
  %v4063 = vld [vmem:[%s2983 + $0x292] sm:$0xff]
  %v4064 = vld [vmem:[%s2983 + $0x2a2] sm:$0xff]
  %v4065 = vld [vmem:[%s2983 + $0x2aa] sm:$0xff]
  %v4066 = vld [vmem:[%s2983 + $0x2ba] sm:$0xff]
  %v4067 = vld [vmem:[%s2983 + $0x2c2] sm:$0xff]
  %v4068 = vld [vmem:[%s2983 + $0x2d2] sm:$0xff]
  %v4069 = vld [vmem:[%s2983 + $0x2da] sm:$0xff]
  %v4070 = vld [vmem:[%s2983 + $0x2ea] sm:$0xff]
  %v4071 = vld [vmem:[%s2983 + $0x2f2] sm:$0xff]
  %v4072 = vld [vmem:[%s2983 + $0x302] sm:$0xff]
  %v4073 = vld [vmem:[%s2983 + $0x30a] sm:$0xff]
  %v4074 = vld [vmem:[%s2983 + $0x31a] sm:$0xff]
  %v4075 = vld [vmem:[%s2983 + $0x322] sm:$0xff]
  %v4076 = vpack.c.bf16 %v4013, %v4012
  %v4077 = vpack.c.bf16 %v4015, %v4014
  %v4078 = vpack.c.bf16 %v4017, %v4016
  %v4079 = vpack.c.bf16 %v4019, %v4018
  %v4080 = vpack.c.bf16 %v4021, %v4020
  %v4081 = vpack.c.bf16 %v4023, %v4022
  %v4082 = vpack.c.bf16 %v4025, %v4024
  %v4083 = vpack.c.bf16 %v4027, %v4026
  %v4084 = vpack.c.bf16 %v4029, %v4028
  %v4085 = vpack.c.bf16 %v4031, %v4030
  %v4086 = vpack.c.bf16 %v4033, %v4032
  %v4087 = vpack.c.bf16 %v4035, %v4034
  %v4088 = vpack.c.bf16 %v4037, %v4036
  %v4089 = vpack.c.bf16 %v4039, %v4038
  %v4090 = vpack.c.bf16 %v4041, %v4040
  %v4091 = vpack.c.bf16 %v4043, %v4042
  %v4092 = vpack.c.bf16 %v4045, %v4044
  %v4093 = vpack.c.bf16 %v4047, %v4046
  %v4094 = vpack.c.bf16 %v4049, %v4048
  %v4095 = vpack.c.bf16 %v4051, %v4050
  %v4096 = vpack.c.bf16 %v4053, %v4052
  %v4097 = vpack.c.bf16 %v4055, %v4054
  %v4098 = vpack.c.bf16 %v4057, %v4056
  %v4099 = vpack.c.bf16 %v4059, %v4058
  %v4100 = vpack.c.bf16 %v4061, %v4060
  %v4101 = vpack.c.bf16 %v4063, %v4062
  %v4102 = vpack.c.bf16 %v4065, %v4064
  %v4103 = vpack.c.bf16 %v4067, %v4066
  %v4104 = vpack.c.bf16 %v4069, %v4068
  %v4105 = vpack.c.bf16 %v4071, %v4070
  %v4106 = vpack.c.bf16 %v4073, %v4072
  %v4107 = vpack.c.bf16 %v4075, %v4074
  %s4108 = scalar_lea.vmem %s1, 512
  %v4109 = vld [vmem:[%s4108] sm:$0xf]
  %v4110 = vld [vmem:[%s4108 + $0x4] sm:$0xf]
  %v4111 = vld [vmem:[%s4108 + $0x8] sm:$0xf]
  %v4112 = vld [vmem:[%s4108 + $0xc] sm:$0xf]
  %v4113 = vld [vmem:[%s4108 + $0x10] sm:$0xf]
  %v4114 = vld [vmem:[%s4108 + $0x14] sm:$0xf]
  %v4115 = vld [vmem:[%s4108 + $0x18] sm:$0xf]
  %v4116 = vld [vmem:[%s4108 + $0x1c] sm:$0xf]
  %v4117 = vld [vmem:[%s4108 + $0x20] sm:$0xf]
  %v4118 = vld [vmem:[%s4108 + $0x24] sm:$0xf]
  %v4119 = vld [vmem:[%s4108 + $0x28] sm:$0xf]
  %v4120 = vld [vmem:[%s4108 + $0x2c] sm:$0xf]
  %v4121 = vld [vmem:[%s4108 + $0x30] sm:$0xf]
  %v4122 = vld [vmem:[%s4108 + $0x34] sm:$0xf]
  %v4123 = vld [vmem:[%s4108 + $0x38] sm:$0xf]
  %v4124 = vld [vmem:[%s4108 + $0x3c] sm:$0xf]
  %v4141 = vunpack.c.l.b16 %v4109
  %v4142 = vunpack.c.l.b16 %v4110
  %v4143 = vunpack.c.l.b16 %v4111
  %v4144 = vunpack.c.l.b16 %v4112
  %v4145 = vunpack.c.l.b16 %v4113
  %v4146 = vunpack.c.l.b16 %v4114
  %v4147 = vunpack.c.l.b16 %v4115
  %v4148 = vunpack.c.l.b16 %v4116
  %v4149 = vunpack.c.l.b16 %v4117
  %v4150 = vunpack.c.l.b16 %v4118
  %v4151 = vunpack.c.l.b16 %v4119
  %v4152 = vunpack.c.l.b16 %v4120
  %v4153 = vunpack.c.l.b16 %v4121
  %v4154 = vunpack.c.l.b16 %v4122
  %v4155 = vunpack.c.l.b16 %v4123
  %v4156 = vunpack.c.l.b16 %v4124
  %v4157 = vpack.c.b16 %v4142, %v4141
  %v4158 = vpack.c.b16 %v4144, %v4143
  %v4159 = vpack.c.b16 %v4146, %v4145
  %v4160 = vpack.c.b16 %v4148, %v4147
  %v4161 = vpack.c.b16 %v4150, %v4149
  %v4162 = vpack.c.b16 %v4152, %v4151
  %v4163 = vpack.c.b16 %v4154, %v4153
  %v4164 = vpack.c.b16 %v4156, %v4155
  %4173 = vmatprep.subr.bf16.mxu0 0
  %4174 = vmatpush1.bf16.msra.mxu0 %v4157
  %4175 = vmatprep.subr.bf16.mxu0 0
  %4176 = vmatpush1.bf16.msra.mxu0 %v4158
  %4177 = vmatprep.subr.bf16.mxu0 0
  %4178 = vmatpush1.bf16.msra.mxu0 %v4159
  %4179 = vmatprep.subr.bf16.mxu0 0
  %4180 = vmatpush1.bf16.msra.mxu0 %v4160
  %4181 = vmatprep.subr.bf16.mxu0 0
  %4182 = vmatpush1.bf16.msra.mxu0 %v4161
  %4183 = vmatprep.subr.bf16.mxu0 0
  %4184 = vmatpush1.bf16.msra.mxu0 %v4162
  %4185 = vmatprep.subr.bf16.mxu0 0
  %4186 = vmatpush1.bf16.msra.mxu0 %v4163
  %4187 = vmatprep.subr.bf16.mxu0 0
  %4188 = vmatpush1.bf16.msra.mxu0 %v4164
  %4189 = vmatprep.subr.bf16.mxu0 0
  %4190 = vmatpush1.bf16.msra.mxu0 0
  %4191 = vmatprep.subr.bf16.mxu0 0
  %4192 = vmatpush1.bf16.msra.mxu0 0
  %4193 = vmatprep.subr.bf16.mxu0 0
  %4194 = vmatpush1.bf16.msra.mxu0 0
  %4195 = vmatprep.subr.bf16.mxu0 0
  %4196 = vmatpush1.bf16.msra.mxu0 0
  %4197 = vmatprep.subr.bf16.mxu0 0
  %4198 = vmatpush1.bf16.msra.mxu0 0
  %4199 = vmatprep.subr.bf16.mxu0 0
  %4200 = vmatpush1.bf16.msra.mxu0 0
  %4201 = vmatprep.subr.bf16.mxu0 0
  %4202 = vmatpush1.bf16.msra.mxu0 0
  %4203 = vmatprep.subr.bf16.mxu0 0
  %4204 = vmatpush1.bf16.msra.mxu0 0
  %4205 = vmatprep.mubr.bf16.mxu0 0
  %4206 = vmatmul.mubr.bf16.gmra.mrb[0].mxu0 %v4076
  %v4207 = vpop.f32.mrb[0].mxu0
  %v4208 = vadd.f32 0.0, %v4207
  %v4209 = vpop.f32.mrb[0].mxu0
  %v4210 = vpop.f32.mrb[0].mxu0
  %v4211 = vadd.f32 0.0, %v4210
  %v4212 = vpop.f32.mrb[0].mxu0
  %4213 = vmatprep.mubr.bf16.mxu0 0
  %4214 = vmatmul.mubr.bf16.gmra.mrb[0].mxu0 %v4077
  %v4215 = vpop.f32.mrb[0].mxu0
  %v4216 = vadd.f32 0.0, %v4215
  %v4217 = vpop.f32.mrb[0].mxu0
  %v4218 = vpop.f32.mrb[0].mxu0
  %v4219 = vadd.f32 0.0, %v4218
  %v4220 = vpop.f32.mrb[0].mxu0
  %4221 = vmatprep.mubr.bf16.mxu0 0
  %4222 = vmatmul.mubr.bf16.gmra.mrb[0].mxu0 %v4078
  %v4223 = vpop.f32.mrb[0].mxu0
  %v4224 = vadd.f32 0.0, %v4223
  %v4225 = vpop.f32.mrb[0].mxu0
  %v4226 = vpop.f32.mrb[0].mxu0
  %v4227 = vadd.f32 0.0, %v4226
  %v4228 = vpop.f32.mrb[0].mxu0
  %4229 = vmatprep.mubr.bf16.mxu0 0
  %4230 = vmatmul.mubr.bf16.gmra.mrb[0].mxu0 %v4079
  %v4231 = vpop.f32.mrb[0].mxu0
  %v4232 = vadd.f32 0.0, %v4231
  %v4233 = vpop.f32.mrb[0].mxu0
  %v4234 = vpop.f32.mrb[0].mxu0
  %v4235 = vadd.f32 0.0, %v4234
  %v4236 = vpop.f32.mrb[0].mxu0
  %4237 = vmatprep.mubr.bf16.mxu0 0
  %4238 = vmatmul.mubr.bf16.gmra.mrb[0].mxu0 %v4080
  %v4239 = vpop.f32.mrb[0].mxu0
  %v4240 = vadd.f32 0.0, %v4239
  %v4241 = vpop.f32.mrb[0].mxu0
  %v4242 = vpop.f32.mrb[0].mxu0
  %v4243 = vadd.f32 0.0, %v4242
  %v4244 = vpop.f32.mrb[0].mxu0
  %4245 = vmatprep.mubr.bf16.mxu0 0
  %4246 = vmatmul.mubr.bf16.gmra.mrb[0].mxu0 %v4081
  %v4247 = vpop.f32.mrb[0].mxu0
  %v4248 = vadd.f32 0.0, %v4247
  %v4249 = vpop.f32.mrb[0].mxu0
  %v4250 = vpop.f32.mrb[0].mxu0
  %v4251 = vadd.f32 0.0, %v4250
  %v4252 = vpop.f32.mrb[0].mxu0
  %4253 = vmatprep.mubr.bf16.mxu0 0
  %4254 = vmatmul.mubr.bf16.gmra.mrb[0].mxu0 %v4082
  %v4255 = vpop.f32.mrb[0].mxu0
  %v4256 = vadd.f32 0.0, %v4255
  %v4257 = vpop.f32.mrb[0].mxu0
  %v4258 = vpop.f32.mrb[0].mxu0
  %v4259 = vadd.f32 0.0, %v4258
  %v4260 = vpop.f32.mrb[0].mxu0
  %4261 = vmatprep.mubr.bf16.mxu0 0
  %4262 = vmatmul.mubr.bf16.gmra.mrb[0].mxu0 %v4083
  %v4263 = vpop.f32.mrb[0].mxu0
  %v4264 = vadd.f32 0.0, %v4263
  %v4265 = vpop.f32.mrb[0].mxu0
  %v4266 = vpop.f32.mrb[0].mxu0
  %v4267 = vadd.f32 0.0, %v4266
  %v4268 = vpop.f32.mrb[0].mxu0
  %4269 = vmatprep.mubr.bf16.mxu0 0
  %4270 = vmatmul.mubr.bf16.gmra.mrb[0].mxu0 %v4084
  %v4271 = vpop.f32.mrb[0].mxu0
  %v4272 = vadd.f32 0.0, %v4271
  %v4273 = vpop.f32.mrb[0].mxu0
  %v4274 = vpop.f32.mrb[0].mxu0
  %v4275 = vadd.f32 0.0, %v4274
  %v4276 = vpop.f32.mrb[0].mxu0
  %4277 = vmatprep.mubr.bf16.mxu0 0
  %4278 = vmatmul.mubr.bf16.gmra.mrb[0].mxu0 %v4085
  %v4279 = vpop.f32.mrb[0].mxu0
  %v4280 = vadd.f32 0.0, %v4279
  %v4281 = vpop.f32.mrb[0].mxu0
  %v4282 = vpop.f32.mrb[0].mxu0
  %v4283 = vadd.f32 0.0, %v4282
  %v4284 = vpop.f32.mrb[0].mxu0
  %4285 = vmatprep.mubr.bf16.mxu0 0
  %4286 = vmatmul.mubr.bf16.gmra.mrb[0].mxu0 %v4086
  %v4287 = vpop.f32.mrb[0].mxu0
  %v4288 = vadd.f32 0.0, %v4287
  %v4289 = vpop.f32.mrb[0].mxu0
  %v4290 = vpop.f32.mrb[0].mxu0
  %v4291 = vadd.f32 0.0, %v4290
  %v4292 = vpop.f32.mrb[0].mxu0
  %4293 = vmatprep.mubr.bf16.mxu0 0
  %4294 = vmatmul.mubr.bf16.gmra.mrb[0].mxu0 %v4087
  %v4295 = vpop.f32.mrb[0].mxu0
  %v4296 = vadd.f32 0.0, %v4295
  %v4297 = vpop.f32.mrb[0].mxu0
  %v4298 = vpop.f32.mrb[0].mxu0
  %v4299 = vadd.f32 0.0, %v4298
  %v4300 = vpop.f32.mrb[0].mxu0
  %4301 = vmatprep.mubr.bf16.mxu0 0
  %4302 = vmatmul.mubr.bf16.gmra.mrb[0].mxu0 %v4088
  %v4303 = vpop.f32.mrb[0].mxu0
  %v4304 = vadd.f32 0.0, %v4303
  %v4305 = vpop.f32.mrb[0].mxu0
  %v4306 = vpop.f32.mrb[0].mxu0
  %v4307 = vadd.f32 0.0, %v4306
  %v4308 = vpop.f32.mrb[0].mxu0
  %4309 = vmatprep.mubr.bf16.mxu0 0
  %4310 = vmatmul.mubr.bf16.gmra.mrb[0].mxu0 %v4089
  %v4311 = vpop.f32.mrb[0].mxu0
  %v4312 = vadd.f32 0.0, %v4311
  %v4313 = vpop.f32.mrb[0].mxu0
  %v4314 = vpop.f32.mrb[0].mxu0
  %v4315 = vadd.f32 0.0, %v4314
  %v4316 = vpop.f32.mrb[0].mxu0
  %4317 = vmatprep.mubr.bf16.mxu0 0
  %4318 = vmatmul.mubr.bf16.gmra.mrb[0].mxu0 %v4090
  %v4319 = vpop.f32.mrb[0].mxu0
  %v4320 = vadd.f32 0.0, %v4319
  %v4321 = vpop.f32.mrb[0].mxu0
  %v4322 = vpop.f32.mrb[0].mxu0
  %v4323 = vadd.f32 0.0, %v4322
  %v4324 = vpop.f32.mrb[0].mxu0
  %4325 = vmatprep.mubr.bf16.mxu0 0
  %4326 = vmatmul.mubr.bf16.gmra.mrb[0].mxu0 %v4091
  %v4327 = vpop.f32.mrb[0].mxu0
  %v4328 = vadd.f32 0.0, %v4327
  %v4329 = vpop.f32.mrb[0].mxu0
  %v4330 = vpop.f32.mrb[0].mxu0
  %v4331 = vadd.f32 0.0, %v4330
  %v4332 = vpop.f32.mrb[0].mxu0
  %4333 = vmatprep.mubr.bf16.mxu0 0
  %4334 = vmatmul.mubr.bf16.gmra.mrb[0].mxu0 %v4092
  %v4335 = vpop.f32.mrb[0].mxu0
  %v4336 = vadd.f32 0.0, %v4335
  %v4337 = vpop.f32.mrb[0].mxu0
  %v4338 = vpop.f32.mrb[0].mxu0
  %v4339 = vadd.f32 0.0, %v4338
  %v4340 = vpop.f32.mrb[0].mxu0
  %4341 = vmatprep.mubr.bf16.mxu0 0
  %4342 = vmatmul.mubr.bf16.gmra.mrb[0].mxu0 %v4093
  %v4343 = vpop.f32.mrb[0].mxu0
  %v4344 = vadd.f32 0.0, %v4343
  %v4345 = vpop.f32.mrb[0].mxu0
  %v4346 = vpop.f32.mrb[0].mxu0
  %v4347 = vadd.f32 0.0, %v4346
  %v4348 = vpop.f32.mrb[0].mxu0
  %4349 = vmatprep.mubr.bf16.mxu0 0
  %4350 = vmatmul.mubr.bf16.gmra.mrb[0].mxu0 %v4094
  %v4351 = vpop.f32.mrb[0].mxu0
  %v4352 = vadd.f32 0.0, %v4351
  %v4353 = vpop.f32.mrb[0].mxu0
  %v4354 = vpop.f32.mrb[0].mxu0
  %v4355 = vadd.f32 0.0, %v4354
  %v4356 = vpop.f32.mrb[0].mxu0
  %4357 = vmatprep.mubr.bf16.mxu0 0
  %4358 = vmatmul.mubr.bf16.gmra.mrb[0].mxu0 %v4095
  %v4359 = vpop.f32.mrb[0].mxu0
  %v4360 = vadd.f32 0.0, %v4359
  %v4361 = vpop.f32.mrb[0].mxu0
  %v4362 = vpop.f32.mrb[0].mxu0
  %v4363 = vadd.f32 0.0, %v4362
  %v4364 = vpop.f32.mrb[0].mxu0
  %4365 = vmatprep.mubr.bf16.mxu0 0
  %4366 = vmatmul.mubr.bf16.gmra.mrb[0].mxu0 %v4096
  %v4367 = vpop.f32.mrb[0].mxu0
  %v4368 = vadd.f32 0.0, %v4367
  %v4369 = vpop.f32.mrb[0].mxu0
  %v4370 = vpop.f32.mrb[0].mxu0
  %v4371 = vadd.f32 0.0, %v4370
  %v4372 = vpop.f32.mrb[0].mxu0
  %4373 = vmatprep.mubr.bf16.mxu0 0
  %4374 = vmatmul.mubr.bf16.gmra.mrb[0].mxu0 %v4097
  %v4375 = vpop.f32.mrb[0].mxu0
  %v4376 = vadd.f32 0.0, %v4375
  %v4377 = vpop.f32.mrb[0].mxu0
  %v4378 = vpop.f32.mrb[0].mxu0
  %v4379 = vadd.f32 0.0, %v4378
  %v4380 = vpop.f32.mrb[0].mxu0
  %4381 = vmatprep.mubr.bf16.mxu0 0
  %4382 = vmatmul.mubr.bf16.gmra.mrb[0].mxu0 %v4098
  %v4383 = vpop.f32.mrb[0].mxu0
  %v4384 = vadd.f32 0.0, %v4383
  %v4385 = vpop.f32.mrb[0].mxu0
  %v4386 = vpop.f32.mrb[0].mxu0
  %v4387 = vadd.f32 0.0, %v4386
  %v4388 = vpop.f32.mrb[0].mxu0
  %4389 = vmatprep.mubr.bf16.mxu0 0
  %4390 = vmatmul.mubr.bf16.gmra.mrb[0].mxu0 %v4099
  %v4391 = vpop.f32.mrb[0].mxu0
  %v4392 = vadd.f32 0.0, %v4391
  %v4393 = vpop.f32.mrb[0].mxu0
  %v4394 = vpop.f32.mrb[0].mxu0
  %v4395 = vadd.f32 0.0, %v4394
  %v4396 = vpop.f32.mrb[0].mxu0
  %4397 = vmatprep.mubr.bf16.mxu0 0
  %4398 = vmatmul.mubr.bf16.gmra.mrb[0].mxu0 %v4100
  %v4399 = vpop.f32.mrb[0].mxu0
  %v4400 = vadd.f32 0.0, %v4399
  %v4401 = vpop.f32.mrb[0].mxu0
  %v4402 = vpop.f32.mrb[0].mxu0
  %v4403 = vadd.f32 0.0, %v4402
  %v4404 = vpop.f32.mrb[0].mxu0
  %4405 = vmatprep.mubr.bf16.mxu0 0
  %4406 = vmatmul.mubr.bf16.gmra.mrb[0].mxu0 %v4101
  %v4407 = vpop.f32.mrb[0].mxu0
  %v4408 = vadd.f32 0.0, %v4407
  %v4409 = vpop.f32.mrb[0].mxu0
  %v4410 = vpop.f32.mrb[0].mxu0
  %v4411 = vadd.f32 0.0, %v4410
  %v4412 = vpop.f32.mrb[0].mxu0
  %4413 = vmatprep.mubr.bf16.mxu0 0
  %4414 = vmatmul.mubr.bf16.gmra.mrb[0].mxu0 %v4102
  %v4415 = vpop.f32.mrb[0].mxu0
  %v4416 = vadd.f32 0.0, %v4415
  %v4417 = vpop.f32.mrb[0].mxu0
  %v4418 = vpop.f32.mrb[0].mxu0
  %v4419 = vadd.f32 0.0, %v4418
  %v4420 = vpop.f32.mrb[0].mxu0
  %4421 = vmatprep.mubr.bf16.mxu0 0
  %4422 = vmatmul.mubr.bf16.gmra.mrb[0].mxu0 %v4103
  %v4423 = vpop.f32.mrb[0].mxu0
  %v4424 = vadd.f32 0.0, %v4423
  %v4425 = vpop.f32.mrb[0].mxu0
  %v4426 = vpop.f32.mrb[0].mxu0
  %v4427 = vadd.f32 0.0, %v4426
  %v4428 = vpop.f32.mrb[0].mxu0
  %4429 = vmatprep.mubr.bf16.mxu0 0
  %4430 = vmatmul.mubr.bf16.gmra.mrb[0].mxu0 %v4104
  %v4431 = vpop.f32.mrb[0].mxu0
  %v4432 = vadd.f32 0.0, %v4431
  %v4433 = vpop.f32.mrb[0].mxu0
  %v4434 = vpop.f32.mrb[0].mxu0
  %v4435 = vadd.f32 0.0, %v4434
  %v4436 = vpop.f32.mrb[0].mxu0
  %4437 = vmatprep.mubr.bf16.mxu0 0
  %4438 = vmatmul.mubr.bf16.gmra.mrb[0].mxu0 %v4105
  %v4439 = vpop.f32.mrb[0].mxu0
  %v4440 = vadd.f32 0.0, %v4439
  %v4441 = vpop.f32.mrb[0].mxu0
  %v4442 = vpop.f32.mrb[0].mxu0
  %v4443 = vadd.f32 0.0, %v4442
  %v4444 = vpop.f32.mrb[0].mxu0
  %4445 = vmatprep.mubr.bf16.mxu0 0
  %4446 = vmatmul.mubr.bf16.gmra.mrb[0].mxu0 %v4106
  %v4447 = vpop.f32.mrb[0].mxu0
  %v4448 = vadd.f32 0.0, %v4447
  %v4449 = vpop.f32.mrb[0].mxu0
  %v4450 = vpop.f32.mrb[0].mxu0
  %v4451 = vadd.f32 0.0, %v4450
  %v4452 = vpop.f32.mrb[0].mxu0
  %4453 = vmatprep.mubr.bf16.mxu0 0
  %4454 = vmatmul.mubr.bf16.gmra.mrb[0].mxu0 %v4107
  %v4455 = vpop.f32.mrb[0].mxu0
  %v4456 = vadd.f32 0.0, %v4455
  %v4457 = vpop.f32.mrb[0].mxu0
  %v4458 = vpop.f32.mrb[0].mxu0
  %v4459 = vadd.f32 0.0, %v4458
  %v4460 = vpop.f32.mrb[0].mxu0
  %4461 = vdwg.mxu0
  %v4462 = vadd.f32 %v3948, %v4208
  %v4463 = vadd.f32 %v3949, %v4211
  %v4464 = vadd.f32 %v3950, %v4216
  %v4465 = vadd.f32 %v3951, %v4219
  %v4466 = vadd.f32 %v3952, %v4224
  %v4467 = vadd.f32 %v3953, %v4227
  %v4468 = vadd.f32 %v3954, %v4232
  %v4469 = vadd.f32 %v3955, %v4235
  %v4470 = vadd.f32 %v3956, %v4240
  %v4471 = vadd.f32 %v3957, %v4243
  %v4472 = vadd.f32 %v3958, %v4248
  %v4473 = vadd.f32 %v3959, %v4251
  %v4474 = vadd.f32 %v3960, %v4256
  %v4475 = vadd.f32 %v3961, %v4259
  %v4476 = vadd.f32 %v3962, %v4264
  %v4477 = vadd.f32 %v3963, %v4267
  %v4478 = vadd.f32 %v3964, %v4272
  %v4479 = vadd.f32 %v3965, %v4275
  %v4480 = vadd.f32 %v3966, %v4280
  %v4481 = vadd.f32 %v3967, %v4283
  %v4482 = vadd.f32 %v3968, %v4288
  %v4483 = vadd.f32 %v3969, %v4291
  %v4484 = vadd.f32 %v3970, %v4296
  %v4485 = vadd.f32 %v3971, %v4299
  %v4486 = vadd.f32 %v3972, %v4304
  %v4487 = vadd.f32 %v3973, %v4307
  %v4488 = vadd.f32 %v3974, %v4312
  %v4489 = vadd.f32 %v3975, %v4315
  %v4490 = vadd.f32 %v3976, %v4320
  %v4491 = vadd.f32 %v3977, %v4323
  %v4492 = vadd.f32 %v3978, %v4328
  %v4493 = vadd.f32 %v3979, %v4331
  %v4494 = vadd.f32 %v3980, %v4336
  %v4495 = vadd.f32 %v3981, %v4339
  %v4496 = vadd.f32 %v3982, %v4344
  %v4497 = vadd.f32 %v3983, %v4347
  %v4498 = vadd.f32 %v3984, %v4352
  %v4499 = vadd.f32 %v3985, %v4355
  %v4500 = vadd.f32 %v3986, %v4360
  %v4501 = vadd.f32 %v3987, %v4363
  %v4502 = vadd.f32 %v3988, %v4368
  %v4503 = vadd.f32 %v3989, %v4371
  %v4504 = vadd.f32 %v3990, %v4376
  %v4505 = vadd.f32 %v3991, %v4379
  %v4506 = vadd.f32 %v3992, %v4384
  %v4507 = vadd.f32 %v3993, %v4387
  %v4508 = vadd.f32 %v3994, %v4392
  %v4509 = vadd.f32 %v3995, %v4395
  %v4510 = vadd.f32 %v3996, %v4400
  %v4511 = vadd.f32 %v3997, %v4403
  %v4512 = vadd.f32 %v3998, %v4408
  %v4513 = vadd.f32 %v3999, %v4411
  %v4514 = vadd.f32 %v4000, %v4416
  %v4515 = vadd.f32 %v4001, %v4419
  %v4516 = vadd.f32 %v4002, %v4424
  %v4517 = vadd.f32 %v4003, %v4427
  %v4518 = vadd.f32 %v4004, %v4432
  %v4519 = vadd.f32 %v4005, %v4435
  %v4520 = vadd.f32 %v4006, %v4440
  %v4521 = vadd.f32 %v4007, %v4443
  %v4522 = vadd.f32 %v4008, %v4448
  %v4523 = vadd.f32 %v4009, %v4451
  %v4524 = vadd.f32 %v4010, %v4456
  %v4525 = vadd.f32 %v4011, %v4459
  %v4526 = vld [vmem:[%s3] sm:$0x1]
  %v4527 = vld [vmem:[%s4] sm:$0x1]
  %v4528 = vadd.f32 %v4462, %v4463
  %v4529 = vadd.f32 %v4528, %v4464
  %v4530 = vadd.f32 %v4529, %v4465
  %v4531 = vadd.f32 %v4530, %v4466
  %v4532 = vadd.f32 %v4531, %v4467
  %v4533 = vadd.f32 %v4532, %v4468
  %v4534 = vadd.f32 %v4533, %v4469
  %v4535 = vadd.f32 %v4534, %v4470
  %v4536 = vadd.f32 %v4535, %v4471
  %v4537 = vadd.f32 %v4536, %v4472
  %v4538 = vadd.f32 %v4537, %v4473
  %v4539 = vadd.f32 %v4538, %v4474
  %v4540 = vadd.f32 %v4539, %v4475
  %v4541 = vadd.f32 %v4540, %v4476
  %v4542 = vadd.f32 %v4541, %v4477
  %v4543 = vadd.f32 %v4542, %v4478
  %v4544 = vadd.f32 %v4543, %v4479
  %v4545 = vadd.f32 %v4544, %v4480
  %v4546 = vadd.f32 %v4545, %v4481
  %v4547 = vadd.f32 %v4546, %v4482
  %v4548 = vadd.f32 %v4547, %v4483
  %v4549 = vadd.f32 %v4548, %v4484
  %v4550 = vadd.f32 %v4549, %v4485
  %v4551 = vadd.f32 %v4550, %v4486
  %v4552 = vadd.f32 %v4551, %v4487
  %v4553 = vadd.f32 %v4552, %v4488
  %v4554 = vadd.f32 %v4553, %v4489
  %v4555 = vadd.f32 %v4554, %v4490
  %v4556 = vadd.f32 %v4555, %v4491
  %v4557 = vadd.f32 %v4556, %v4492
  %v4558 = vadd.f32 %v4557, %v4493
  %v4559 = vadd.f32 %v4558, %v4494
  %v4560 = vadd.f32 %v4559, %v4495
  %v4561 = vadd.f32 %v4560, %v4496
  %v4562 = vadd.f32 %v4561, %v4497
  %v4563 = vadd.f32 %v4562, %v4498
  %v4564 = vadd.f32 %v4563, %v4499
  %v4565 = vadd.f32 %v4564, %v4500
  %v4566 = vadd.f32 %v4565, %v4501
  %v4567 = vadd.f32 %v4566, %v4502
  %v4568 = vadd.f32 %v4567, %v4503
  %v4569 = vadd.f32 %v4568, %v4504
  %v4570 = vadd.f32 %v4569, %v4505
  %v4571 = vadd.f32 %v4570, %v4506
  %v4572 = vadd.f32 %v4571, %v4507
  %v4573 = vadd.f32 %v4572, %v4508
  %v4574 = vadd.f32 %v4573, %v4509
  %v4575 = vadd.f32 %v4574, %v4510
  %v4576 = vadd.f32 %v4575, %v4511
  %v4577 = vadd.f32 %v4576, %v4512
  %v4578 = vadd.f32 %v4577, %v4513
  %v4579 = vadd.f32 %v4578, %v4514
  %v4580 = vadd.f32 %v4579, %v4515
  %v4581 = vadd.f32 %v4580, %v4516
  %v4582 = vadd.f32 %v4581, %v4517
  %v4583 = vadd.f32 %v4582, %v4518
  %v4584 = vadd.f32 %v4583, %v4519
  %v4585 = vadd.f32 %v4584, %v4520
  %v4586 = vadd.f32 %v4585, %v4521
  %v4587 = vadd.f32 %v4586, %v4522
  %v4588 = vadd.f32 %v4587, %v4523
  %v4589 = vadd.f32 %v4588, %v4524
  %v4590 = vadd.f32 %v4589, %v4525
  %v4591 = vrot.slane %v4590, 4
  %v4592 = vadd.f32 %v4590, %v4591
  %v4593 = vrot.slane %v4592, 2
  %v4594 = vadd.f32 %v4592, %v4593
  %v4595 = vrot.slane %v4594, 1
  %v4596 = vadd.f32 %v4594, %v4595
  %v4597 = vmul.f32 %v4596, 0.001953125
  %v4598 = vmul.f32 %v4462, %v4462
  %v4599 = vmul.f32 %v4463, %v4463
  %v4600 = vmul.f32 %v4464, %v4464
  %v4601 = vmul.f32 %v4465, %v4465
  %v4602 = vmul.f32 %v4466, %v4466
  %v4603 = vmul.f32 %v4467, %v4467
  %v4604 = vmul.f32 %v4468, %v4468
  %v4605 = vmul.f32 %v4469, %v4469
  %v4606 = vmul.f32 %v4470, %v4470
  %v4607 = vmul.f32 %v4471, %v4471
  %v4608 = vmul.f32 %v4472, %v4472
  %v4609 = vmul.f32 %v4473, %v4473
  %v4610 = vmul.f32 %v4474, %v4474
  %v4611 = vmul.f32 %v4475, %v4475
  %v4612 = vmul.f32 %v4476, %v4476
  %v4613 = vmul.f32 %v4477, %v4477
  %v4614 = vmul.f32 %v4478, %v4478
  %v4615 = vmul.f32 %v4479, %v4479
  %v4616 = vmul.f32 %v4480, %v4480
  %v4617 = vmul.f32 %v4481, %v4481
  %v4618 = vmul.f32 %v4482, %v4482
  %v4619 = vmul.f32 %v4483, %v4483
  %v4620 = vmul.f32 %v4484, %v4484
  %v4621 = vmul.f32 %v4485, %v4485
  %v4622 = vmul.f32 %v4486, %v4486
  %v4623 = vmul.f32 %v4487, %v4487
  %v4624 = vmul.f32 %v4488, %v4488
  %v4625 = vmul.f32 %v4489, %v4489
  %v4626 = vmul.f32 %v4490, %v4490
  %v4627 = vmul.f32 %v4491, %v4491
  %v4628 = vmul.f32 %v4492, %v4492
  %v4629 = vmul.f32 %v4493, %v4493
  %v4630 = vmul.f32 %v4494, %v4494
  %v4631 = vmul.f32 %v4495, %v4495
  %v4632 = vmul.f32 %v4496, %v4496
  %v4633 = vmul.f32 %v4497, %v4497
  %v4634 = vmul.f32 %v4498, %v4498
  %v4635 = vmul.f32 %v4499, %v4499
  %v4636 = vmul.f32 %v4500, %v4500
  %v4637 = vmul.f32 %v4501, %v4501
  %v4638 = vmul.f32 %v4502, %v4502
  %v4639 = vmul.f32 %v4503, %v4503
  %v4640 = vmul.f32 %v4504, %v4504
  %v4641 = vmul.f32 %v4505, %v4505
  %v4642 = vmul.f32 %v4506, %v4506
  %v4643 = vmul.f32 %v4507, %v4507
  %v4644 = vmul.f32 %v4508, %v4508
  %v4645 = vmul.f32 %v4509, %v4509
  %v4646 = vmul.f32 %v4510, %v4510
  %v4647 = vmul.f32 %v4511, %v4511
  %v4648 = vmul.f32 %v4512, %v4512
  %v4649 = vmul.f32 %v4513, %v4513
  %v4650 = vmul.f32 %v4514, %v4514
  %v4651 = vmul.f32 %v4515, %v4515
  %v4652 = vmul.f32 %v4516, %v4516
  %v4653 = vmul.f32 %v4517, %v4517
  %v4654 = vmul.f32 %v4518, %v4518
  %v4655 = vmul.f32 %v4519, %v4519
  %v4656 = vmul.f32 %v4520, %v4520
  %v4657 = vmul.f32 %v4521, %v4521
  %v4658 = vmul.f32 %v4522, %v4522
  %v4659 = vmul.f32 %v4523, %v4523
  %v4660 = vmul.f32 %v4524, %v4524
  %v4661 = vmul.f32 %v4525, %v4525
  %v4662 = vadd.f32 %v4598, %v4599
  %v4663 = vadd.f32 %v4662, %v4600
  %v4664 = vadd.f32 %v4663, %v4601
  %v4665 = vadd.f32 %v4664, %v4602
  %v4666 = vadd.f32 %v4665, %v4603
  %v4667 = vadd.f32 %v4666, %v4604
  %v4668 = vadd.f32 %v4667, %v4605
  %v4669 = vadd.f32 %v4668, %v4606
  %v4670 = vadd.f32 %v4669, %v4607
  %v4671 = vadd.f32 %v4670, %v4608
  %v4672 = vadd.f32 %v4671, %v4609
  %v4673 = vadd.f32 %v4672, %v4610
  %v4674 = vadd.f32 %v4673, %v4611
  %v4675 = vadd.f32 %v4674, %v4612
  %v4676 = vadd.f32 %v4675, %v4613
  %v4677 = vadd.f32 %v4676, %v4614
  %v4678 = vadd.f32 %v4677, %v4615
  %v4679 = vadd.f32 %v4678, %v4616
  %v4680 = vadd.f32 %v4679, %v4617
  %v4681 = vadd.f32 %v4680, %v4618
  %v4682 = vadd.f32 %v4681, %v4619
  %v4683 = vadd.f32 %v4682, %v4620
  %v4684 = vadd.f32 %v4683, %v4621
  %v4685 = vadd.f32 %v4684, %v4622
  %v4686 = vadd.f32 %v4685, %v4623
  %v4687 = vadd.f32 %v4686, %v4624
  %v4688 = vadd.f32 %v4687, %v4625
  %v4689 = vadd.f32 %v4688, %v4626
  %v4690 = vadd.f32 %v4689, %v4627
  %v4691 = vadd.f32 %v4690, %v4628
  %v4692 = vadd.f32 %v4691, %v4629
  %v4693 = vadd.f32 %v4692, %v4630
  %v4694 = vadd.f32 %v4693, %v4631
  %v4695 = vadd.f32 %v4694, %v4632
  %v4696 = vadd.f32 %v4695, %v4633
  %v4697 = vadd.f32 %v4696, %v4634
  %v4698 = vadd.f32 %v4697, %v4635
  %v4699 = vadd.f32 %v4698, %v4636
  %v4700 = vadd.f32 %v4699, %v4637
  %v4701 = vadd.f32 %v4700, %v4638
  %v4702 = vadd.f32 %v4701, %v4639
  %v4703 = vadd.f32 %v4702, %v4640
  %v4704 = vadd.f32 %v4703, %v4641
  %v4705 = vadd.f32 %v4704, %v4642
  %v4706 = vadd.f32 %v4705, %v4643
  %v4707 = vadd.f32 %v4706, %v4644
  %v4708 = vadd.f32 %v4707, %v4645
  %v4709 = vadd.f32 %v4708, %v4646
  %v4710 = vadd.f32 %v4709, %v4647
  %v4711 = vadd.f32 %v4710, %v4648
  %v4712 = vadd.f32 %v4711, %v4649
  %v4713 = vadd.f32 %v4712, %v4650
  %v4714 = vadd.f32 %v4713, %v4651
  %v4715 = vadd.f32 %v4714, %v4652
  %v4716 = vadd.f32 %v4715, %v4653
  %v4717 = vadd.f32 %v4716, %v4654
  %v4718 = vadd.f32 %v4717, %v4655
  %v4719 = vadd.f32 %v4718, %v4656
  %v4720 = vadd.f32 %v4719, %v4657
  %v4721 = vadd.f32 %v4720, %v4658
  %v4722 = vadd.f32 %v4721, %v4659
  %v4723 = vadd.f32 %v4722, %v4660
  %v4724 = vadd.f32 %v4723, %v4661
  %v4725 = vrot.slane %v4724, 4
  %v4726 = vadd.f32 %v4724, %v4725
  %v4727 = vrot.slane %v4726, 2
  %v4728 = vadd.f32 %v4726, %v4727
  %v4729 = vrot.slane %v4728, 1
  %v4730 = vadd.f32 %v4728, %v4729
  %v4731 = vmul.f32 %v4730, 0.001953125
  %v4732 = vmul.f32 %v4597, %v4597
  %v4733 = vsub.f32 %v4731, %v4732
  %v4734 = vadd.f32 %v4733, 1e-05
  %v4735 = vrsqrt.pop %v4734
  %v4736 = vmul.f32 %v4526, %v4735
  %v4737 = vmul.f32 %v4597, %v4736
  %v4738 = vsub.f32 %v4527, %v4737
  %v4740 = vlaneseq
  %v4741 = vshrl.u32 %v4740, 7
  %v4742 = vsub.s32 0, %v4741
  %v4743 = vrot.slane %v4736, %v4742
  %v4745 = vmul.f32 %v4462, %v4743
  %v4746 = vmul.f32 %v4463, %v4743
  %v4747 = vmul.f32 %v4464, %v4743
  %v4748 = vmul.f32 %v4465, %v4743
  %v4749 = vmul.f32 %v4466, %v4743
  %v4750 = vmul.f32 %v4467, %v4743
  %v4751 = vmul.f32 %v4468, %v4743
  %v4752 = vmul.f32 %v4469, %v4743
  %v4753 = vmul.f32 %v4470, %v4743
  %v4754 = vmul.f32 %v4471, %v4743
  %v4755 = vmul.f32 %v4472, %v4743
  %v4756 = vmul.f32 %v4473, %v4743
  %v4757 = vmul.f32 %v4474, %v4743
  %v4758 = vmul.f32 %v4475, %v4743
  %v4759 = vmul.f32 %v4476, %v4743
  %v4760 = vmul.f32 %v4477, %v4743
  %v4761 = vmul.f32 %v4478, %v4743
  %v4762 = vmul.f32 %v4479, %v4743
  %v4763 = vmul.f32 %v4480, %v4743
  %v4764 = vmul.f32 %v4481, %v4743
  %v4765 = vmul.f32 %v4482, %v4743
  %v4766 = vmul.f32 %v4483, %v4743
  %v4767 = vmul.f32 %v4484, %v4743
  %v4768 = vmul.f32 %v4485, %v4743
  %v4769 = vmul.f32 %v4486, %v4743
  %v4770 = vmul.f32 %v4487, %v4743
  %v4771 = vmul.f32 %v4488, %v4743
  %v4772 = vmul.f32 %v4489, %v4743
  %v4773 = vmul.f32 %v4490, %v4743
  %v4774 = vmul.f32 %v4491, %v4743
  %v4775 = vmul.f32 %v4492, %v4743
  %v4776 = vmul.f32 %v4493, %v4743
  %v4777 = vmul.f32 %v4494, %v4743
  %v4778 = vmul.f32 %v4495, %v4743
  %v4779 = vmul.f32 %v4496, %v4743
  %v4780 = vmul.f32 %v4497, %v4743
  %v4781 = vmul.f32 %v4498, %v4743
  %v4782 = vmul.f32 %v4499, %v4743
  %v4783 = vmul.f32 %v4500, %v4743
  %v4784 = vmul.f32 %v4501, %v4743
  %v4785 = vmul.f32 %v4502, %v4743
  %v4786 = vmul.f32 %v4503, %v4743
  %v4787 = vmul.f32 %v4504, %v4743
  %v4788 = vmul.f32 %v4505, %v4743
  %v4789 = vmul.f32 %v4506, %v4743
  %v4790 = vmul.f32 %v4507, %v4743
  %v4791 = vmul.f32 %v4508, %v4743
  %v4792 = vmul.f32 %v4509, %v4743
  %v4793 = vmul.f32 %v4510, %v4743
  %v4794 = vmul.f32 %v4511, %v4743
  %v4795 = vmul.f32 %v4512, %v4743
  %v4796 = vmul.f32 %v4513, %v4743
  %v4797 = vmul.f32 %v4514, %v4743
  %v4798 = vmul.f32 %v4515, %v4743
  %v4799 = vmul.f32 %v4516, %v4743
  %v4800 = vmul.f32 %v4517, %v4743
  %v4801 = vmul.f32 %v4518, %v4743
  %v4802 = vmul.f32 %v4519, %v4743
  %v4803 = vmul.f32 %v4520, %v4743
  %v4804 = vmul.f32 %v4521, %v4743
  %v4805 = vmul.f32 %v4522, %v4743
  %v4806 = vmul.f32 %v4523, %v4743
  %v4807 = vmul.f32 %v4524, %v4743
  %v4808 = vmul.f32 %v4525, %v4743
  %v4810 = vlaneseq
  %v4811 = vshrl.u32 %v4810, 7
  %v4812 = vsub.s32 0, %v4811
  %v4813 = vrot.slane %v4738, %v4812
  %v4815 = vadd.f32 %v4745, %v4813
  %v4816 = vadd.f32 %v4746, %v4813
  %v4817 = vadd.f32 %v4747, %v4813
  %v4818 = vadd.f32 %v4748, %v4813
  %v4819 = vadd.f32 %v4749, %v4813
  %v4820 = vadd.f32 %v4750, %v4813
  %v4821 = vadd.f32 %v4751, %v4813
  %v4822 = vadd.f32 %v4752, %v4813
  %v4823 = vadd.f32 %v4753, %v4813
  %v4824 = vadd.f32 %v4754, %v4813
  %v4825 = vadd.f32 %v4755, %v4813
  %v4826 = vadd.f32 %v4756, %v4813
  %v4827 = vadd.f32 %v4757, %v4813
  %v4828 = vadd.f32 %v4758, %v4813
  %v4829 = vadd.f32 %v4759, %v4813
  %v4830 = vadd.f32 %v4760, %v4813
  %v4831 = vadd.f32 %v4761, %v4813
  %v4832 = vadd.f32 %v4762, %v4813
  %v4833 = vadd.f32 %v4763, %v4813
  %v4834 = vadd.f32 %v4764, %v4813
  %v4835 = vadd.f32 %v4765, %v4813
  %v4836 = vadd.f32 %v4766, %v4813
  %v4837 = vadd.f32 %v4767, %v4813
  %v4838 = vadd.f32 %v4768, %v4813
  %v4839 = vadd.f32 %v4769, %v4813
  %v4840 = vadd.f32 %v4770, %v4813
  %v4841 = vadd.f32 %v4771, %v4813
  %v4842 = vadd.f32 %v4772, %v4813
  %v4843 = vadd.f32 %v4773, %v4813
  %v4844 = vadd.f32 %v4774, %v4813
  %v4845 = vadd.f32 %v4775, %v4813
  %v4846 = vadd.f32 %v4776, %v4813
  %v4847 = vadd.f32 %v4777, %v4813
  %v4848 = vadd.f32 %v4778, %v4813
  %v4849 = vadd.f32 %v4779, %v4813
  %v4850 = vadd.f32 %v4780, %v4813
  %v4851 = vadd.f32 %v4781, %v4813
  %v4852 = vadd.f32 %v4782, %v4813
  %v4853 = vadd.f32 %v4783, %v4813
  %v4854 = vadd.f32 %v4784, %v4813
  %v4855 = vadd.f32 %v4785, %v4813
  %v4856 = vadd.f32 %v4786, %v4813
  %v4857 = vadd.f32 %v4787, %v4813
  %v4858 = vadd.f32 %v4788, %v4813
  %v4859 = vadd.f32 %v4789, %v4813
  %v4860 = vadd.f32 %v4790, %v4813
  %v4861 = vadd.f32 %v4791, %v4813
  %v4862 = vadd.f32 %v4792, %v4813
  %v4863 = vadd.f32 %v4793, %v4813
  %v4864 = vadd.f32 %v4794, %v4813
  %v4865 = vadd.f32 %v4795, %v4813
  %v4866 = vadd.f32 %v4796, %v4813
  %v4867 = vadd.f32 %v4797, %v4813
  %v4868 = vadd.f32 %v4798, %v4813
  %v4869 = vadd.f32 %v4799, %v4813
  %v4870 = vadd.f32 %v4800, %v4813
  %v4871 = vadd.f32 %v4801, %v4813
  %v4872 = vadd.f32 %v4802, %v4813
  %v4873 = vadd.f32 %v4803, %v4813
  %v4874 = vadd.f32 %v4804, %v4813
  %v4875 = vadd.f32 %v4805, %v4813
  %v4876 = vadd.f32 %v4806, %v4813
  %v4877 = vadd.f32 %v4807, %v4813
  %v4878 = vadd.f32 %v4808, %v4813
  %v4879 = vmax.f32 %v4815, 0.0
  %v4880 = vmax.f32 %v4816, 0.0
  %v4881 = vmax.f32 %v4817, 0.0
  %v4882 = vmax.f32 %v4818, 0.0
  %v4883 = vmax.f32 %v4819, 0.0
  %v4884 = vmax.f32 %v4820, 0.0
  %v4885 = vmax.f32 %v4821, 0.0
  %v4886 = vmax.f32 %v4822, 0.0
  %v4887 = vmax.f32 %v4823, 0.0
  %v4888 = vmax.f32 %v4824, 0.0
  %v4889 = vmax.f32 %v4825, 0.0
  %v4890 = vmax.f32 %v4826, 0.0
  %v4891 = vmax.f32 %v4827, 0.0
  %v4892 = vmax.f32 %v4828, 0.0
  %v4893 = vmax.f32 %v4829, 0.0
  %v4894 = vmax.f32 %v4830, 0.0
  %v4895 = vmax.f32 %v4831, 0.0
  %v4896 = vmax.f32 %v4832, 0.0
  %v4897 = vmax.f32 %v4833, 0.0
  %v4898 = vmax.f32 %v4834, 0.0
  %v4899 = vmax.f32 %v4835, 0.0
  %v4900 = vmax.f32 %v4836, 0.0
  %v4901 = vmax.f32 %v4837, 0.0
  %v4902 = vmax.f32 %v4838, 0.0
  %v4903 = vmax.f32 %v4839, 0.0
  %v4904 = vmax.f32 %v4840, 0.0
  %v4905 = vmax.f32 %v4841, 0.0
  %v4906 = vmax.f32 %v4842, 0.0
  %v4907 = vmax.f32 %v4843, 0.0
  %v4908 = vmax.f32 %v4844, 0.0
  %v4909 = vmax.f32 %v4845, 0.0
  %v4910 = vmax.f32 %v4846, 0.0
  %v4911 = vmax.f32 %v4847, 0.0
  %v4912 = vmax.f32 %v4848, 0.0
  %v4913 = vmax.f32 %v4849, 0.0
  %v4914 = vmax.f32 %v4850, 0.0
  %v4915 = vmax.f32 %v4851, 0.0
  %v4916 = vmax.f32 %v4852, 0.0
  %v4917 = vmax.f32 %v4853, 0.0
  %v4918 = vmax.f32 %v4854, 0.0
  %v4919 = vmax.f32 %v4855, 0.0
  %v4920 = vmax.f32 %v4856, 0.0
  %v4921 = vmax.f32 %v4857, 0.0
  %v4922 = vmax.f32 %v4858, 0.0
  %v4923 = vmax.f32 %v4859, 0.0
  %v4924 = vmax.f32 %v4860, 0.0
  %v4925 = vmax.f32 %v4861, 0.0
  %v4926 = vmax.f32 %v4862, 0.0
  %v4927 = vmax.f32 %v4863, 0.0
  %v4928 = vmax.f32 %v4864, 0.0
  %v4929 = vmax.f32 %v4865, 0.0
  %v4930 = vmax.f32 %v4866, 0.0
  %v4931 = vmax.f32 %v4867, 0.0
  %v4932 = vmax.f32 %v4868, 0.0
  %v4933 = vmax.f32 %v4869, 0.0
  %v4934 = vmax.f32 %v4870, 0.0
  %v4935 = vmax.f32 %v4871, 0.0
  %v4936 = vmax.f32 %v4872, 0.0
  %v4937 = vmax.f32 %v4873, 0.0
  %v4938 = vmax.f32 %v4874, 0.0
  %v4939 = vmax.f32 %v4875, 0.0
  %v4940 = vmax.f32 %v4876, 0.0
  %v4941 = vmax.f32 %v4877, 0.0
  %v4942 = vmax.f32 %v4878, 0.0
  %4943 = vst [vmem:[#allocation2] sm:$0xff] 0.0
  %4944 = vst [vmem:[#allocation2 + $0x8] sm:$0xff] 0.0
  %4945 = vst [vmem:[#allocation2 + $0x10] sm:$0xff] 0.0
  %4946 = vst [vmem:[#allocation2 + $0x18] sm:$0xff] 0.0
  %4947 = vst [vmem:[#allocation2 + $0x20] sm:$0xff] 0.0
  %4948 = vst [vmem:[#allocation2 + $0x28] sm:$0xff] 0.0
  %4949 = vst [vmem:[#allocation2 + $0x30] sm:$0xff] 0.0
  %4950 = vst [vmem:[#allocation2 + $0x38] sm:$0xff] 0.0
  %4951 = vst [vmem:[#allocation2 + $0x40] sm:$0xff] 0.0
  %4952 = vst [vmem:[#allocation2 + $0x48] sm:$0xff] 0.0
  %4953 = vst [vmem:[#allocation2 + $0x50] sm:$0xff] 0.0
  %4954 = vst [vmem:[#allocation2 + $0x58] sm:$0xff] 0.0
  %4955 = vst [vmem:[#allocation2 + $0x60] sm:$0xff] 0.0
  %4956 = vst [vmem:[#allocation2 + $0x68] sm:$0xff] 0.0
  %4957 = vst [vmem:[#allocation2 + $0x70] sm:$0xff] 0.0
  %4958 = vst [vmem:[#allocation2 + $0x78] sm:$0xff] 0.0
  %4959 = vst [vmem:[#allocation2 + $0x80] sm:$0xff] 0.0
  %4960 = vst [vmem:[#allocation2 + $0x88] sm:$0xff] 0.0
  %4961 = vst [vmem:[#allocation2 + $0x90] sm:$0xff] 0.0
  %4962 = vst [vmem:[#allocation2 + $0x98] sm:$0xff] 0.0
  %4963 = vst [vmem:[#allocation2 + $0xa0] sm:$0xff] 0.0
  %4964 = vst [vmem:[#allocation2 + $0xa8] sm:$0xff] 0.0
  %4965 = vst [vmem:[#allocation2 + $0xb0] sm:$0xff] 0.0
  %4966 = vst [vmem:[#allocation2 + $0xb8] sm:$0xff] 0.0
  %4967 = vst [vmem:[#allocation2 + $0xc0] sm:$0xff] 0.0
  %4968 = vst [vmem:[#allocation2 + $0xc8] sm:$0xff] 0.0
  %4969 = vst [vmem:[#allocation2 + $0xd0] sm:$0xff] 0.0
  %4970 = vst [vmem:[#allocation2 + $0xd8] sm:$0xff] 0.0
  %4971 = vst [vmem:[#allocation2 + $0xe0] sm:$0xff] 0.0
  %4972 = vst [vmem:[#allocation2 + $0xe8] sm:$0xff] 0.0
  %4973 = vst [vmem:[#allocation2 + $0xf0] sm:$0xff] 0.0
  %4974 = vst [vmem:[#allocation2 + $0xf8] sm:$0xff] 0.0
  %4975 = vst [vmem:[#allocation2 + $0x100] sm:$0xff] 0.0
  %4976 = vst [vmem:[#allocation2 + $0x108] sm:$0xff] 0.0
  %4977 = vst [vmem:[#allocation2 + $0x110] sm:$0xff] 0.0
  %4978 = vst [vmem:[#allocation2 + $0x118] sm:$0xff] 0.0
  %4979 = vst [vmem:[#allocation2 + $0x120] sm:$0xff] 0.0
  %4980 = vst [vmem:[#allocation2 + $0x128] sm:$0xff] 0.0
  %4981 = vst [vmem:[#allocation2 + $0x130] sm:$0xff] 0.0
  %4982 = vst [vmem:[#allocation2 + $0x138] sm:$0xff] 0.0
  %4983 = vst [vmem:[#allocation2 + $0x140] sm:$0xff] 0.0
  %4984 = vst [vmem:[#allocation2 + $0x148] sm:$0xff] 0.0
  %4985 = vst [vmem:[#allocation2 + $0x150] sm:$0xff] 0.0
  %4986 = vst [vmem:[#allocation2 + $0x158] sm:$0xff] 0.0
  %4987 = vst [vmem:[#allocation2 + $0x160] sm:$0xff] 0.0
  %4988 = vst [vmem:[#allocation2 + $0x168] sm:$0xff] 0.0
  %4989 = vst [vmem:[#allocation2 + $0x170] sm:$0xff] 0.0
  %4990 = vst [vmem:[#allocation2 + $0x178] sm:$0xff] 0.0
  %4991 = vst [vmem:[#allocation2 + $0x180] sm:$0xff] 0.0
  %4992 = vst [vmem:[#allocation2 + $0x188] sm:$0xff] 0.0
  %4993 = vst [vmem:[#allocation2 + $0x190] sm:$0xff] 0.0
  %4994 = vst [vmem:[#allocation2 + $0x198] sm:$0xff] 0.0
  %4995 = vst [vmem:[#allocation2 + $0x1a0] sm:$0xff] 0.0
  %4996 = vst [vmem:[#allocation2 + $0x1a8] sm:$0xff] 0.0
  %4997 = vst [vmem:[#allocation2 + $0x1b0] sm:$0xff] 0.0
  %4998 = vst [vmem:[#allocation2 + $0x1b8] sm:$0xff] 0.0
  %4999 = vst [vmem:[#allocation2 + $0x1c0] sm:$0xff] 0.0
  %5000 = vst [vmem:[#allocation2 + $0x1c8] sm:$0xff] 0.0
  %5001 = vst [vmem:[#allocation2 + $0x1d0] sm:$0xff] 0.0
  %5002 = vst [vmem:[#allocation2 + $0x1d8] sm:$0xff] 0.0
  %5003 = vst [vmem:[#allocation2 + $0x1e0] sm:$0xff] 0.0
  %5004 = vst [vmem:[#allocation2 + $0x1e8] sm:$0xff] 0.0
  %5005 = vst [vmem:[#allocation2 + $0x1f0] sm:$0xff] 0.0
  %5006 = vst [vmem:[#allocation2 + $0x1f8] sm:$0xff] 0.0
  %5007 = vst [vmem:[#allocation2 + $0x200] sm:$0xff] 0.0
  %5008 = vst [vmem:[#allocation2 + $0x208] sm:$0xff] 0.0
  %5009 = vst [vmem:[#allocation2 + $0x210] sm:$0xff] 0.0
  %5010 = vst [vmem:[#allocation2 + $0x218] sm:$0xff] 0.0
  %5011 = vst [vmem:[#allocation2 + $0x220] sm:$0xff] 0.0
  %5012 = vst [vmem:[#allocation2 + $0x228] sm:$0xff] 0.0
  %5013 = vst [vmem:[#allocation2 + $0x230] sm:$0xff] 0.0
  %5014 = vst [vmem:[#allocation2 + $0x238] sm:$0xff] 0.0
  %5015 = vst [vmem:[#allocation2 + $0x240] sm:$0xff] 0.0
  %5016 = vst [vmem:[#allocation2 + $0x248] sm:$0xff] 0.0
  %5017 = vst [vmem:[#allocation2 + $0x250] sm:$0xff] 0.0
  %5018 = vst [vmem:[#allocation2 + $0x258] sm:$0xff] 0.0
  %5019 = vst [vmem:[#allocation2 + $0x260] sm:$0xff] 0.0
  %5020 = vst [vmem:[#allocation2 + $0x268] sm:$0xff] 0.0
  %5021 = vst [vmem:[#allocation2 + $0x270] sm:$0xff] 0.0
  %5022 = vst [vmem:[#allocation2 + $0x278] sm:$0xff] 0.0
  %5023 = vst [vmem:[#allocation2 + $0x280] sm:$0xff] 0.0
  %5024 = vst [vmem:[#allocation2 + $0x288] sm:$0xff] 0.0
  %5025 = vst [vmem:[#allocation2 + $0x290] sm:$0xff] 0.0
  %5026 = vst [vmem:[#allocation2 + $0x298] sm:$0xff] 0.0
  %5027 = vst [vmem:[#allocation2 + $0x2a0] sm:$0xff] 0.0
  %5028 = vst [vmem:[#allocation2 + $0x2a8] sm:$0xff] 0.0
  %5029 = vst [vmem:[#allocation2 + $0x2b0] sm:$0xff] 0.0
  %5030 = vst [vmem:[#allocation2 + $0x2b8] sm:$0xff] 0.0
  %5031 = vst [vmem:[#allocation2 + $0x2c0] sm:$0xff] 0.0
  %5032 = vst [vmem:[#allocation2 + $0x2c8] sm:$0xff] 0.0
  %5033 = vst [vmem:[#allocation2 + $0x2d0] sm:$0xff] 0.0
  %5034 = vst [vmem:[#allocation2 + $0x2d8] sm:$0xff] 0.0
  %5035 = vst [vmem:[#allocation2 + $0x2e0] sm:$0xff] 0.0
  %5036 = vst [vmem:[#allocation2 + $0x2e8] sm:$0xff] 0.0
  %5037 = vst [vmem:[#allocation2 + $0x2f0] sm:$0xff] 0.0
  %5038 = vst [vmem:[#allocation2 + $0x2f8] sm:$0xff] 0.0
  %5039 = vst [vmem:[#allocation2 + $0x300] sm:$0xff] 0.0
  %5040 = vst [vmem:[#allocation2 + $0x308] sm:$0xff] 0.0
  %5041 = vst [vmem:[#allocation2 + $0x310] sm:$0xff] 0.0
  %5042 = vst [vmem:[#allocation2 + $0x318] sm:$0xff] 0.0
  %5043 = vst [vmem:[#allocation2 + $0x320] sm:$0xff] 0.0
  %5044 = vst [vmem:[#allocation2 + $0x328] sm:$0xff] 0.0
  %5045 = vst [vmem:[#allocation2 + $0x330] sm:$0xff] 0.0
  %5046 = vst [vmem:[#allocation2 + $0x338] sm:$0xff] 0.0
  %5047 = vst [vmem:[#allocation2 + $0x340] sm:$0xff] 0.0
  %5048 = vst [vmem:[#allocation2 + $0x348] sm:$0xff] 0.0
  %5049 = vst [vmem:[#allocation2 + $0x350] sm:$0xff] 0.0
  %5050 = vst [vmem:[#allocation2 + $0x358] sm:$0xff] 0.0
  %5051 = vst [vmem:[#allocation2 + $0x360] sm:$0xff] 0.0
  %5052 = vst [vmem:[#allocation2 + $0x368] sm:$0xff] 0.0
  %5053 = vst [vmem:[#allocation2 + $0x370] sm:$0xff] 0.0
  %5054 = vst [vmem:[#allocation2 + $0x378] sm:$0xff] 0.0
  %5055 = vst [vmem:[#allocation2 + $0x380] sm:$0xff] 0.0
  %5056 = vst [vmem:[#allocation2 + $0x388] sm:$0xff] 0.0
  %5057 = vst [vmem:[#allocation2 + $0x390] sm:$0xff] 0.0
  %5058 = vst [vmem:[#allocation2 + $0x398] sm:$0xff] 0.0
  %5059 = vst [vmem:[#allocation2 + $0x3a0] sm:$0xff] 0.0
  %5060 = vst [vmem:[#allocation2 + $0x3a8] sm:$0xff] 0.0
  %5061 = vst [vmem:[#allocation2 + $0x3b0] sm:$0xff] 0.0
  %5062 = vst [vmem:[#allocation2 + $0x3b8] sm:$0xff] 0.0
  %5063 = vst [vmem:[#allocation2 + $0x3c0] sm:$0xff] 0.0
  %5064 = vst [vmem:[#allocation2 + $0x3c8] sm:$0xff] 0.0
  %5065 = vst [vmem:[#allocation2 + $0x3d0] sm:$0xff] 0.0
  %5066 = vst [vmem:[#allocation2 + $0x3d8] sm:$0xff] 0.0
  %5067 = vst [vmem:[#allocation2 + $0x3e0] sm:$0xff] 0.0
  %5068 = vst [vmem:[#allocation2 + $0x3e8] sm:$0xff] 0.0
  %5069 = vst [vmem:[#allocation2 + $0x3f0] sm:$0xff] 0.0
  %5070 = vst [vmem:[#allocation2 + $0x3f8] sm:$0xff] 0.0
  %5071 = vst [vmem:[#allocation2 + $0x400] sm:$0xff] 0.0
  %5072 = vst [vmem:[#allocation2 + $0x408] sm:$0xff] 0.0
  %5073 = vst [vmem:[#allocation2 + $0x410] sm:$0xff] 0.0
  %5074 = vst [vmem:[#allocation2 + $0x418] sm:$0xff] 0.0
  %5075 = vst [vmem:[#allocation2 + $0x420] sm:$0xff] 0.0
  %5076 = vst [vmem:[#allocation2 + $0x428] sm:$0xff] 0.0
  %5077 = vst [vmem:[#allocation2 + $0x430] sm:$0xff] 0.0
  %5078 = vst [vmem:[#allocation2 + $0x438] sm:$0xff] 0.0
  %5079 = vst [vmem:[#allocation2 + $0x440] sm:$0xff] 0.0
  %5080 = vst [vmem:[#allocation2 + $0x448] sm:$0xff] 0.0
  %5081 = vst [vmem:[#allocation2 + $0x450] sm:$0xff] 0.0
  %5082 = vst [vmem:[#allocation2 + $0x458] sm:$0xff] 0.0
  %5083 = vst [vmem:[#allocation2 + $0x460] sm:$0xff] 0.0
  %5084 = vst [vmem:[#allocation2 + $0x468] sm:$0xff] 0.0
  %5085 = vst [vmem:[#allocation2 + $0x470] sm:$0xff] 0.0
  %5086 = vst [vmem:[#allocation2 + $0x478] sm:$0xff] 0.0
  %s5087 = scalar_lea.vmem [#allocation2], 32
  %5088 = vst [vmem:[%s5087 + $0x8] sm:$0xff] %v4879
  %5089 = vst [vmem:[%s5087 + $0x10] sm:$0xff] %v4880
  %5090 = vst [vmem:[%s5087 + $0x28] sm:$0xff] %v4881
  %5091 = vst [vmem:[%s5087 + $0x30] sm:$0xff] %v4882
  %5092 = vst [vmem:[%s5087 + $0x48] sm:$0xff] %v4883
  %5093 = vst [vmem:[%s5087 + $0x50] sm:$0xff] %v4884
  %5094 = vst [vmem:[%s5087 + $0x68] sm:$0xff] %v4885
  %5095 = vst [vmem:[%s5087 + $0x70] sm:$0xff] %v4886
  %5096 = vst [vmem:[%s5087 + $0x88] sm:$0xff] %v4887
  %5097 = vst [vmem:[%s5087 + $0x90] sm:$0xff] %v4888
  %5098 = vst [vmem:[%s5087 + $0xa8] sm:$0xff] %v4889
  %5099 = vst [vmem:[%s5087 + $0xb0] sm:$0xff] %v4890
  %5100 = vst [vmem:[%s5087 + $0xc8] sm:$0xff] %v4891
  %5101 = vst [vmem:[%s5087 + $0xd0] sm:$0xff] %v4892
  %5102 = vst [vmem:[%s5087 + $0xe8] sm:$0xff] %v4893
  %5103 = vst [vmem:[%s5087 + $0xf0] sm:$0xff] %v4894
  %5104 = vst [vmem:[%s5087 + $0x108] sm:$0xff] %v4895
  %5105 = vst [vmem:[%s5087 + $0x110] sm:$0xff] %v4896
  %5106 = vst [vmem:[%s5087 + $0x128] sm:$0xff] %v4897
  %5107 = vst [vmem:[%s5087 + $0x130] sm:$0xff] %v4898
  %5108 = vst [vmem:[%s5087 + $0x148] sm:$0xff] %v4899
  %5109 = vst [vmem:[%s5087 + $0x150] sm:$0xff] %v4900
  %5110 = vst [vmem:[%s5087 + $0x168] sm:$0xff] %v4901
  %5111 = vst [vmem:[%s5087 + $0x170] sm:$0xff] %v4902
  %5112 = vst [vmem:[%s5087 + $0x188] sm:$0xff] %v4903
  %5113 = vst [vmem:[%s5087 + $0x190] sm:$0xff] %v4904
  %5114 = vst [vmem:[%s5087 + $0x1a8] sm:$0xff] %v4905
  %5115 = vst [vmem:[%s5087 + $0x1b0] sm:$0xff] %v4906
  %5116 = vst [vmem:[%s5087 + $0x1c8] sm:$0xff] %v4907
  %5117 = vst [vmem:[%s5087 + $0x1d0] sm:$0xff] %v4908
  %5118 = vst [vmem:[%s5087 + $0x1e8] sm:$0xff] %v4909
  %5119 = vst [vmem:[%s5087 + $0x1f0] sm:$0xff] %v4910
  %5120 = vst [vmem:[%s5087 + $0x248] sm:$0xff] %v4911
  %5121 = vst [vmem:[%s5087 + $0x250] sm:$0xff] %v4912
  %5122 = vst [vmem:[%s5087 + $0x268] sm:$0xff] %v4913
  %5123 = vst [vmem:[%s5087 + $0x270] sm:$0xff] %v4914
  %5124 = vst [vmem:[%s5087 + $0x288] sm:$0xff] %v4915
  %5125 = vst [vmem:[%s5087 + $0x290] sm:$0xff] %v4916
  %5126 = vst [vmem:[%s5087 + $0x2a8] sm:$0xff] %v4917
  %5127 = vst [vmem:[%s5087 + $0x2b0] sm:$0xff] %v4918
  %5128 = vst [vmem:[%s5087 + $0x2c8] sm:$0xff] %v4919
  %5129 = vst [vmem:[%s5087 + $0x2d0] sm:$0xff] %v4920
  %5130 = vst [vmem:[%s5087 + $0x2e8] sm:$0xff] %v4921
  %5131 = vst [vmem:[%s5087 + $0x2f0] sm:$0xff] %v4922
  %5132 = vst [vmem:[%s5087 + $0x308] sm:$0xff] %v4923
  %5133 = vst [vmem:[%s5087 + $0x310] sm:$0xff] %v4924
  %5134 = vst [vmem:[%s5087 + $0x328] sm:$0xff] %v4925
  %5135 = vst [vmem:[%s5087 + $0x330] sm:$0xff] %v4926
  %5136 = vst [vmem:[%s5087 + $0x348] sm:$0xff] %v4927
  %5137 = vst [vmem:[%s5087 + $0x350] sm:$0xff] %v4928
  %5138 = vst [vmem:[%s5087 + $0x368] sm:$0xff] %v4929
  %5139 = vst [vmem:[%s5087 + $0x370] sm:$0xff] %v4930
  %5140 = vst [vmem:[%s5087 + $0x388] sm:$0xff] %v4931
  %5141 = vst [vmem:[%s5087 + $0x390] sm:$0xff] %v4932
  %5142 = vst [vmem:[%s5087 + $0x3a8] sm:$0xff] %v4933
  %5143 = vst [vmem:[%s5087 + $0x3b0] sm:$0xff] %v4934
  %5144 = vst [vmem:[%s5087 + $0x3c8] sm:$0xff] %v4935
  %5145 = vst [vmem:[%s5087 + $0x3d0] sm:$0xff] %v4936
  %5146 = vst [vmem:[%s5087 + $0x3e8] sm:$0xff] %v4937
  %5147 = vst [vmem:[%s5087 + $0x3f0] sm:$0xff] %v4938
  %5148 = vst [vmem:[%s5087 + $0x408] sm:$0xff] %v4939
  %5149 = vst [vmem:[%s5087 + $0x410] sm:$0xff] %v4940
  %5150 = vst [vmem:[%s5087 + $0x428] sm:$0xff] %v4941
  %5151 = vst [vmem:[%s5087 + $0x430] sm:$0xff] %v4942
  %v5152 = vld [vmem:[#allocation2 + $0x7] sm:$0xff]
  %v5153 = vld [vmem:[#allocation2 + $0xf] sm:$0xff]
  %v5154 = vld [vmem:[#allocation2 + $0x27] sm:$0xff]
  %v5155 = vld [vmem:[#allocation2 + $0x2f] sm:$0xff]
  %v5156 = vld [vmem:[#allocation2 + $0x47] sm:$0xff]
  %v5157 = vld [vmem:[#allocation2 + $0x4f] sm:$0xff]
  %v5158 = vld [vmem:[#allocation2 + $0x67] sm:$0xff]
  %v5159 = vld [vmem:[#allocation2 + $0x6f] sm:$0xff]
  %v5160 = vld [vmem:[#allocation2 + $0x87] sm:$0xff]
  %v5161 = vld [vmem:[#allocation2 + $0x8f] sm:$0xff]
  %v5162 = vld [vmem:[#allocation2 + $0xa7] sm:$0xff]
  %v5163 = vld [vmem:[#allocation2 + $0xaf] sm:$0xff]
  %v5164 = vld [vmem:[#allocation2 + $0xc7] sm:$0xff]
  %v5165 = vld [vmem:[#allocation2 + $0xcf] sm:$0xff]
  %v5166 = vld [vmem:[#allocation2 + $0xe7] sm:$0xff]
  %v5167 = vld [vmem:[#allocation2 + $0xef] sm:$0xff]
  %v5168 = vld [vmem:[#allocation2 + $0x107] sm:$0xff]
  %v5169 = vld [vmem:[#allocation2 + $0x10f] sm:$0xff]
  %v5170 = vld [vmem:[#allocation2 + $0x127] sm:$0xff]
  %v5171 = vld [vmem:[#allocation2 + $0x12f] sm:$0xff]
  %v5172 = vld [vmem:[#allocation2 + $0x147] sm:$0xff]
  %v5173 = vld [vmem:[#allocation2 + $0x14f] sm:$0xff]
  %v5174 = vld [vmem:[#allocation2 + $0x167] sm:$0xff]
  %v5175 = vld [vmem:[#allocation2 + $0x16f] sm:$0xff]
  %v5176 = vld [vmem:[#allocation2 + $0x187] sm:$0xff]
  %v5177 = vld [vmem:[#allocation2 + $0x18f] sm:$0xff]
  %v5178 = vld [vmem:[#allocation2 + $0x1a7] sm:$0xff]
  %v5179 = vld [vmem:[#allocation2 + $0x1af] sm:$0xff]
  %v5180 = vld [vmem:[#allocation2 + $0x1c7] sm:$0xff]
  %v5181 = vld [vmem:[#allocation2 + $0x1cf] sm:$0xff]
  %v5182 = vld [vmem:[#allocation2 + $0x1e7] sm:$0xff]
  %v5183 = vld [vmem:[#allocation2 + $0x1ef] sm:$0xff]
  %v5184 = vld [vmem:[#allocation2 + $0x247] sm:$0xff]
  %v5185 = vld [vmem:[#allocation2 + $0x24f] sm:$0xff]
  %v5186 = vld [vmem:[#allocation2 + $0x267] sm:$0xff]
  %v5187 = vld [vmem:[#allocation2 + $0x26f] sm:$0xff]
  %v5188 = vld [vmem:[#allocation2 + $0x287] sm:$0xff]
  %v5189 = vld [vmem:[#allocation2 + $0x28f] sm:$0xff]
  %v5190 = vld [vmem:[#allocation2 + $0x2a7] sm:$0xff]
  %v5191 = vld [vmem:[#allocation2 + $0x2af] sm:$0xff]
  %v5192 = vld [vmem:[#allocation2 + $0x2c7] sm:$0xff]
  %v5193 = vld [vmem:[#allocation2 + $0x2cf] sm:$0xff]
  %v5194 = vld [vmem:[#allocation2 + $0x2e7] sm:$0xff]
  %v5195 = vld [vmem:[#allocation2 + $0x2ef] sm:$0xff]
  %v5196 = vld [vmem:[#allocation2 + $0x307] sm:$0xff]
  %v5197 = vld [vmem:[#allocation2 + $0x30f] sm:$0xff]
  %v5198 = vld [vmem:[#allocation2 + $0x327] sm:$0xff]
  %v5199 = vld [vmem:[#allocation2 + $0x32f] sm:$0xff]
  %v5200 = vld [vmem:[#allocation2 + $0x347] sm:$0xff]
  %v5201 = vld [vmem:[#allocation2 + $0x34f] sm:$0xff]
  %v5202 = vld [vmem:[#allocation2 + $0x367] sm:$0xff]
  %v5203 = vld [vmem:[#allocation2 + $0x36f] sm:$0xff]
  %v5204 = vld [vmem:[#allocation2 + $0x387] sm:$0xff]
  %v5205 = vld [vmem:[#allocation2 + $0x38f] sm:$0xff]
  %v5206 = vld [vmem:[#allocation2 + $0x3a7] sm:$0xff]
  %v5207 = vld [vmem:[#allocation2 + $0x3af] sm:$0xff]
  %v5208 = vld [vmem:[#allocation2 + $0x3c7] sm:$0xff]
  %v5209 = vld [vmem:[#allocation2 + $0x3cf] sm:$0xff]
  %v5210 = vld [vmem:[#allocation2 + $0x3e7] sm:$0xff]
  %v5211 = vld [vmem:[#allocation2 + $0x3ef] sm:$0xff]
  %v5212 = vld [vmem:[#allocation2 + $0x407] sm:$0xff]
  %v5213 = vld [vmem:[#allocation2 + $0x40f] sm:$0xff]
  %v5214 = vld [vmem:[#allocation2 + $0x427] sm:$0xff]
  %v5215 = vld [vmem:[#allocation2 + $0x42f] sm:$0xff]
  %v5216 = vpack.c.bf16 %v5153, %v5152
  %v5217 = vpack.c.bf16 %v5155, %v5154
  %v5218 = vpack.c.bf16 %v5157, %v5156
  %v5219 = vpack.c.bf16 %v5159, %v5158
  %v5220 = vpack.c.bf16 %v5161, %v5160
  %v5221 = vpack.c.bf16 %v5163, %v5162
  %v5222 = vpack.c.bf16 %v5165, %v5164
  %v5223 = vpack.c.bf16 %v5167, %v5166
  %v5224 = vpack.c.bf16 %v5169, %v5168
  %v5225 = vpack.c.bf16 %v5171, %v5170
  %v5226 = vpack.c.bf16 %v5173, %v5172
  %v5227 = vpack.c.bf16 %v5175, %v5174
  %v5228 = vpack.c.bf16 %v5177, %v5176
  %v5229 = vpack.c.bf16 %v5179, %v5178
  %v5230 = vpack.c.bf16 %v5181, %v5180
  %v5231 = vpack.c.bf16 %v5183, %v5182
  %v5232 = vpack.c.bf16 %v5185, %v5184
  %v5233 = vpack.c.bf16 %v5187, %v5186
  %v5234 = vpack.c.bf16 %v5189, %v5188
  %v5235 = vpack.c.bf16 %v5191, %v5190
  %v5236 = vpack.c.bf16 %v5193, %v5192
  %v5237 = vpack.c.bf16 %v5195, %v5194
  %v5238 = vpack.c.bf16 %v5197, %v5196
  %v5239 = vpack.c.bf16 %v5199, %v5198
  %v5240 = vpack.c.bf16 %v5201, %v5200
  %v5241 = vpack.c.bf16 %v5203, %v5202
  %v5242 = vpack.c.bf16 %v5205, %v5204
  %v5243 = vpack.c.bf16 %v5207, %v5206
  %v5244 = vpack.c.bf16 %v5209, %v5208
  %v5245 = vpack.c.bf16 %v5211, %v5210
  %v5246 = vpack.c.bf16 %v5213, %v5212
  %v5247 = vpack.c.bf16 %v5215, %v5214
  %v5248 = vld [vmem:[%s2] sm:$0xf]
  %v5249 = vld [vmem:[%s2 + $0x4] sm:$0xf]
  %v5250 = vld [vmem:[%s2 + $0x8] sm:$0xf]
  %v5251 = vld [vmem:[%s2 + $0xc] sm:$0xf]
  %v5252 = vld [vmem:[%s2 + $0x10] sm:$0xf]
  %v5253 = vld [vmem:[%s2 + $0x14] sm:$0xf]
  %v5254 = vld [vmem:[%s2 + $0x18] sm:$0xf]
  %v5255 = vld [vmem:[%s2 + $0x1c] sm:$0xf]
  %v5256 = vld [vmem:[%s2 + $0x20] sm:$0xf]
  %v5257 = vld [vmem:[%s2 + $0x24] sm:$0xf]
  %v5258 = vld [vmem:[%s2 + $0x28] sm:$0xf]
  %v5259 = vld [vmem:[%s2 + $0x2c] sm:$0xf]
  %v5260 = vld [vmem:[%s2 + $0x30] sm:$0xf]
  %v5261 = vld [vmem:[%s2 + $0x34] sm:$0xf]
  %v5262 = vld [vmem:[%s2 + $0x38] sm:$0xf]
  %v5263 = vld [vmem:[%s2 + $0x3c] sm:$0xf]
  %v5264 = vld [vmem:[#allocation2 + $0x8] sm:$0xff]
  %v5265 = vld [vmem:[#allocation2 + $0x10] sm:$0xff]
  %v5266 = vld [vmem:[#allocation2 + $0x28] sm:$0xff]
  %v5267 = vld [vmem:[#allocation2 + $0x30] sm:$0xff]
  %v5268 = vld [vmem:[#allocation2 + $0x48] sm:$0xff]
  %v5269 = vld [vmem:[#allocation2 + $0x50] sm:$0xff]
  %v5270 = vld [vmem:[#allocation2 + $0x68] sm:$0xff]
  %v5271 = vld [vmem:[#allocation2 + $0x70] sm:$0xff]
  %v5272 = vld [vmem:[#allocation2 + $0x88] sm:$0xff]
  %v5273 = vld [vmem:[#allocation2 + $0x90] sm:$0xff]
  %v5274 = vld [vmem:[#allocation2 + $0xa8] sm:$0xff]
  %v5275 = vld [vmem:[#allocation2 + $0xb0] sm:$0xff]
  %v5276 = vld [vmem:[#allocation2 + $0xc8] sm:$0xff]
  %v5277 = vld [vmem:[#allocation2 + $0xd0] sm:$0xff]
  %v5278 = vld [vmem:[#allocation2 + $0xe8] sm:$0xff]
  %v5279 = vld [vmem:[#allocation2 + $0xf0] sm:$0xff]
  %v5280 = vld [vmem:[#allocation2 + $0x108] sm:$0xff]
  %v5281 = vld [vmem:[#allocation2 + $0x110] sm:$0xff]
  %v5282 = vld [vmem:[#allocation2 + $0x128] sm:$0xff]
  %v5283 = vld [vmem:[#allocation2 + $0x130] sm:$0xff]
  %v5284 = vld [vmem:[#allocation2 + $0x148] sm:$0xff]
  %v5285 = vld [vmem:[#allocation2 + $0x150] sm:$0xff]
  %v5286 = vld [vmem:[#allocation2 + $0x168] sm:$0xff]
  %v5287 = vld [vmem:[#allocation2 + $0x170] sm:$0xff]
  %v5288 = vld [vmem:[#allocation2 + $0x188] sm:$0xff]
  %v5289 = vld [vmem:[#allocation2 + $0x190] sm:$0xff]
  %v5290 = vld [vmem:[#allocation2 + $0x1a8] sm:$0xff]
  %v5291 = vld [vmem:[#allocation2 + $0x1b0] sm:$0xff]
  %v5292 = vld [vmem:[#allocation2 + $0x1c8] sm:$0xff]
  %v5293 = vld [vmem:[#allocation2 + $0x1d0] sm:$0xff]
  %v5294 = vld [vmem:[#allocation2 + $0x1e8] sm:$0xff]
  %v5295 = vld [vmem:[#allocation2 + $0x1f0] sm:$0xff]
  %v5296 = vld [vmem:[#allocation2 + $0x248] sm:$0xff]
  %v5297 = vld [vmem:[#allocation2 + $0x250] sm:$0xff]
  %v5298 = vld [vmem:[#allocation2 + $0x268] sm:$0xff]
  %v5299 = vld [vmem:[#allocation2 + $0x270] sm:$0xff]
  %v5300 = vld [vmem:[#allocation2 + $0x288] sm:$0xff]
  %v5301 = vld [vmem:[#allocation2 + $0x290] sm:$0xff]
  %v5302 = vld [vmem:[#allocation2 + $0x2a8] sm:$0xff]
  %v5303 = vld [vmem:[#allocation2 + $0x2b0] sm:$0xff]
  %v5304 = vld [vmem:[#allocation2 + $0x2c8] sm:$0xff]
  %v5305 = vld [vmem:[#allocation2 + $0x2d0] sm:$0xff]
  %v5306 = vld [vmem:[#allocation2 + $0x2e8] sm:$0xff]
  %v5307 = vld [vmem:[#allocation2 + $0x2f0] sm:$0xff]
  %v5308 = vld [vmem:[#allocation2 + $0x308] sm:$0xff]
  %v5309 = vld [vmem:[#allocation2 + $0x310] sm:$0xff]
  %v5310 = vld [vmem:[#allocation2 + $0x328] sm:$0xff]
  %v5311 = vld [vmem:[#allocation2 + $0x330] sm:$0xff]
  %v5312 = vld [vmem:[#allocation2 + $0x348] sm:$0xff]
  %v5313 = vld [vmem:[#allocation2 + $0x350] sm:$0xff]
  %v5314 = vld [vmem:[#allocation2 + $0x368] sm:$0xff]
  %v5315 = vld [vmem:[#allocation2 + $0x370] sm:$0xff]
  %v5316 = vld [vmem:[#allocation2 + $0x388] sm:$0xff]
  %v5317 = vld [vmem:[#allocation2 + $0x390] sm:$0xff]
  %v5318 = vld [vmem:[#allocation2 + $0x3a8] sm:$0xff]
  %v5319 = vld [vmem:[#allocation2 + $0x3b0] sm:$0xff]
  %v5320 = vld [vmem:[#allocation2 + $0x3c8] sm:$0xff]
  %v5321 = vld [vmem:[#allocation2 + $0x3d0] sm:$0xff]
  %v5322 = vld [vmem:[#allocation2 + $0x3e8] sm:$0xff]
  %v5323 = vld [vmem:[#allocation2 + $0x3f0] sm:$0xff]
  %v5324 = vld [vmem:[#allocation2 + $0x408] sm:$0xff]
  %v5325 = vld [vmem:[#allocation2 + $0x410] sm:$0xff]
  %v5326 = vld [vmem:[#allocation2 + $0x428] sm:$0xff]
  %v5327 = vld [vmem:[#allocation2 + $0x430] sm:$0xff]
  %v5328 = vpack.c.bf16 %v5265, %v5264
  %v5329 = vpack.c.bf16 %v5267, %v5266
  %v5330 = vpack.c.bf16 %v5269, %v5268
  %v5331 = vpack.c.bf16 %v5271, %v5270
  %v5332 = vpack.c.bf16 %v5273, %v5272
  %v5333 = vpack.c.bf16 %v5275, %v5274
  %v5334 = vpack.c.bf16 %v5277, %v5276
  %v5335 = vpack.c.bf16 %v5279, %v5278
  %v5336 = vpack.c.bf16 %v5281, %v5280
  %v5337 = vpack.c.bf16 %v5283, %v5282
  %v5338 = vpack.c.bf16 %v5285, %v5284
  %v5339 = vpack.c.bf16 %v5287, %v5286
  %v5340 = vpack.c.bf16 %v5289, %v5288
  %v5341 = vpack.c.bf16 %v5291, %v5290
  %v5342 = vpack.c.bf16 %v5293, %v5292
  %v5343 = vpack.c.bf16 %v5295, %v5294
  %v5344 = vpack.c.bf16 %v5297, %v5296
  %v5345 = vpack.c.bf16 %v5299, %v5298
  %v5346 = vpack.c.bf16 %v5301, %v5300
  %v5347 = vpack.c.bf16 %v5303, %v5302
  %v5348 = vpack.c.bf16 %v5305, %v5304
  %v5349 = vpack.c.bf16 %v5307, %v5306
  %v5350 = vpack.c.bf16 %v5309, %v5308
  %v5351 = vpack.c.bf16 %v5311, %v5310
  %v5352 = vpack.c.bf16 %v5313, %v5312
  %v5353 = vpack.c.bf16 %v5315, %v5314
  %v5354 = vpack.c.bf16 %v5317, %v5316
  %v5355 = vpack.c.bf16 %v5319, %v5318
  %v5356 = vpack.c.bf16 %v5321, %v5320
  %v5357 = vpack.c.bf16 %v5323, %v5322
  %v5358 = vpack.c.bf16 %v5325, %v5324
  %v5359 = vpack.c.bf16 %v5327, %v5326
  %s5360 = scalar_lea.vmem %s2, 64
  %v5361 = vld [vmem:[%s5360] sm:$0xf]
  %v5362 = vld [vmem:[%s5360 + $0x4] sm:$0xf]
  %v5363 = vld [vmem:[%s5360 + $0x8] sm:$0xf]
  %v5364 = vld [vmem:[%s5360 + $0xc] sm:$0xf]
  %v5365 = vld [vmem:[%s5360 + $0x10] sm:$0xf]
  %v5366 = vld [vmem:[%s5360 + $0x14] sm:$0xf]
  %v5367 = vld [vmem:[%s5360 + $0x18] sm:$0xf]
  %v5368 = vld [vmem:[%s5360 + $0x1c] sm:$0xf]
  %v5369 = vld [vmem:[%s5360 + $0x20] sm:$0xf]
  %v5370 = vld [vmem:[%s5360 + $0x24] sm:$0xf]
  %v5371 = vld [vmem:[%s5360 + $0x28] sm:$0xf]
  %v5372 = vld [vmem:[%s5360 + $0x2c] sm:$0xf]
  %v5373 = vld [vmem:[%s5360 + $0x30] sm:$0xf]
  %v5374 = vld [vmem:[%s5360 + $0x34] sm:$0xf]
  %v5375 = vld [vmem:[%s5360 + $0x38] sm:$0xf]
  %v5376 = vld [vmem:[%s5360 + $0x3c] sm:$0xf]
  %v5393 = vunpack.c.l.b16 %v5361
  %v5394 = vunpack.c.l.b16 %v5362
  %v5395 = vunpack.c.l.b16 %v5363
  %v5396 = vunpack.c.l.b16 %v5364
  %v5397 = vunpack.c.l.b16 %v5365
  %v5398 = vunpack.c.l.b16 %v5366
  %v5399 = vunpack.c.l.b16 %v5367
  %v5400 = vunpack.c.l.b16 %v5368
  %v5401 = vunpack.c.l.b16 %v5369
  %v5402 = vunpack.c.l.b16 %v5370
  %v5403 = vunpack.c.l.b16 %v5371
  %v5404 = vunpack.c.l.b16 %v5372
  %v5405 = vunpack.c.l.b16 %v5373
  %v5406 = vunpack.c.l.b16 %v5374
  %v5407 = vunpack.c.l.b16 %v5375
  %v5408 = vunpack.c.l.b16 %v5376
  %v5409 = vpack.c.b16 %v5394, %v5393
  %v5410 = vpack.c.b16 %v5396, %v5395
  %v5411 = vpack.c.b16 %v5398, %v5397
  %v5412 = vpack.c.b16 %v5400, %v5399
  %v5413 = vpack.c.b16 %v5402, %v5401
  %v5414 = vpack.c.b16 %v5404, %v5403
  %v5415 = vpack.c.b16 %v5406, %v5405
  %v5416 = vpack.c.b16 %v5408, %v5407
  %5425 = vmatprep.subr.bf16.mxu0 0
  %5426 = vmatpush1.bf16.msra.mxu0 %v5409
  %5427 = vmatprep.subr.bf16.mxu0 0
  %5428 = vmatpush1.bf16.msra.mxu0 %v5410
  %5429 = vmatprep.subr.bf16.mxu0 0
  %5430 = vmatpush1.bf16.msra.mxu0 %v5411
  %5431 = vmatprep.subr.bf16.mxu0 0
  %5432 = vmatpush1.bf16.msra.mxu0 %v5412
  %5433 = vmatprep.subr.bf16.mxu0 0
  %5434 = vmatpush1.bf16.msra.mxu0 %v5413
  %5435 = vmatprep.subr.bf16.mxu0 0
  %5436 = vmatpush1.bf16.msra.mxu0 %v5414
  %5437 = vmatprep.subr.bf16.mxu0 0
  %5438 = vmatpush1.bf16.msra.mxu0 %v5415
  %5439 = vmatprep.subr.bf16.mxu0 0
  %5440 = vmatpush1.bf16.msra.mxu0 %v5416
  %5441 = vmatprep.subr.bf16.mxu0 0
  %5442 = vmatpush1.bf16.msra.mxu0 0
  %5443 = vmatprep.subr.bf16.mxu0 0
  %5444 = vmatpush1.bf16.msra.mxu0 0
  %5445 = vmatprep.subr.bf16.mxu0 0
  %5446 = vmatpush1.bf16.msra.mxu0 0
  %5447 = vmatprep.subr.bf16.mxu0 0
  %5448 = vmatpush1.bf16.msra.mxu0 0
  %5449 = vmatprep.subr.bf16.mxu0 0
  %5450 = vmatpush1.bf16.msra.mxu0 0
  %5451 = vmatprep.subr.bf16.mxu0 0
  %5452 = vmatpush1.bf16.msra.mxu0 0
  %5453 = vmatprep.subr.bf16.mxu0 0
  %5454 = vmatpush1.bf16.msra.mxu0 0
  %5455 = vmatprep.subr.bf16.mxu0 0
  %5456 = vmatpush1.bf16.msra.mxu0 0
  %5457 = vmatprep.mubr.bf16.mxu0 0
  %5458 = vmatmul.mubr.bf16.gmra.mrb[0].mxu0 %v5328
  %v5459 = vpop.f32.mrb[0].mxu0
  %v5460 = vadd.f32 0.0, %v5459
  %v5461 = vpop.f32.mrb[0].mxu0
  %v5462 = vpop.f32.mrb[0].mxu0
  %v5463 = vadd.f32 0.0, %v5462
  %v5464 = vpop.f32.mrb[0].mxu0
  %5465 = vmatprep.mubr.bf16.mxu0 0
  %5466 = vmatmul.mubr.bf16.gmra.mrb[0].mxu0 %v5329
  %v5467 = vpop.f32.mrb[0].mxu0
  %v5468 = vadd.f32 0.0, %v5467
  %v5469 = vpop.f32.mrb[0].mxu0
  %v5470 = vpop.f32.mrb[0].mxu0
  %v5471 = vadd.f32 0.0, %v5470
  %v5472 = vpop.f32.mrb[0].mxu0
  %5473 = vmatprep.mubr.bf16.mxu0 0
  %5474 = vmatmul.mubr.bf16.gmra.mrb[0].mxu0 %v5330
  %v5475 = vpop.f32.mrb[0].mxu0
  %v5476 = vadd.f32 0.0, %v5475
  %v5477 = vpop.f32.mrb[0].mxu0
  %v5478 = vpop.f32.mrb[0].mxu0
  %v5479 = vadd.f32 0.0, %v5478
  %v5480 = vpop.f32.mrb[0].mxu0
  %5481 = vmatprep.mubr.bf16.mxu0 0
  %5482 = vmatmul.mubr.bf16.gmra.mrb[0].mxu0 %v5331
  %v5483 = vpop.f32.mrb[0].mxu0
  %v5484 = vadd.f32 0.0, %v5483
  %v5485 = vpop.f32.mrb[0].mxu0
  %v5486 = vpop.f32.mrb[0].mxu0
  %v5487 = vadd.f32 0.0, %v5486
  %v5488 = vpop.f32.mrb[0].mxu0
  %5489 = vmatprep.mubr.bf16.mxu0 0
  %5490 = vmatmul.mubr.bf16.gmra.mrb[0].mxu0 %v5332
  %v5491 = vpop.f32.mrb[0].mxu0
  %v5492 = vadd.f32 0.0, %v5491
  %v5493 = vpop.f32.mrb[0].mxu0
  %v5494 = vpop.f32.mrb[0].mxu0
  %v5495 = vadd.f32 0.0, %v5494
  %v5496 = vpop.f32.mrb[0].mxu0
  %5497 = vmatprep.mubr.bf16.mxu0 0
  %5498 = vmatmul.mubr.bf16.gmra.mrb[0].mxu0 %v5333
  %v5499 = vpop.f32.mrb[0].mxu0
  %v5500 = vadd.f32 0.0, %v5499
  %v5501 = vpop.f32.mrb[0].mxu0
  %v5502 = vpop.f32.mrb[0].mxu0
  %v5503 = vadd.f32 0.0, %v5502
  %v5504 = vpop.f32.mrb[0].mxu0
  %5505 = vmatprep.mubr.bf16.mxu0 0
  %5506 = vmatmul.mubr.bf16.gmra.mrb[0].mxu0 %v5334
  %v5507 = vpop.f32.mrb[0].mxu0
  %v5508 = vadd.f32 0.0, %v5507
  %v5509 = vpop.f32.mrb[0].mxu0
  %v5510 = vpop.f32.mrb[0].mxu0
  %v5511 = vadd.f32 0.0, %v5510
  %v5512 = vpop.f32.mrb[0].mxu0
  %5513 = vmatprep.mubr.bf16.mxu0 0
  %5514 = vmatmul.mubr.bf16.gmra.mrb[0].mxu0 %v5335
  %v5515 = vpop.f32.mrb[0].mxu0
  %v5516 = vadd.f32 0.0, %v5515
  %v5517 = vpop.f32.mrb[0].mxu0
  %v5518 = vpop.f32.mrb[0].mxu0
  %v5519 = vadd.f32 0.0, %v5518
  %v5520 = vpop.f32.mrb[0].mxu0
  %5521 = vmatprep.mubr.bf16.mxu0 0
  %5522 = vmatmul.mubr.bf16.gmra.mrb[0].mxu0 %v5336
  %v5523 = vpop.f32.mrb[0].mxu0
  %v5524 = vadd.f32 0.0, %v5523
  %v5525 = vpop.f32.mrb[0].mxu0
  %v5526 = vpop.f32.mrb[0].mxu0
  %v5527 = vadd.f32 0.0, %v5526
  %v5528 = vpop.f32.mrb[0].mxu0
  %5529 = vmatprep.mubr.bf16.mxu0 0
  %5530 = vmatmul.mubr.bf16.gmra.mrb[0].mxu0 %v5337
  %v5531 = vpop.f32.mrb[0].mxu0
  %v5532 = vadd.f32 0.0, %v5531
  %v5533 = vpop.f32.mrb[0].mxu0
  %v5534 = vpop.f32.mrb[0].mxu0
  %v5535 = vadd.f32 0.0, %v5534
  %v5536 = vpop.f32.mrb[0].mxu0
  %5537 = vmatprep.mubr.bf16.mxu0 0
  %5538 = vmatmul.mubr.bf16.gmra.mrb[0].mxu0 %v5338
  %v5539 = vpop.f32.mrb[0].mxu0
  %v5540 = vadd.f32 0.0, %v5539
  %v5541 = vpop.f32.mrb[0].mxu0
  %v5542 = vpop.f32.mrb[0].mxu0
  %v5543 = vadd.f32 0.0, %v5542
  %v5544 = vpop.f32.mrb[0].mxu0
  %5545 = vmatprep.mubr.bf16.mxu0 0
  %5546 = vmatmul.mubr.bf16.gmra.mrb[0].mxu0 %v5339
  %v5547 = vpop.f32.mrb[0].mxu0
  %v5548 = vadd.f32 0.0, %v5547
  %v5549 = vpop.f32.mrb[0].mxu0
  %v5550 = vpop.f32.mrb[0].mxu0
  %v5551 = vadd.f32 0.0, %v5550
  %v5552 = vpop.f32.mrb[0].mxu0
  %5553 = vmatprep.mubr.bf16.mxu0 0
  %5554 = vmatmul.mubr.bf16.gmra.mrb[0].mxu0 %v5340
  %v5555 = vpop.f32.mrb[0].mxu0
  %v5556 = vadd.f32 0.0, %v5555
  %v5557 = vpop.f32.mrb[0].mxu0
  %v5558 = vpop.f32.mrb[0].mxu0
  %v5559 = vadd.f32 0.0, %v5558
  %v5560 = vpop.f32.mrb[0].mxu0
  %5561 = vmatprep.mubr.bf16.mxu0 0
  %5562 = vmatmul.mubr.bf16.gmra.mrb[0].mxu0 %v5341
  %v5563 = vpop.f32.mrb[0].mxu0
  %v5564 = vadd.f32 0.0, %v5563
  %v5565 = vpop.f32.mrb[0].mxu0
  %v5566 = vpop.f32.mrb[0].mxu0
  %v5567 = vadd.f32 0.0, %v5566
  %v5568 = vpop.f32.mrb[0].mxu0
  %5569 = vmatprep.mubr.bf16.mxu0 0
  %5570 = vmatmul.mubr.bf16.gmra.mrb[0].mxu0 %v5342
  %v5571 = vpop.f32.mrb[0].mxu0
  %v5572 = vadd.f32 0.0, %v5571
  %v5573 = vpop.f32.mrb[0].mxu0
  %v5574 = vpop.f32.mrb[0].mxu0
  %v5575 = vadd.f32 0.0, %v5574
  %v5576 = vpop.f32.mrb[0].mxu0
  %5577 = vmatprep.mubr.bf16.mxu0 0
  %5578 = vmatmul.mubr.bf16.gmra.mrb[0].mxu0 %v5343
  %v5579 = vpop.f32.mrb[0].mxu0
  %v5580 = vadd.f32 0.0, %v5579
  %v5581 = vpop.f32.mrb[0].mxu0
  %v5582 = vpop.f32.mrb[0].mxu0
  %v5583 = vadd.f32 0.0, %v5582
  %v5584 = vpop.f32.mrb[0].mxu0
  %5585 = vmatprep.mubr.bf16.mxu0 0
  %5586 = vmatmul.mubr.bf16.gmra.mrb[0].mxu0 %v5344
  %v5587 = vpop.f32.mrb[0].mxu0
  %v5588 = vadd.f32 0.0, %v5587
  %v5589 = vpop.f32.mrb[0].mxu0
  %v5590 = vpop.f32.mrb[0].mxu0
  %v5591 = vadd.f32 0.0, %v5590
  %v5592 = vpop.f32.mrb[0].mxu0
  %5593 = vmatprep.mubr.bf16.mxu0 0
  %5594 = vmatmul.mubr.bf16.gmra.mrb[0].mxu0 %v5345
  %v5595 = vpop.f32.mrb[0].mxu0
  %v5596 = vadd.f32 0.0, %v5595
  %v5597 = vpop.f32.mrb[0].mxu0
  %v5598 = vpop.f32.mrb[0].mxu0
  %v5599 = vadd.f32 0.0, %v5598
  %v5600 = vpop.f32.mrb[0].mxu0
  %5601 = vmatprep.mubr.bf16.mxu0 0
  %5602 = vmatmul.mubr.bf16.gmra.mrb[0].mxu0 %v5346
  %v5603 = vpop.f32.mrb[0].mxu0
  %v5604 = vadd.f32 0.0, %v5603
  %v5605 = vpop.f32.mrb[0].mxu0
  %v5606 = vpop.f32.mrb[0].mxu0
  %v5607 = vadd.f32 0.0, %v5606
  %v5608 = vpop.f32.mrb[0].mxu0
  %5609 = vmatprep.mubr.bf16.mxu0 0
  %5610 = vmatmul.mubr.bf16.gmra.mrb[0].mxu0 %v5347
  %v5611 = vpop.f32.mrb[0].mxu0
  %v5612 = vadd.f32 0.0, %v5611
  %v5613 = vpop.f32.mrb[0].mxu0
  %v5614 = vpop.f32.mrb[0].mxu0
  %v5615 = vadd.f32 0.0, %v5614
  %v5616 = vpop.f32.mrb[0].mxu0
  %5617 = vmatprep.mubr.bf16.mxu0 0
  %5618 = vmatmul.mubr.bf16.gmra.mrb[0].mxu0 %v5348
  %v5619 = vpop.f32.mrb[0].mxu0
  %v5620 = vadd.f32 0.0, %v5619
  %v5621 = vpop.f32.mrb[0].mxu0
  %v5622 = vpop.f32.mrb[0].mxu0
  %v5623 = vadd.f32 0.0, %v5622
  %v5624 = vpop.f32.mrb[0].mxu0
  %5625 = vmatprep.mubr.bf16.mxu0 0
  %5626 = vmatmul.mubr.bf16.gmra.mrb[0].mxu0 %v5349
  %v5627 = vpop.f32.mrb[0].mxu0
  %v5628 = vadd.f32 0.0, %v5627
  %v5629 = vpop.f32.mrb[0].mxu0
  %v5630 = vpop.f32.mrb[0].mxu0
  %v5631 = vadd.f32 0.0, %v5630
  %v5632 = vpop.f32.mrb[0].mxu0
  %5633 = vmatprep.mubr.bf16.mxu0 0
  %5634 = vmatmul.mubr.bf16.gmra.mrb[0].mxu0 %v5350
  %v5635 = vpop.f32.mrb[0].mxu0
  %v5636 = vadd.f32 0.0, %v5635
  %v5637 = vpop.f32.mrb[0].mxu0
  %v5638 = vpop.f32.mrb[0].mxu0
  %v5639 = vadd.f32 0.0, %v5638
  %v5640 = vpop.f32.mrb[0].mxu0
  %5641 = vmatprep.mubr.bf16.mxu0 0
  %5642 = vmatmul.mubr.bf16.gmra.mrb[0].mxu0 %v5351
  %v5643 = vpop.f32.mrb[0].mxu0
  %v5644 = vadd.f32 0.0, %v5643
  %v5645 = vpop.f32.mrb[0].mxu0
  %v5646 = vpop.f32.mrb[0].mxu0
  %v5647 = vadd.f32 0.0, %v5646
  %v5648 = vpop.f32.mrb[0].mxu0
  %5649 = vmatprep.mubr.bf16.mxu0 0
  %5650 = vmatmul.mubr.bf16.gmra.mrb[0].mxu0 %v5352
  %v5651 = vpop.f32.mrb[0].mxu0
  %v5652 = vadd.f32 0.0, %v5651
  %v5653 = vpop.f32.mrb[0].mxu0
  %v5654 = vpop.f32.mrb[0].mxu0
  %v5655 = vadd.f32 0.0, %v5654
  %v5656 = vpop.f32.mrb[0].mxu0
  %5657 = vmatprep.mubr.bf16.mxu0 0
  %5658 = vmatmul.mubr.bf16.gmra.mrb[0].mxu0 %v5353
  %v5659 = vpop.f32.mrb[0].mxu0
  %v5660 = vadd.f32 0.0, %v5659
  %v5661 = vpop.f32.mrb[0].mxu0
  %v5662 = vpop.f32.mrb[0].mxu0
  %v5663 = vadd.f32 0.0, %v5662
  %v5664 = vpop.f32.mrb[0].mxu0
  %5665 = vmatprep.mubr.bf16.mxu0 0
  %5666 = vmatmul.mubr.bf16.gmra.mrb[0].mxu0 %v5354
  %v5667 = vpop.f32.mrb[0].mxu0
  %v5668 = vadd.f32 0.0, %v5667
  %v5669 = vpop.f32.mrb[0].mxu0
  %v5670 = vpop.f32.mrb[0].mxu0
  %v5671 = vadd.f32 0.0, %v5670
  %v5672 = vpop.f32.mrb[0].mxu0
  %5673 = vmatprep.mubr.bf16.mxu0 0
  %5674 = vmatmul.mubr.bf16.gmra.mrb[0].mxu0 %v5355
  %v5675 = vpop.f32.mrb[0].mxu0
  %v5676 = vadd.f32 0.0, %v5675
  %v5677 = vpop.f32.mrb[0].mxu0
  %v5678 = vpop.f32.mrb[0].mxu0
  %v5679 = vadd.f32 0.0, %v5678
  %v5680 = vpop.f32.mrb[0].mxu0
  %5681 = vmatprep.mubr.bf16.mxu0 0
  %5682 = vmatmul.mubr.bf16.gmra.mrb[0].mxu0 %v5356
  %v5683 = vpop.f32.mrb[0].mxu0
  %v5684 = vadd.f32 0.0, %v5683
  %v5685 = vpop.f32.mrb[0].mxu0
  %v5686 = vpop.f32.mrb[0].mxu0
  %v5687 = vadd.f32 0.0, %v5686
  %v5688 = vpop.f32.mrb[0].mxu0
  %5689 = vmatprep.mubr.bf16.mxu0 0
  %5690 = vmatmul.mubr.bf16.gmra.mrb[0].mxu0 %v5357
  %v5691 = vpop.f32.mrb[0].mxu0
  %v5692 = vadd.f32 0.0, %v5691
  %v5693 = vpop.f32.mrb[0].mxu0
  %v5694 = vpop.f32.mrb[0].mxu0
  %v5695 = vadd.f32 0.0, %v5694
  %v5696 = vpop.f32.mrb[0].mxu0
  %5697 = vmatprep.mubr.bf16.mxu0 0
  %5698 = vmatmul.mubr.bf16.gmra.mrb[0].mxu0 %v5358
  %v5699 = vpop.f32.mrb[0].mxu0
  %v5700 = vadd.f32 0.0, %v5699
  %v5701 = vpop.f32.mrb[0].mxu0
  %v5702 = vpop.f32.mrb[0].mxu0
  %v5703 = vadd.f32 0.0, %v5702
  %v5704 = vpop.f32.mrb[0].mxu0
  %5705 = vmatprep.mubr.bf16.mxu0 0
  %5706 = vmatmul.mubr.bf16.gmra.mrb[0].mxu0 %v5359
  %v5707 = vpop.f32.mrb[0].mxu0
  %v5708 = vadd.f32 0.0, %v5707
  %v5709 = vpop.f32.mrb[0].mxu0
  %v5710 = vpop.f32.mrb[0].mxu0
  %v5711 = vadd.f32 0.0, %v5710
  %v5712 = vpop.f32.mrb[0].mxu0
  %5713 = vdwg.mxu0
  %v5730 = vunpack.c.l.b16 %v5248
  %v5731 = vunpack.c.l.b16 %v5249
  %v5732 = vunpack.c.l.b16 %v5250
  %v5733 = vunpack.c.l.b16 %v5251
  %v5734 = vunpack.c.l.b16 %v5252
  %v5735 = vunpack.c.l.b16 %v5253
  %v5736 = vunpack.c.l.b16 %v5254
  %v5737 = vunpack.c.l.b16 %v5255
  %v5738 = vunpack.c.l.b16 %v5256
  %v5739 = vunpack.c.l.b16 %v5257
  %v5740 = vunpack.c.l.b16 %v5258
  %v5741 = vunpack.c.l.b16 %v5259
  %v5742 = vunpack.c.l.b16 %v5260
  %v5743 = vunpack.c.l.b16 %v5261
  %v5744 = vunpack.c.l.b16 %v5262
  %v5745 = vunpack.c.l.b16 %v5263
  %v5746 = vpack.c.b16 %v5731, %v5730
  %v5747 = vpack.c.b16 %v5733, %v5732
  %v5748 = vpack.c.b16 %v5735, %v5734
  %v5749 = vpack.c.b16 %v5737, %v5736
  %v5750 = vpack.c.b16 %v5739, %v5738
  %v5751 = vpack.c.b16 %v5741, %v5740
  %v5752 = vpack.c.b16 %v5743, %v5742
  %v5753 = vpack.c.b16 %v5745, %v5744
  %5762 = vmatprep.subr.bf16.mxu0 0
  %5763 = vmatpush1.bf16.msra.mxu0 %v5746
  %5764 = vmatprep.subr.bf16.mxu0 0
  %5765 = vmatpush1.bf16.msra.mxu0 %v5747
  %5766 = vmatprep.subr.bf16.mxu0 0
  %5767 = vmatpush1.bf16.msra.mxu0 %v5748
  %5768 = vmatprep.subr.bf16.mxu0 0
  %5769 = vmatpush1.bf16.msra.mxu0 %v5749
  %5770 = vmatprep.subr.bf16.mxu0 0
  %5771 = vmatpush1.bf16.msra.mxu0 %v5750
  %5772 = vmatprep.subr.bf16.mxu0 0
  %5773 = vmatpush1.bf16.msra.mxu0 %v5751
  %5774 = vmatprep.subr.bf16.mxu0 0
  %5775 = vmatpush1.bf16.msra.mxu0 %v5752
  %5776 = vmatprep.subr.bf16.mxu0 0
  %5777 = vmatpush1.bf16.msra.mxu0 %v5753
  %5778 = vmatprep.subr.bf16.mxu0 0
  %5779 = vmatpush1.bf16.msra.mxu0 0
  %5780 = vmatprep.subr.bf16.mxu0 0
  %5781 = vmatpush1.bf16.msra.mxu0 0
  %5782 = vmatprep.subr.bf16.mxu0 0
  %5783 = vmatpush1.bf16.msra.mxu0 0
  %5784 = vmatprep.subr.bf16.mxu0 0
  %5785 = vmatpush1.bf16.msra.mxu0 0
  %5786 = vmatprep.subr.bf16.mxu0 0
  %5787 = vmatpush1.bf16.msra.mxu0 0
  %5788 = vmatprep.subr.bf16.mxu0 0
  %5789 = vmatpush1.bf16.msra.mxu0 0
  %5790 = vmatprep.subr.bf16.mxu0 0
  %5791 = vmatpush1.bf16.msra.mxu0 0
  %5792 = vmatprep.subr.bf16.mxu0 0
  %5793 = vmatpush1.bf16.msra.mxu0 0
  %5794 = vmatprep.mubr.bf16.mxu0 0
  %5795 = vmatmul.mubr.bf16.gmra.mrb[0].mxu0 %v5216
  %v5796 = vpop.f32.mrb[0].mxu0
  %v5797 = vadd.f32 %v5460, %v5796
  %v5798 = vpop.f32.mrb[0].mxu0
  %v5799 = vpop.f32.mrb[0].mxu0
  %v5800 = vadd.f32 %v5463, %v5799
  %v5801 = vpop.f32.mrb[0].mxu0
  %5802 = vmatprep.mubr.bf16.mxu0 0
  %5803 = vmatmul.mubr.bf16.gmra.mrb[0].mxu0 %v5217
  %v5804 = vpop.f32.mrb[0].mxu0
  %v5805 = vadd.f32 %v5468, %v5804
  %v5806 = vpop.f32.mrb[0].mxu0
  %v5807 = vpop.f32.mrb[0].mxu0
  %v5808 = vadd.f32 %v5471, %v5807
  %v5809 = vpop.f32.mrb[0].mxu0
  %5810 = vmatprep.mubr.bf16.mxu0 0
  %5811 = vmatmul.mubr.bf16.gmra.mrb[0].mxu0 %v5218
  %v5812 = vpop.f32.mrb[0].mxu0
  %v5813 = vadd.f32 %v5476, %v5812
  %v5814 = vpop.f32.mrb[0].mxu0
  %v5815 = vpop.f32.mrb[0].mxu0
  %v5816 = vadd.f32 %v5479, %v5815
  %v5817 = vpop.f32.mrb[0].mxu0
  %5818 = vmatprep.mubr.bf16.mxu0 0
  %5819 = vmatmul.mubr.bf16.gmra.mrb[0].mxu0 %v5219
  %v5820 = vpop.f32.mrb[0].mxu0
  %v5821 = vadd.f32 %v5484, %v5820
  %v5822 = vpop.f32.mrb[0].mxu0
  %v5823 = vpop.f32.mrb[0].mxu0
  %v5824 = vadd.f32 %v5487, %v5823
  %v5825 = vpop.f32.mrb[0].mxu0
  %5826 = vmatprep.mubr.bf16.mxu0 0
  %5827 = vmatmul.mubr.bf16.gmra.mrb[0].mxu0 %v5220
  %v5828 = vpop.f32.mrb[0].mxu0
  %v5829 = vadd.f32 %v5492, %v5828
  %v5830 = vpop.f32.mrb[0].mxu0
  %v5831 = vpop.f32.mrb[0].mxu0
  %v5832 = vadd.f32 %v5495, %v5831
  %v5833 = vpop.f32.mrb[0].mxu0
  %5834 = vmatprep.mubr.bf16.mxu0 0
  %5835 = vmatmul.mubr.bf16.gmra.mrb[0].mxu0 %v5221
  %v5836 = vpop.f32.mrb[0].mxu0
  %v5837 = vadd.f32 %v5500, %v5836
  %v5838 = vpop.f32.mrb[0].mxu0
  %v5839 = vpop.f32.mrb[0].mxu0
  %v5840 = vadd.f32 %v5503, %v5839
  %v5841 = vpop.f32.mrb[0].mxu0
  %5842 = vmatprep.mubr.bf16.mxu0 0
  %5843 = vmatmul.mubr.bf16.gmra.mrb[0].mxu0 %v5222
  %v5844 = vpop.f32.mrb[0].mxu0
  %v5845 = vadd.f32 %v5508, %v5844
  %v5846 = vpop.f32.mrb[0].mxu0
  %v5847 = vpop.f32.mrb[0].mxu0
  %v5848 = vadd.f32 %v5511, %v5847
  %v5849 = vpop.f32.mrb[0].mxu0
  %5850 = vmatprep.mubr.bf16.mxu0 0
  %5851 = vmatmul.mubr.bf16.gmra.mrb[0].mxu0 %v5223
  %v5852 = vpop.f32.mrb[0].mxu0
  %v5853 = vadd.f32 %v5516, %v5852
  %v5854 = vpop.f32.mrb[0].mxu0
  %v5855 = vpop.f32.mrb[0].mxu0
  %v5856 = vadd.f32 %v5519, %v5855
  %v5857 = vpop.f32.mrb[0].mxu0
  %5858 = vmatprep.mubr.bf16.mxu0 0
  %5859 = vmatmul.mubr.bf16.gmra.mrb[0].mxu0 %v5224
  %v5860 = vpop.f32.mrb[0].mxu0
  %v5861 = vadd.f32 %v5524, %v5860
  %v5862 = vpop.f32.mrb[0].mxu0
  %v5863 = vpop.f32.mrb[0].mxu0
  %v5864 = vadd.f32 %v5527, %v5863
  %v5865 = vpop.f32.mrb[0].mxu0
  %5866 = vmatprep.mubr.bf16.mxu0 0
  %5867 = vmatmul.mubr.bf16.gmra.mrb[0].mxu0 %v5225
  %v5868 = vpop.f32.mrb[0].mxu0
  %v5869 = vadd.f32 %v5532, %v5868
  %v5870 = vpop.f32.mrb[0].mxu0
  %v5871 = vpop.f32.mrb[0].mxu0
  %v5872 = vadd.f32 %v5535, %v5871
  %v5873 = vpop.f32.mrb[0].mxu0
  %5874 = vmatprep.mubr.bf16.mxu0 0
  %5875 = vmatmul.mubr.bf16.gmra.mrb[0].mxu0 %v5226
  %v5876 = vpop.f32.mrb[0].mxu0
  %v5877 = vadd.f32 %v5540, %v5876
  %v5878 = vpop.f32.mrb[0].mxu0
  %v5879 = vpop.f32.mrb[0].mxu0
  %v5880 = vadd.f32 %v5543, %v5879
  %v5881 = vpop.f32.mrb[0].mxu0
  %5882 = vmatprep.mubr.bf16.mxu0 0
  %5883 = vmatmul.mubr.bf16.gmra.mrb[0].mxu0 %v5227
  %v5884 = vpop.f32.mrb[0].mxu0
  %v5885 = vadd.f32 %v5548, %v5884
  %v5886 = vpop.f32.mrb[0].mxu0
  %v5887 = vpop.f32.mrb[0].mxu0
  %v5888 = vadd.f32 %v5551, %v5887
  %v5889 = vpop.f32.mrb[0].mxu0
  %5890 = vmatprep.mubr.bf16.mxu0 0
  %5891 = vmatmul.mubr.bf16.gmra.mrb[0].mxu0 %v5228
  %v5892 = vpop.f32.mrb[0].mxu0
  %v5893 = vadd.f32 %v5556, %v5892
  %v5894 = vpop.f32.mrb[0].mxu0
  %v5895 = vpop.f32.mrb[0].mxu0
  %v5896 = vadd.f32 %v5559, %v5895
  %v5897 = vpop.f32.mrb[0].mxu0
  %5898 = vmatprep.mubr.bf16.mxu0 0
  %5899 = vmatmul.mubr.bf16.gmra.mrb[0].mxu0 %v5229
  %v5900 = vpop.f32.mrb[0].mxu0
  %v5901 = vadd.f32 %v5564, %v5900
  %v5902 = vpop.f32.mrb[0].mxu0
  %v5903 = vpop.f32.mrb[0].mxu0
  %v5904 = vadd.f32 %v5567, %v5903
  %v5905 = vpop.f32.mrb[0].mxu0
  %5906 = vmatprep.mubr.bf16.mxu0 0
  %5907 = vmatmul.mubr.bf16.gmra.mrb[0].mxu0 %v5230
  %v5908 = vpop.f32.mrb[0].mxu0
  %v5909 = vadd.f32 %v5572, %v5908
  %v5910 = vpop.f32.mrb[0].mxu0
  %v5911 = vpop.f32.mrb[0].mxu0
  %v5912 = vadd.f32 %v5575, %v5911
  %v5913 = vpop.f32.mrb[0].mxu0
  %5914 = vmatprep.mubr.bf16.mxu0 0
  %5915 = vmatmul.mubr.bf16.gmra.mrb[0].mxu0 %v5231
  %v5916 = vpop.f32.mrb[0].mxu0
  %v5917 = vadd.f32 %v5580, %v5916
  %v5918 = vpop.f32.mrb[0].mxu0
  %v5919 = vpop.f32.mrb[0].mxu0
  %v5920 = vadd.f32 %v5583, %v5919
  %v5921 = vpop.f32.mrb[0].mxu0
  %5922 = vmatprep.mubr.bf16.mxu0 0
  %5923 = vmatmul.mubr.bf16.gmra.mrb[0].mxu0 %v5232
  %v5924 = vpop.f32.mrb[0].mxu0
  %v5925 = vadd.f32 %v5588, %v5924
  %v5926 = vpop.f32.mrb[0].mxu0
  %v5927 = vpop.f32.mrb[0].mxu0
  %v5928 = vadd.f32 %v5591, %v5927
  %v5929 = vpop.f32.mrb[0].mxu0
  %5930 = vmatprep.mubr.bf16.mxu0 0
  %5931 = vmatmul.mubr.bf16.gmra.mrb[0].mxu0 %v5233
  %v5932 = vpop.f32.mrb[0].mxu0
  %v5933 = vadd.f32 %v5596, %v5932
  %v5934 = vpop.f32.mrb[0].mxu0
  %v5935 = vpop.f32.mrb[0].mxu0
  %v5936 = vadd.f32 %v5599, %v5935
  %v5937 = vpop.f32.mrb[0].mxu0
  %5938 = vmatprep.mubr.bf16.mxu0 0
  %5939 = vmatmul.mubr.bf16.gmra.mrb[0].mxu0 %v5234
  %v5940 = vpop.f32.mrb[0].mxu0
  %v5941 = vadd.f32 %v5604, %v5940
  %v5942 = vpop.f32.mrb[0].mxu0
  %v5943 = vpop.f32.mrb[0].mxu0
  %v5944 = vadd.f32 %v5607, %v5943
  %v5945 = vpop.f32.mrb[0].mxu0
  %5946 = vmatprep.mubr.bf16.mxu0 0
  %5947 = vmatmul.mubr.bf16.gmra.mrb[0].mxu0 %v5235
  %v5948 = vpop.f32.mrb[0].mxu0
  %v5949 = vadd.f32 %v5612, %v5948
  %v5950 = vpop.f32.mrb[0].mxu0
  %v5951 = vpop.f32.mrb[0].mxu0
  %v5952 = vadd.f32 %v5615, %v5951
  %v5953 = vpop.f32.mrb[0].mxu0
  %5954 = vmatprep.mubr.bf16.mxu0 0
  %5955 = vmatmul.mubr.bf16.gmra.mrb[0].mxu0 %v5236
  %v5956 = vpop.f32.mrb[0].mxu0
  %v5957 = vadd.f32 %v5620, %v5956
  %v5958 = vpop.f32.mrb[0].mxu0
  %v5959 = vpop.f32.mrb[0].mxu0
  %v5960 = vadd.f32 %v5623, %v5959
  %v5961 = vpop.f32.mrb[0].mxu0
  %5962 = vmatprep.mubr.bf16.mxu0 0
  %5963 = vmatmul.mubr.bf16.gmra.mrb[0].mxu0 %v5237
  %v5964 = vpop.f32.mrb[0].mxu0
  %v5965 = vadd.f32 %v5628, %v5964
  %v5966 = vpop.f32.mrb[0].mxu0
  %v5967 = vpop.f32.mrb[0].mxu0
  %v5968 = vadd.f32 %v5631, %v5967
  %v5969 = vpop.f32.mrb[0].mxu0
  %5970 = vmatprep.mubr.bf16.mxu0 0
  %5971 = vmatmul.mubr.bf16.gmra.mrb[0].mxu0 %v5238
  %v5972 = vpop.f32.mrb[0].mxu0
  %v5973 = vadd.f32 %v5636, %v5972
  %v5974 = vpop.f32.mrb[0].mxu0
  %v5975 = vpop.f32.mrb[0].mxu0
  %v5976 = vadd.f32 %v5639, %v5975
  %v5977 = vpop.f32.mrb[0].mxu0
  %5978 = vmatprep.mubr.bf16.mxu0 0
  %5979 = vmatmul.mubr.bf16.gmra.mrb[0].mxu0 %v5239
  %v5980 = vpop.f32.mrb[0].mxu0
  %v5981 = vadd.f32 %v5644, %v5980
  %v5982 = vpop.f32.mrb[0].mxu0
  %v5983 = vpop.f32.mrb[0].mxu0
  %v5984 = vadd.f32 %v5647, %v5983
  %v5985 = vpop.f32.mrb[0].mxu0
  %5986 = vmatprep.mubr.bf16.mxu0 0
  %5987 = vmatmul.mubr.bf16.gmra.mrb[0].mxu0 %v5240
  %v5988 = vpop.f32.mrb[0].mxu0
  %v5989 = vadd.f32 %v5652, %v5988
  %v5990 = vpop.f32.mrb[0].mxu0
  %v5991 = vpop.f32.mrb[0].mxu0
  %v5992 = vadd.f32 %v5655, %v5991
  %v5993 = vpop.f32.mrb[0].mxu0
  %5994 = vmatprep.mubr.bf16.mxu0 0
  %5995 = vmatmul.mubr.bf16.gmra.mrb[0].mxu0 %v5241
  %v5996 = vpop.f32.mrb[0].mxu0
  %v5997 = vadd.f32 %v5660, %v5996
  %v5998 = vpop.f32.mrb[0].mxu0
  %v5999 = vpop.f32.mrb[0].mxu0
  %v6000 = vadd.f32 %v5663, %v5999
  %v6001 = vpop.f32.mrb[0].mxu0
  %6002 = vmatprep.mubr.bf16.mxu0 0
  %6003 = vmatmul.mubr.bf16.gmra.mrb[0].mxu0 %v5242
  %v6004 = vpop.f32.mrb[0].mxu0
  %v6005 = vadd.f32 %v5668, %v6004
  %v6006 = vpop.f32.mrb[0].mxu0
  %v6007 = vpop.f32.mrb[0].mxu0
  %v6008 = vadd.f32 %v5671, %v6007
  %v6009 = vpop.f32.mrb[0].mxu0
  %6010 = vmatprep.mubr.bf16.mxu0 0
  %6011 = vmatmul.mubr.bf16.gmra.mrb[0].mxu0 %v5243
  %v6012 = vpop.f32.mrb[0].mxu0
  %v6013 = vadd.f32 %v5676, %v6012
  %v6014 = vpop.f32.mrb[0].mxu0
  %v6015 = vpop.f32.mrb[0].mxu0
  %v6016 = vadd.f32 %v5679, %v6015
  %v6017 = vpop.f32.mrb[0].mxu0
  %6018 = vmatprep.mubr.bf16.mxu0 0
  %6019 = vmatmul.mubr.bf16.gmra.mrb[0].mxu0 %v5244
  %v6020 = vpop.f32.mrb[0].mxu0
  %v6021 = vadd.f32 %v5684, %v6020
  %v6022 = vpop.f32.mrb[0].mxu0
  %v6023 = vpop.f32.mrb[0].mxu0
  %v6024 = vadd.f32 %v5687, %v6023
  %v6025 = vpop.f32.mrb[0].mxu0
  %6026 = vmatprep.mubr.bf16.mxu0 0
  %6027 = vmatmul.mubr.bf16.gmra.mrb[0].mxu0 %v5245
  %v6028 = vpop.f32.mrb[0].mxu0
  %v6029 = vadd.f32 %v5692, %v6028
  %v6030 = vpop.f32.mrb[0].mxu0
  %v6031 = vpop.f32.mrb[0].mxu0
  %v6032 = vadd.f32 %v5695, %v6031
  %v6033 = vpop.f32.mrb[0].mxu0
  %6034 = vmatprep.mubr.bf16.mxu0 0
  %6035 = vmatmul.mubr.bf16.gmra.mrb[0].mxu0 %v5246
  %v6036 = vpop.f32.mrb[0].mxu0
  %v6037 = vadd.f32 %v5700, %v6036
  %v6038 = vpop.f32.mrb[0].mxu0
  %v6039 = vpop.f32.mrb[0].mxu0
  %v6040 = vadd.f32 %v5703, %v6039
  %v6041 = vpop.f32.mrb[0].mxu0
  %6042 = vmatprep.mubr.bf16.mxu0 0
  %6043 = vmatmul.mubr.bf16.gmra.mrb[0].mxu0 %v5247
  %v6044 = vpop.f32.mrb[0].mxu0
  %v6045 = vadd.f32 %v5708, %v6044
  %v6046 = vpop.f32.mrb[0].mxu0
  %v6047 = vpop.f32.mrb[0].mxu0
  %v6048 = vadd.f32 %v5711, %v6047
  %v6049 = vpop.f32.mrb[0].mxu0
  %6050 = vdwg.mxu0
  %v6051 = vld [vmem:[#allocation2 + $0x9] sm:$0xff]
  %v6052 = vld [vmem:[#allocation2 + $0x11] sm:$0xff]
  %v6053 = vld [vmem:[#allocation2 + $0x29] sm:$0xff]
  %v6054 = vld [vmem:[#allocation2 + $0x31] sm:$0xff]
  %v6055 = vld [vmem:[#allocation2 + $0x49] sm:$0xff]
  %v6056 = vld [vmem:[#allocation2 + $0x51] sm:$0xff]
  %v6057 = vld [vmem:[#allocation2 + $0x69] sm:$0xff]
  %v6058 = vld [vmem:[#allocation2 + $0x71] sm:$0xff]
  %v6059 = vld [vmem:[#allocation2 + $0x89] sm:$0xff]
  %v6060 = vld [vmem:[#allocation2 + $0x91] sm:$0xff]
  %v6061 = vld [vmem:[#allocation2 + $0xa9] sm:$0xff]
  %v6062 = vld [vmem:[#allocation2 + $0xb1] sm:$0xff]
  %v6063 = vld [vmem:[#allocation2 + $0xc9] sm:$0xff]
  %v6064 = vld [vmem:[#allocation2 + $0xd1] sm:$0xff]
  %v6065 = vld [vmem:[#allocation2 + $0xe9] sm:$0xff]
  %v6066 = vld [vmem:[#allocation2 + $0xf1] sm:$0xff]
  %v6067 = vld [vmem:[#allocation2 + $0x109] sm:$0xff]
  %v6068 = vld [vmem:[#allocation2 + $0x111] sm:$0xff]
  %v6069 = vld [vmem:[#allocation2 + $0x129] sm:$0xff]
  %v6070 = vld [vmem:[#allocation2 + $0x131] sm:$0xff]
  %v6071 = vld [vmem:[#allocation2 + $0x149] sm:$0xff]
  %v6072 = vld [vmem:[#allocation2 + $0x151] sm:$0xff]
  %v6073 = vld [vmem:[#allocation2 + $0x169] sm:$0xff]
  %v6074 = vld [vmem:[#allocation2 + $0x171] sm:$0xff]
  %v6075 = vld [vmem:[#allocation2 + $0x189] sm:$0xff]
  %v6076 = vld [vmem:[#allocation2 + $0x191] sm:$0xff]
  %v6077 = vld [vmem:[#allocation2 + $0x1a9] sm:$0xff]
  %v6078 = vld [vmem:[#allocation2 + $0x1b1] sm:$0xff]
  %v6079 = vld [vmem:[#allocation2 + $0x1c9] sm:$0xff]
  %v6080 = vld [vmem:[#allocation2 + $0x1d1] sm:$0xff]
  %v6081 = vld [vmem:[#allocation2 + $0x1e9] sm:$0xff]
  %v6082 = vld [vmem:[#allocation2 + $0x1f1] sm:$0xff]
  %v6083 = vld [vmem:[#allocation2 + $0x249] sm:$0xff]
  %v6084 = vld [vmem:[#allocation2 + $0x251] sm:$0xff]
  %v6085 = vld [vmem:[#allocation2 + $0x269] sm:$0xff]
  %v6086 = vld [vmem:[#allocation2 + $0x271] sm:$0xff]
  %v6087 = vld [vmem:[#allocation2 + $0x289] sm:$0xff]
  %v6088 = vld [vmem:[#allocation2 + $0x291] sm:$0xff]
  %v6089 = vld [vmem:[#allocation2 + $0x2a9] sm:$0xff]
  %v6090 = vld [vmem:[#allocation2 + $0x2b1] sm:$0xff]
  %v6091 = vld [vmem:[#allocation2 + $0x2c9] sm:$0xff]
  %v6092 = vld [vmem:[#allocation2 + $0x2d1] sm:$0xff]
  %v6093 = vld [vmem:[#allocation2 + $0x2e9] sm:$0xff]
  %v6094 = vld [vmem:[#allocation2 + $0x2f1] sm:$0xff]
  %v6095 = vld [vmem:[#allocation2 + $0x309] sm:$0xff]
  %v6096 = vld [vmem:[#allocation2 + $0x311] sm:$0xff]
  %v6097 = vld [vmem:[#allocation2 + $0x329] sm:$0xff]
  %v6098 = vld [vmem:[#allocation2 + $0x331] sm:$0xff]
  %v6099 = vld [vmem:[#allocation2 + $0x349] sm:$0xff]
  %v6100 = vld [vmem:[#allocation2 + $0x351] sm:$0xff]
  %v6101 = vld [vmem:[#allocation2 + $0x369] sm:$0xff]
  %v6102 = vld [vmem:[#allocation2 + $0x371] sm:$0xff]
  %v6103 = vld [vmem:[#allocation2 + $0x389] sm:$0xff]
  %v6104 = vld [vmem:[#allocation2 + $0x391] sm:$0xff]
  %v6105 = vld [vmem:[#allocation2 + $0x3a9] sm:$0xff]
  %v6106 = vld [vmem:[#allocation2 + $0x3b1] sm:$0xff]
  %v6107 = vld [vmem:[#allocation2 + $0x3c9] sm:$0xff]
  %v6108 = vld [vmem:[#allocation2 + $0x3d1] sm:$0xff]
  %v6109 = vld [vmem:[#allocation2 + $0x3e9] sm:$0xff]
  %v6110 = vld [vmem:[#allocation2 + $0x3f1] sm:$0xff]
  %v6111 = vld [vmem:[#allocation2 + $0x409] sm:$0xff]
  %v6112 = vld [vmem:[#allocation2 + $0x411] sm:$0xff]
  %v6113 = vld [vmem:[#allocation2 + $0x429] sm:$0xff]
  %v6114 = vld [vmem:[#allocation2 + $0x431] sm:$0xff]
  %v6115 = vpack.c.bf16 %v6052, %v6051
  %v6116 = vpack.c.bf16 %v6054, %v6053
  %v6117 = vpack.c.bf16 %v6056, %v6055
  %v6118 = vpack.c.bf16 %v6058, %v6057
  %v6119 = vpack.c.bf16 %v6060, %v6059
  %v6120 = vpack.c.bf16 %v6062, %v6061
  %v6121 = vpack.c.bf16 %v6064, %v6063
  %v6122 = vpack.c.bf16 %v6066, %v6065
  %v6123 = vpack.c.bf16 %v6068, %v6067
  %v6124 = vpack.c.bf16 %v6070, %v6069
  %v6125 = vpack.c.bf16 %v6072, %v6071
  %v6126 = vpack.c.bf16 %v6074, %v6073
  %v6127 = vpack.c.bf16 %v6076, %v6075
  %v6128 = vpack.c.bf16 %v6078, %v6077
  %v6129 = vpack.c.bf16 %v6080, %v6079
  %v6130 = vpack.c.bf16 %v6082, %v6081
  %v6131 = vpack.c.bf16 %v6084, %v6083
  %v6132 = vpack.c.bf16 %v6086, %v6085
  %v6133 = vpack.c.bf16 %v6088, %v6087
  %v6134 = vpack.c.bf16 %v6090, %v6089
  %v6135 = vpack.c.bf16 %v6092, %v6091
  %v6136 = vpack.c.bf16 %v6094, %v6093
  %v6137 = vpack.c.bf16 %v6096, %v6095
  %v6138 = vpack.c.bf16 %v6098, %v6097
  %v6139 = vpack.c.bf16 %v6100, %v6099
  %v6140 = vpack.c.bf16 %v6102, %v6101
  %v6141 = vpack.c.bf16 %v6104, %v6103
  %v6142 = vpack.c.bf16 %v6106, %v6105
  %v6143 = vpack.c.bf16 %v6108, %v6107
  %v6144 = vpack.c.bf16 %v6110, %v6109
  %v6145 = vpack.c.bf16 %v6112, %v6111
  %v6146 = vpack.c.bf16 %v6114, %v6113
  %s6147 = scalar_lea.vmem %s2, 128
  %v6148 = vld [vmem:[%s6147] sm:$0xf]
  %v6149 = vld [vmem:[%s6147 + $0x4] sm:$0xf]
  %v6150 = vld [vmem:[%s6147 + $0x8] sm:$0xf]
  %v6151 = vld [vmem:[%s6147 + $0xc] sm:$0xf]
  %v6152 = vld [vmem:[%s6147 + $0x10] sm:$0xf]
  %v6153 = vld [vmem:[%s6147 + $0x14] sm:$0xf]
  %v6154 = vld [vmem:[%s6147 + $0x18] sm:$0xf]
  %v6155 = vld [vmem:[%s6147 + $0x1c] sm:$0xf]
  %v6156 = vld [vmem:[%s6147 + $0x20] sm:$0xf]
  %v6157 = vld [vmem:[%s6147 + $0x24] sm:$0xf]
  %v6158 = vld [vmem:[%s6147 + $0x28] sm:$0xf]
  %v6159 = vld [vmem:[%s6147 + $0x2c] sm:$0xf]
  %v6160 = vld [vmem:[%s6147 + $0x30] sm:$0xf]
  %v6161 = vld [vmem:[%s6147 + $0x34] sm:$0xf]
  %v6162 = vld [vmem:[%s6147 + $0x38] sm:$0xf]
  %v6163 = vld [vmem:[%s6147 + $0x3c] sm:$0xf]
  %v6180 = vunpack.c.l.b16 %v6148
  %v6181 = vunpack.c.l.b16 %v6149
  %v6182 = vunpack.c.l.b16 %v6150
  %v6183 = vunpack.c.l.b16 %v6151
  %v6184 = vunpack.c.l.b16 %v6152
  %v6185 = vunpack.c.l.b16 %v6153
  %v6186 = vunpack.c.l.b16 %v6154
  %v6187 = vunpack.c.l.b16 %v6155
  %v6188 = vunpack.c.l.b16 %v6156
  %v6189 = vunpack.c.l.b16 %v6157
  %v6190 = vunpack.c.l.b16 %v6158
  %v6191 = vunpack.c.l.b16 %v6159
  %v6192 = vunpack.c.l.b16 %v6160
  %v6193 = vunpack.c.l.b16 %v6161
  %v6194 = vunpack.c.l.b16 %v6162
  %v6195 = vunpack.c.l.b16 %v6163
  %v6196 = vpack.c.b16 %v6181, %v6180
  %v6197 = vpack.c.b16 %v6183, %v6182
  %v6198 = vpack.c.b16 %v6185, %v6184
  %v6199 = vpack.c.b16 %v6187, %v6186
  %v6200 = vpack.c.b16 %v6189, %v6188
  %v6201 = vpack.c.b16 %v6191, %v6190
  %v6202 = vpack.c.b16 %v6193, %v6192
  %v6203 = vpack.c.b16 %v6195, %v6194
  %6212 = vmatprep.subr.bf16.mxu0 0
  %6213 = vmatpush1.bf16.msra.mxu0 %v6196
  %6214 = vmatprep.subr.bf16.mxu0 0
  %6215 = vmatpush1.bf16.msra.mxu0 %v6197
  %6216 = vmatprep.subr.bf16.mxu0 0
  %6217 = vmatpush1.bf16.msra.mxu0 %v6198
  %6218 = vmatprep.subr.bf16.mxu0 0
  %6219 = vmatpush1.bf16.msra.mxu0 %v6199
  %6220 = vmatprep.subr.bf16.mxu0 0
  %6221 = vmatpush1.bf16.msra.mxu0 %v6200
  %6222 = vmatprep.subr.bf16.mxu0 0
  %6223 = vmatpush1.bf16.msra.mxu0 %v6201
  %6224 = vmatprep.subr.bf16.mxu0 0
  %6225 = vmatpush1.bf16.msra.mxu0 %v6202
  %6226 = vmatprep.subr.bf16.mxu0 0
  %6227 = vmatpush1.bf16.msra.mxu0 %v6203
  %6228 = vmatprep.subr.bf16.mxu0 0
  %6229 = vmatpush1.bf16.msra.mxu0 0
  %6230 = vmatprep.subr.bf16.mxu0 0
  %6231 = vmatpush1.bf16.msra.mxu0 0
  %6232 = vmatprep.subr.bf16.mxu0 0
  %6233 = vmatpush1.bf16.msra.mxu0 0
  %6234 = vmatprep.subr.bf16.mxu0 0
  %6235 = vmatpush1.bf16.msra.mxu0 0
  %6236 = vmatprep.subr.bf16.mxu0 0
  %6237 = vmatpush1.bf16.msra.mxu0 0
  %6238 = vmatprep.subr.bf16.mxu0 0
  %6239 = vmatpush1.bf16.msra.mxu0 0
  %6240 = vmatprep.subr.bf16.mxu0 0
  %6241 = vmatpush1.bf16.msra.mxu0 0
  %6242 = vmatprep.subr.bf16.mxu0 0
  %6243 = vmatpush1.bf16.msra.mxu0 0
  %6244 = vmatprep.mubr.bf16.mxu0 0
  %6245 = vmatmul.mubr.bf16.gmra.mrb[0].mxu0 %v6115
  %v6246 = vpop.f32.mrb[0].mxu0
  %v6247 = vadd.f32 0.0, %v6246
  %v6248 = vpop.f32.mrb[0].mxu0
  %v6249 = vpop.f32.mrb[0].mxu0
  %v6250 = vadd.f32 0.0, %v6249
  %v6251 = vpop.f32.mrb[0].mxu0
  %6252 = vmatprep.mubr.bf16.mxu0 0
  %6253 = vmatmul.mubr.bf16.gmra.mrb[0].mxu0 %v6116
  %v6254 = vpop.f32.mrb[0].mxu0
  %v6255 = vadd.f32 0.0, %v6254
  %v6256 = vpop.f32.mrb[0].mxu0
  %v6257 = vpop.f32.mrb[0].mxu0
  %v6258 = vadd.f32 0.0, %v6257
  %v6259 = vpop.f32.mrb[0].mxu0
  %6260 = vmatprep.mubr.bf16.mxu0 0
  %6261 = vmatmul.mubr.bf16.gmra.mrb[0].mxu0 %v6117
  %v6262 = vpop.f32.mrb[0].mxu0
  %v6263 = vadd.f32 0.0, %v6262
  %v6264 = vpop.f32.mrb[0].mxu0
  %v6265 = vpop.f32.mrb[0].mxu0
  %v6266 = vadd.f32 0.0, %v6265
  %v6267 = vpop.f32.mrb[0].mxu0
  %6268 = vmatprep.mubr.bf16.mxu0 0
  %6269 = vmatmul.mubr.bf16.gmra.mrb[0].mxu0 %v6118
  %v6270 = vpop.f32.mrb[0].mxu0
  %v6271 = vadd.f32 0.0, %v6270
  %v6272 = vpop.f32.mrb[0].mxu0
  %v6273 = vpop.f32.mrb[0].mxu0
  %v6274 = vadd.f32 0.0, %v6273
  %v6275 = vpop.f32.mrb[0].mxu0
  %6276 = vmatprep.mubr.bf16.mxu0 0
  %6277 = vmatmul.mubr.bf16.gmra.mrb[0].mxu0 %v6119
  %v6278 = vpop.f32.mrb[0].mxu0
  %v6279 = vadd.f32 0.0, %v6278
  %v6280 = vpop.f32.mrb[0].mxu0
  %v6281 = vpop.f32.mrb[0].mxu0
  %v6282 = vadd.f32 0.0, %v6281
  %v6283 = vpop.f32.mrb[0].mxu0
  %6284 = vmatprep.mubr.bf16.mxu0 0
  %6285 = vmatmul.mubr.bf16.gmra.mrb[0].mxu0 %v6120
  %v6286 = vpop.f32.mrb[0].mxu0
  %v6287 = vadd.f32 0.0, %v6286
  %v6288 = vpop.f32.mrb[0].mxu0
  %v6289 = vpop.f32.mrb[0].mxu0
  %v6290 = vadd.f32 0.0, %v6289
  %v6291 = vpop.f32.mrb[0].mxu0
  %6292 = vmatprep.mubr.bf16.mxu0 0
  %6293 = vmatmul.mubr.bf16.gmra.mrb[0].mxu0 %v6121
  %v6294 = vpop.f32.mrb[0].mxu0
  %v6295 = vadd.f32 0.0, %v6294
  %v6296 = vpop.f32.mrb[0].mxu0
  %v6297 = vpop.f32.mrb[0].mxu0
  %v6298 = vadd.f32 0.0, %v6297
  %v6299 = vpop.f32.mrb[0].mxu0
  %6300 = vmatprep.mubr.bf16.mxu0 0
  %6301 = vmatmul.mubr.bf16.gmra.mrb[0].mxu0 %v6122
  %v6302 = vpop.f32.mrb[0].mxu0
  %v6303 = vadd.f32 0.0, %v6302
  %v6304 = vpop.f32.mrb[0].mxu0
  %v6305 = vpop.f32.mrb[0].mxu0
  %v6306 = vadd.f32 0.0, %v6305
  %v6307 = vpop.f32.mrb[0].mxu0
  %6308 = vmatprep.mubr.bf16.mxu0 0
  %6309 = vmatmul.mubr.bf16.gmra.mrb[0].mxu0 %v6123
  %v6310 = vpop.f32.mrb[0].mxu0
  %v6311 = vadd.f32 0.0, %v6310
  %v6312 = vpop.f32.mrb[0].mxu0
  %v6313 = vpop.f32.mrb[0].mxu0
  %v6314 = vadd.f32 0.0, %v6313
  %v6315 = vpop.f32.mrb[0].mxu0
  %6316 = vmatprep.mubr.bf16.mxu0 0
  %6317 = vmatmul.mubr.bf16.gmra.mrb[0].mxu0 %v6124
  %v6318 = vpop.f32.mrb[0].mxu0
  %v6319 = vadd.f32 0.0, %v6318
  %v6320 = vpop.f32.mrb[0].mxu0
  %v6321 = vpop.f32.mrb[0].mxu0
  %v6322 = vadd.f32 0.0, %v6321
  %v6323 = vpop.f32.mrb[0].mxu0
  %6324 = vmatprep.mubr.bf16.mxu0 0
  %6325 = vmatmul.mubr.bf16.gmra.mrb[0].mxu0 %v6125
  %v6326 = vpop.f32.mrb[0].mxu0
  %v6327 = vadd.f32 0.0, %v6326
  %v6328 = vpop.f32.mrb[0].mxu0
  %v6329 = vpop.f32.mrb[0].mxu0
  %v6330 = vadd.f32 0.0, %v6329
  %v6331 = vpop.f32.mrb[0].mxu0
  %6332 = vmatprep.mubr.bf16.mxu0 0
  %6333 = vmatmul.mubr.bf16.gmra.mrb[0].mxu0 %v6126
  %v6334 = vpop.f32.mrb[0].mxu0
  %v6335 = vadd.f32 0.0, %v6334
  %v6336 = vpop.f32.mrb[0].mxu0
  %v6337 = vpop.f32.mrb[0].mxu0
  %v6338 = vadd.f32 0.0, %v6337
  %v6339 = vpop.f32.mrb[0].mxu0
  %6340 = vmatprep.mubr.bf16.mxu0 0
  %6341 = vmatmul.mubr.bf16.gmra.mrb[0].mxu0 %v6127
  %v6342 = vpop.f32.mrb[0].mxu0
  %v6343 = vadd.f32 0.0, %v6342
  %v6344 = vpop.f32.mrb[0].mxu0
  %v6345 = vpop.f32.mrb[0].mxu0
  %v6346 = vadd.f32 0.0, %v6345
  %v6347 = vpop.f32.mrb[0].mxu0
  %6348 = vmatprep.mubr.bf16.mxu0 0
  %6349 = vmatmul.mubr.bf16.gmra.mrb[0].mxu0 %v6128
  %v6350 = vpop.f32.mrb[0].mxu0
  %v6351 = vadd.f32 0.0, %v6350
  %v6352 = vpop.f32.mrb[0].mxu0
  %v6353 = vpop.f32.mrb[0].mxu0
  %v6354 = vadd.f32 0.0, %v6353
  %v6355 = vpop.f32.mrb[0].mxu0
  %6356 = vmatprep.mubr.bf16.mxu0 0
  %6357 = vmatmul.mubr.bf16.gmra.mrb[0].mxu0 %v6129
  %v6358 = vpop.f32.mrb[0].mxu0
  %v6359 = vadd.f32 0.0, %v6358
  %v6360 = vpop.f32.mrb[0].mxu0
  %v6361 = vpop.f32.mrb[0].mxu0
  %v6362 = vadd.f32 0.0, %v6361
  %v6363 = vpop.f32.mrb[0].mxu0
  %6364 = vmatprep.mubr.bf16.mxu0 0
  %6365 = vmatmul.mubr.bf16.gmra.mrb[0].mxu0 %v6130
  %v6366 = vpop.f32.mrb[0].mxu0
  %v6367 = vadd.f32 0.0, %v6366
  %v6368 = vpop.f32.mrb[0].mxu0
  %v6369 = vpop.f32.mrb[0].mxu0
  %v6370 = vadd.f32 0.0, %v6369
  %v6371 = vpop.f32.mrb[0].mxu0
  %6372 = vmatprep.mubr.bf16.mxu0 0
  %6373 = vmatmul.mubr.bf16.gmra.mrb[0].mxu0 %v6131
  %v6374 = vpop.f32.mrb[0].mxu0
  %v6375 = vadd.f32 0.0, %v6374
  %v6376 = vpop.f32.mrb[0].mxu0
  %v6377 = vpop.f32.mrb[0].mxu0
  %v6378 = vadd.f32 0.0, %v6377
  %v6379 = vpop.f32.mrb[0].mxu0
  %6380 = vmatprep.mubr.bf16.mxu0 0
  %6381 = vmatmul.mubr.bf16.gmra.mrb[0].mxu0 %v6132
  %v6382 = vpop.f32.mrb[0].mxu0
  %v6383 = vadd.f32 0.0, %v6382
  %v6384 = vpop.f32.mrb[0].mxu0
  %v6385 = vpop.f32.mrb[0].mxu0
  %v6386 = vadd.f32 0.0, %v6385
  %v6387 = vpop.f32.mrb[0].mxu0
  %6388 = vmatprep.mubr.bf16.mxu0 0
  %6389 = vmatmul.mubr.bf16.gmra.mrb[0].mxu0 %v6133
  %v6390 = vpop.f32.mrb[0].mxu0
  %v6391 = vadd.f32 0.0, %v6390
  %v6392 = vpop.f32.mrb[0].mxu0
  %v6393 = vpop.f32.mrb[0].mxu0
  %v6394 = vadd.f32 0.0, %v6393
  %v6395 = vpop.f32.mrb[0].mxu0
  %6396 = vmatprep.mubr.bf16.mxu0 0
  %6397 = vmatmul.mubr.bf16.gmra.mrb[0].mxu0 %v6134
  %v6398 = vpop.f32.mrb[0].mxu0
  %v6399 = vadd.f32 0.0, %v6398
  %v6400 = vpop.f32.mrb[0].mxu0
  %v6401 = vpop.f32.mrb[0].mxu0
  %v6402 = vadd.f32 0.0, %v6401
  %v6403 = vpop.f32.mrb[0].mxu0
  %6404 = vmatprep.mubr.bf16.mxu0 0
  %6405 = vmatmul.mubr.bf16.gmra.mrb[0].mxu0 %v6135
  %v6406 = vpop.f32.mrb[0].mxu0
  %v6407 = vadd.f32 0.0, %v6406
  %v6408 = vpop.f32.mrb[0].mxu0
  %v6409 = vpop.f32.mrb[0].mxu0
  %v6410 = vadd.f32 0.0, %v6409
  %v6411 = vpop.f32.mrb[0].mxu0
  %6412 = vmatprep.mubr.bf16.mxu0 0
  %6413 = vmatmul.mubr.bf16.gmra.mrb[0].mxu0 %v6136
  %v6414 = vpop.f32.mrb[0].mxu0
  %v6415 = vadd.f32 0.0, %v6414
  %v6416 = vpop.f32.mrb[0].mxu0
  %v6417 = vpop.f32.mrb[0].mxu0
  %v6418 = vadd.f32 0.0, %v6417
  %v6419 = vpop.f32.mrb[0].mxu0
  %6420 = vmatprep.mubr.bf16.mxu0 0
  %6421 = vmatmul.mubr.bf16.gmra.mrb[0].mxu0 %v6137
  %v6422 = vpop.f32.mrb[0].mxu0
  %v6423 = vadd.f32 0.0, %v6422
  %v6424 = vpop.f32.mrb[0].mxu0
  %v6425 = vpop.f32.mrb[0].mxu0
  %v6426 = vadd.f32 0.0, %v6425
  %v6427 = vpop.f32.mrb[0].mxu0
  %6428 = vmatprep.mubr.bf16.mxu0 0
  %6429 = vmatmul.mubr.bf16.gmra.mrb[0].mxu0 %v6138
  %v6430 = vpop.f32.mrb[0].mxu0
  %v6431 = vadd.f32 0.0, %v6430
  %v6432 = vpop.f32.mrb[0].mxu0
  %v6433 = vpop.f32.mrb[0].mxu0
  %v6434 = vadd.f32 0.0, %v6433
  %v6435 = vpop.f32.mrb[0].mxu0
  %6436 = vmatprep.mubr.bf16.mxu0 0
  %6437 = vmatmul.mubr.bf16.gmra.mrb[0].mxu0 %v6139
  %v6438 = vpop.f32.mrb[0].mxu0
  %v6439 = vadd.f32 0.0, %v6438
  %v6440 = vpop.f32.mrb[0].mxu0
  %v6441 = vpop.f32.mrb[0].mxu0
  %v6442 = vadd.f32 0.0, %v6441
  %v6443 = vpop.f32.mrb[0].mxu0
  %6444 = vmatprep.mubr.bf16.mxu0 0
  %6445 = vmatmul.mubr.bf16.gmra.mrb[0].mxu0 %v6140
  %v6446 = vpop.f32.mrb[0].mxu0
  %v6447 = vadd.f32 0.0, %v6446
  %v6448 = vpop.f32.mrb[0].mxu0
  %v6449 = vpop.f32.mrb[0].mxu0
  %v6450 = vadd.f32 0.0, %v6449
  %v6451 = vpop.f32.mrb[0].mxu0
  %6452 = vmatprep.mubr.bf16.mxu0 0
  %6453 = vmatmul.mubr.bf16.gmra.mrb[0].mxu0 %v6141
  %v6454 = vpop.f32.mrb[0].mxu0
  %v6455 = vadd.f32 0.0, %v6454
  %v6456 = vpop.f32.mrb[0].mxu0
  %v6457 = vpop.f32.mrb[0].mxu0
  %v6458 = vadd.f32 0.0, %v6457
  %v6459 = vpop.f32.mrb[0].mxu0
  %6460 = vmatprep.mubr.bf16.mxu0 0
  %6461 = vmatmul.mubr.bf16.gmra.mrb[0].mxu0 %v6142
  %v6462 = vpop.f32.mrb[0].mxu0
  %v6463 = vadd.f32 0.0, %v6462
  %v6464 = vpop.f32.mrb[0].mxu0
  %v6465 = vpop.f32.mrb[0].mxu0
  %v6466 = vadd.f32 0.0, %v6465
  %v6467 = vpop.f32.mrb[0].mxu0
  %6468 = vmatprep.mubr.bf16.mxu0 0
  %6469 = vmatmul.mubr.bf16.gmra.mrb[0].mxu0 %v6143
  %v6470 = vpop.f32.mrb[0].mxu0
  %v6471 = vadd.f32 0.0, %v6470
  %v6472 = vpop.f32.mrb[0].mxu0
  %v6473 = vpop.f32.mrb[0].mxu0
  %v6474 = vadd.f32 0.0, %v6473
  %v6475 = vpop.f32.mrb[0].mxu0
  %6476 = vmatprep.mubr.bf16.mxu0 0
  %6477 = vmatmul.mubr.bf16.gmra.mrb[0].mxu0 %v6144
  %v6478 = vpop.f32.mrb[0].mxu0
  %v6479 = vadd.f32 0.0, %v6478
  %v6480 = vpop.f32.mrb[0].mxu0
  %v6481 = vpop.f32.mrb[0].mxu0
  %v6482 = vadd.f32 0.0, %v6481
  %v6483 = vpop.f32.mrb[0].mxu0
  %6484 = vmatprep.mubr.bf16.mxu0 0
  %6485 = vmatmul.mubr.bf16.gmra.mrb[0].mxu0 %v6145
  %v6486 = vpop.f32.mrb[0].mxu0
  %v6487 = vadd.f32 0.0, %v6486
  %v6488 = vpop.f32.mrb[0].mxu0
  %v6489 = vpop.f32.mrb[0].mxu0
  %v6490 = vadd.f32 0.0, %v6489
  %v6491 = vpop.f32.mrb[0].mxu0
  %6492 = vmatprep.mubr.bf16.mxu0 0
  %6493 = vmatmul.mubr.bf16.gmra.mrb[0].mxu0 %v6146
  %v6494 = vpop.f32.mrb[0].mxu0
  %v6495 = vadd.f32 0.0, %v6494
  %v6496 = vpop.f32.mrb[0].mxu0
  %v6497 = vpop.f32.mrb[0].mxu0
  %v6498 = vadd.f32 0.0, %v6497
  %v6499 = vpop.f32.mrb[0].mxu0
  %6500 = vdwg.mxu0
  %v6501 = vadd.f32 %v5797, %v6247
  %v6502 = vadd.f32 %v5800, %v6250
  %v6503 = vadd.f32 %v5805, %v6255
  %v6504 = vadd.f32 %v5808, %v6258
  %v6505 = vadd.f32 %v5813, %v6263
  %v6506 = vadd.f32 %v5816, %v6266
  %v6507 = vadd.f32 %v5821, %v6271
  %v6508 = vadd.f32 %v5824, %v6274
  %v6509 = vadd.f32 %v5829, %v6279
  %v6510 = vadd.f32 %v5832, %v6282
  %v6511 = vadd.f32 %v5837, %v6287
  %v6512 = vadd.f32 %v5840, %v6290
  %v6513 = vadd.f32 %v5845, %v6295
  %v6514 = vadd.f32 %v5848, %v6298
  %v6515 = vadd.f32 %v5853, %v6303
  %v6516 = vadd.f32 %v5856, %v6306
  %v6517 = vadd.f32 %v5861, %v6311
  %v6518 = vadd.f32 %v5864, %v6314
  %v6519 = vadd.f32 %v5869, %v6319
  %v6520 = vadd.f32 %v5872, %v6322
  %v6521 = vadd.f32 %v5877, %v6327
  %v6522 = vadd.f32 %v5880, %v6330
  %v6523 = vadd.f32 %v5885, %v6335
  %v6524 = vadd.f32 %v5888, %v6338
  %v6525 = vadd.f32 %v5893, %v6343
  %v6526 = vadd.f32 %v5896, %v6346
  %v6527 = vadd.f32 %v5901, %v6351
  %v6528 = vadd.f32 %v5904, %v6354
  %v6529 = vadd.f32 %v5909, %v6359
  %v6530 = vadd.f32 %v5912, %v6362
  %v6531 = vadd.f32 %v5917, %v6367
  %v6532 = vadd.f32 %v5920, %v6370
  %v6533 = vadd.f32 %v5925, %v6375
  %v6534 = vadd.f32 %v5928, %v6378
  %v6535 = vadd.f32 %v5933, %v6383
  %v6536 = vadd.f32 %v5936, %v6386
  %v6537 = vadd.f32 %v5941, %v6391
  %v6538 = vadd.f32 %v5944, %v6394
  %v6539 = vadd.f32 %v5949, %v6399
  %v6540 = vadd.f32 %v5952, %v6402
  %v6541 = vadd.f32 %v5957, %v6407
  %v6542 = vadd.f32 %v5960, %v6410
  %v6543 = vadd.f32 %v5965, %v6415
  %v6544 = vadd.f32 %v5968, %v6418
  %v6545 = vadd.f32 %v5973, %v6423
  %v6546 = vadd.f32 %v5976, %v6426
  %v6547 = vadd.f32 %v5981, %v6431
  %v6548 = vadd.f32 %v5984, %v6434
  %v6549 = vadd.f32 %v5989, %v6439
  %v6550 = vadd.f32 %v5992, %v6442
  %v6551 = vadd.f32 %v5997, %v6447
  %v6552 = vadd.f32 %v6000, %v6450
  %v6553 = vadd.f32 %v6005, %v6455
  %v6554 = vadd.f32 %v6008, %v6458
  %v6555 = vadd.f32 %v6013, %v6463
  %v6556 = vadd.f32 %v6016, %v6466
  %v6557 = vadd.f32 %v6021, %v6471
  %v6558 = vadd.f32 %v6024, %v6474
  %v6559 = vadd.f32 %v6029, %v6479
  %v6560 = vadd.f32 %v6032, %v6482
  %v6561 = vadd.f32 %v6037, %v6487
  %v6562 = vadd.f32 %v6040, %v6490
  %v6563 = vadd.f32 %v6045, %v6495
  %v6564 = vadd.f32 %v6048, %v6498
  %v6565 = vld [vmem:[%s5087 + $0x7] sm:$0xff]
  %v6566 = vld [vmem:[%s5087 + $0xf] sm:$0xff]
  %v6567 = vld [vmem:[%s5087 + $0x27] sm:$0xff]
  %v6568 = vld [vmem:[%s5087 + $0x2f] sm:$0xff]
  %v6569 = vld [vmem:[%s5087 + $0x47] sm:$0xff]
  %v6570 = vld [vmem:[%s5087 + $0x4f] sm:$0xff]
  %v6571 = vld [vmem:[%s5087 + $0x67] sm:$0xff]
  %v6572 = vld [vmem:[%s5087 + $0x6f] sm:$0xff]
  %v6573 = vld [vmem:[%s5087 + $0x87] sm:$0xff]
  %v6574 = vld [vmem:[%s5087 + $0x8f] sm:$0xff]
  %v6575 = vld [vmem:[%s5087 + $0xa7] sm:$0xff]
  %v6576 = vld [vmem:[%s5087 + $0xaf] sm:$0xff]
  %v6577 = vld [vmem:[%s5087 + $0xc7] sm:$0xff]
  %v6578 = vld [vmem:[%s5087 + $0xcf] sm:$0xff]
  %v6579 = vld [vmem:[%s5087 + $0xe7] sm:$0xff]
  %v6580 = vld [vmem:[%s5087 + $0xef] sm:$0xff]
  %v6581 = vld [vmem:[%s5087 + $0x107] sm:$0xff]
  %v6582 = vld [vmem:[%s5087 + $0x10f] sm:$0xff]
  %v6583 = vld [vmem:[%s5087 + $0x127] sm:$0xff]
  %v6584 = vld [vmem:[%s5087 + $0x12f] sm:$0xff]
  %v6585 = vld [vmem:[%s5087 + $0x147] sm:$0xff]
  %v6586 = vld [vmem:[%s5087 + $0x14f] sm:$0xff]
  %v6587 = vld [vmem:[%s5087 + $0x167] sm:$0xff]
  %v6588 = vld [vmem:[%s5087 + $0x16f] sm:$0xff]
  %v6589 = vld [vmem:[%s5087 + $0x187] sm:$0xff]
  %v6590 = vld [vmem:[%s5087 + $0x18f] sm:$0xff]
  %v6591 = vld [vmem:[%s5087 + $0x1a7] sm:$0xff]
  %v6592 = vld [vmem:[%s5087 + $0x1af] sm:$0xff]
  %v6593 = vld [vmem:[%s5087 + $0x1c7] sm:$0xff]
  %v6594 = vld [vmem:[%s5087 + $0x1cf] sm:$0xff]
  %v6595 = vld [vmem:[%s5087 + $0x1e7] sm:$0xff]
  %v6596 = vld [vmem:[%s5087 + $0x1ef] sm:$0xff]
  %v6597 = vld [vmem:[%s5087 + $0x247] sm:$0xff]
  %v6598 = vld [vmem:[%s5087 + $0x24f] sm:$0xff]
  %v6599 = vld [vmem:[%s5087 + $0x267] sm:$0xff]
  %v6600 = vld [vmem:[%s5087 + $0x26f] sm:$0xff]
  %v6601 = vld [vmem:[%s5087 + $0x287] sm:$0xff]
  %v6602 = vld [vmem:[%s5087 + $0x28f] sm:$0xff]
  %v6603 = vld [vmem:[%s5087 + $0x2a7] sm:$0xff]
  %v6604 = vld [vmem:[%s5087 + $0x2af] sm:$0xff]
  %v6605 = vld [vmem:[%s5087 + $0x2c7] sm:$0xff]
  %v6606 = vld [vmem:[%s5087 + $0x2cf] sm:$0xff]
  %v6607 = vld [vmem:[%s5087 + $0x2e7] sm:$0xff]
  %v6608 = vld [vmem:[%s5087 + $0x2ef] sm:$0xff]
  %v6609 = vld [vmem:[%s5087 + $0x307] sm:$0xff]
  %v6610 = vld [vmem:[%s5087 + $0x30f] sm:$0xff]
  %v6611 = vld [vmem:[%s5087 + $0x327] sm:$0xff]
  %v6612 = vld [vmem:[%s5087 + $0x32f] sm:$0xff]
  %v6613 = vld [vmem:[%s5087 + $0x347] sm:$0xff]
  %v6614 = vld [vmem:[%s5087 + $0x34f] sm:$0xff]
  %v6615 = vld [vmem:[%s5087 + $0x367] sm:$0xff]
  %v6616 = vld [vmem:[%s5087 + $0x36f] sm:$0xff]
  %v6617 = vld [vmem:[%s5087 + $0x387] sm:$0xff]
  %v6618 = vld [vmem:[%s5087 + $0x38f] sm:$0xff]
  %v6619 = vld [vmem:[%s5087 + $0x3a7] sm:$0xff]
  %v6620 = vld [vmem:[%s5087 + $0x3af] sm:$0xff]
  %v6621 = vld [vmem:[%s5087 + $0x3c7] sm:$0xff]
  %v6622 = vld [vmem:[%s5087 + $0x3cf] sm:$0xff]
  %v6623 = vld [vmem:[%s5087 + $0x3e7] sm:$0xff]
  %v6624 = vld [vmem:[%s5087 + $0x3ef] sm:$0xff]
  %v6625 = vld [vmem:[%s5087 + $0x407] sm:$0xff]
  %v6626 = vld [vmem:[%s5087 + $0x40f] sm:$0xff]
  %v6627 = vld [vmem:[%s5087 + $0x427] sm:$0xff]
  %v6628 = vld [vmem:[%s5087 + $0x42f] sm:$0xff]
  %v6629 = vpack.c.bf16 %v6566, %v6565
  %v6630 = vpack.c.bf16 %v6568, %v6567
  %v6631 = vpack.c.bf16 %v6570, %v6569
  %v6632 = vpack.c.bf16 %v6572, %v6571
  %v6633 = vpack.c.bf16 %v6574, %v6573
  %v6634 = vpack.c.bf16 %v6576, %v6575
  %v6635 = vpack.c.bf16 %v6578, %v6577
  %v6636 = vpack.c.bf16 %v6580, %v6579
  %v6637 = vpack.c.bf16 %v6582, %v6581
  %v6638 = vpack.c.bf16 %v6584, %v6583
  %v6639 = vpack.c.bf16 %v6586, %v6585
  %v6640 = vpack.c.bf16 %v6588, %v6587
  %v6641 = vpack.c.bf16 %v6590, %v6589
  %v6642 = vpack.c.bf16 %v6592, %v6591
  %v6643 = vpack.c.bf16 %v6594, %v6593
  %v6644 = vpack.c.bf16 %v6596, %v6595
  %v6645 = vpack.c.bf16 %v6598, %v6597
  %v6646 = vpack.c.bf16 %v6600, %v6599
  %v6647 = vpack.c.bf16 %v6602, %v6601
  %v6648 = vpack.c.bf16 %v6604, %v6603
  %v6649 = vpack.c.bf16 %v6606, %v6605
  %v6650 = vpack.c.bf16 %v6608, %v6607
  %v6651 = vpack.c.bf16 %v6610, %v6609
  %v6652 = vpack.c.bf16 %v6612, %v6611
  %v6653 = vpack.c.bf16 %v6614, %v6613
  %v6654 = vpack.c.bf16 %v6616, %v6615
  %v6655 = vpack.c.bf16 %v6618, %v6617
  %v6656 = vpack.c.bf16 %v6620, %v6619
  %v6657 = vpack.c.bf16 %v6622, %v6621
  %v6658 = vpack.c.bf16 %v6624, %v6623
  %v6659 = vpack.c.bf16 %v6626, %v6625
  %v6660 = vpack.c.bf16 %v6628, %v6627
  %s6661 = scalar_lea.vmem %s2, 192
  %v6662 = vld [vmem:[%s6661] sm:$0xf]
  %v6663 = vld [vmem:[%s6661 + $0x4] sm:$0xf]
  %v6664 = vld [vmem:[%s6661 + $0x8] sm:$0xf]
  %v6665 = vld [vmem:[%s6661 + $0xc] sm:$0xf]
  %v6666 = vld [vmem:[%s6661 + $0x10] sm:$0xf]
  %v6667 = vld [vmem:[%s6661 + $0x14] sm:$0xf]
  %v6668 = vld [vmem:[%s6661 + $0x18] sm:$0xf]
  %v6669 = vld [vmem:[%s6661 + $0x1c] sm:$0xf]
  %v6670 = vld [vmem:[%s6661 + $0x20] sm:$0xf]
  %v6671 = vld [vmem:[%s6661 + $0x24] sm:$0xf]
  %v6672 = vld [vmem:[%s6661 + $0x28] sm:$0xf]
  %v6673 = vld [vmem:[%s6661 + $0x2c] sm:$0xf]
  %v6674 = vld [vmem:[%s6661 + $0x30] sm:$0xf]
  %v6675 = vld [vmem:[%s6661 + $0x34] sm:$0xf]
  %v6676 = vld [vmem:[%s6661 + $0x38] sm:$0xf]
  %v6677 = vld [vmem:[%s6661 + $0x3c] sm:$0xf]
  %v6694 = vunpack.c.l.b16 %v6662
  %v6695 = vunpack.c.l.b16 %v6663
  %v6696 = vunpack.c.l.b16 %v6664
  %v6697 = vunpack.c.l.b16 %v6665
  %v6698 = vunpack.c.l.b16 %v6666
  %v6699 = vunpack.c.l.b16 %v6667
  %v6700 = vunpack.c.l.b16 %v6668
  %v6701 = vunpack.c.l.b16 %v6669
  %v6702 = vunpack.c.l.b16 %v6670
  %v6703 = vunpack.c.l.b16 %v6671
  %v6704 = vunpack.c.l.b16 %v6672
  %v6705 = vunpack.c.l.b16 %v6673
  %v6706 = vunpack.c.l.b16 %v6674
  %v6707 = vunpack.c.l.b16 %v6675
  %v6708 = vunpack.c.l.b16 %v6676
  %v6709 = vunpack.c.l.b16 %v6677
  %v6710 = vpack.c.b16 %v6695, %v6694
  %v6711 = vpack.c.b16 %v6697, %v6696
  %v6712 = vpack.c.b16 %v6699, %v6698
  %v6713 = vpack.c.b16 %v6701, %v6700
  %v6714 = vpack.c.b16 %v6703, %v6702
  %v6715 = vpack.c.b16 %v6705, %v6704
  %v6716 = vpack.c.b16 %v6707, %v6706
  %v6717 = vpack.c.b16 %v6709, %v6708
  %6726 = vmatprep.subr.bf16.mxu0 0
  %6727 = vmatpush1.bf16.msra.mxu0 %v6710
  %6728 = vmatprep.subr.bf16.mxu0 0
  %6729 = vmatpush1.bf16.msra.mxu0 %v6711
  %6730 = vmatprep.subr.bf16.mxu0 0
  %6731 = vmatpush1.bf16.msra.mxu0 %v6712
  %6732 = vmatprep.subr.bf16.mxu0 0
  %6733 = vmatpush1.bf16.msra.mxu0 %v6713
  %6734 = vmatprep.subr.bf16.mxu0 0
  %6735 = vmatpush1.bf16.msra.mxu0 %v6714
  %6736 = vmatprep.subr.bf16.mxu0 0
  %6737 = vmatpush1.bf16.msra.mxu0 %v6715
  %6738 = vmatprep.subr.bf16.mxu0 0
  %6739 = vmatpush1.bf16.msra.mxu0 %v6716
  %6740 = vmatprep.subr.bf16.mxu0 0
  %6741 = vmatpush1.bf16.msra.mxu0 %v6717
  %6742 = vmatprep.subr.bf16.mxu0 0
  %6743 = vmatpush1.bf16.msra.mxu0 0
  %6744 = vmatprep.subr.bf16.mxu0 0
  %6745 = vmatpush1.bf16.msra.mxu0 0
  %6746 = vmatprep.subr.bf16.mxu0 0
  %6747 = vmatpush1.bf16.msra.mxu0 0
  %6748 = vmatprep.subr.bf16.mxu0 0
  %6749 = vmatpush1.bf16.msra.mxu0 0
  %6750 = vmatprep.subr.bf16.mxu0 0
  %6751 = vmatpush1.bf16.msra.mxu0 0
  %6752 = vmatprep.subr.bf16.mxu0 0
  %6753 = vmatpush1.bf16.msra.mxu0 0
  %6754 = vmatprep.subr.bf16.mxu0 0
  %6755 = vmatpush1.bf16.msra.mxu0 0
  %6756 = vmatprep.subr.bf16.mxu0 0
  %6757 = vmatpush1.bf16.msra.mxu0 0
  %6758 = vmatprep.mubr.bf16.mxu0 0
  %6759 = vmatmul.mubr.bf16.gmra.mrb[0].mxu0 %v6629
  %v6760 = vpop.f32.mrb[0].mxu0
  %v6761 = vadd.f32 0.0, %v6760
  %v6762 = vpop.f32.mrb[0].mxu0
  %v6763 = vpop.f32.mrb[0].mxu0
  %v6764 = vadd.f32 0.0, %v6763
  %v6765 = vpop.f32.mrb[0].mxu0
  %6766 = vmatprep.mubr.bf16.mxu0 0
  %6767 = vmatmul.mubr.bf16.gmra.mrb[0].mxu0 %v6630
  %v6768 = vpop.f32.mrb[0].mxu0
  %v6769 = vadd.f32 0.0, %v6768
  %v6770 = vpop.f32.mrb[0].mxu0
  %v6771 = vpop.f32.mrb[0].mxu0
  %v6772 = vadd.f32 0.0, %v6771
  %v6773 = vpop.f32.mrb[0].mxu0
  %6774 = vmatprep.mubr.bf16.mxu0 0
  %6775 = vmatmul.mubr.bf16.gmra.mrb[0].mxu0 %v6631
  %v6776 = vpop.f32.mrb[0].mxu0
  %v6777 = vadd.f32 0.0, %v6776
  %v6778 = vpop.f32.mrb[0].mxu0
  %v6779 = vpop.f32.mrb[0].mxu0
  %v6780 = vadd.f32 0.0, %v6779
  %v6781 = vpop.f32.mrb[0].mxu0
  %6782 = vmatprep.mubr.bf16.mxu0 0
  %6783 = vmatmul.mubr.bf16.gmra.mrb[0].mxu0 %v6632
  %v6784 = vpop.f32.mrb[0].mxu0
  %v6785 = vadd.f32 0.0, %v6784
  %v6786 = vpop.f32.mrb[0].mxu0
  %v6787 = vpop.f32.mrb[0].mxu0
  %v6788 = vadd.f32 0.0, %v6787
  %v6789 = vpop.f32.mrb[0].mxu0
  %6790 = vmatprep.mubr.bf16.mxu0 0
  %6791 = vmatmul.mubr.bf16.gmra.mrb[0].mxu0 %v6633
  %v6792 = vpop.f32.mrb[0].mxu0
  %v6793 = vadd.f32 0.0, %v6792
  %v6794 = vpop.f32.mrb[0].mxu0
  %v6795 = vpop.f32.mrb[0].mxu0
  %v6796 = vadd.f32 0.0, %v6795
  %v6797 = vpop.f32.mrb[0].mxu0
  %6798 = vmatprep.mubr.bf16.mxu0 0
  %6799 = vmatmul.mubr.bf16.gmra.mrb[0].mxu0 %v6634
  %v6800 = vpop.f32.mrb[0].mxu0
  %v6801 = vadd.f32 0.0, %v6800
  %v6802 = vpop.f32.mrb[0].mxu0
  %v6803 = vpop.f32.mrb[0].mxu0
  %v6804 = vadd.f32 0.0, %v6803
  %v6805 = vpop.f32.mrb[0].mxu0
  %6806 = vmatprep.mubr.bf16.mxu0 0
  %6807 = vmatmul.mubr.bf16.gmra.mrb[0].mxu0 %v6635
  %v6808 = vpop.f32.mrb[0].mxu0
  %v6809 = vadd.f32 0.0, %v6808
  %v6810 = vpop.f32.mrb[0].mxu0
  %v6811 = vpop.f32.mrb[0].mxu0
  %v6812 = vadd.f32 0.0, %v6811
  %v6813 = vpop.f32.mrb[0].mxu0
  %6814 = vmatprep.mubr.bf16.mxu0 0
  %6815 = vmatmul.mubr.bf16.gmra.mrb[0].mxu0 %v6636
  %v6816 = vpop.f32.mrb[0].mxu0
  %v6817 = vadd.f32 0.0, %v6816
  %v6818 = vpop.f32.mrb[0].mxu0
  %v6819 = vpop.f32.mrb[0].mxu0
  %v6820 = vadd.f32 0.0, %v6819
  %v6821 = vpop.f32.mrb[0].mxu0
  %6822 = vmatprep.mubr.bf16.mxu0 0
  %6823 = vmatmul.mubr.bf16.gmra.mrb[0].mxu0 %v6637
  %v6824 = vpop.f32.mrb[0].mxu0
  %v6825 = vadd.f32 0.0, %v6824
  %v6826 = vpop.f32.mrb[0].mxu0
  %v6827 = vpop.f32.mrb[0].mxu0
  %v6828 = vadd.f32 0.0, %v6827
  %v6829 = vpop.f32.mrb[0].mxu0
  %6830 = vmatprep.mubr.bf16.mxu0 0
  %6831 = vmatmul.mubr.bf16.gmra.mrb[0].mxu0 %v6638
  %v6832 = vpop.f32.mrb[0].mxu0
  %v6833 = vadd.f32 0.0, %v6832
  %v6834 = vpop.f32.mrb[0].mxu0
  %v6835 = vpop.f32.mrb[0].mxu0
  %v6836 = vadd.f32 0.0, %v6835
  %v6837 = vpop.f32.mrb[0].mxu0
  %6838 = vmatprep.mubr.bf16.mxu0 0
  %6839 = vmatmul.mubr.bf16.gmra.mrb[0].mxu0 %v6639
  %v6840 = vpop.f32.mrb[0].mxu0
  %v6841 = vadd.f32 0.0, %v6840
  %v6842 = vpop.f32.mrb[0].mxu0
  %v6843 = vpop.f32.mrb[0].mxu0
  %v6844 = vadd.f32 0.0, %v6843
  %v6845 = vpop.f32.mrb[0].mxu0
  %6846 = vmatprep.mubr.bf16.mxu0 0
  %6847 = vmatmul.mubr.bf16.gmra.mrb[0].mxu0 %v6640
  %v6848 = vpop.f32.mrb[0].mxu0
  %v6849 = vadd.f32 0.0, %v6848
  %v6850 = vpop.f32.mrb[0].mxu0
  %v6851 = vpop.f32.mrb[0].mxu0
  %v6852 = vadd.f32 0.0, %v6851
  %v6853 = vpop.f32.mrb[0].mxu0
  %6854 = vmatprep.mubr.bf16.mxu0 0
  %6855 = vmatmul.mubr.bf16.gmra.mrb[0].mxu0 %v6641
  %v6856 = vpop.f32.mrb[0].mxu0
  %v6857 = vadd.f32 0.0, %v6856
  %v6858 = vpop.f32.mrb[0].mxu0
  %v6859 = vpop.f32.mrb[0].mxu0
  %v6860 = vadd.f32 0.0, %v6859
  %v6861 = vpop.f32.mrb[0].mxu0
  %6862 = vmatprep.mubr.bf16.mxu0 0
  %6863 = vmatmul.mubr.bf16.gmra.mrb[0].mxu0 %v6642
  %v6864 = vpop.f32.mrb[0].mxu0
  %v6865 = vadd.f32 0.0, %v6864
  %v6866 = vpop.f32.mrb[0].mxu0
  %v6867 = vpop.f32.mrb[0].mxu0
  %v6868 = vadd.f32 0.0, %v6867
  %v6869 = vpop.f32.mrb[0].mxu0
  %6870 = vmatprep.mubr.bf16.mxu0 0
  %6871 = vmatmul.mubr.bf16.gmra.mrb[0].mxu0 %v6643
  %v6872 = vpop.f32.mrb[0].mxu0
  %v6873 = vadd.f32 0.0, %v6872
  %v6874 = vpop.f32.mrb[0].mxu0
  %v6875 = vpop.f32.mrb[0].mxu0
  %v6876 = vadd.f32 0.0, %v6875
  %v6877 = vpop.f32.mrb[0].mxu0
  %6878 = vmatprep.mubr.bf16.mxu0 0
  %6879 = vmatmul.mubr.bf16.gmra.mrb[0].mxu0 %v6644
  %v6880 = vpop.f32.mrb[0].mxu0
  %v6881 = vadd.f32 0.0, %v6880
  %v6882 = vpop.f32.mrb[0].mxu0
  %v6883 = vpop.f32.mrb[0].mxu0
  %v6884 = vadd.f32 0.0, %v6883
  %v6885 = vpop.f32.mrb[0].mxu0
  %6886 = vmatprep.mubr.bf16.mxu0 0
  %6887 = vmatmul.mubr.bf16.gmra.mrb[0].mxu0 %v6645
  %v6888 = vpop.f32.mrb[0].mxu0
  %v6889 = vadd.f32 0.0, %v6888
  %v6890 = vpop.f32.mrb[0].mxu0
  %v6891 = vpop.f32.mrb[0].mxu0
  %v6892 = vadd.f32 0.0, %v6891
  %v6893 = vpop.f32.mrb[0].mxu0
  %6894 = vmatprep.mubr.bf16.mxu0 0
  %6895 = vmatmul.mubr.bf16.gmra.mrb[0].mxu0 %v6646
  %v6896 = vpop.f32.mrb[0].mxu0
  %v6897 = vadd.f32 0.0, %v6896
  %v6898 = vpop.f32.mrb[0].mxu0
  %v6899 = vpop.f32.mrb[0].mxu0
  %v6900 = vadd.f32 0.0, %v6899
  %v6901 = vpop.f32.mrb[0].mxu0
  %6902 = vmatprep.mubr.bf16.mxu0 0
  %6903 = vmatmul.mubr.bf16.gmra.mrb[0].mxu0 %v6647
  %v6904 = vpop.f32.mrb[0].mxu0
  %v6905 = vadd.f32 0.0, %v6904
  %v6906 = vpop.f32.mrb[0].mxu0
  %v6907 = vpop.f32.mrb[0].mxu0
  %v6908 = vadd.f32 0.0, %v6907
  %v6909 = vpop.f32.mrb[0].mxu0
  %6910 = vmatprep.mubr.bf16.mxu0 0
  %6911 = vmatmul.mubr.bf16.gmra.mrb[0].mxu0 %v6648
  %v6912 = vpop.f32.mrb[0].mxu0
  %v6913 = vadd.f32 0.0, %v6912
  %v6914 = vpop.f32.mrb[0].mxu0
  %v6915 = vpop.f32.mrb[0].mxu0
  %v6916 = vadd.f32 0.0, %v6915
  %v6917 = vpop.f32.mrb[0].mxu0
  %6918 = vmatprep.mubr.bf16.mxu0 0
  %6919 = vmatmul.mubr.bf16.gmra.mrb[0].mxu0 %v6649
  %v6920 = vpop.f32.mrb[0].mxu0
  %v6921 = vadd.f32 0.0, %v6920
  %v6922 = vpop.f32.mrb[0].mxu0
  %v6923 = vpop.f32.mrb[0].mxu0
  %v6924 = vadd.f32 0.0, %v6923
  %v6925 = vpop.f32.mrb[0].mxu0
  %6926 = vmatprep.mubr.bf16.mxu0 0
  %6927 = vmatmul.mubr.bf16.gmra.mrb[0].mxu0 %v6650
  %v6928 = vpop.f32.mrb[0].mxu0
  %v6929 = vadd.f32 0.0, %v6928
  %v6930 = vpop.f32.mrb[0].mxu0
  %v6931 = vpop.f32.mrb[0].mxu0
  %v6932 = vadd.f32 0.0, %v6931
  %v6933 = vpop.f32.mrb[0].mxu0
  %6934 = vmatprep.mubr.bf16.mxu0 0
  %6935 = vmatmul.mubr.bf16.gmra.mrb[0].mxu0 %v6651
  %v6936 = vpop.f32.mrb[0].mxu0
  %v6937 = vadd.f32 0.0, %v6936
  %v6938 = vpop.f32.mrb[0].mxu0
  %v6939 = vpop.f32.mrb[0].mxu0
  %v6940 = vadd.f32 0.0, %v6939
  %v6941 = vpop.f32.mrb[0].mxu0
  %6942 = vmatprep.mubr.bf16.mxu0 0
  %6943 = vmatmul.mubr.bf16.gmra.mrb[0].mxu0 %v6652
  %v6944 = vpop.f32.mrb[0].mxu0
  %v6945 = vadd.f32 0.0, %v6944
  %v6946 = vpop.f32.mrb[0].mxu0
  %v6947 = vpop.f32.mrb[0].mxu0
  %v6948 = vadd.f32 0.0, %v6947
  %v6949 = vpop.f32.mrb[0].mxu0
  %6950 = vmatprep.mubr.bf16.mxu0 0
  %6951 = vmatmul.mubr.bf16.gmra.mrb[0].mxu0 %v6653
  %v6952 = vpop.f32.mrb[0].mxu0
  %v6953 = vadd.f32 0.0, %v6952
  %v6954 = vpop.f32.mrb[0].mxu0
  %v6955 = vpop.f32.mrb[0].mxu0
  %v6956 = vadd.f32 0.0, %v6955
  %v6957 = vpop.f32.mrb[0].mxu0
  %6958 = vmatprep.mubr.bf16.mxu0 0
  %6959 = vmatmul.mubr.bf16.gmra.mrb[0].mxu0 %v6654
  %v6960 = vpop.f32.mrb[0].mxu0
  %v6961 = vadd.f32 0.0, %v6960
  %v6962 = vpop.f32.mrb[0].mxu0
  %v6963 = vpop.f32.mrb[0].mxu0
  %v6964 = vadd.f32 0.0, %v6963
  %v6965 = vpop.f32.mrb[0].mxu0
  %6966 = vmatprep.mubr.bf16.mxu0 0
  %6967 = vmatmul.mubr.bf16.gmra.mrb[0].mxu0 %v6655
  %v6968 = vpop.f32.mrb[0].mxu0
  %v6969 = vadd.f32 0.0, %v6968
  %v6970 = vpop.f32.mrb[0].mxu0
  %v6971 = vpop.f32.mrb[0].mxu0
  %v6972 = vadd.f32 0.0, %v6971
  %v6973 = vpop.f32.mrb[0].mxu0
  %6974 = vmatprep.mubr.bf16.mxu0 0
  %6975 = vmatmul.mubr.bf16.gmra.mrb[0].mxu0 %v6656
  %v6976 = vpop.f32.mrb[0].mxu0
  %v6977 = vadd.f32 0.0, %v6976
  %v6978 = vpop.f32.mrb[0].mxu0
  %v6979 = vpop.f32.mrb[0].mxu0
  %v6980 = vadd.f32 0.0, %v6979
  %v6981 = vpop.f32.mrb[0].mxu0
  %6982 = vmatprep.mubr.bf16.mxu0 0
  %6983 = vmatmul.mubr.bf16.gmra.mrb[0].mxu0 %v6657
  %v6984 = vpop.f32.mrb[0].mxu0
  %v6985 = vadd.f32 0.0, %v6984
  %v6986 = vpop.f32.mrb[0].mxu0
  %v6987 = vpop.f32.mrb[0].mxu0
  %v6988 = vadd.f32 0.0, %v6987
  %v6989 = vpop.f32.mrb[0].mxu0
  %6990 = vmatprep.mubr.bf16.mxu0 0
  %6991 = vmatmul.mubr.bf16.gmra.mrb[0].mxu0 %v6658
  %v6992 = vpop.f32.mrb[0].mxu0
  %v6993 = vadd.f32 0.0, %v6992
  %v6994 = vpop.f32.mrb[0].mxu0
  %v6995 = vpop.f32.mrb[0].mxu0
  %v6996 = vadd.f32 0.0, %v6995
  %v6997 = vpop.f32.mrb[0].mxu0
  %6998 = vmatprep.mubr.bf16.mxu0 0
  %6999 = vmatmul.mubr.bf16.gmra.mrb[0].mxu0 %v6659
  %v7000 = vpop.f32.mrb[0].mxu0
  %v7001 = vadd.f32 0.0, %v7000
  %v7002 = vpop.f32.mrb[0].mxu0
  %v7003 = vpop.f32.mrb[0].mxu0
  %v7004 = vadd.f32 0.0, %v7003
  %v7005 = vpop.f32.mrb[0].mxu0
  %7006 = vmatprep.mubr.bf16.mxu0 0
  %7007 = vmatmul.mubr.bf16.gmra.mrb[0].mxu0 %v6660
  %v7008 = vpop.f32.mrb[0].mxu0
  %v7009 = vadd.f32 0.0, %v7008
  %v7010 = vpop.f32.mrb[0].mxu0
  %v7011 = vpop.f32.mrb[0].mxu0
  %v7012 = vadd.f32 0.0, %v7011
  %v7013 = vpop.f32.mrb[0].mxu0
  %7014 = vdwg.mxu0
  %v7015 = vadd.f32 %v6501, %v6761
  %v7016 = vadd.f32 %v6502, %v6764
  %v7017 = vadd.f32 %v6503, %v6769
  %v7018 = vadd.f32 %v6504, %v6772
  %v7019 = vadd.f32 %v6505, %v6777
  %v7020 = vadd.f32 %v6506, %v6780
  %v7021 = vadd.f32 %v6507, %v6785
  %v7022 = vadd.f32 %v6508, %v6788
  %v7023 = vadd.f32 %v6509, %v6793
  %v7024 = vadd.f32 %v6510, %v6796
  %v7025 = vadd.f32 %v6511, %v6801
  %v7026 = vadd.f32 %v6512, %v6804
  %v7027 = vadd.f32 %v6513, %v6809
  %v7028 = vadd.f32 %v6514, %v6812
  %v7029 = vadd.f32 %v6515, %v6817
  %v7030 = vadd.f32 %v6516, %v6820
  %v7031 = vadd.f32 %v6517, %v6825
  %v7032 = vadd.f32 %v6518, %v6828
  %v7033 = vadd.f32 %v6519, %v6833
  %v7034 = vadd.f32 %v6520, %v6836
  %v7035 = vadd.f32 %v6521, %v6841
  %v7036 = vadd.f32 %v6522, %v6844
  %v7037 = vadd.f32 %v6523, %v6849
  %v7038 = vadd.f32 %v6524, %v6852
  %v7039 = vadd.f32 %v6525, %v6857
  %v7040 = vadd.f32 %v6526, %v6860
  %v7041 = vadd.f32 %v6527, %v6865
  %v7042 = vadd.f32 %v6528, %v6868
  %v7043 = vadd.f32 %v6529, %v6873
  %v7044 = vadd.f32 %v6530, %v6876
  %v7045 = vadd.f32 %v6531, %v6881
  %v7046 = vadd.f32 %v6532, %v6884
  %v7047 = vadd.f32 %v6533, %v6889
  %v7048 = vadd.f32 %v6534, %v6892
  %v7049 = vadd.f32 %v6535, %v6897
  %v7050 = vadd.f32 %v6536, %v6900
  %v7051 = vadd.f32 %v6537, %v6905
  %v7052 = vadd.f32 %v6538, %v6908
  %v7053 = vadd.f32 %v6539, %v6913
  %v7054 = vadd.f32 %v6540, %v6916
  %v7055 = vadd.f32 %v6541, %v6921
  %v7056 = vadd.f32 %v6542, %v6924
  %v7057 = vadd.f32 %v6543, %v6929
  %v7058 = vadd.f32 %v6544, %v6932
  %v7059 = vadd.f32 %v6545, %v6937
  %v7060 = vadd.f32 %v6546, %v6940
  %v7061 = vadd.f32 %v6547, %v6945
  %v7062 = vadd.f32 %v6548, %v6948
  %v7063 = vadd.f32 %v6549, %v6953
  %v7064 = vadd.f32 %v6550, %v6956
  %v7065 = vadd.f32 %v6551, %v6961
  %v7066 = vadd.f32 %v6552, %v6964
  %v7067 = vadd.f32 %v6553, %v6969
  %v7068 = vadd.f32 %v6554, %v6972
  %v7069 = vadd.f32 %v6555, %v6977
  %v7070 = vadd.f32 %v6556, %v6980
  %v7071 = vadd.f32 %v6557, %v6985
  %v7072 = vadd.f32 %v6558, %v6988
  %v7073 = vadd.f32 %v6559, %v6993
  %v7074 = vadd.f32 %v6560, %v6996
  %v7075 = vadd.f32 %v6561, %v7001
  %v7076 = vadd.f32 %v6562, %v7004
  %v7077 = vadd.f32 %v6563, %v7009
  %v7078 = vadd.f32 %v6564, %v7012
  %v7079 = vld [vmem:[%s5087 + $0x8] sm:$0xff]
  %v7080 = vld [vmem:[%s5087 + $0x10] sm:$0xff]
  %v7081 = vld [vmem:[%s5087 + $0x28] sm:$0xff]
  %v7082 = vld [vmem:[%s5087 + $0x30] sm:$0xff]
  %v7083 = vld [vmem:[%s5087 + $0x48] sm:$0xff]
  %v7084 = vld [vmem:[%s5087 + $0x50] sm:$0xff]
  %v7085 = vld [vmem:[%s5087 + $0x68] sm:$0xff]
  %v7086 = vld [vmem:[%s5087 + $0x70] sm:$0xff]
  %v7087 = vld [vmem:[%s5087 + $0x88] sm:$0xff]
  %v7088 = vld [vmem:[%s5087 + $0x90] sm:$0xff]
  %v7089 = vld [vmem:[%s5087 + $0xa8] sm:$0xff]
  %v7090 = vld [vmem:[%s5087 + $0xb0] sm:$0xff]
  %v7091 = vld [vmem:[%s5087 + $0xc8] sm:$0xff]
  %v7092 = vld [vmem:[%s5087 + $0xd0] sm:$0xff]
  %v7093 = vld [vmem:[%s5087 + $0xe8] sm:$0xff]
  %v7094 = vld [vmem:[%s5087 + $0xf0] sm:$0xff]
  %v7095 = vld [vmem:[%s5087 + $0x108] sm:$0xff]
  %v7096 = vld [vmem:[%s5087 + $0x110] sm:$0xff]
  %v7097 = vld [vmem:[%s5087 + $0x128] sm:$0xff]
  %v7098 = vld [vmem:[%s5087 + $0x130] sm:$0xff]
  %v7099 = vld [vmem:[%s5087 + $0x148] sm:$0xff]
  %v7100 = vld [vmem:[%s5087 + $0x150] sm:$0xff]
  %v7101 = vld [vmem:[%s5087 + $0x168] sm:$0xff]
  %v7102 = vld [vmem:[%s5087 + $0x170] sm:$0xff]
  %v7103 = vld [vmem:[%s5087 + $0x188] sm:$0xff]
  %v7104 = vld [vmem:[%s5087 + $0x190] sm:$0xff]
  %v7105 = vld [vmem:[%s5087 + $0x1a8] sm:$0xff]
  %v7106 = vld [vmem:[%s5087 + $0x1b0] sm:$0xff]
  %v7107 = vld [vmem:[%s5087 + $0x1c8] sm:$0xff]
  %v7108 = vld [vmem:[%s5087 + $0x1d0] sm:$0xff]
  %v7109 = vld [vmem:[%s5087 + $0x1e8] sm:$0xff]
  %v7110 = vld [vmem:[%s5087 + $0x1f0] sm:$0xff]
  %v7111 = vld [vmem:[%s5087 + $0x248] sm:$0xff]
  %v7112 = vld [vmem:[%s5087 + $0x250] sm:$0xff]
  %v7113 = vld [vmem:[%s5087 + $0x268] sm:$0xff]
  %v7114 = vld [vmem:[%s5087 + $0x270] sm:$0xff]
  %v7115 = vld [vmem:[%s5087 + $0x288] sm:$0xff]
  %v7116 = vld [vmem:[%s5087 + $0x290] sm:$0xff]
  %v7117 = vld [vmem:[%s5087 + $0x2a8] sm:$0xff]
  %v7118 = vld [vmem:[%s5087 + $0x2b0] sm:$0xff]
  %v7119 = vld [vmem:[%s5087 + $0x2c8] sm:$0xff]
  %v7120 = vld [vmem:[%s5087 + $0x2d0] sm:$0xff]
  %v7121 = vld [vmem:[%s5087 + $0x2e8] sm:$0xff]
  %v7122 = vld [vmem:[%s5087 + $0x2f0] sm:$0xff]
  %v7123 = vld [vmem:[%s5087 + $0x308] sm:$0xff]
  %v7124 = vld [vmem:[%s5087 + $0x310] sm:$0xff]
  %v7125 = vld [vmem:[%s5087 + $0x328] sm:$0xff]
  %v7126 = vld [vmem:[%s5087 + $0x330] sm:$0xff]
  %v7127 = vld [vmem:[%s5087 + $0x348] sm:$0xff]
  %v7128 = vld [vmem:[%s5087 + $0x350] sm:$0xff]
  %v7129 = vld [vmem:[%s5087 + $0x368] sm:$0xff]
  %v7130 = vld [vmem:[%s5087 + $0x370] sm:$0xff]
  %v7131 = vld [vmem:[%s5087 + $0x388] sm:$0xff]
  %v7132 = vld [vmem:[%s5087 + $0x390] sm:$0xff]
  %v7133 = vld [vmem:[%s5087 + $0x3a8] sm:$0xff]
  %v7134 = vld [vmem:[%s5087 + $0x3b0] sm:$0xff]
  %v7135 = vld [vmem:[%s5087 + $0x3c8] sm:$0xff]
  %v7136 = vld [vmem:[%s5087 + $0x3d0] sm:$0xff]
  %v7137 = vld [vmem:[%s5087 + $0x3e8] sm:$0xff]
  %v7138 = vld [vmem:[%s5087 + $0x3f0] sm:$0xff]
  %v7139 = vld [vmem:[%s5087 + $0x408] sm:$0xff]
  %v7140 = vld [vmem:[%s5087 + $0x410] sm:$0xff]
  %v7141 = vld [vmem:[%s5087 + $0x428] sm:$0xff]
  %v7142 = vld [vmem:[%s5087 + $0x430] sm:$0xff]
  %v7143 = vpack.c.bf16 %v7080, %v7079
  %v7144 = vpack.c.bf16 %v7082, %v7081
  %v7145 = vpack.c.bf16 %v7084, %v7083
  %v7146 = vpack.c.bf16 %v7086, %v7085
  %v7147 = vpack.c.bf16 %v7088, %v7087
  %v7148 = vpack.c.bf16 %v7090, %v7089
  %v7149 = vpack.c.bf16 %v7092, %v7091
  %v7150 = vpack.c.bf16 %v7094, %v7093
  %v7151 = vpack.c.bf16 %v7096, %v7095
  %v7152 = vpack.c.bf16 %v7098, %v7097
  %v7153 = vpack.c.bf16 %v7100, %v7099
  %v7154 = vpack.c.bf16 %v7102, %v7101
  %v7155 = vpack.c.bf16 %v7104, %v7103
  %v7156 = vpack.c.bf16 %v7106, %v7105
  %v7157 = vpack.c.bf16 %v7108, %v7107
  %v7158 = vpack.c.bf16 %v7110, %v7109
  %v7159 = vpack.c.bf16 %v7112, %v7111
  %v7160 = vpack.c.bf16 %v7114, %v7113
  %v7161 = vpack.c.bf16 %v7116, %v7115
  %v7162 = vpack.c.bf16 %v7118, %v7117
  %v7163 = vpack.c.bf16 %v7120, %v7119
  %v7164 = vpack.c.bf16 %v7122, %v7121
  %v7165 = vpack.c.bf16 %v7124, %v7123
  %v7166 = vpack.c.bf16 %v7126, %v7125
  %v7167 = vpack.c.bf16 %v7128, %v7127
  %v7168 = vpack.c.bf16 %v7130, %v7129
  %v7169 = vpack.c.bf16 %v7132, %v7131
  %v7170 = vpack.c.bf16 %v7134, %v7133
  %v7171 = vpack.c.bf16 %v7136, %v7135
  %v7172 = vpack.c.bf16 %v7138, %v7137
  %v7173 = vpack.c.bf16 %v7140, %v7139
  %v7174 = vpack.c.bf16 %v7142, %v7141
  %s7175 = scalar_lea.vmem %s2, 256
  %v7176 = vld [vmem:[%s7175] sm:$0xf]
  %v7177 = vld [vmem:[%s7175 + $0x4] sm:$0xf]
  %v7178 = vld [vmem:[%s7175 + $0x8] sm:$0xf]
  %v7179 = vld [vmem:[%s7175 + $0xc] sm:$0xf]
  %v7180 = vld [vmem:[%s7175 + $0x10] sm:$0xf]
  %v7181 = vld [vmem:[%s7175 + $0x14] sm:$0xf]
  %v7182 = vld [vmem:[%s7175 + $0x18] sm:$0xf]
  %v7183 = vld [vmem:[%s7175 + $0x1c] sm:$0xf]
  %v7184 = vld [vmem:[%s7175 + $0x20] sm:$0xf]
  %v7185 = vld [vmem:[%s7175 + $0x24] sm:$0xf]
  %v7186 = vld [vmem:[%s7175 + $0x28] sm:$0xf]
  %v7187 = vld [vmem:[%s7175 + $0x2c] sm:$0xf]
  %v7188 = vld [vmem:[%s7175 + $0x30] sm:$0xf]
  %v7189 = vld [vmem:[%s7175 + $0x34] sm:$0xf]
  %v7190 = vld [vmem:[%s7175 + $0x38] sm:$0xf]
  %v7191 = vld [vmem:[%s7175 + $0x3c] sm:$0xf]
  %v7208 = vunpack.c.l.b16 %v7176
  %v7209 = vunpack.c.l.b16 %v7177
  %v7210 = vunpack.c.l.b16 %v7178
  %v7211 = vunpack.c.l.b16 %v7179
  %v7212 = vunpack.c.l.b16 %v7180
  %v7213 = vunpack.c.l.b16 %v7181
  %v7214 = vunpack.c.l.b16 %v7182
  %v7215 = vunpack.c.l.b16 %v7183
  %v7216 = vunpack.c.l.b16 %v7184
  %v7217 = vunpack.c.l.b16 %v7185
  %v7218 = vunpack.c.l.b16 %v7186
  %v7219 = vunpack.c.l.b16 %v7187
  %v7220 = vunpack.c.l.b16 %v7188
  %v7221 = vunpack.c.l.b16 %v7189
  %v7222 = vunpack.c.l.b16 %v7190
  %v7223 = vunpack.c.l.b16 %v7191
  %v7224 = vpack.c.b16 %v7209, %v7208
  %v7225 = vpack.c.b16 %v7211, %v7210
  %v7226 = vpack.c.b16 %v7213, %v7212
  %v7227 = vpack.c.b16 %v7215, %v7214
  %v7228 = vpack.c.b16 %v7217, %v7216
  %v7229 = vpack.c.b16 %v7219, %v7218
  %v7230 = vpack.c.b16 %v7221, %v7220
  %v7231 = vpack.c.b16 %v7223, %v7222
  %7240 = vmatprep.subr.bf16.mxu0 0
  %7241 = vmatpush1.bf16.msra.mxu0 %v7224
  %7242 = vmatprep.subr.bf16.mxu0 0
  %7243 = vmatpush1.bf16.msra.mxu0 %v7225
  %7244 = vmatprep.subr.bf16.mxu0 0
  %7245 = vmatpush1.bf16.msra.mxu0 %v7226
  %7246 = vmatprep.subr.bf16.mxu0 0
  %7247 = vmatpush1.bf16.msra.mxu0 %v7227
  %7248 = vmatprep.subr.bf16.mxu0 0
  %7249 = vmatpush1.bf16.msra.mxu0 %v7228
  %7250 = vmatprep.subr.bf16.mxu0 0
  %7251 = vmatpush1.bf16.msra.mxu0 %v7229
  %7252 = vmatprep.subr.bf16.mxu0 0
  %7253 = vmatpush1.bf16.msra.mxu0 %v7230
  %7254 = vmatprep.subr.bf16.mxu0 0
  %7255 = vmatpush1.bf16.msra.mxu0 %v7231
  %7256 = vmatprep.subr.bf16.mxu0 0
  %7257 = vmatpush1.bf16.msra.mxu0 0
  %7258 = vmatprep.subr.bf16.mxu0 0
  %7259 = vmatpush1.bf16.msra.mxu0 0
  %7260 = vmatprep.subr.bf16.mxu0 0
  %7261 = vmatpush1.bf16.msra.mxu0 0
  %7262 = vmatprep.subr.bf16.mxu0 0
  %7263 = vmatpush1.bf16.msra.mxu0 0
  %7264 = vmatprep.subr.bf16.mxu0 0
  %7265 = vmatpush1.bf16.msra.mxu0 0
  %7266 = vmatprep.subr.bf16.mxu0 0
  %7267 = vmatpush1.bf16.msra.mxu0 0
  %7268 = vmatprep.subr.bf16.mxu0 0
  %7269 = vmatpush1.bf16.msra.mxu0 0
  %7270 = vmatprep.subr.bf16.mxu0 0
  %7271 = vmatpush1.bf16.msra.mxu0 0
  %7272 = vmatprep.mubr.bf16.mxu0 0
  %7273 = vmatmul.mubr.bf16.gmra.mrb[0].mxu0 %v7143
  %v7274 = vpop.f32.mrb[0].mxu0
  %v7275 = vadd.f32 0.0, %v7274
  %v7276 = vpop.f32.mrb[0].mxu0
  %v7277 = vpop.f32.mrb[0].mxu0
  %v7278 = vadd.f32 0.0, %v7277
  %v7279 = vpop.f32.mrb[0].mxu0
  %7280 = vmatprep.mubr.bf16.mxu0 0
  %7281 = vmatmul.mubr.bf16.gmra.mrb[0].mxu0 %v7144
  %v7282 = vpop.f32.mrb[0].mxu0
  %v7283 = vadd.f32 0.0, %v7282
  %v7284 = vpop.f32.mrb[0].mxu0
  %v7285 = vpop.f32.mrb[0].mxu0
  %v7286 = vadd.f32 0.0, %v7285
  %v7287 = vpop.f32.mrb[0].mxu0
  %7288 = vmatprep.mubr.bf16.mxu0 0
  %7289 = vmatmul.mubr.bf16.gmra.mrb[0].mxu0 %v7145
  %v7290 = vpop.f32.mrb[0].mxu0
  %v7291 = vadd.f32 0.0, %v7290
  %v7292 = vpop.f32.mrb[0].mxu0
  %v7293 = vpop.f32.mrb[0].mxu0
  %v7294 = vadd.f32 0.0, %v7293
  %v7295 = vpop.f32.mrb[0].mxu0
  %7296 = vmatprep.mubr.bf16.mxu0 0
  %7297 = vmatmul.mubr.bf16.gmra.mrb[0].mxu0 %v7146
  %v7298 = vpop.f32.mrb[0].mxu0
  %v7299 = vadd.f32 0.0, %v7298
  %v7300 = vpop.f32.mrb[0].mxu0
  %v7301 = vpop.f32.mrb[0].mxu0
  %v7302 = vadd.f32 0.0, %v7301
  %v7303 = vpop.f32.mrb[0].mxu0
  %7304 = vmatprep.mubr.bf16.mxu0 0
  %7305 = vmatmul.mubr.bf16.gmra.mrb[0].mxu0 %v7147
  %v7306 = vpop.f32.mrb[0].mxu0
  %v7307 = vadd.f32 0.0, %v7306
  %v7308 = vpop.f32.mrb[0].mxu0
  %v7309 = vpop.f32.mrb[0].mxu0
  %v7310 = vadd.f32 0.0, %v7309
  %v7311 = vpop.f32.mrb[0].mxu0
  %7312 = vmatprep.mubr.bf16.mxu0 0
  %7313 = vmatmul.mubr.bf16.gmra.mrb[0].mxu0 %v7148
  %v7314 = vpop.f32.mrb[0].mxu0
  %v7315 = vadd.f32 0.0, %v7314
  %v7316 = vpop.f32.mrb[0].mxu0
  %v7317 = vpop.f32.mrb[0].mxu0
  %v7318 = vadd.f32 0.0, %v7317
  %v7319 = vpop.f32.mrb[0].mxu0
  %7320 = vmatprep.mubr.bf16.mxu0 0
  %7321 = vmatmul.mubr.bf16.gmra.mrb[0].mxu0 %v7149
  %v7322 = vpop.f32.mrb[0].mxu0
  %v7323 = vadd.f32 0.0, %v7322
  %v7324 = vpop.f32.mrb[0].mxu0
  %v7325 = vpop.f32.mrb[0].mxu0
  %v7326 = vadd.f32 0.0, %v7325
  %v7327 = vpop.f32.mrb[0].mxu0
  %7328 = vmatprep.mubr.bf16.mxu0 0
  %7329 = vmatmul.mubr.bf16.gmra.mrb[0].mxu0 %v7150
  %v7330 = vpop.f32.mrb[0].mxu0
  %v7331 = vadd.f32 0.0, %v7330
  %v7332 = vpop.f32.mrb[0].mxu0
  %v7333 = vpop.f32.mrb[0].mxu0
  %v7334 = vadd.f32 0.0, %v7333
  %v7335 = vpop.f32.mrb[0].mxu0
  %7336 = vmatprep.mubr.bf16.mxu0 0
  %7337 = vmatmul.mubr.bf16.gmra.mrb[0].mxu0 %v7151
  %v7338 = vpop.f32.mrb[0].mxu0
  %v7339 = vadd.f32 0.0, %v7338
  %v7340 = vpop.f32.mrb[0].mxu0
  %v7341 = vpop.f32.mrb[0].mxu0
  %v7342 = vadd.f32 0.0, %v7341
  %v7343 = vpop.f32.mrb[0].mxu0
  %7344 = vmatprep.mubr.bf16.mxu0 0
  %7345 = vmatmul.mubr.bf16.gmra.mrb[0].mxu0 %v7152
  %v7346 = vpop.f32.mrb[0].mxu0
  %v7347 = vadd.f32 0.0, %v7346
  %v7348 = vpop.f32.mrb[0].mxu0
  %v7349 = vpop.f32.mrb[0].mxu0
  %v7350 = vadd.f32 0.0, %v7349
  %v7351 = vpop.f32.mrb[0].mxu0
  %7352 = vmatprep.mubr.bf16.mxu0 0
  %7353 = vmatmul.mubr.bf16.gmra.mrb[0].mxu0 %v7153
  %v7354 = vpop.f32.mrb[0].mxu0
  %v7355 = vadd.f32 0.0, %v7354
  %v7356 = vpop.f32.mrb[0].mxu0
  %v7357 = vpop.f32.mrb[0].mxu0
  %v7358 = vadd.f32 0.0, %v7357
  %v7359 = vpop.f32.mrb[0].mxu0
  %7360 = vmatprep.mubr.bf16.mxu0 0
  %7361 = vmatmul.mubr.bf16.gmra.mrb[0].mxu0 %v7154
  %v7362 = vpop.f32.mrb[0].mxu0
  %v7363 = vadd.f32 0.0, %v7362
  %v7364 = vpop.f32.mrb[0].mxu0
  %v7365 = vpop.f32.mrb[0].mxu0
  %v7366 = vadd.f32 0.0, %v7365
  %v7367 = vpop.f32.mrb[0].mxu0
  %7368 = vmatprep.mubr.bf16.mxu0 0
  %7369 = vmatmul.mubr.bf16.gmra.mrb[0].mxu0 %v7155
  %v7370 = vpop.f32.mrb[0].mxu0
  %v7371 = vadd.f32 0.0, %v7370
  %v7372 = vpop.f32.mrb[0].mxu0
  %v7373 = vpop.f32.mrb[0].mxu0
  %v7374 = vadd.f32 0.0, %v7373
  %v7375 = vpop.f32.mrb[0].mxu0
  %7376 = vmatprep.mubr.bf16.mxu0 0
  %7377 = vmatmul.mubr.bf16.gmra.mrb[0].mxu0 %v7156
  %v7378 = vpop.f32.mrb[0].mxu0
  %v7379 = vadd.f32 0.0, %v7378
  %v7380 = vpop.f32.mrb[0].mxu0
  %v7381 = vpop.f32.mrb[0].mxu0
  %v7382 = vadd.f32 0.0, %v7381
  %v7383 = vpop.f32.mrb[0].mxu0
  %7384 = vmatprep.mubr.bf16.mxu0 0
  %7385 = vmatmul.mubr.bf16.gmra.mrb[0].mxu0 %v7157
  %v7386 = vpop.f32.mrb[0].mxu0
  %v7387 = vadd.f32 0.0, %v7386
  %v7388 = vpop.f32.mrb[0].mxu0
  %v7389 = vpop.f32.mrb[0].mxu0
  %v7390 = vadd.f32 0.0, %v7389
  %v7391 = vpop.f32.mrb[0].mxu0
  %7392 = vmatprep.mubr.bf16.mxu0 0
  %7393 = vmatmul.mubr.bf16.gmra.mrb[0].mxu0 %v7158
  %v7394 = vpop.f32.mrb[0].mxu0
  %v7395 = vadd.f32 0.0, %v7394
  %v7396 = vpop.f32.mrb[0].mxu0
  %v7397 = vpop.f32.mrb[0].mxu0
  %v7398 = vadd.f32 0.0, %v7397
  %v7399 = vpop.f32.mrb[0].mxu0
  %7400 = vmatprep.mubr.bf16.mxu0 0
  %7401 = vmatmul.mubr.bf16.gmra.mrb[0].mxu0 %v7159
  %v7402 = vpop.f32.mrb[0].mxu0
  %v7403 = vadd.f32 0.0, %v7402
  %v7404 = vpop.f32.mrb[0].mxu0
  %v7405 = vpop.f32.mrb[0].mxu0
  %v7406 = vadd.f32 0.0, %v7405
  %v7407 = vpop.f32.mrb[0].mxu0
  %7408 = vmatprep.mubr.bf16.mxu0 0
  %7409 = vmatmul.mubr.bf16.gmra.mrb[0].mxu0 %v7160
  %v7410 = vpop.f32.mrb[0].mxu0
  %v7411 = vadd.f32 0.0, %v7410
  %v7412 = vpop.f32.mrb[0].mxu0
  %v7413 = vpop.f32.mrb[0].mxu0
  %v7414 = vadd.f32 0.0, %v7413
  %v7415 = vpop.f32.mrb[0].mxu0
  %7416 = vmatprep.mubr.bf16.mxu0 0
  %7417 = vmatmul.mubr.bf16.gmra.mrb[0].mxu0 %v7161
  %v7418 = vpop.f32.mrb[0].mxu0
  %v7419 = vadd.f32 0.0, %v7418
  %v7420 = vpop.f32.mrb[0].mxu0
  %v7421 = vpop.f32.mrb[0].mxu0
  %v7422 = vadd.f32 0.0, %v7421
  %v7423 = vpop.f32.mrb[0].mxu0
  %7424 = vmatprep.mubr.bf16.mxu0 0
  %7425 = vmatmul.mubr.bf16.gmra.mrb[0].mxu0 %v7162
  %v7426 = vpop.f32.mrb[0].mxu0
  %v7427 = vadd.f32 0.0, %v7426
  %v7428 = vpop.f32.mrb[0].mxu0
  %v7429 = vpop.f32.mrb[0].mxu0
  %v7430 = vadd.f32 0.0, %v7429
  %v7431 = vpop.f32.mrb[0].mxu0
  %7432 = vmatprep.mubr.bf16.mxu0 0
  %7433 = vmatmul.mubr.bf16.gmra.mrb[0].mxu0 %v7163
  %v7434 = vpop.f32.mrb[0].mxu0
  %v7435 = vadd.f32 0.0, %v7434
  %v7436 = vpop.f32.mrb[0].mxu0
  %v7437 = vpop.f32.mrb[0].mxu0
  %v7438 = vadd.f32 0.0, %v7437
  %v7439 = vpop.f32.mrb[0].mxu0
  %7440 = vmatprep.mubr.bf16.mxu0 0
  %7441 = vmatmul.mubr.bf16.gmra.mrb[0].mxu0 %v7164
  %v7442 = vpop.f32.mrb[0].mxu0
  %v7443 = vadd.f32 0.0, %v7442
  %v7444 = vpop.f32.mrb[0].mxu0
  %v7445 = vpop.f32.mrb[0].mxu0
  %v7446 = vadd.f32 0.0, %v7445
  %v7447 = vpop.f32.mrb[0].mxu0
  %7448 = vmatprep.mubr.bf16.mxu0 0
  %7449 = vmatmul.mubr.bf16.gmra.mrb[0].mxu0 %v7165
  %v7450 = vpop.f32.mrb[0].mxu0
  %v7451 = vadd.f32 0.0, %v7450
  %v7452 = vpop.f32.mrb[0].mxu0
  %v7453 = vpop.f32.mrb[0].mxu0
  %v7454 = vadd.f32 0.0, %v7453
  %v7455 = vpop.f32.mrb[0].mxu0
  %7456 = vmatprep.mubr.bf16.mxu0 0
  %7457 = vmatmul.mubr.bf16.gmra.mrb[0].mxu0 %v7166
  %v7458 = vpop.f32.mrb[0].mxu0
  %v7459 = vadd.f32 0.0, %v7458
  %v7460 = vpop.f32.mrb[0].mxu0
  %v7461 = vpop.f32.mrb[0].mxu0
  %v7462 = vadd.f32 0.0, %v7461
  %v7463 = vpop.f32.mrb[0].mxu0
  %7464 = vmatprep.mubr.bf16.mxu0 0
  %7465 = vmatmul.mubr.bf16.gmra.mrb[0].mxu0 %v7167
  %v7466 = vpop.f32.mrb[0].mxu0
  %v7467 = vadd.f32 0.0, %v7466
  %v7468 = vpop.f32.mrb[0].mxu0
  %v7469 = vpop.f32.mrb[0].mxu0
  %v7470 = vadd.f32 0.0, %v7469
  %v7471 = vpop.f32.mrb[0].mxu0
  %7472 = vmatprep.mubr.bf16.mxu0 0
  %7473 = vmatmul.mubr.bf16.gmra.mrb[0].mxu0 %v7168
  %v7474 = vpop.f32.mrb[0].mxu0
  %v7475 = vadd.f32 0.0, %v7474
  %v7476 = vpop.f32.mrb[0].mxu0
  %v7477 = vpop.f32.mrb[0].mxu0
  %v7478 = vadd.f32 0.0, %v7477
  %v7479 = vpop.f32.mrb[0].mxu0
  %7480 = vmatprep.mubr.bf16.mxu0 0
  %7481 = vmatmul.mubr.bf16.gmra.mrb[0].mxu0 %v7169
  %v7482 = vpop.f32.mrb[0].mxu0
  %v7483 = vadd.f32 0.0, %v7482
  %v7484 = vpop.f32.mrb[0].mxu0
  %v7485 = vpop.f32.mrb[0].mxu0
  %v7486 = vadd.f32 0.0, %v7485
  %v7487 = vpop.f32.mrb[0].mxu0
  %7488 = vmatprep.mubr.bf16.mxu0 0
  %7489 = vmatmul.mubr.bf16.gmra.mrb[0].mxu0 %v7170
  %v7490 = vpop.f32.mrb[0].mxu0
  %v7491 = vadd.f32 0.0, %v7490
  %v7492 = vpop.f32.mrb[0].mxu0
  %v7493 = vpop.f32.mrb[0].mxu0
  %v7494 = vadd.f32 0.0, %v7493
  %v7495 = vpop.f32.mrb[0].mxu0
  %7496 = vmatprep.mubr.bf16.mxu0 0
  %7497 = vmatmul.mubr.bf16.gmra.mrb[0].mxu0 %v7171
  %v7498 = vpop.f32.mrb[0].mxu0
  %v7499 = vadd.f32 0.0, %v7498
  %v7500 = vpop.f32.mrb[0].mxu0
  %v7501 = vpop.f32.mrb[0].mxu0
  %v7502 = vadd.f32 0.0, %v7501
  %v7503 = vpop.f32.mrb[0].mxu0
  %7504 = vmatprep.mubr.bf16.mxu0 0
  %7505 = vmatmul.mubr.bf16.gmra.mrb[0].mxu0 %v7172
  %v7506 = vpop.f32.mrb[0].mxu0
  %v7507 = vadd.f32 0.0, %v7506
  %v7508 = vpop.f32.mrb[0].mxu0
  %v7509 = vpop.f32.mrb[0].mxu0
  %v7510 = vadd.f32 0.0, %v7509
  %v7511 = vpop.f32.mrb[0].mxu0
  %7512 = vmatprep.mubr.bf16.mxu0 0
  %7513 = vmatmul.mubr.bf16.gmra.mrb[0].mxu0 %v7173
  %v7514 = vpop.f32.mrb[0].mxu0
  %v7515 = vadd.f32 0.0, %v7514
  %v7516 = vpop.f32.mrb[0].mxu0
  %v7517 = vpop.f32.mrb[0].mxu0
  %v7518 = vadd.f32 0.0, %v7517
  %v7519 = vpop.f32.mrb[0].mxu0
  %7520 = vmatprep.mubr.bf16.mxu0 0
  %7521 = vmatmul.mubr.bf16.gmra.mrb[0].mxu0 %v7174
  %v7522 = vpop.f32.mrb[0].mxu0
  %v7523 = vadd.f32 0.0, %v7522
  %v7524 = vpop.f32.mrb[0].mxu0
  %v7525 = vpop.f32.mrb[0].mxu0
  %v7526 = vadd.f32 0.0, %v7525
  %v7527 = vpop.f32.mrb[0].mxu0
  %7528 = vdwg.mxu0
  %v7529 = vadd.f32 %v7015, %v7275
  %v7530 = vadd.f32 %v7016, %v7278
  %v7531 = vadd.f32 %v7017, %v7283
  %v7532 = vadd.f32 %v7018, %v7286
  %v7533 = vadd.f32 %v7019, %v7291
  %v7534 = vadd.f32 %v7020, %v7294
  %v7535 = vadd.f32 %v7021, %v7299
  %v7536 = vadd.f32 %v7022, %v7302
  %v7537 = vadd.f32 %v7023, %v7307
  %v7538 = vadd.f32 %v7024, %v7310
  %v7539 = vadd.f32 %v7025, %v7315
  %v7540 = vadd.f32 %v7026, %v7318
  %v7541 = vadd.f32 %v7027, %v7323
  %v7542 = vadd.f32 %v7028, %v7326
  %v7543 = vadd.f32 %v7029, %v7331
  %v7544 = vadd.f32 %v7030, %v7334
  %v7545 = vadd.f32 %v7031, %v7339
  %v7546 = vadd.f32 %v7032, %v7342
  %v7547 = vadd.f32 %v7033, %v7347
  %v7548 = vadd.f32 %v7034, %v7350
  %v7549 = vadd.f32 %v7035, %v7355
  %v7550 = vadd.f32 %v7036, %v7358
  %v7551 = vadd.f32 %v7037, %v7363
  %v7552 = vadd.f32 %v7038, %v7366
  %v7553 = vadd.f32 %v7039, %v7371
  %v7554 = vadd.f32 %v7040, %v7374
  %v7555 = vadd.f32 %v7041, %v7379
  %v7556 = vadd.f32 %v7042, %v7382
  %v7557 = vadd.f32 %v7043, %v7387
  %v7558 = vadd.f32 %v7044, %v7390
  %v7559 = vadd.f32 %v7045, %v7395
  %v7560 = vadd.f32 %v7046, %v7398
  %v7561 = vadd.f32 %v7047, %v7403
  %v7562 = vadd.f32 %v7048, %v7406
  %v7563 = vadd.f32 %v7049, %v7411
  %v7564 = vadd.f32 %v7050, %v7414
  %v7565 = vadd.f32 %v7051, %v7419
  %v7566 = vadd.f32 %v7052, %v7422
  %v7567 = vadd.f32 %v7053, %v7427
  %v7568 = vadd.f32 %v7054, %v7430
  %v7569 = vadd.f32 %v7055, %v7435
  %v7570 = vadd.f32 %v7056, %v7438
  %v7571 = vadd.f32 %v7057, %v7443
  %v7572 = vadd.f32 %v7058, %v7446
  %v7573 = vadd.f32 %v7059, %v7451
  %v7574 = vadd.f32 %v7060, %v7454
  %v7575 = vadd.f32 %v7061, %v7459
  %v7576 = vadd.f32 %v7062, %v7462
  %v7577 = vadd.f32 %v7063, %v7467
  %v7578 = vadd.f32 %v7064, %v7470
  %v7579 = vadd.f32 %v7065, %v7475
  %v7580 = vadd.f32 %v7066, %v7478
  %v7581 = vadd.f32 %v7067, %v7483
  %v7582 = vadd.f32 %v7068, %v7486
  %v7583 = vadd.f32 %v7069, %v7491
  %v7584 = vadd.f32 %v7070, %v7494
  %v7585 = vadd.f32 %v7071, %v7499
  %v7586 = vadd.f32 %v7072, %v7502
  %v7587 = vadd.f32 %v7073, %v7507
  %v7588 = vadd.f32 %v7074, %v7510
  %v7589 = vadd.f32 %v7075, %v7515
  %v7590 = vadd.f32 %v7076, %v7518
  %v7591 = vadd.f32 %v7077, %v7523
  %v7592 = vadd.f32 %v7078, %v7526
  %v7593 = vld [vmem:[%s5087 + $0x9] sm:$0xff]
  %v7594 = vld [vmem:[%s5087 + $0x11] sm:$0xff]
  %v7595 = vld [vmem:[%s5087 + $0x29] sm:$0xff]
  %v7596 = vld [vmem:[%s5087 + $0x31] sm:$0xff]
  %v7597 = vld [vmem:[%s5087 + $0x49] sm:$0xff]
  %v7598 = vld [vmem:[%s5087 + $0x51] sm:$0xff]
  %v7599 = vld [vmem:[%s5087 + $0x69] sm:$0xff]
  %v7600 = vld [vmem:[%s5087 + $0x71] sm:$0xff]
  %v7601 = vld [vmem:[%s5087 + $0x89] sm:$0xff]
  %v7602 = vld [vmem:[%s5087 + $0x91] sm:$0xff]
  %v7603 = vld [vmem:[%s5087 + $0xa9] sm:$0xff]
  %v7604 = vld [vmem:[%s5087 + $0xb1] sm:$0xff]
  %v7605 = vld [vmem:[%s5087 + $0xc9] sm:$0xff]
  %v7606 = vld [vmem:[%s5087 + $0xd1] sm:$0xff]
  %v7607 = vld [vmem:[%s5087 + $0xe9] sm:$0xff]
  %v7608 = vld [vmem:[%s5087 + $0xf1] sm:$0xff]
  %v7609 = vld [vmem:[%s5087 + $0x109] sm:$0xff]
  %v7610 = vld [vmem:[%s5087 + $0x111] sm:$0xff]
  %v7611 = vld [vmem:[%s5087 + $0x129] sm:$0xff]
  %v7612 = vld [vmem:[%s5087 + $0x131] sm:$0xff]
  %v7613 = vld [vmem:[%s5087 + $0x149] sm:$0xff]
  %v7614 = vld [vmem:[%s5087 + $0x151] sm:$0xff]
  %v7615 = vld [vmem:[%s5087 + $0x169] sm:$0xff]
  %v7616 = vld [vmem:[%s5087 + $0x171] sm:$0xff]
  %v7617 = vld [vmem:[%s5087 + $0x189] sm:$0xff]
  %v7618 = vld [vmem:[%s5087 + $0x191] sm:$0xff]
  %v7619 = vld [vmem:[%s5087 + $0x1a9] sm:$0xff]
  %v7620 = vld [vmem:[%s5087 + $0x1b1] sm:$0xff]
  %v7621 = vld [vmem:[%s5087 + $0x1c9] sm:$0xff]
  %v7622 = vld [vmem:[%s5087 + $0x1d1] sm:$0xff]
  %v7623 = vld [vmem:[%s5087 + $0x1e9] sm:$0xff]
  %v7624 = vld [vmem:[%s5087 + $0x1f1] sm:$0xff]
  %v7625 = vld [vmem:[%s5087 + $0x249] sm:$0xff]
  %v7626 = vld [vmem:[%s5087 + $0x251] sm:$0xff]
  %v7627 = vld [vmem:[%s5087 + $0x269] sm:$0xff]
  %v7628 = vld [vmem:[%s5087 + $0x271] sm:$0xff]
  %v7629 = vld [vmem:[%s5087 + $0x289] sm:$0xff]
  %v7630 = vld [vmem:[%s5087 + $0x291] sm:$0xff]
  %v7631 = vld [vmem:[%s5087 + $0x2a9] sm:$0xff]
  %v7632 = vld [vmem:[%s5087 + $0x2b1] sm:$0xff]
  %v7633 = vld [vmem:[%s5087 + $0x2c9] sm:$0xff]
  %v7634 = vld [vmem:[%s5087 + $0x2d1] sm:$0xff]
  %v7635 = vld [vmem:[%s5087 + $0x2e9] sm:$0xff]
  %v7636 = vld [vmem:[%s5087 + $0x2f1] sm:$0xff]
  %v7637 = vld [vmem:[%s5087 + $0x309] sm:$0xff]
  %v7638 = vld [vmem:[%s5087 + $0x311] sm:$0xff]
  %v7639 = vld [vmem:[%s5087 + $0x329] sm:$0xff]
  %v7640 = vld [vmem:[%s5087 + $0x331] sm:$0xff]
  %v7641 = vld [vmem:[%s5087 + $0x349] sm:$0xff]
  %v7642 = vld [vmem:[%s5087 + $0x351] sm:$0xff]
  %v7643 = vld [vmem:[%s5087 + $0x369] sm:$0xff]
  %v7644 = vld [vmem:[%s5087 + $0x371] sm:$0xff]
  %v7645 = vld [vmem:[%s5087 + $0x389] sm:$0xff]
  %v7646 = vld [vmem:[%s5087 + $0x391] sm:$0xff]
  %v7647 = vld [vmem:[%s5087 + $0x3a9] sm:$0xff]
  %v7648 = vld [vmem:[%s5087 + $0x3b1] sm:$0xff]
  %v7649 = vld [vmem:[%s5087 + $0x3c9] sm:$0xff]
  %v7650 = vld [vmem:[%s5087 + $0x3d1] sm:$0xff]
  %v7651 = vld [vmem:[%s5087 + $0x3e9] sm:$0xff]
  %v7652 = vld [vmem:[%s5087 + $0x3f1] sm:$0xff]
  %v7653 = vld [vmem:[%s5087 + $0x409] sm:$0xff]
  %v7654 = vld [vmem:[%s5087 + $0x411] sm:$0xff]
  %v7655 = vld [vmem:[%s5087 + $0x429] sm:$0xff]
  %v7656 = vld [vmem:[%s5087 + $0x431] sm:$0xff]
  %v7657 = vpack.c.bf16 %v7594, %v7593
  %v7658 = vpack.c.bf16 %v7596, %v7595
  %v7659 = vpack.c.bf16 %v7598, %v7597
  %v7660 = vpack.c.bf16 %v7600, %v7599
  %v7661 = vpack.c.bf16 %v7602, %v7601
  %v7662 = vpack.c.bf16 %v7604, %v7603
  %v7663 = vpack.c.bf16 %v7606, %v7605
  %v7664 = vpack.c.bf16 %v7608, %v7607
  %v7665 = vpack.c.bf16 %v7610, %v7609
  %v7666 = vpack.c.bf16 %v7612, %v7611
  %v7667 = vpack.c.bf16 %v7614, %v7613
  %v7668 = vpack.c.bf16 %v7616, %v7615
  %v7669 = vpack.c.bf16 %v7618, %v7617
  %v7670 = vpack.c.bf16 %v7620, %v7619
  %v7671 = vpack.c.bf16 %v7622, %v7621
  %v7672 = vpack.c.bf16 %v7624, %v7623
  %v7673 = vpack.c.bf16 %v7626, %v7625
  %v7674 = vpack.c.bf16 %v7628, %v7627
  %v7675 = vpack.c.bf16 %v7630, %v7629
  %v7676 = vpack.c.bf16 %v7632, %v7631
  %v7677 = vpack.c.bf16 %v7634, %v7633
  %v7678 = vpack.c.bf16 %v7636, %v7635
  %v7679 = vpack.c.bf16 %v7638, %v7637
  %v7680 = vpack.c.bf16 %v7640, %v7639
  %v7681 = vpack.c.bf16 %v7642, %v7641
  %v7682 = vpack.c.bf16 %v7644, %v7643
  %v7683 = vpack.c.bf16 %v7646, %v7645
  %v7684 = vpack.c.bf16 %v7648, %v7647
  %v7685 = vpack.c.bf16 %v7650, %v7649
  %v7686 = vpack.c.bf16 %v7652, %v7651
  %v7687 = vpack.c.bf16 %v7654, %v7653
  %v7688 = vpack.c.bf16 %v7656, %v7655
  %s7689 = scalar_lea.vmem %s2, 320
  %v7690 = vld [vmem:[%s7689] sm:$0xf]
  %v7691 = vld [vmem:[%s7689 + $0x4] sm:$0xf]
  %v7692 = vld [vmem:[%s7689 + $0x8] sm:$0xf]
  %v7693 = vld [vmem:[%s7689 + $0xc] sm:$0xf]
  %v7694 = vld [vmem:[%s7689 + $0x10] sm:$0xf]
  %v7695 = vld [vmem:[%s7689 + $0x14] sm:$0xf]
  %v7696 = vld [vmem:[%s7689 + $0x18] sm:$0xf]
  %v7697 = vld [vmem:[%s7689 + $0x1c] sm:$0xf]
  %v7698 = vld [vmem:[%s7689 + $0x20] sm:$0xf]
  %v7699 = vld [vmem:[%s7689 + $0x24] sm:$0xf]
  %v7700 = vld [vmem:[%s7689 + $0x28] sm:$0xf]
  %v7701 = vld [vmem:[%s7689 + $0x2c] sm:$0xf]
  %v7702 = vld [vmem:[%s7689 + $0x30] sm:$0xf]
  %v7703 = vld [vmem:[%s7689 + $0x34] sm:$0xf]
  %v7704 = vld [vmem:[%s7689 + $0x38] sm:$0xf]
  %v7705 = vld [vmem:[%s7689 + $0x3c] sm:$0xf]
  %v7722 = vunpack.c.l.b16 %v7690
  %v7723 = vunpack.c.l.b16 %v7691
  %v7724 = vunpack.c.l.b16 %v7692
  %v7725 = vunpack.c.l.b16 %v7693
  %v7726 = vunpack.c.l.b16 %v7694
  %v7727 = vunpack.c.l.b16 %v7695
  %v7728 = vunpack.c.l.b16 %v7696
  %v7729 = vunpack.c.l.b16 %v7697
  %v7730 = vunpack.c.l.b16 %v7698
  %v7731 = vunpack.c.l.b16 %v7699
  %v7732 = vunpack.c.l.b16 %v7700
  %v7733 = vunpack.c.l.b16 %v7701
  %v7734 = vunpack.c.l.b16 %v7702
  %v7735 = vunpack.c.l.b16 %v7703
  %v7736 = vunpack.c.l.b16 %v7704
  %v7737 = vunpack.c.l.b16 %v7705
  %v7738 = vpack.c.b16 %v7723, %v7722
  %v7739 = vpack.c.b16 %v7725, %v7724
  %v7740 = vpack.c.b16 %v7727, %v7726
  %v7741 = vpack.c.b16 %v7729, %v7728
  %v7742 = vpack.c.b16 %v7731, %v7730
  %v7743 = vpack.c.b16 %v7733, %v7732
  %v7744 = vpack.c.b16 %v7735, %v7734
  %v7745 = vpack.c.b16 %v7737, %v7736
  %7754 = vmatprep.subr.bf16.mxu0 0
  %7755 = vmatpush1.bf16.msra.mxu0 %v7738
  %7756 = vmatprep.subr.bf16.mxu0 0
  %7757 = vmatpush1.bf16.msra.mxu0 %v7739
  %7758 = vmatprep.subr.bf16.mxu0 0
  %7759 = vmatpush1.bf16.msra.mxu0 %v7740
  %7760 = vmatprep.subr.bf16.mxu0 0
  %7761 = vmatpush1.bf16.msra.mxu0 %v7741
  %7762 = vmatprep.subr.bf16.mxu0 0
  %7763 = vmatpush1.bf16.msra.mxu0 %v7742
  %7764 = vmatprep.subr.bf16.mxu0 0
  %7765 = vmatpush1.bf16.msra.mxu0 %v7743
  %7766 = vmatprep.subr.bf16.mxu0 0
  %7767 = vmatpush1.bf16.msra.mxu0 %v7744
  %7768 = vmatprep.subr.bf16.mxu0 0
  %7769 = vmatpush1.bf16.msra.mxu0 %v7745
  %7770 = vmatprep.subr.bf16.mxu0 0
  %7771 = vmatpush1.bf16.msra.mxu0 0
  %7772 = vmatprep.subr.bf16.mxu0 0
  %7773 = vmatpush1.bf16.msra.mxu0 0
  %7774 = vmatprep.subr.bf16.mxu0 0
  %7775 = vmatpush1.bf16.msra.mxu0 0
  %7776 = vmatprep.subr.bf16.mxu0 0
  %7777 = vmatpush1.bf16.msra.mxu0 0
  %7778 = vmatprep.subr.bf16.mxu0 0
  %7779 = vmatpush1.bf16.msra.mxu0 0
  %7780 = vmatprep.subr.bf16.mxu0 0
  %7781 = vmatpush1.bf16.msra.mxu0 0
  %7782 = vmatprep.subr.bf16.mxu0 0
  %7783 = vmatpush1.bf16.msra.mxu0 0
  %7784 = vmatprep.subr.bf16.mxu0 0
  %7785 = vmatpush1.bf16.msra.mxu0 0
  %7786 = vmatprep.mubr.bf16.mxu0 0
  %7787 = vmatmul.mubr.bf16.gmra.mrb[0].mxu0 %v7657
  %v7788 = vpop.f32.mrb[0].mxu0
  %v7789 = vadd.f32 0.0, %v7788
  %v7790 = vpop.f32.mrb[0].mxu0
  %v7791 = vpop.f32.mrb[0].mxu0
  %v7792 = vadd.f32 0.0, %v7791
  %v7793 = vpop.f32.mrb[0].mxu0
  %7794 = vmatprep.mubr.bf16.mxu0 0
  %7795 = vmatmul.mubr.bf16.gmra.mrb[0].mxu0 %v7658
  %v7796 = vpop.f32.mrb[0].mxu0
  %v7797 = vadd.f32 0.0, %v7796
  %v7798 = vpop.f32.mrb[0].mxu0
  %v7799 = vpop.f32.mrb[0].mxu0
  %v7800 = vadd.f32 0.0, %v7799
  %v7801 = vpop.f32.mrb[0].mxu0
  %7802 = vmatprep.mubr.bf16.mxu0 0
  %7803 = vmatmul.mubr.bf16.gmra.mrb[0].mxu0 %v7659
  %v7804 = vpop.f32.mrb[0].mxu0
  %v7805 = vadd.f32 0.0, %v7804
  %v7806 = vpop.f32.mrb[0].mxu0
  %v7807 = vpop.f32.mrb[0].mxu0
  %v7808 = vadd.f32 0.0, %v7807
  %v7809 = vpop.f32.mrb[0].mxu0
  %7810 = vmatprep.mubr.bf16.mxu0 0
  %7811 = vmatmul.mubr.bf16.gmra.mrb[0].mxu0 %v7660
  %v7812 = vpop.f32.mrb[0].mxu0
  %v7813 = vadd.f32 0.0, %v7812
  %v7814 = vpop.f32.mrb[0].mxu0
  %v7815 = vpop.f32.mrb[0].mxu0
  %v7816 = vadd.f32 0.0, %v7815
  %v7817 = vpop.f32.mrb[0].mxu0
  %7818 = vmatprep.mubr.bf16.mxu0 0
  %7819 = vmatmul.mubr.bf16.gmra.mrb[0].mxu0 %v7661
  %v7820 = vpop.f32.mrb[0].mxu0
  %v7821 = vadd.f32 0.0, %v7820
  %v7822 = vpop.f32.mrb[0].mxu0
  %v7823 = vpop.f32.mrb[0].mxu0
  %v7824 = vadd.f32 0.0, %v7823
  %v7825 = vpop.f32.mrb[0].mxu0
  %7826 = vmatprep.mubr.bf16.mxu0 0
  %7827 = vmatmul.mubr.bf16.gmra.mrb[0].mxu0 %v7662
  %v7828 = vpop.f32.mrb[0].mxu0
  %v7829 = vadd.f32 0.0, %v7828
  %v7830 = vpop.f32.mrb[0].mxu0
  %v7831 = vpop.f32.mrb[0].mxu0
  %v7832 = vadd.f32 0.0, %v7831
  %v7833 = vpop.f32.mrb[0].mxu0
  %7834 = vmatprep.mubr.bf16.mxu0 0
  %7835 = vmatmul.mubr.bf16.gmra.mrb[0].mxu0 %v7663
  %v7836 = vpop.f32.mrb[0].mxu0
  %v7837 = vadd.f32 0.0, %v7836
  %v7838 = vpop.f32.mrb[0].mxu0
  %v7839 = vpop.f32.mrb[0].mxu0
  %v7840 = vadd.f32 0.0, %v7839
  %v7841 = vpop.f32.mrb[0].mxu0
  %7842 = vmatprep.mubr.bf16.mxu0 0
  %7843 = vmatmul.mubr.bf16.gmra.mrb[0].mxu0 %v7664
  %v7844 = vpop.f32.mrb[0].mxu0
  %v7845 = vadd.f32 0.0, %v7844
  %v7846 = vpop.f32.mrb[0].mxu0
  %v7847 = vpop.f32.mrb[0].mxu0
  %v7848 = vadd.f32 0.0, %v7847
  %v7849 = vpop.f32.mrb[0].mxu0
  %7850 = vmatprep.mubr.bf16.mxu0 0
  %7851 = vmatmul.mubr.bf16.gmra.mrb[0].mxu0 %v7665
  %v7852 = vpop.f32.mrb[0].mxu0
  %v7853 = vadd.f32 0.0, %v7852
  %v7854 = vpop.f32.mrb[0].mxu0
  %v7855 = vpop.f32.mrb[0].mxu0
  %v7856 = vadd.f32 0.0, %v7855
  %v7857 = vpop.f32.mrb[0].mxu0
  %7858 = vmatprep.mubr.bf16.mxu0 0
  %7859 = vmatmul.mubr.bf16.gmra.mrb[0].mxu0 %v7666
  %v7860 = vpop.f32.mrb[0].mxu0
  %v7861 = vadd.f32 0.0, %v7860
  %v7862 = vpop.f32.mrb[0].mxu0
  %v7863 = vpop.f32.mrb[0].mxu0
  %v7864 = vadd.f32 0.0, %v7863
  %v7865 = vpop.f32.mrb[0].mxu0
  %7866 = vmatprep.mubr.bf16.mxu0 0
  %7867 = vmatmul.mubr.bf16.gmra.mrb[0].mxu0 %v7667
  %v7868 = vpop.f32.mrb[0].mxu0
  %v7869 = vadd.f32 0.0, %v7868
  %v7870 = vpop.f32.mrb[0].mxu0
  %v7871 = vpop.f32.mrb[0].mxu0
  %v7872 = vadd.f32 0.0, %v7871
  %v7873 = vpop.f32.mrb[0].mxu0
  %7874 = vmatprep.mubr.bf16.mxu0 0
  %7875 = vmatmul.mubr.bf16.gmra.mrb[0].mxu0 %v7668
  %v7876 = vpop.f32.mrb[0].mxu0
  %v7877 = vadd.f32 0.0, %v7876
  %v7878 = vpop.f32.mrb[0].mxu0
  %v7879 = vpop.f32.mrb[0].mxu0
  %v7880 = vadd.f32 0.0, %v7879
  %v7881 = vpop.f32.mrb[0].mxu0
  %7882 = vmatprep.mubr.bf16.mxu0 0
  %7883 = vmatmul.mubr.bf16.gmra.mrb[0].mxu0 %v7669
  %v7884 = vpop.f32.mrb[0].mxu0
  %v7885 = vadd.f32 0.0, %v7884
  %v7886 = vpop.f32.mrb[0].mxu0
  %v7887 = vpop.f32.mrb[0].mxu0
  %v7888 = vadd.f32 0.0, %v7887
  %v7889 = vpop.f32.mrb[0].mxu0
  %7890 = vmatprep.mubr.bf16.mxu0 0
  %7891 = vmatmul.mubr.bf16.gmra.mrb[0].mxu0 %v7670
  %v7892 = vpop.f32.mrb[0].mxu0
  %v7893 = vadd.f32 0.0, %v7892
  %v7894 = vpop.f32.mrb[0].mxu0
  %v7895 = vpop.f32.mrb[0].mxu0
  %v7896 = vadd.f32 0.0, %v7895
  %v7897 = vpop.f32.mrb[0].mxu0
  %7898 = vmatprep.mubr.bf16.mxu0 0
  %7899 = vmatmul.mubr.bf16.gmra.mrb[0].mxu0 %v7671
  %v7900 = vpop.f32.mrb[0].mxu0
  %v7901 = vadd.f32 0.0, %v7900
  %v7902 = vpop.f32.mrb[0].mxu0
  %v7903 = vpop.f32.mrb[0].mxu0
  %v7904 = vadd.f32 0.0, %v7903
  %v7905 = vpop.f32.mrb[0].mxu0
  %7906 = vmatprep.mubr.bf16.mxu0 0
  %7907 = vmatmul.mubr.bf16.gmra.mrb[0].mxu0 %v7672
  %v7908 = vpop.f32.mrb[0].mxu0
  %v7909 = vadd.f32 0.0, %v7908
  %v7910 = vpop.f32.mrb[0].mxu0
  %v7911 = vpop.f32.mrb[0].mxu0
  %v7912 = vadd.f32 0.0, %v7911
  %v7913 = vpop.f32.mrb[0].mxu0
  %7914 = vmatprep.mubr.bf16.mxu0 0
  %7915 = vmatmul.mubr.bf16.gmra.mrb[0].mxu0 %v7673
  %v7916 = vpop.f32.mrb[0].mxu0
  %v7917 = vadd.f32 0.0, %v7916
  %v7918 = vpop.f32.mrb[0].mxu0
  %v7919 = vpop.f32.mrb[0].mxu0
  %v7920 = vadd.f32 0.0, %v7919
  %v7921 = vpop.f32.mrb[0].mxu0
  %7922 = vmatprep.mubr.bf16.mxu0 0
  %7923 = vmatmul.mubr.bf16.gmra.mrb[0].mxu0 %v7674
  %v7924 = vpop.f32.mrb[0].mxu0
  %v7925 = vadd.f32 0.0, %v7924
  %v7926 = vpop.f32.mrb[0].mxu0
  %v7927 = vpop.f32.mrb[0].mxu0
  %v7928 = vadd.f32 0.0, %v7927
  %v7929 = vpop.f32.mrb[0].mxu0
  %7930 = vmatprep.mubr.bf16.mxu0 0
  %7931 = vmatmul.mubr.bf16.gmra.mrb[0].mxu0 %v7675
  %v7932 = vpop.f32.mrb[0].mxu0
  %v7933 = vadd.f32 0.0, %v7932
  %v7934 = vpop.f32.mrb[0].mxu0
  %v7935 = vpop.f32.mrb[0].mxu0
  %v7936 = vadd.f32 0.0, %v7935
  %v7937 = vpop.f32.mrb[0].mxu0
  %7938 = vmatprep.mubr.bf16.mxu0 0
  %7939 = vmatmul.mubr.bf16.gmra.mrb[0].mxu0 %v7676
  %v7940 = vpop.f32.mrb[0].mxu0
  %v7941 = vadd.f32 0.0, %v7940
  %v7942 = vpop.f32.mrb[0].mxu0
  %v7943 = vpop.f32.mrb[0].mxu0
  %v7944 = vadd.f32 0.0, %v7943
  %v7945 = vpop.f32.mrb[0].mxu0
  %7946 = vmatprep.mubr.bf16.mxu0 0
  %7947 = vmatmul.mubr.bf16.gmra.mrb[0].mxu0 %v7677
  %v7948 = vpop.f32.mrb[0].mxu0
  %v7949 = vadd.f32 0.0, %v7948
  %v7950 = vpop.f32.mrb[0].mxu0
  %v7951 = vpop.f32.mrb[0].mxu0
  %v7952 = vadd.f32 0.0, %v7951
  %v7953 = vpop.f32.mrb[0].mxu0
  %7954 = vmatprep.mubr.bf16.mxu0 0
  %7955 = vmatmul.mubr.bf16.gmra.mrb[0].mxu0 %v7678
  %v7956 = vpop.f32.mrb[0].mxu0
  %v7957 = vadd.f32 0.0, %v7956
  %v7958 = vpop.f32.mrb[0].mxu0
  %v7959 = vpop.f32.mrb[0].mxu0
  %v7960 = vadd.f32 0.0, %v7959
  %v7961 = vpop.f32.mrb[0].mxu0
  %7962 = vmatprep.mubr.bf16.mxu0 0
  %7963 = vmatmul.mubr.bf16.gmra.mrb[0].mxu0 %v7679
  %v7964 = vpop.f32.mrb[0].mxu0
  %v7965 = vadd.f32 0.0, %v7964
  %v7966 = vpop.f32.mrb[0].mxu0
  %v7967 = vpop.f32.mrb[0].mxu0
  %v7968 = vadd.f32 0.0, %v7967
  %v7969 = vpop.f32.mrb[0].mxu0
  %7970 = vmatprep.mubr.bf16.mxu0 0
  %7971 = vmatmul.mubr.bf16.gmra.mrb[0].mxu0 %v7680
  %v7972 = vpop.f32.mrb[0].mxu0
  %v7973 = vadd.f32 0.0, %v7972
  %v7974 = vpop.f32.mrb[0].mxu0
  %v7975 = vpop.f32.mrb[0].mxu0
  %v7976 = vadd.f32 0.0, %v7975
  %v7977 = vpop.f32.mrb[0].mxu0
  %7978 = vmatprep.mubr.bf16.mxu0 0
  %7979 = vmatmul.mubr.bf16.gmra.mrb[0].mxu0 %v7681
  %v7980 = vpop.f32.mrb[0].mxu0
  %v7981 = vadd.f32 0.0, %v7980
  %v7982 = vpop.f32.mrb[0].mxu0
  %v7983 = vpop.f32.mrb[0].mxu0
  %v7984 = vadd.f32 0.0, %v7983
  %v7985 = vpop.f32.mrb[0].mxu0
  %7986 = vmatprep.mubr.bf16.mxu0 0
  %7987 = vmatmul.mubr.bf16.gmra.mrb[0].mxu0 %v7682
  %v7988 = vpop.f32.mrb[0].mxu0
  %v7989 = vadd.f32 0.0, %v7988
  %v7990 = vpop.f32.mrb[0].mxu0
  %v7991 = vpop.f32.mrb[0].mxu0
  %v7992 = vadd.f32 0.0, %v7991
  %v7993 = vpop.f32.mrb[0].mxu0
  %7994 = vmatprep.mubr.bf16.mxu0 0
  %7995 = vmatmul.mubr.bf16.gmra.mrb[0].mxu0 %v7683
  %v7996 = vpop.f32.mrb[0].mxu0
  %v7997 = vadd.f32 0.0, %v7996
  %v7998 = vpop.f32.mrb[0].mxu0
  %v7999 = vpop.f32.mrb[0].mxu0
  %v8000 = vadd.f32 0.0, %v7999
  %v8001 = vpop.f32.mrb[0].mxu0
  %8002 = vmatprep.mubr.bf16.mxu0 0
  %8003 = vmatmul.mubr.bf16.gmra.mrb[0].mxu0 %v7684
  %v8004 = vpop.f32.mrb[0].mxu0
  %v8005 = vadd.f32 0.0, %v8004
  %v8006 = vpop.f32.mrb[0].mxu0
  %v8007 = vpop.f32.mrb[0].mxu0
  %v8008 = vadd.f32 0.0, %v8007
  %v8009 = vpop.f32.mrb[0].mxu0
  %8010 = vmatprep.mubr.bf16.mxu0 0
  %8011 = vmatmul.mubr.bf16.gmra.mrb[0].mxu0 %v7685
  %v8012 = vpop.f32.mrb[0].mxu0
  %v8013 = vadd.f32 0.0, %v8012
  %v8014 = vpop.f32.mrb[0].mxu0
  %v8015 = vpop.f32.mrb[0].mxu0
  %v8016 = vadd.f32 0.0, %v8015
  %v8017 = vpop.f32.mrb[0].mxu0
  %8018 = vmatprep.mubr.bf16.mxu0 0
  %8019 = vmatmul.mubr.bf16.gmra.mrb[0].mxu0 %v7686
  %v8020 = vpop.f32.mrb[0].mxu0
  %v8021 = vadd.f32 0.0, %v8020
  %v8022 = vpop.f32.mrb[0].mxu0
  %v8023 = vpop.f32.mrb[0].mxu0
  %v8024 = vadd.f32 0.0, %v8023
  %v8025 = vpop.f32.mrb[0].mxu0
  %8026 = vmatprep.mubr.bf16.mxu0 0
  %8027 = vmatmul.mubr.bf16.gmra.mrb[0].mxu0 %v7687
  %v8028 = vpop.f32.mrb[0].mxu0
  %v8029 = vadd.f32 0.0, %v8028
  %v8030 = vpop.f32.mrb[0].mxu0
  %v8031 = vpop.f32.mrb[0].mxu0
  %v8032 = vadd.f32 0.0, %v8031
  %v8033 = vpop.f32.mrb[0].mxu0
  %8034 = vmatprep.mubr.bf16.mxu0 0
  %8035 = vmatmul.mubr.bf16.gmra.mrb[0].mxu0 %v7688
  %v8036 = vpop.f32.mrb[0].mxu0
  %v8037 = vadd.f32 0.0, %v8036
  %v8038 = vpop.f32.mrb[0].mxu0
  %v8039 = vpop.f32.mrb[0].mxu0
  %v8040 = vadd.f32 0.0, %v8039
  %v8041 = vpop.f32.mrb[0].mxu0
  %8042 = vdwg.mxu0
  %v8043 = vadd.f32 %v7529, %v7789
  %v8044 = vadd.f32 %v7530, %v7792
  %v8045 = vadd.f32 %v7531, %v7797
  %v8046 = vadd.f32 %v7532, %v7800
  %v8047 = vadd.f32 %v7533, %v7805
  %v8048 = vadd.f32 %v7534, %v7808
  %v8049 = vadd.f32 %v7535, %v7813
  %v8050 = vadd.f32 %v7536, %v7816
  %v8051 = vadd.f32 %v7537, %v7821
  %v8052 = vadd.f32 %v7538, %v7824
  %v8053 = vadd.f32 %v7539, %v7829
  %v8054 = vadd.f32 %v7540, %v7832
  %v8055 = vadd.f32 %v7541, %v7837
  %v8056 = vadd.f32 %v7542, %v7840
  %v8057 = vadd.f32 %v7543, %v7845
  %v8058 = vadd.f32 %v7544, %v7848
  %v8059 = vadd.f32 %v7545, %v7853
  %v8060 = vadd.f32 %v7546, %v7856
  %v8061 = vadd.f32 %v7547, %v7861
  %v8062 = vadd.f32 %v7548, %v7864
  %v8063 = vadd.f32 %v7549, %v7869
  %v8064 = vadd.f32 %v7550, %v7872
  %v8065 = vadd.f32 %v7551, %v7877
  %v8066 = vadd.f32 %v7552, %v7880
  %v8067 = vadd.f32 %v7553, %v7885
  %v8068 = vadd.f32 %v7554, %v7888
  %v8069 = vadd.f32 %v7555, %v7893
  %v8070 = vadd.f32 %v7556, %v7896
  %v8071 = vadd.f32 %v7557, %v7901
  %v8072 = vadd.f32 %v7558, %v7904
  %v8073 = vadd.f32 %v7559, %v7909
  %v8074 = vadd.f32 %v7560, %v7912
  %v8075 = vadd.f32 %v7561, %v7917
  %v8076 = vadd.f32 %v7562, %v7920
  %v8077 = vadd.f32 %v7563, %v7925
  %v8078 = vadd.f32 %v7564, %v7928
  %v8079 = vadd.f32 %v7565, %v7933
  %v8080 = vadd.f32 %v7566, %v7936
  %v8081 = vadd.f32 %v7567, %v7941
  %v8082 = vadd.f32 %v7568, %v7944
  %v8083 = vadd.f32 %v7569, %v7949
  %v8084 = vadd.f32 %v7570, %v7952
  %v8085 = vadd.f32 %v7571, %v7957
  %v8086 = vadd.f32 %v7572, %v7960
  %v8087 = vadd.f32 %v7573, %v7965
  %v8088 = vadd.f32 %v7574, %v7968
  %v8089 = vadd.f32 %v7575, %v7973
  %v8090 = vadd.f32 %v7576, %v7976
  %v8091 = vadd.f32 %v7577, %v7981
  %v8092 = vadd.f32 %v7578, %v7984
  %v8093 = vadd.f32 %v7579, %v7989
  %v8094 = vadd.f32 %v7580, %v7992
  %v8095 = vadd.f32 %v7581, %v7997
  %v8096 = vadd.f32 %v7582, %v8000
  %v8097 = vadd.f32 %v7583, %v8005
  %v8098 = vadd.f32 %v7584, %v8008
  %v8099 = vadd.f32 %v7585, %v8013
  %v8100 = vadd.f32 %v7586, %v8016
  %v8101 = vadd.f32 %v7587, %v8021
  %v8102 = vadd.f32 %v7588, %v8024
  %v8103 = vadd.f32 %v7589, %v8029
  %v8104 = vadd.f32 %v7590, %v8032
  %v8105 = vadd.f32 %v7591, %v8037
  %v8106 = vadd.f32 %v7592, %v8040
  %s8107 = scalar_lea.vmem [#allocation2], 64
  %v8108 = vld [vmem:[%s8107 + $0x7] sm:$0xff]
  %v8109 = vld [vmem:[%s8107 + $0xf] sm:$0xff]
  %v8110 = vld [vmem:[%s8107 + $0x27] sm:$0xff]
  %v8111 = vld [vmem:[%s8107 + $0x2f] sm:$0xff]
  %v8112 = vld [vmem:[%s8107 + $0x47] sm:$0xff]
  %v8113 = vld [vmem:[%s8107 + $0x4f] sm:$0xff]
  %v8114 = vld [vmem:[%s8107 + $0x67] sm:$0xff]
  %v8115 = vld [vmem:[%s8107 + $0x6f] sm:$0xff]
  %v8116 = vld [vmem:[%s8107 + $0x87] sm:$0xff]
  %v8117 = vld [vmem:[%s8107 + $0x8f] sm:$0xff]
  %v8118 = vld [vmem:[%s8107 + $0xa7] sm:$0xff]
  %v8119 = vld [vmem:[%s8107 + $0xaf] sm:$0xff]
  %v8120 = vld [vmem:[%s8107 + $0xc7] sm:$0xff]
  %v8121 = vld [vmem:[%s8107 + $0xcf] sm:$0xff]
  %v8122 = vld [vmem:[%s8107 + $0xe7] sm:$0xff]
  %v8123 = vld [vmem:[%s8107 + $0xef] sm:$0xff]
  %v8124 = vld [vmem:[%s8107 + $0x107] sm:$0xff]
  %v8125 = vld [vmem:[%s8107 + $0x10f] sm:$0xff]
  %v8126 = vld [vmem:[%s8107 + $0x127] sm:$0xff]
  %v8127 = vld [vmem:[%s8107 + $0x12f] sm:$0xff]
  %v8128 = vld [vmem:[%s8107 + $0x147] sm:$0xff]
  %v8129 = vld [vmem:[%s8107 + $0x14f] sm:$0xff]
  %v8130 = vld [vmem:[%s8107 + $0x167] sm:$0xff]
  %v8131 = vld [vmem:[%s8107 + $0x16f] sm:$0xff]
  %v8132 = vld [vmem:[%s8107 + $0x187] sm:$0xff]
  %v8133 = vld [vmem:[%s8107 + $0x18f] sm:$0xff]
  %v8134 = vld [vmem:[%s8107 + $0x1a7] sm:$0xff]
  %v8135 = vld [vmem:[%s8107 + $0x1af] sm:$0xff]
  %v8136 = vld [vmem:[%s8107 + $0x1c7] sm:$0xff]
  %v8137 = vld [vmem:[%s8107 + $0x1cf] sm:$0xff]
  %v8138 = vld [vmem:[%s8107 + $0x1e7] sm:$0xff]
  %v8139 = vld [vmem:[%s8107 + $0x1ef] sm:$0xff]
  %v8140 = vld [vmem:[%s8107 + $0x247] sm:$0xff]
  %v8141 = vld [vmem:[%s8107 + $0x24f] sm:$0xff]
  %v8142 = vld [vmem:[%s8107 + $0x267] sm:$0xff]
  %v8143 = vld [vmem:[%s8107 + $0x26f] sm:$0xff]
  %v8144 = vld [vmem:[%s8107 + $0x287] sm:$0xff]
  %v8145 = vld [vmem:[%s8107 + $0x28f] sm:$0xff]
  %v8146 = vld [vmem:[%s8107 + $0x2a7] sm:$0xff]
  %v8147 = vld [vmem:[%s8107 + $0x2af] sm:$0xff]
  %v8148 = vld [vmem:[%s8107 + $0x2c7] sm:$0xff]
  %v8149 = vld [vmem:[%s8107 + $0x2cf] sm:$0xff]
  %v8150 = vld [vmem:[%s8107 + $0x2e7] sm:$0xff]
  %v8151 = vld [vmem:[%s8107 + $0x2ef] sm:$0xff]
  %v8152 = vld [vmem:[%s8107 + $0x307] sm:$0xff]
  %v8153 = vld [vmem:[%s8107 + $0x30f] sm:$0xff]
  %v8154 = vld [vmem:[%s8107 + $0x327] sm:$0xff]
  %v8155 = vld [vmem:[%s8107 + $0x32f] sm:$0xff]
  %v8156 = vld [vmem:[%s8107 + $0x347] sm:$0xff]
  %v8157 = vld [vmem:[%s8107 + $0x34f] sm:$0xff]
  %v8158 = vld [vmem:[%s8107 + $0x367] sm:$0xff]
  %v8159 = vld [vmem:[%s8107 + $0x36f] sm:$0xff]
  %v8160 = vld [vmem:[%s8107 + $0x387] sm:$0xff]
  %v8161 = vld [vmem:[%s8107 + $0x38f] sm:$0xff]
  %v8162 = vld [vmem:[%s8107 + $0x3a7] sm:$0xff]
  %v8163 = vld [vmem:[%s8107 + $0x3af] sm:$0xff]
  %v8164 = vld [vmem:[%s8107 + $0x3c7] sm:$0xff]
  %v8165 = vld [vmem:[%s8107 + $0x3cf] sm:$0xff]
  %v8166 = vld [vmem:[%s8107 + $0x3e7] sm:$0xff]
  %v8167 = vld [vmem:[%s8107 + $0x3ef] sm:$0xff]
  %v8168 = vld [vmem:[%s8107 + $0x407] sm:$0xff]
  %v8169 = vld [vmem:[%s8107 + $0x40f] sm:$0xff]
  %v8170 = vld [vmem:[%s8107 + $0x427] sm:$0xff]
  %v8171 = vld [vmem:[%s8107 + $0x42f] sm:$0xff]
  %v8172 = vpack.c.bf16 %v8109, %v8108
  %v8173 = vpack.c.bf16 %v8111, %v8110
  %v8174 = vpack.c.bf16 %v8113, %v8112
  %v8175 = vpack.c.bf16 %v8115, %v8114
  %v8176 = vpack.c.bf16 %v8117, %v8116
  %v8177 = vpack.c.bf16 %v8119, %v8118
  %v8178 = vpack.c.bf16 %v8121, %v8120
  %v8179 = vpack.c.bf16 %v8123, %v8122
  %v8180 = vpack.c.bf16 %v8125, %v8124
  %v8181 = vpack.c.bf16 %v8127, %v8126
  %v8182 = vpack.c.bf16 %v8129, %v8128
  %v8183 = vpack.c.bf16 %v8131, %v8130
  %v8184 = vpack.c.bf16 %v8133, %v8132
  %v8185 = vpack.c.bf16 %v8135, %v8134
  %v8186 = vpack.c.bf16 %v8137, %v8136
  %v8187 = vpack.c.bf16 %v8139, %v8138
  %v8188 = vpack.c.bf16 %v8141, %v8140
  %v8189 = vpack.c.bf16 %v8143, %v8142
  %v8190 = vpack.c.bf16 %v8145, %v8144
  %v8191 = vpack.c.bf16 %v8147, %v8146
  %v8192 = vpack.c.bf16 %v8149, %v8148
  %v8193 = vpack.c.bf16 %v8151, %v8150
  %v8194 = vpack.c.bf16 %v8153, %v8152
  %v8195 = vpack.c.bf16 %v8155, %v8154
  %v8196 = vpack.c.bf16 %v8157, %v8156
  %v8197 = vpack.c.bf16 %v8159, %v8158
  %v8198 = vpack.c.bf16 %v8161, %v8160
  %v8199 = vpack.c.bf16 %v8163, %v8162
  %v8200 = vpack.c.bf16 %v8165, %v8164
  %v8201 = vpack.c.bf16 %v8167, %v8166
  %v8202 = vpack.c.bf16 %v8169, %v8168
  %v8203 = vpack.c.bf16 %v8171, %v8170
  %s8204 = scalar_lea.vmem %s2, 384
  %v8205 = vld [vmem:[%s8204] sm:$0xf]
  %v8206 = vld [vmem:[%s8204 + $0x4] sm:$0xf]
  %v8207 = vld [vmem:[%s8204 + $0x8] sm:$0xf]
  %v8208 = vld [vmem:[%s8204 + $0xc] sm:$0xf]
  %v8209 = vld [vmem:[%s8204 + $0x10] sm:$0xf]
  %v8210 = vld [vmem:[%s8204 + $0x14] sm:$0xf]
  %v8211 = vld [vmem:[%s8204 + $0x18] sm:$0xf]
  %v8212 = vld [vmem:[%s8204 + $0x1c] sm:$0xf]
  %v8213 = vld [vmem:[%s8204 + $0x20] sm:$0xf]
  %v8214 = vld [vmem:[%s8204 + $0x24] sm:$0xf]
  %v8215 = vld [vmem:[%s8204 + $0x28] sm:$0xf]
  %v8216 = vld [vmem:[%s8204 + $0x2c] sm:$0xf]
  %v8217 = vld [vmem:[%s8204 + $0x30] sm:$0xf]
  %v8218 = vld [vmem:[%s8204 + $0x34] sm:$0xf]
  %v8219 = vld [vmem:[%s8204 + $0x38] sm:$0xf]
  %v8220 = vld [vmem:[%s8204 + $0x3c] sm:$0xf]
  %v8237 = vunpack.c.l.b16 %v8205
  %v8238 = vunpack.c.l.b16 %v8206
  %v8239 = vunpack.c.l.b16 %v8207
  %v8240 = vunpack.c.l.b16 %v8208
  %v8241 = vunpack.c.l.b16 %v8209
  %v8242 = vunpack.c.l.b16 %v8210
  %v8243 = vunpack.c.l.b16 %v8211
  %v8244 = vunpack.c.l.b16 %v8212
  %v8245 = vunpack.c.l.b16 %v8213
  %v8246 = vunpack.c.l.b16 %v8214
  %v8247 = vunpack.c.l.b16 %v8215
  %v8248 = vunpack.c.l.b16 %v8216
  %v8249 = vunpack.c.l.b16 %v8217
  %v8250 = vunpack.c.l.b16 %v8218
  %v8251 = vunpack.c.l.b16 %v8219
  %v8252 = vunpack.c.l.b16 %v8220
  %v8253 = vpack.c.b16 %v8238, %v8237
  %v8254 = vpack.c.b16 %v8240, %v8239
  %v8255 = vpack.c.b16 %v8242, %v8241
  %v8256 = vpack.c.b16 %v8244, %v8243
  %v8257 = vpack.c.b16 %v8246, %v8245
  %v8258 = vpack.c.b16 %v8248, %v8247
  %v8259 = vpack.c.b16 %v8250, %v8249
  %v8260 = vpack.c.b16 %v8252, %v8251
  %8269 = vmatprep.subr.bf16.mxu0 0
  %8270 = vmatpush1.bf16.msra.mxu0 %v8253
  %8271 = vmatprep.subr.bf16.mxu0 0
  %8272 = vmatpush1.bf16.msra.mxu0 %v8254
  %8273 = vmatprep.subr.bf16.mxu0 0
  %8274 = vmatpush1.bf16.msra.mxu0 %v8255
  %8275 = vmatprep.subr.bf16.mxu0 0
  %8276 = vmatpush1.bf16.msra.mxu0 %v8256
  %8277 = vmatprep.subr.bf16.mxu0 0
  %8278 = vmatpush1.bf16.msra.mxu0 %v8257
  %8279 = vmatprep.subr.bf16.mxu0 0
  %8280 = vmatpush1.bf16.msra.mxu0 %v8258
  %8281 = vmatprep.subr.bf16.mxu0 0
  %8282 = vmatpush1.bf16.msra.mxu0 %v8259
  %8283 = vmatprep.subr.bf16.mxu0 0
  %8284 = vmatpush1.bf16.msra.mxu0 %v8260
  %8285 = vmatprep.subr.bf16.mxu0 0
  %8286 = vmatpush1.bf16.msra.mxu0 0
  %8287 = vmatprep.subr.bf16.mxu0 0
  %8288 = vmatpush1.bf16.msra.mxu0 0
  %8289 = vmatprep.subr.bf16.mxu0 0
  %8290 = vmatpush1.bf16.msra.mxu0 0
  %8291 = vmatprep.subr.bf16.mxu0 0
  %8292 = vmatpush1.bf16.msra.mxu0 0
  %8293 = vmatprep.subr.bf16.mxu0 0
  %8294 = vmatpush1.bf16.msra.mxu0 0
  %8295 = vmatprep.subr.bf16.mxu0 0
  %8296 = vmatpush1.bf16.msra.mxu0 0
  %8297 = vmatprep.subr.bf16.mxu0 0
  %8298 = vmatpush1.bf16.msra.mxu0 0
  %8299 = vmatprep.subr.bf16.mxu0 0
  %8300 = vmatpush1.bf16.msra.mxu0 0
  %8301 = vmatprep.mubr.bf16.mxu0 0
  %8302 = vmatmul.mubr.bf16.gmra.mrb[0].mxu0 %v8172
  %v8303 = vpop.f32.mrb[0].mxu0
  %v8304 = vadd.f32 0.0, %v8303
  %v8305 = vpop.f32.mrb[0].mxu0
  %v8306 = vpop.f32.mrb[0].mxu0
  %v8307 = vadd.f32 0.0, %v8306
  %v8308 = vpop.f32.mrb[0].mxu0
  %8309 = vmatprep.mubr.bf16.mxu0 0
  %8310 = vmatmul.mubr.bf16.gmra.mrb[0].mxu0 %v8173
  %v8311 = vpop.f32.mrb[0].mxu0
  %v8312 = vadd.f32 0.0, %v8311
  %v8313 = vpop.f32.mrb[0].mxu0
  %v8314 = vpop.f32.mrb[0].mxu0
  %v8315 = vadd.f32 0.0, %v8314
  %v8316 = vpop.f32.mrb[0].mxu0
  %8317 = vmatprep.mubr.bf16.mxu0 0
  %8318 = vmatmul.mubr.bf16.gmra.mrb[0].mxu0 %v8174
  %v8319 = vpop.f32.mrb[0].mxu0
  %v8320 = vadd.f32 0.0, %v8319
  %v8321 = vpop.f32.mrb[0].mxu0
  %v8322 = vpop.f32.mrb[0].mxu0
  %v8323 = vadd.f32 0.0, %v8322
  %v8324 = vpop.f32.mrb[0].mxu0
  %8325 = vmatprep.mubr.bf16.mxu0 0
  %8326 = vmatmul.mubr.bf16.gmra.mrb[0].mxu0 %v8175
  %v8327 = vpop.f32.mrb[0].mxu0
  %v8328 = vadd.f32 0.0, %v8327
  %v8329 = vpop.f32.mrb[0].mxu0
  %v8330 = vpop.f32.mrb[0].mxu0
  %v8331 = vadd.f32 0.0, %v8330
  %v8332 = vpop.f32.mrb[0].mxu0
  %8333 = vmatprep.mubr.bf16.mxu0 0
  %8334 = vmatmul.mubr.bf16.gmra.mrb[0].mxu0 %v8176
  %v8335 = vpop.f32.mrb[0].mxu0
  %v8336 = vadd.f32 0.0, %v8335
  %v8337 = vpop.f32.mrb[0].mxu0
  %v8338 = vpop.f32.mrb[0].mxu0
  %v8339 = vadd.f32 0.0, %v8338
  %v8340 = vpop.f32.mrb[0].mxu0
  %8341 = vmatprep.mubr.bf16.mxu0 0
  %8342 = vmatmul.mubr.bf16.gmra.mrb[0].mxu0 %v8177
  %v8343 = vpop.f32.mrb[0].mxu0
  %v8344 = vadd.f32 0.0, %v8343
  %v8345 = vpop.f32.mrb[0].mxu0
  %v8346 = vpop.f32.mrb[0].mxu0
  %v8347 = vadd.f32 0.0, %v8346
  %v8348 = vpop.f32.mrb[0].mxu0
  %8349 = vmatprep.mubr.bf16.mxu0 0
  %8350 = vmatmul.mubr.bf16.gmra.mrb[0].mxu0 %v8178
  %v8351 = vpop.f32.mrb[0].mxu0
  %v8352 = vadd.f32 0.0, %v8351
  %v8353 = vpop.f32.mrb[0].mxu0
  %v8354 = vpop.f32.mrb[0].mxu0
  %v8355 = vadd.f32 0.0, %v8354
  %v8356 = vpop.f32.mrb[0].mxu0
  %8357 = vmatprep.mubr.bf16.mxu0 0
  %8358 = vmatmul.mubr.bf16.gmra.mrb[0].mxu0 %v8179
  %v8359 = vpop.f32.mrb[0].mxu0
  %v8360 = vadd.f32 0.0, %v8359
  %v8361 = vpop.f32.mrb[0].mxu0
  %v8362 = vpop.f32.mrb[0].mxu0
  %v8363 = vadd.f32 0.0, %v8362
  %v8364 = vpop.f32.mrb[0].mxu0
  %8365 = vmatprep.mubr.bf16.mxu0 0
  %8366 = vmatmul.mubr.bf16.gmra.mrb[0].mxu0 %v8180
  %v8367 = vpop.f32.mrb[0].mxu0
  %v8368 = vadd.f32 0.0, %v8367
  %v8369 = vpop.f32.mrb[0].mxu0
  %v8370 = vpop.f32.mrb[0].mxu0
  %v8371 = vadd.f32 0.0, %v8370
  %v8372 = vpop.f32.mrb[0].mxu0
  %8373 = vmatprep.mubr.bf16.mxu0 0
  %8374 = vmatmul.mubr.bf16.gmra.mrb[0].mxu0 %v8181
  %v8375 = vpop.f32.mrb[0].mxu0
  %v8376 = vadd.f32 0.0, %v8375
  %v8377 = vpop.f32.mrb[0].mxu0
  %v8378 = vpop.f32.mrb[0].mxu0
  %v8379 = vadd.f32 0.0, %v8378
  %v8380 = vpop.f32.mrb[0].mxu0
  %8381 = vmatprep.mubr.bf16.mxu0 0
  %8382 = vmatmul.mubr.bf16.gmra.mrb[0].mxu0 %v8182
  %v8383 = vpop.f32.mrb[0].mxu0
  %v8384 = vadd.f32 0.0, %v8383
  %v8385 = vpop.f32.mrb[0].mxu0
  %v8386 = vpop.f32.mrb[0].mxu0
  %v8387 = vadd.f32 0.0, %v8386
  %v8388 = vpop.f32.mrb[0].mxu0
  %8389 = vmatprep.mubr.bf16.mxu0 0
  %8390 = vmatmul.mubr.bf16.gmra.mrb[0].mxu0 %v8183
  %v8391 = vpop.f32.mrb[0].mxu0
  %v8392 = vadd.f32 0.0, %v8391
  %v8393 = vpop.f32.mrb[0].mxu0
  %v8394 = vpop.f32.mrb[0].mxu0
  %v8395 = vadd.f32 0.0, %v8394
  %v8396 = vpop.f32.mrb[0].mxu0
  %8397 = vmatprep.mubr.bf16.mxu0 0
  %8398 = vmatmul.mubr.bf16.gmra.mrb[0].mxu0 %v8184
  %v8399 = vpop.f32.mrb[0].mxu0
  %v8400 = vadd.f32 0.0, %v8399
  %v8401 = vpop.f32.mrb[0].mxu0
  %v8402 = vpop.f32.mrb[0].mxu0
  %v8403 = vadd.f32 0.0, %v8402
  %v8404 = vpop.f32.mrb[0].mxu0
  %8405 = vmatprep.mubr.bf16.mxu0 0
  %8406 = vmatmul.mubr.bf16.gmra.mrb[0].mxu0 %v8185
  %v8407 = vpop.f32.mrb[0].mxu0
  %v8408 = vadd.f32 0.0, %v8407
  %v8409 = vpop.f32.mrb[0].mxu0
  %v8410 = vpop.f32.mrb[0].mxu0
  %v8411 = vadd.f32 0.0, %v8410
  %v8412 = vpop.f32.mrb[0].mxu0
  %8413 = vmatprep.mubr.bf16.mxu0 0
  %8414 = vmatmul.mubr.bf16.gmra.mrb[0].mxu0 %v8186
  %v8415 = vpop.f32.mrb[0].mxu0
  %v8416 = vadd.f32 0.0, %v8415
  %v8417 = vpop.f32.mrb[0].mxu0
  %v8418 = vpop.f32.mrb[0].mxu0
  %v8419 = vadd.f32 0.0, %v8418
  %v8420 = vpop.f32.mrb[0].mxu0
  %8421 = vmatprep.mubr.bf16.mxu0 0
  %8422 = vmatmul.mubr.bf16.gmra.mrb[0].mxu0 %v8187
  %v8423 = vpop.f32.mrb[0].mxu0
  %v8424 = vadd.f32 0.0, %v8423
  %v8425 = vpop.f32.mrb[0].mxu0
  %v8426 = vpop.f32.mrb[0].mxu0
  %v8427 = vadd.f32 0.0, %v8426
  %v8428 = vpop.f32.mrb[0].mxu0
  %8429 = vmatprep.mubr.bf16.mxu0 0
  %8430 = vmatmul.mubr.bf16.gmra.mrb[0].mxu0 %v8188
  %v8431 = vpop.f32.mrb[0].mxu0
  %v8432 = vadd.f32 0.0, %v8431
  %v8433 = vpop.f32.mrb[0].mxu0
  %v8434 = vpop.f32.mrb[0].mxu0
  %v8435 = vadd.f32 0.0, %v8434
  %v8436 = vpop.f32.mrb[0].mxu0
  %8437 = vmatprep.mubr.bf16.mxu0 0
  %8438 = vmatmul.mubr.bf16.gmra.mrb[0].mxu0 %v8189
  %v8439 = vpop.f32.mrb[0].mxu0
  %v8440 = vadd.f32 0.0, %v8439
  %v8441 = vpop.f32.mrb[0].mxu0
  %v8442 = vpop.f32.mrb[0].mxu0
  %v8443 = vadd.f32 0.0, %v8442
  %v8444 = vpop.f32.mrb[0].mxu0
  %8445 = vmatprep.mubr.bf16.mxu0 0
  %8446 = vmatmul.mubr.bf16.gmra.mrb[0].mxu0 %v8190
  %v8447 = vpop.f32.mrb[0].mxu0
  %v8448 = vadd.f32 0.0, %v8447
  %v8449 = vpop.f32.mrb[0].mxu0
  %v8450 = vpop.f32.mrb[0].mxu0
  %v8451 = vadd.f32 0.0, %v8450
  %v8452 = vpop.f32.mrb[0].mxu0
  %8453 = vmatprep.mubr.bf16.mxu0 0
  %8454 = vmatmul.mubr.bf16.gmra.mrb[0].mxu0 %v8191
  %v8455 = vpop.f32.mrb[0].mxu0
  %v8456 = vadd.f32 0.0, %v8455
  %v8457 = vpop.f32.mrb[0].mxu0
  %v8458 = vpop.f32.mrb[0].mxu0
  %v8459 = vadd.f32 0.0, %v8458
  %v8460 = vpop.f32.mrb[0].mxu0
  %8461 = vmatprep.mubr.bf16.mxu0 0
  %8462 = vmatmul.mubr.bf16.gmra.mrb[0].mxu0 %v8192
  %v8463 = vpop.f32.mrb[0].mxu0
  %v8464 = vadd.f32 0.0, %v8463
  %v8465 = vpop.f32.mrb[0].mxu0
  %v8466 = vpop.f32.mrb[0].mxu0
  %v8467 = vadd.f32 0.0, %v8466
  %v8468 = vpop.f32.mrb[0].mxu0
  %8469 = vmatprep.mubr.bf16.mxu0 0
  %8470 = vmatmul.mubr.bf16.gmra.mrb[0].mxu0 %v8193
  %v8471 = vpop.f32.mrb[0].mxu0
  %v8472 = vadd.f32 0.0, %v8471
  %v8473 = vpop.f32.mrb[0].mxu0
  %v8474 = vpop.f32.mrb[0].mxu0
  %v8475 = vadd.f32 0.0, %v8474
  %v8476 = vpop.f32.mrb[0].mxu0
  %8477 = vmatprep.mubr.bf16.mxu0 0
  %8478 = vmatmul.mubr.bf16.gmra.mrb[0].mxu0 %v8194
  %v8479 = vpop.f32.mrb[0].mxu0
  %v8480 = vadd.f32 0.0, %v8479
  %v8481 = vpop.f32.mrb[0].mxu0
  %v8482 = vpop.f32.mrb[0].mxu0
  %v8483 = vadd.f32 0.0, %v8482
  %v8484 = vpop.f32.mrb[0].mxu0
  %8485 = vmatprep.mubr.bf16.mxu0 0
  %8486 = vmatmul.mubr.bf16.gmra.mrb[0].mxu0 %v8195
  %v8487 = vpop.f32.mrb[0].mxu0
  %v8488 = vadd.f32 0.0, %v8487
  %v8489 = vpop.f32.mrb[0].mxu0
  %v8490 = vpop.f32.mrb[0].mxu0
  %v8491 = vadd.f32 0.0, %v8490
  %v8492 = vpop.f32.mrb[0].mxu0
  %8493 = vmatprep.mubr.bf16.mxu0 0
  %8494 = vmatmul.mubr.bf16.gmra.mrb[0].mxu0 %v8196
  %v8495 = vpop.f32.mrb[0].mxu0
  %v8496 = vadd.f32 0.0, %v8495
  %v8497 = vpop.f32.mrb[0].mxu0
  %v8498 = vpop.f32.mrb[0].mxu0
  %v8499 = vadd.f32 0.0, %v8498
  %v8500 = vpop.f32.mrb[0].mxu0
  %8501 = vmatprep.mubr.bf16.mxu0 0
  %8502 = vmatmul.mubr.bf16.gmra.mrb[0].mxu0 %v8197
  %v8503 = vpop.f32.mrb[0].mxu0
  %v8504 = vadd.f32 0.0, %v8503
  %v8505 = vpop.f32.mrb[0].mxu0
  %v8506 = vpop.f32.mrb[0].mxu0
  %v8507 = vadd.f32 0.0, %v8506
  %v8508 = vpop.f32.mrb[0].mxu0
  %8509 = vmatprep.mubr.bf16.mxu0 0
  %8510 = vmatmul.mubr.bf16.gmra.mrb[0].mxu0 %v8198
  %v8511 = vpop.f32.mrb[0].mxu0
  %v8512 = vadd.f32 0.0, %v8511
  %v8513 = vpop.f32.mrb[0].mxu0
  %v8514 = vpop.f32.mrb[0].mxu0
  %v8515 = vadd.f32 0.0, %v8514
  %v8516 = vpop.f32.mrb[0].mxu0
  %8517 = vmatprep.mubr.bf16.mxu0 0
  %8518 = vmatmul.mubr.bf16.gmra.mrb[0].mxu0 %v8199
  %v8519 = vpop.f32.mrb[0].mxu0
  %v8520 = vadd.f32 0.0, %v8519
  %v8521 = vpop.f32.mrb[0].mxu0
  %v8522 = vpop.f32.mrb[0].mxu0
  %v8523 = vadd.f32 0.0, %v8522
  %v8524 = vpop.f32.mrb[0].mxu0
  %8525 = vmatprep.mubr.bf16.mxu0 0
  %8526 = vmatmul.mubr.bf16.gmra.mrb[0].mxu0 %v8200
  %v8527 = vpop.f32.mrb[0].mxu0
  %v8528 = vadd.f32 0.0, %v8527
  %v8529 = vpop.f32.mrb[0].mxu0
  %v8530 = vpop.f32.mrb[0].mxu0
  %v8531 = vadd.f32 0.0, %v8530
  %v8532 = vpop.f32.mrb[0].mxu0
  %8533 = vmatprep.mubr.bf16.mxu0 0
  %8534 = vmatmul.mubr.bf16.gmra.mrb[0].mxu0 %v8201
  %v8535 = vpop.f32.mrb[0].mxu0
  %v8536 = vadd.f32 0.0, %v8535
  %v8537 = vpop.f32.mrb[0].mxu0
  %v8538 = vpop.f32.mrb[0].mxu0
  %v8539 = vadd.f32 0.0, %v8538
  %v8540 = vpop.f32.mrb[0].mxu0
  %8541 = vmatprep.mubr.bf16.mxu0 0
  %8542 = vmatmul.mubr.bf16.gmra.mrb[0].mxu0 %v8202
  %v8543 = vpop.f32.mrb[0].mxu0
  %v8544 = vadd.f32 0.0, %v8543
  %v8545 = vpop.f32.mrb[0].mxu0
  %v8546 = vpop.f32.mrb[0].mxu0
  %v8547 = vadd.f32 0.0, %v8546
  %v8548 = vpop.f32.mrb[0].mxu0
  %8549 = vmatprep.mubr.bf16.mxu0 0
  %8550 = vmatmul.mubr.bf16.gmra.mrb[0].mxu0 %v8203
  %v8551 = vpop.f32.mrb[0].mxu0
  %v8552 = vadd.f32 0.0, %v8551
  %v8553 = vpop.f32.mrb[0].mxu0
  %v8554 = vpop.f32.mrb[0].mxu0
  %v8555 = vadd.f32 0.0, %v8554
  %v8556 = vpop.f32.mrb[0].mxu0
  %8557 = vdwg.mxu0
  %v8558 = vadd.f32 %v8043, %v8304
  %v8559 = vadd.f32 %v8044, %v8307
  %v8560 = vadd.f32 %v8045, %v8312
  %v8561 = vadd.f32 %v8046, %v8315
  %v8562 = vadd.f32 %v8047, %v8320
  %v8563 = vadd.f32 %v8048, %v8323
  %v8564 = vadd.f32 %v8049, %v8328
  %v8565 = vadd.f32 %v8050, %v8331
  %v8566 = vadd.f32 %v8051, %v8336
  %v8567 = vadd.f32 %v8052, %v8339
  %v8568 = vadd.f32 %v8053, %v8344
  %v8569 = vadd.f32 %v8054, %v8347
  %v8570 = vadd.f32 %v8055, %v8352
  %v8571 = vadd.f32 %v8056, %v8355
  %v8572 = vadd.f32 %v8057, %v8360
  %v8573 = vadd.f32 %v8058, %v8363
  %v8574 = vadd.f32 %v8059, %v8368
  %v8575 = vadd.f32 %v8060, %v8371
  %v8576 = vadd.f32 %v8061, %v8376
  %v8577 = vadd.f32 %v8062, %v8379
  %v8578 = vadd.f32 %v8063, %v8384
  %v8579 = vadd.f32 %v8064, %v8387
  %v8580 = vadd.f32 %v8065, %v8392
  %v8581 = vadd.f32 %v8066, %v8395
  %v8582 = vadd.f32 %v8067, %v8400
  %v8583 = vadd.f32 %v8068, %v8403
  %v8584 = vadd.f32 %v8069, %v8408
  %v8585 = vadd.f32 %v8070, %v8411
  %v8586 = vadd.f32 %v8071, %v8416
  %v8587 = vadd.f32 %v8072, %v8419
  %v8588 = vadd.f32 %v8073, %v8424
  %v8589 = vadd.f32 %v8074, %v8427
  %v8590 = vadd.f32 %v8075, %v8432
  %v8591 = vadd.f32 %v8076, %v8435
  %v8592 = vadd.f32 %v8077, %v8440
  %v8593 = vadd.f32 %v8078, %v8443
  %v8594 = vadd.f32 %v8079, %v8448
  %v8595 = vadd.f32 %v8080, %v8451
  %v8596 = vadd.f32 %v8081, %v8456
  %v8597 = vadd.f32 %v8082, %v8459
  %v8598 = vadd.f32 %v8083, %v8464
  %v8599 = vadd.f32 %v8084, %v8467
  %v8600 = vadd.f32 %v8085, %v8472
  %v8601 = vadd.f32 %v8086, %v8475
  %v8602 = vadd.f32 %v8087, %v8480
  %v8603 = vadd.f32 %v8088, %v8483
  %v8604 = vadd.f32 %v8089, %v8488
  %v8605 = vadd.f32 %v8090, %v8491
  %v8606 = vadd.f32 %v8091, %v8496
  %v8607 = vadd.f32 %v8092, %v8499
  %v8608 = vadd.f32 %v8093, %v8504
  %v8609 = vadd.f32 %v8094, %v8507
  %v8610 = vadd.f32 %v8095, %v8512
  %v8611 = vadd.f32 %v8096, %v8515
  %v8612 = vadd.f32 %v8097, %v8520
  %v8613 = vadd.f32 %v8098, %v8523
  %v8614 = vadd.f32 %v8099, %v8528
  %v8615 = vadd.f32 %v8100, %v8531
  %v8616 = vadd.f32 %v8101, %v8536
  %v8617 = vadd.f32 %v8102, %v8539
  %v8618 = vadd.f32 %v8103, %v8544
  %v8619 = vadd.f32 %v8104, %v8547
  %v8620 = vadd.f32 %v8105, %v8552
  %v8621 = vadd.f32 %v8106, %v8555
  %v8622 = vld [vmem:[%s8107 + $0x8] sm:$0xff]
  %v8623 = vld [vmem:[%s8107 + $0x10] sm:$0xff]
  %v8624 = vld [vmem:[%s8107 + $0x28] sm:$0xff]
  %v8625 = vld [vmem:[%s8107 + $0x30] sm:$0xff]
  %v8626 = vld [vmem:[%s8107 + $0x48] sm:$0xff]
  %v8627 = vld [vmem:[%s8107 + $0x50] sm:$0xff]
  %v8628 = vld [vmem:[%s8107 + $0x68] sm:$0xff]
  %v8629 = vld [vmem:[%s8107 + $0x70] sm:$0xff]
  %v8630 = vld [vmem:[%s8107 + $0x88] sm:$0xff]
  %v8631 = vld [vmem:[%s8107 + $0x90] sm:$0xff]
  %v8632 = vld [vmem:[%s8107 + $0xa8] sm:$0xff]
  %v8633 = vld [vmem:[%s8107 + $0xb0] sm:$0xff]
  %v8634 = vld [vmem:[%s8107 + $0xc8] sm:$0xff]
  %v8635 = vld [vmem:[%s8107 + $0xd0] sm:$0xff]
  %v8636 = vld [vmem:[%s8107 + $0xe8] sm:$0xff]
  %v8637 = vld [vmem:[%s8107 + $0xf0] sm:$0xff]
  %v8638 = vld [vmem:[%s8107 + $0x108] sm:$0xff]
  %v8639 = vld [vmem:[%s8107 + $0x110] sm:$0xff]
  %v8640 = vld [vmem:[%s8107 + $0x128] sm:$0xff]
  %v8641 = vld [vmem:[%s8107 + $0x130] sm:$0xff]
  %v8642 = vld [vmem:[%s8107 + $0x148] sm:$0xff]
  %v8643 = vld [vmem:[%s8107 + $0x150] sm:$0xff]
  %v8644 = vld [vmem:[%s8107 + $0x168] sm:$0xff]
  %v8645 = vld [vmem:[%s8107 + $0x170] sm:$0xff]
  %v8646 = vld [vmem:[%s8107 + $0x188] sm:$0xff]
  %v8647 = vld [vmem:[%s8107 + $0x190] sm:$0xff]
  %v8648 = vld [vmem:[%s8107 + $0x1a8] sm:$0xff]
  %v8649 = vld [vmem:[%s8107 + $0x1b0] sm:$0xff]
  %v8650 = vld [vmem:[%s8107 + $0x1c8] sm:$0xff]
  %v8651 = vld [vmem:[%s8107 + $0x1d0] sm:$0xff]
  %v8652 = vld [vmem:[%s8107 + $0x1e8] sm:$0xff]
  %v8653 = vld [vmem:[%s8107 + $0x1f0] sm:$0xff]
  %v8654 = vld [vmem:[%s8107 + $0x248] sm:$0xff]
  %v8655 = vld [vmem:[%s8107 + $0x250] sm:$0xff]
  %v8656 = vld [vmem:[%s8107 + $0x268] sm:$0xff]
  %v8657 = vld [vmem:[%s8107 + $0x270] sm:$0xff]
  %v8658 = vld [vmem:[%s8107 + $0x288] sm:$0xff]
  %v8659 = vld [vmem:[%s8107 + $0x290] sm:$0xff]
  %v8660 = vld [vmem:[%s8107 + $0x2a8] sm:$0xff]
  %v8661 = vld [vmem:[%s8107 + $0x2b0] sm:$0xff]
  %v8662 = vld [vmem:[%s8107 + $0x2c8] sm:$0xff]
  %v8663 = vld [vmem:[%s8107 + $0x2d0] sm:$0xff]
  %v8664 = vld [vmem:[%s8107 + $0x2e8] sm:$0xff]
  %v8665 = vld [vmem:[%s8107 + $0x2f0] sm:$0xff]
  %v8666 = vld [vmem:[%s8107 + $0x308] sm:$0xff]
  %v8667 = vld [vmem:[%s8107 + $0x310] sm:$0xff]
  %v8668 = vld [vmem:[%s8107 + $0x328] sm:$0xff]
  %v8669 = vld [vmem:[%s8107 + $0x330] sm:$0xff]
  %v8670 = vld [vmem:[%s8107 + $0x348] sm:$0xff]
  %v8671 = vld [vmem:[%s8107 + $0x350] sm:$0xff]
  %v8672 = vld [vmem:[%s8107 + $0x368] sm:$0xff]
  %v8673 = vld [vmem:[%s8107 + $0x370] sm:$0xff]
  %v8674 = vld [vmem:[%s8107 + $0x388] sm:$0xff]
  %v8675 = vld [vmem:[%s8107 + $0x390] sm:$0xff]
  %v8676 = vld [vmem:[%s8107 + $0x3a8] sm:$0xff]
  %v8677 = vld [vmem:[%s8107 + $0x3b0] sm:$0xff]
  %v8678 = vld [vmem:[%s8107 + $0x3c8] sm:$0xff]
  %v8679 = vld [vmem:[%s8107 + $0x3d0] sm:$0xff]
  %v8680 = vld [vmem:[%s8107 + $0x3e8] sm:$0xff]
  %v8681 = vld [vmem:[%s8107 + $0x3f0] sm:$0xff]
  %v8682 = vld [vmem:[%s8107 + $0x408] sm:$0xff]
  %v8683 = vld [vmem:[%s8107 + $0x410] sm:$0xff]
  %v8684 = vld [vmem:[%s8107 + $0x428] sm:$0xff]
  %v8685 = vld [vmem:[%s8107 + $0x430] sm:$0xff]
  %v8686 = vpack.c.bf16 %v8623, %v8622
  %v8687 = vpack.c.bf16 %v8625, %v8624
  %v8688 = vpack.c.bf16 %v8627, %v8626
  %v8689 = vpack.c.bf16 %v8629, %v8628
  %v8690 = vpack.c.bf16 %v8631, %v8630
  %v8691 = vpack.c.bf16 %v8633, %v8632
  %v8692 = vpack.c.bf16 %v8635, %v8634
  %v8693 = vpack.c.bf16 %v8637, %v8636
  %v8694 = vpack.c.bf16 %v8639, %v8638
  %v8695 = vpack.c.bf16 %v8641, %v8640
  %v8696 = vpack.c.bf16 %v8643, %v8642
  %v8697 = vpack.c.bf16 %v8645, %v8644
  %v8698 = vpack.c.bf16 %v8647, %v8646
  %v8699 = vpack.c.bf16 %v8649, %v8648
  %v8700 = vpack.c.bf16 %v8651, %v8650
  %v8701 = vpack.c.bf16 %v8653, %v8652
  %v8702 = vpack.c.bf16 %v8655, %v8654
  %v8703 = vpack.c.bf16 %v8657, %v8656
  %v8704 = vpack.c.bf16 %v8659, %v8658
  %v8705 = vpack.c.bf16 %v8661, %v8660
  %v8706 = vpack.c.bf16 %v8663, %v8662
  %v8707 = vpack.c.bf16 %v8665, %v8664
  %v8708 = vpack.c.bf16 %v8667, %v8666
  %v8709 = vpack.c.bf16 %v8669, %v8668
  %v8710 = vpack.c.bf16 %v8671, %v8670
  %v8711 = vpack.c.bf16 %v8673, %v8672
  %v8712 = vpack.c.bf16 %v8675, %v8674
  %v8713 = vpack.c.bf16 %v8677, %v8676
  %v8714 = vpack.c.bf16 %v8679, %v8678
  %v8715 = vpack.c.bf16 %v8681, %v8680
  %v8716 = vpack.c.bf16 %v8683, %v8682
  %v8717 = vpack.c.bf16 %v8685, %v8684
  %s8718 = scalar_lea.vmem %s2, 448
  %v8719 = vld [vmem:[%s8718] sm:$0xf]
  %v8720 = vld [vmem:[%s8718 + $0x4] sm:$0xf]
  %v8721 = vld [vmem:[%s8718 + $0x8] sm:$0xf]
  %v8722 = vld [vmem:[%s8718 + $0xc] sm:$0xf]
  %v8723 = vld [vmem:[%s8718 + $0x10] sm:$0xf]
  %v8724 = vld [vmem:[%s8718 + $0x14] sm:$0xf]
  %v8725 = vld [vmem:[%s8718 + $0x18] sm:$0xf]
  %v8726 = vld [vmem:[%s8718 + $0x1c] sm:$0xf]
  %v8727 = vld [vmem:[%s8718 + $0x20] sm:$0xf]
  %v8728 = vld [vmem:[%s8718 + $0x24] sm:$0xf]
  %v8729 = vld [vmem:[%s8718 + $0x28] sm:$0xf]
  %v8730 = vld [vmem:[%s8718 + $0x2c] sm:$0xf]
  %v8731 = vld [vmem:[%s8718 + $0x30] sm:$0xf]
  %v8732 = vld [vmem:[%s8718 + $0x34] sm:$0xf]
  %v8733 = vld [vmem:[%s8718 + $0x38] sm:$0xf]
  %v8734 = vld [vmem:[%s8718 + $0x3c] sm:$0xf]
  %v8751 = vunpack.c.l.b16 %v8719
  %v8752 = vunpack.c.l.b16 %v8720
  %v8753 = vunpack.c.l.b16 %v8721
  %v8754 = vunpack.c.l.b16 %v8722
  %v8755 = vunpack.c.l.b16 %v8723
  %v8756 = vunpack.c.l.b16 %v8724
  %v8757 = vunpack.c.l.b16 %v8725
  %v8758 = vunpack.c.l.b16 %v8726
  %v8759 = vunpack.c.l.b16 %v8727
  %v8760 = vunpack.c.l.b16 %v8728
  %v8761 = vunpack.c.l.b16 %v8729
  %v8762 = vunpack.c.l.b16 %v8730
  %v8763 = vunpack.c.l.b16 %v8731
  %v8764 = vunpack.c.l.b16 %v8732
  %v8765 = vunpack.c.l.b16 %v8733
  %v8766 = vunpack.c.l.b16 %v8734
  %v8767 = vpack.c.b16 %v8752, %v8751
  %v8768 = vpack.c.b16 %v8754, %v8753
  %v8769 = vpack.c.b16 %v8756, %v8755
  %v8770 = vpack.c.b16 %v8758, %v8757
  %v8771 = vpack.c.b16 %v8760, %v8759
  %v8772 = vpack.c.b16 %v8762, %v8761
  %v8773 = vpack.c.b16 %v8764, %v8763
  %v8774 = vpack.c.b16 %v8766, %v8765
  %8783 = vmatprep.subr.bf16.mxu0 0
  %8784 = vmatpush1.bf16.msra.mxu0 %v8767
  %8785 = vmatprep.subr.bf16.mxu0 0
  %8786 = vmatpush1.bf16.msra.mxu0 %v8768
  %8787 = vmatprep.subr.bf16.mxu0 0
  %8788 = vmatpush1.bf16.msra.mxu0 %v8769
  %8789 = vmatprep.subr.bf16.mxu0 0
  %8790 = vmatpush1.bf16.msra.mxu0 %v8770
  %8791 = vmatprep.subr.bf16.mxu0 0
  %8792 = vmatpush1.bf16.msra.mxu0 %v8771
  %8793 = vmatprep.subr.bf16.mxu0 0
  %8794 = vmatpush1.bf16.msra.mxu0 %v8772
  %8795 = vmatprep.subr.bf16.mxu0 0
  %8796 = vmatpush1.bf16.msra.mxu0 %v8773
  %8797 = vmatprep.subr.bf16.mxu0 0
  %8798 = vmatpush1.bf16.msra.mxu0 %v8774
  %8799 = vmatprep.subr.bf16.mxu0 0
  %8800 = vmatpush1.bf16.msra.mxu0 0
  %8801 = vmatprep.subr.bf16.mxu0 0
  %8802 = vmatpush1.bf16.msra.mxu0 0
  %8803 = vmatprep.subr.bf16.mxu0 0
  %8804 = vmatpush1.bf16.msra.mxu0 0
  %8805 = vmatprep.subr.bf16.mxu0 0
  %8806 = vmatpush1.bf16.msra.mxu0 0
  %8807 = vmatprep.subr.bf16.mxu0 0
  %8808 = vmatpush1.bf16.msra.mxu0 0
  %8809 = vmatprep.subr.bf16.mxu0 0
  %8810 = vmatpush1.bf16.msra.mxu0 0
  %8811 = vmatprep.subr.bf16.mxu0 0
  %8812 = vmatpush1.bf16.msra.mxu0 0
  %8813 = vmatprep.subr.bf16.mxu0 0
  %8814 = vmatpush1.bf16.msra.mxu0 0
  %8815 = vmatprep.mubr.bf16.mxu0 0
  %8816 = vmatmul.mubr.bf16.gmra.mrb[0].mxu0 %v8686
  %v8817 = vpop.f32.mrb[0].mxu0
  %v8818 = vadd.f32 0.0, %v8817
  %v8819 = vpop.f32.mrb[0].mxu0
  %v8820 = vpop.f32.mrb[0].mxu0
  %v8821 = vadd.f32 0.0, %v8820
  %v8822 = vpop.f32.mrb[0].mxu0
  %8823 = vmatprep.mubr.bf16.mxu0 0
  %8824 = vmatmul.mubr.bf16.gmra.mrb[0].mxu0 %v8687
  %v8825 = vpop.f32.mrb[0].mxu0
  %v8826 = vadd.f32 0.0, %v8825
  %v8827 = vpop.f32.mrb[0].mxu0
  %v8828 = vpop.f32.mrb[0].mxu0
  %v8829 = vadd.f32 0.0, %v8828
  %v8830 = vpop.f32.mrb[0].mxu0
  %8831 = vmatprep.mubr.bf16.mxu0 0
  %8832 = vmatmul.mubr.bf16.gmra.mrb[0].mxu0 %v8688
  %v8833 = vpop.f32.mrb[0].mxu0
  %v8834 = vadd.f32 0.0, %v8833
  %v8835 = vpop.f32.mrb[0].mxu0
  %v8836 = vpop.f32.mrb[0].mxu0
  %v8837 = vadd.f32 0.0, %v8836
  %v8838 = vpop.f32.mrb[0].mxu0
  %8839 = vmatprep.mubr.bf16.mxu0 0
  %8840 = vmatmul.mubr.bf16.gmra.mrb[0].mxu0 %v8689
  %v8841 = vpop.f32.mrb[0].mxu0
  %v8842 = vadd.f32 0.0, %v8841
  %v8843 = vpop.f32.mrb[0].mxu0
  %v8844 = vpop.f32.mrb[0].mxu0
  %v8845 = vadd.f32 0.0, %v8844
  %v8846 = vpop.f32.mrb[0].mxu0
  %8847 = vmatprep.mubr.bf16.mxu0 0
  %8848 = vmatmul.mubr.bf16.gmra.mrb[0].mxu0 %v8690
  %v8849 = vpop.f32.mrb[0].mxu0
  %v8850 = vadd.f32 0.0, %v8849
  %v8851 = vpop.f32.mrb[0].mxu0
  %v8852 = vpop.f32.mrb[0].mxu0
  %v8853 = vadd.f32 0.0, %v8852
  %v8854 = vpop.f32.mrb[0].mxu0
  %8855 = vmatprep.mubr.bf16.mxu0 0
  %8856 = vmatmul.mubr.bf16.gmra.mrb[0].mxu0 %v8691
  %v8857 = vpop.f32.mrb[0].mxu0
  %v8858 = vadd.f32 0.0, %v8857
  %v8859 = vpop.f32.mrb[0].mxu0
  %v8860 = vpop.f32.mrb[0].mxu0
  %v8861 = vadd.f32 0.0, %v8860
  %v8862 = vpop.f32.mrb[0].mxu0
  %8863 = vmatprep.mubr.bf16.mxu0 0
  %8864 = vmatmul.mubr.bf16.gmra.mrb[0].mxu0 %v8692
  %v8865 = vpop.f32.mrb[0].mxu0
  %v8866 = vadd.f32 0.0, %v8865
  %v8867 = vpop.f32.mrb[0].mxu0
  %v8868 = vpop.f32.mrb[0].mxu0
  %v8869 = vadd.f32 0.0, %v8868
  %v8870 = vpop.f32.mrb[0].mxu0
  %8871 = vmatprep.mubr.bf16.mxu0 0
  %8872 = vmatmul.mubr.bf16.gmra.mrb[0].mxu0 %v8693
  %v8873 = vpop.f32.mrb[0].mxu0
  %v8874 = vadd.f32 0.0, %v8873
  %v8875 = vpop.f32.mrb[0].mxu0
  %v8876 = vpop.f32.mrb[0].mxu0
  %v8877 = vadd.f32 0.0, %v8876
  %v8878 = vpop.f32.mrb[0].mxu0
  %8879 = vmatprep.mubr.bf16.mxu0 0
  %8880 = vmatmul.mubr.bf16.gmra.mrb[0].mxu0 %v8694
  %v8881 = vpop.f32.mrb[0].mxu0
  %v8882 = vadd.f32 0.0, %v8881
  %v8883 = vpop.f32.mrb[0].mxu0
  %v8884 = vpop.f32.mrb[0].mxu0
  %v8885 = vadd.f32 0.0, %v8884
  %v8886 = vpop.f32.mrb[0].mxu0
  %8887 = vmatprep.mubr.bf16.mxu0 0
  %8888 = vmatmul.mubr.bf16.gmra.mrb[0].mxu0 %v8695
  %v8889 = vpop.f32.mrb[0].mxu0
  %v8890 = vadd.f32 0.0, %v8889
  %v8891 = vpop.f32.mrb[0].mxu0
  %v8892 = vpop.f32.mrb[0].mxu0
  %v8893 = vadd.f32 0.0, %v8892
  %v8894 = vpop.f32.mrb[0].mxu0
  %8895 = vmatprep.mubr.bf16.mxu0 0
  %8896 = vmatmul.mubr.bf16.gmra.mrb[0].mxu0 %v8696
  %v8897 = vpop.f32.mrb[0].mxu0
  %v8898 = vadd.f32 0.0, %v8897
  %v8899 = vpop.f32.mrb[0].mxu0
  %v8900 = vpop.f32.mrb[0].mxu0
  %v8901 = vadd.f32 0.0, %v8900
  %v8902 = vpop.f32.mrb[0].mxu0
  %8903 = vmatprep.mubr.bf16.mxu0 0
  %8904 = vmatmul.mubr.bf16.gmra.mrb[0].mxu0 %v8697
  %v8905 = vpop.f32.mrb[0].mxu0
  %v8906 = vadd.f32 0.0, %v8905
  %v8907 = vpop.f32.mrb[0].mxu0
  %v8908 = vpop.f32.mrb[0].mxu0
  %v8909 = vadd.f32 0.0, %v8908
  %v8910 = vpop.f32.mrb[0].mxu0
  %8911 = vmatprep.mubr.bf16.mxu0 0
  %8912 = vmatmul.mubr.bf16.gmra.mrb[0].mxu0 %v8698
  %v8913 = vpop.f32.mrb[0].mxu0
  %v8914 = vadd.f32 0.0, %v8913
  %v8915 = vpop.f32.mrb[0].mxu0
  %v8916 = vpop.f32.mrb[0].mxu0
  %v8917 = vadd.f32 0.0, %v8916
  %v8918 = vpop.f32.mrb[0].mxu0
  %8919 = vmatprep.mubr.bf16.mxu0 0
  %8920 = vmatmul.mubr.bf16.gmra.mrb[0].mxu0 %v8699
  %v8921 = vpop.f32.mrb[0].mxu0
  %v8922 = vadd.f32 0.0, %v8921
  %v8923 = vpop.f32.mrb[0].mxu0
  %v8924 = vpop.f32.mrb[0].mxu0
  %v8925 = vadd.f32 0.0, %v8924
  %v8926 = vpop.f32.mrb[0].mxu0
  %8927 = vmatprep.mubr.bf16.mxu0 0
  %8928 = vmatmul.mubr.bf16.gmra.mrb[0].mxu0 %v8700
  %v8929 = vpop.f32.mrb[0].mxu0
  %v8930 = vadd.f32 0.0, %v8929
  %v8931 = vpop.f32.mrb[0].mxu0
  %v8932 = vpop.f32.mrb[0].mxu0
  %v8933 = vadd.f32 0.0, %v8932
  %v8934 = vpop.f32.mrb[0].mxu0
  %8935 = vmatprep.mubr.bf16.mxu0 0
  %8936 = vmatmul.mubr.bf16.gmra.mrb[0].mxu0 %v8701
  %v8937 = vpop.f32.mrb[0].mxu0
  %v8938 = vadd.f32 0.0, %v8937
  %v8939 = vpop.f32.mrb[0].mxu0
  %v8940 = vpop.f32.mrb[0].mxu0
  %v8941 = vadd.f32 0.0, %v8940
  %v8942 = vpop.f32.mrb[0].mxu0
  %8943 = vmatprep.mubr.bf16.mxu0 0
  %8944 = vmatmul.mubr.bf16.gmra.mrb[0].mxu0 %v8702
  %v8945 = vpop.f32.mrb[0].mxu0
  %v8946 = vadd.f32 0.0, %v8945
  %v8947 = vpop.f32.mrb[0].mxu0
  %v8948 = vpop.f32.mrb[0].mxu0
  %v8949 = vadd.f32 0.0, %v8948
  %v8950 = vpop.f32.mrb[0].mxu0
  %8951 = vmatprep.mubr.bf16.mxu0 0
  %8952 = vmatmul.mubr.bf16.gmra.mrb[0].mxu0 %v8703
  %v8953 = vpop.f32.mrb[0].mxu0
  %v8954 = vadd.f32 0.0, %v8953
  %v8955 = vpop.f32.mrb[0].mxu0
  %v8956 = vpop.f32.mrb[0].mxu0
  %v8957 = vadd.f32 0.0, %v8956
  %v8958 = vpop.f32.mrb[0].mxu0
  %8959 = vmatprep.mubr.bf16.mxu0 0
  %8960 = vmatmul.mubr.bf16.gmra.mrb[0].mxu0 %v8704
  %v8961 = vpop.f32.mrb[0].mxu0
  %v8962 = vadd.f32 0.0, %v8961
  %v8963 = vpop.f32.mrb[0].mxu0
  %v8964 = vpop.f32.mrb[0].mxu0
  %v8965 = vadd.f32 0.0, %v8964
  %v8966 = vpop.f32.mrb[0].mxu0
  %8967 = vmatprep.mubr.bf16.mxu0 0
  %8968 = vmatmul.mubr.bf16.gmra.mrb[0].mxu0 %v8705
  %v8969 = vpop.f32.mrb[0].mxu0
  %v8970 = vadd.f32 0.0, %v8969
  %v8971 = vpop.f32.mrb[0].mxu0
  %v8972 = vpop.f32.mrb[0].mxu0
  %v8973 = vadd.f32 0.0, %v8972
  %v8974 = vpop.f32.mrb[0].mxu0
  %8975 = vmatprep.mubr.bf16.mxu0 0
  %8976 = vmatmul.mubr.bf16.gmra.mrb[0].mxu0 %v8706
  %v8977 = vpop.f32.mrb[0].mxu0
  %v8978 = vadd.f32 0.0, %v8977
  %v8979 = vpop.f32.mrb[0].mxu0
  %v8980 = vpop.f32.mrb[0].mxu0
  %v8981 = vadd.f32 0.0, %v8980
  %v8982 = vpop.f32.mrb[0].mxu0
  %8983 = vmatprep.mubr.bf16.mxu0 0
  %8984 = vmatmul.mubr.bf16.gmra.mrb[0].mxu0 %v8707
  %v8985 = vpop.f32.mrb[0].mxu0
  %v8986 = vadd.f32 0.0, %v8985
  %v8987 = vpop.f32.mrb[0].mxu0
  %v8988 = vpop.f32.mrb[0].mxu0
  %v8989 = vadd.f32 0.0, %v8988
  %v8990 = vpop.f32.mrb[0].mxu0
  %8991 = vmatprep.mubr.bf16.mxu0 0
  %8992 = vmatmul.mubr.bf16.gmra.mrb[0].mxu0 %v8708
  %v8993 = vpop.f32.mrb[0].mxu0
  %v8994 = vadd.f32 0.0, %v8993
  %v8995 = vpop.f32.mrb[0].mxu0
  %v8996 = vpop.f32.mrb[0].mxu0
  %v8997 = vadd.f32 0.0, %v8996
  %v8998 = vpop.f32.mrb[0].mxu0
  %8999 = vmatprep.mubr.bf16.mxu0 0
  %9000 = vmatmul.mubr.bf16.gmra.mrb[0].mxu0 %v8709
  %v9001 = vpop.f32.mrb[0].mxu0
  %v9002 = vadd.f32 0.0, %v9001
  %v9003 = vpop.f32.mrb[0].mxu0
  %v9004 = vpop.f32.mrb[0].mxu0
  %v9005 = vadd.f32 0.0, %v9004
  %v9006 = vpop.f32.mrb[0].mxu0
  %9007 = vmatprep.mubr.bf16.mxu0 0
  %9008 = vmatmul.mubr.bf16.gmra.mrb[0].mxu0 %v8710
  %v9009 = vpop.f32.mrb[0].mxu0
  %v9010 = vadd.f32 0.0, %v9009
  %v9011 = vpop.f32.mrb[0].mxu0
  %v9012 = vpop.f32.mrb[0].mxu0
  %v9013 = vadd.f32 0.0, %v9012
  %v9014 = vpop.f32.mrb[0].mxu0
  %9015 = vmatprep.mubr.bf16.mxu0 0
  %9016 = vmatmul.mubr.bf16.gmra.mrb[0].mxu0 %v8711
  %v9017 = vpop.f32.mrb[0].mxu0
  %v9018 = vadd.f32 0.0, %v9017
  %v9019 = vpop.f32.mrb[0].mxu0
  %v9020 = vpop.f32.mrb[0].mxu0
  %v9021 = vadd.f32 0.0, %v9020
  %v9022 = vpop.f32.mrb[0].mxu0
  %9023 = vmatprep.mubr.bf16.mxu0 0
  %9024 = vmatmul.mubr.bf16.gmra.mrb[0].mxu0 %v8712
  %v9025 = vpop.f32.mrb[0].mxu0
  %v9026 = vadd.f32 0.0, %v9025
  %v9027 = vpop.f32.mrb[0].mxu0
  %v9028 = vpop.f32.mrb[0].mxu0
  %v9029 = vadd.f32 0.0, %v9028
  %v9030 = vpop.f32.mrb[0].mxu0
  %9031 = vmatprep.mubr.bf16.mxu0 0
  %9032 = vmatmul.mubr.bf16.gmra.mrb[0].mxu0 %v8713
  %v9033 = vpop.f32.mrb[0].mxu0
  %v9034 = vadd.f32 0.0, %v9033
  %v9035 = vpop.f32.mrb[0].mxu0
  %v9036 = vpop.f32.mrb[0].mxu0
  %v9037 = vadd.f32 0.0, %v9036
  %v9038 = vpop.f32.mrb[0].mxu0
  %9039 = vmatprep.mubr.bf16.mxu0 0
  %9040 = vmatmul.mubr.bf16.gmra.mrb[0].mxu0 %v8714
  %v9041 = vpop.f32.mrb[0].mxu0
  %v9042 = vadd.f32 0.0, %v9041
  %v9043 = vpop.f32.mrb[0].mxu0
  %v9044 = vpop.f32.mrb[0].mxu0
  %v9045 = vadd.f32 0.0, %v9044
  %v9046 = vpop.f32.mrb[0].mxu0
  %9047 = vmatprep.mubr.bf16.mxu0 0
  %9048 = vmatmul.mubr.bf16.gmra.mrb[0].mxu0 %v8715
  %v9049 = vpop.f32.mrb[0].mxu0
  %v9050 = vadd.f32 0.0, %v9049
  %v9051 = vpop.f32.mrb[0].mxu0
  %v9052 = vpop.f32.mrb[0].mxu0
  %v9053 = vadd.f32 0.0, %v9052
  %v9054 = vpop.f32.mrb[0].mxu0
  %9055 = vmatprep.mubr.bf16.mxu0 0
  %9056 = vmatmul.mubr.bf16.gmra.mrb[0].mxu0 %v8716
  %v9057 = vpop.f32.mrb[0].mxu0
  %v9058 = vadd.f32 0.0, %v9057
  %v9059 = vpop.f32.mrb[0].mxu0
  %v9060 = vpop.f32.mrb[0].mxu0
  %v9061 = vadd.f32 0.0, %v9060
  %v9062 = vpop.f32.mrb[0].mxu0
  %9063 = vmatprep.mubr.bf16.mxu0 0
  %9064 = vmatmul.mubr.bf16.gmra.mrb[0].mxu0 %v8717
  %v9065 = vpop.f32.mrb[0].mxu0
  %v9066 = vadd.f32 0.0, %v9065
  %v9067 = vpop.f32.mrb[0].mxu0
  %v9068 = vpop.f32.mrb[0].mxu0
  %v9069 = vadd.f32 0.0, %v9068
  %v9070 = vpop.f32.mrb[0].mxu0
  %9071 = vdwg.mxu0
  %v9072 = vadd.f32 %v8558, %v8818
  %v9073 = vadd.f32 %v8559, %v8821
  %v9074 = vadd.f32 %v8560, %v8826
  %v9075 = vadd.f32 %v8561, %v8829
  %v9076 = vadd.f32 %v8562, %v8834
  %v9077 = vadd.f32 %v8563, %v8837
  %v9078 = vadd.f32 %v8564, %v8842
  %v9079 = vadd.f32 %v8565, %v8845
  %v9080 = vadd.f32 %v8566, %v8850
  %v9081 = vadd.f32 %v8567, %v8853
  %v9082 = vadd.f32 %v8568, %v8858
  %v9083 = vadd.f32 %v8569, %v8861
  %v9084 = vadd.f32 %v8570, %v8866
  %v9085 = vadd.f32 %v8571, %v8869
  %v9086 = vadd.f32 %v8572, %v8874
  %v9087 = vadd.f32 %v8573, %v8877
  %v9088 = vadd.f32 %v8574, %v8882
  %v9089 = vadd.f32 %v8575, %v8885
  %v9090 = vadd.f32 %v8576, %v8890
  %v9091 = vadd.f32 %v8577, %v8893
  %v9092 = vadd.f32 %v8578, %v8898
  %v9093 = vadd.f32 %v8579, %v8901
  %v9094 = vadd.f32 %v8580, %v8906
  %v9095 = vadd.f32 %v8581, %v8909
  %v9096 = vadd.f32 %v8582, %v8914
  %v9097 = vadd.f32 %v8583, %v8917
  %v9098 = vadd.f32 %v8584, %v8922
  %v9099 = vadd.f32 %v8585, %v8925
  %v9100 = vadd.f32 %v8586, %v8930
  %v9101 = vadd.f32 %v8587, %v8933
  %v9102 = vadd.f32 %v8588, %v8938
  %v9103 = vadd.f32 %v8589, %v8941
  %v9104 = vadd.f32 %v8590, %v8946
  %v9105 = vadd.f32 %v8591, %v8949
  %v9106 = vadd.f32 %v8592, %v8954
  %v9107 = vadd.f32 %v8593, %v8957
  %v9108 = vadd.f32 %v8594, %v8962
  %v9109 = vadd.f32 %v8595, %v8965
  %v9110 = vadd.f32 %v8596, %v8970
  %v9111 = vadd.f32 %v8597, %v8973
  %v9112 = vadd.f32 %v8598, %v8978
  %v9113 = vadd.f32 %v8599, %v8981
  %v9114 = vadd.f32 %v8600, %v8986
  %v9115 = vadd.f32 %v8601, %v8989
  %v9116 = vadd.f32 %v8602, %v8994
  %v9117 = vadd.f32 %v8603, %v8997
  %v9118 = vadd.f32 %v8604, %v9002
  %v9119 = vadd.f32 %v8605, %v9005
  %v9120 = vadd.f32 %v8606, %v9010
  %v9121 = vadd.f32 %v8607, %v9013
  %v9122 = vadd.f32 %v8608, %v9018
  %v9123 = vadd.f32 %v8609, %v9021
  %v9124 = vadd.f32 %v8610, %v9026
  %v9125 = vadd.f32 %v8611, %v9029
  %v9126 = vadd.f32 %v8612, %v9034
  %v9127 = vadd.f32 %v8613, %v9037
  %v9128 = vadd.f32 %v8614, %v9042
  %v9129 = vadd.f32 %v8615, %v9045
  %v9130 = vadd.f32 %v8616, %v9050
  %v9131 = vadd.f32 %v8617, %v9053
  %v9132 = vadd.f32 %v8618, %v9058
  %v9133 = vadd.f32 %v8619, %v9061
  %v9134 = vadd.f32 %v8620, %v9066
  %v9135 = vadd.f32 %v8621, %v9069
  %v9136 = vld [vmem:[%s8107 + $0x9] sm:$0xff]
  %v9137 = vld [vmem:[%s8107 + $0x11] sm:$0xff]
  %v9138 = vld [vmem:[%s8107 + $0x29] sm:$0xff]
  %v9139 = vld [vmem:[%s8107 + $0x31] sm:$0xff]
  %v9140 = vld [vmem:[%s8107 + $0x49] sm:$0xff]
  %v9141 = vld [vmem:[%s8107 + $0x51] sm:$0xff]
  %v9142 = vld [vmem:[%s8107 + $0x69] sm:$0xff]
  %v9143 = vld [vmem:[%s8107 + $0x71] sm:$0xff]
  %v9144 = vld [vmem:[%s8107 + $0x89] sm:$0xff]
  %v9145 = vld [vmem:[%s8107 + $0x91] sm:$0xff]
  %v9146 = vld [vmem:[%s8107 + $0xa9] sm:$0xff]
  %v9147 = vld [vmem:[%s8107 + $0xb1] sm:$0xff]
  %v9148 = vld [vmem:[%s8107 + $0xc9] sm:$0xff]
  %v9149 = vld [vmem:[%s8107 + $0xd1] sm:$0xff]
  %v9150 = vld [vmem:[%s8107 + $0xe9] sm:$0xff]
  %v9151 = vld [vmem:[%s8107 + $0xf1] sm:$0xff]
  %v9152 = vld [vmem:[%s8107 + $0x109] sm:$0xff]
  %v9153 = vld [vmem:[%s8107 + $0x111] sm:$0xff]
  %v9154 = vld [vmem:[%s8107 + $0x129] sm:$0xff]
  %v9155 = vld [vmem:[%s8107 + $0x131] sm:$0xff]
  %v9156 = vld [vmem:[%s8107 + $0x149] sm:$0xff]
  %v9157 = vld [vmem:[%s8107 + $0x151] sm:$0xff]
  %v9158 = vld [vmem:[%s8107 + $0x169] sm:$0xff]
  %v9159 = vld [vmem:[%s8107 + $0x171] sm:$0xff]
  %v9160 = vld [vmem:[%s8107 + $0x189] sm:$0xff]
  %v9161 = vld [vmem:[%s8107 + $0x191] sm:$0xff]
  %v9162 = vld [vmem:[%s8107 + $0x1a9] sm:$0xff]
  %v9163 = vld [vmem:[%s8107 + $0x1b1] sm:$0xff]
  %v9164 = vld [vmem:[%s8107 + $0x1c9] sm:$0xff]
  %v9165 = vld [vmem:[%s8107 + $0x1d1] sm:$0xff]
  %v9166 = vld [vmem:[%s8107 + $0x1e9] sm:$0xff]
  %v9167 = vld [vmem:[%s8107 + $0x1f1] sm:$0xff]
  %v9168 = vld [vmem:[%s8107 + $0x249] sm:$0xff]
  %v9169 = vld [vmem:[%s8107 + $0x251] sm:$0xff]
  %v9170 = vld [vmem:[%s8107 + $0x269] sm:$0xff]
  %v9171 = vld [vmem:[%s8107 + $0x271] sm:$0xff]
  %v9172 = vld [vmem:[%s8107 + $0x289] sm:$0xff]
  %v9173 = vld [vmem:[%s8107 + $0x291] sm:$0xff]
  %v9174 = vld [vmem:[%s8107 + $0x2a9] sm:$0xff]
  %v9175 = vld [vmem:[%s8107 + $0x2b1] sm:$0xff]
  %v9176 = vld [vmem:[%s8107 + $0x2c9] sm:$0xff]
  %v9177 = vld [vmem:[%s8107 + $0x2d1] sm:$0xff]
  %v9178 = vld [vmem:[%s8107 + $0x2e9] sm:$0xff]
  %v9179 = vld [vmem:[%s8107 + $0x2f1] sm:$0xff]
  %v9180 = vld [vmem:[%s8107 + $0x309] sm:$0xff]
  %v9181 = vld [vmem:[%s8107 + $0x311] sm:$0xff]
  %v9182 = vld [vmem:[%s8107 + $0x329] sm:$0xff]
  %v9183 = vld [vmem:[%s8107 + $0x331] sm:$0xff]
  %v9184 = vld [vmem:[%s8107 + $0x349] sm:$0xff]
  %v9185 = vld [vmem:[%s8107 + $0x351] sm:$0xff]
  %v9186 = vld [vmem:[%s8107 + $0x369] sm:$0xff]
  %v9187 = vld [vmem:[%s8107 + $0x371] sm:$0xff]
  %v9188 = vld [vmem:[%s8107 + $0x389] sm:$0xff]
  %v9189 = vld [vmem:[%s8107 + $0x391] sm:$0xff]
  %v9190 = vld [vmem:[%s8107 + $0x3a9] sm:$0xff]
  %v9191 = vld [vmem:[%s8107 + $0x3b1] sm:$0xff]
  %v9192 = vld [vmem:[%s8107 + $0x3c9] sm:$0xff]
  %v9193 = vld [vmem:[%s8107 + $0x3d1] sm:$0xff]
  %v9194 = vld [vmem:[%s8107 + $0x3e9] sm:$0xff]
  %v9195 = vld [vmem:[%s8107 + $0x3f1] sm:$0xff]
  %v9196 = vld [vmem:[%s8107 + $0x409] sm:$0xff]
  %v9197 = vld [vmem:[%s8107 + $0x411] sm:$0xff]
  %v9198 = vld [vmem:[%s8107 + $0x429] sm:$0xff]
  %v9199 = vld [vmem:[%s8107 + $0x431] sm:$0xff]
  %v9200 = vpack.c.bf16 %v9137, %v9136
  %v9201 = vpack.c.bf16 %v9139, %v9138
  %v9202 = vpack.c.bf16 %v9141, %v9140
  %v9203 = vpack.c.bf16 %v9143, %v9142
  %v9204 = vpack.c.bf16 %v9145, %v9144
  %v9205 = vpack.c.bf16 %v9147, %v9146
  %v9206 = vpack.c.bf16 %v9149, %v9148
  %v9207 = vpack.c.bf16 %v9151, %v9150
  %v9208 = vpack.c.bf16 %v9153, %v9152
  %v9209 = vpack.c.bf16 %v9155, %v9154
  %v9210 = vpack.c.bf16 %v9157, %v9156
  %v9211 = vpack.c.bf16 %v9159, %v9158
  %v9212 = vpack.c.bf16 %v9161, %v9160
  %v9213 = vpack.c.bf16 %v9163, %v9162
  %v9214 = vpack.c.bf16 %v9165, %v9164
  %v9215 = vpack.c.bf16 %v9167, %v9166
  %v9216 = vpack.c.bf16 %v9169, %v9168
  %v9217 = vpack.c.bf16 %v9171, %v9170
  %v9218 = vpack.c.bf16 %v9173, %v9172
  %v9219 = vpack.c.bf16 %v9175, %v9174
  %v9220 = vpack.c.bf16 %v9177, %v9176
  %v9221 = vpack.c.bf16 %v9179, %v9178
  %v9222 = vpack.c.bf16 %v9181, %v9180
  %v9223 = vpack.c.bf16 %v9183, %v9182
  %v9224 = vpack.c.bf16 %v9185, %v9184
  %v9225 = vpack.c.bf16 %v9187, %v9186
  %v9226 = vpack.c.bf16 %v9189, %v9188
  %v9227 = vpack.c.bf16 %v9191, %v9190
  %v9228 = vpack.c.bf16 %v9193, %v9192
  %v9229 = vpack.c.bf16 %v9195, %v9194
  %v9230 = vpack.c.bf16 %v9197, %v9196
  %v9231 = vpack.c.bf16 %v9199, %v9198
  %s9232 = scalar_lea.vmem %s2, 512
  %v9233 = vld [vmem:[%s9232] sm:$0xf]
  %v9234 = vld [vmem:[%s9232 + $0x4] sm:$0xf]
  %v9235 = vld [vmem:[%s9232 + $0x8] sm:$0xf]
  %v9236 = vld [vmem:[%s9232 + $0xc] sm:$0xf]
  %v9237 = vld [vmem:[%s9232 + $0x10] sm:$0xf]
  %v9238 = vld [vmem:[%s9232 + $0x14] sm:$0xf]
  %v9239 = vld [vmem:[%s9232 + $0x18] sm:$0xf]
  %v9240 = vld [vmem:[%s9232 + $0x1c] sm:$0xf]
  %v9241 = vld [vmem:[%s9232 + $0x20] sm:$0xf]
  %v9242 = vld [vmem:[%s9232 + $0x24] sm:$0xf]
  %v9243 = vld [vmem:[%s9232 + $0x28] sm:$0xf]
  %v9244 = vld [vmem:[%s9232 + $0x2c] sm:$0xf]
  %v9245 = vld [vmem:[%s9232 + $0x30] sm:$0xf]
  %v9246 = vld [vmem:[%s9232 + $0x34] sm:$0xf]
  %v9247 = vld [vmem:[%s9232 + $0x38] sm:$0xf]
  %v9248 = vld [vmem:[%s9232 + $0x3c] sm:$0xf]
  %v9265 = vunpack.c.l.b16 %v9233
  %v9266 = vunpack.c.l.b16 %v9234
  %v9267 = vunpack.c.l.b16 %v9235
  %v9268 = vunpack.c.l.b16 %v9236
  %v9269 = vunpack.c.l.b16 %v9237
  %v9270 = vunpack.c.l.b16 %v9238
  %v9271 = vunpack.c.l.b16 %v9239
  %v9272 = vunpack.c.l.b16 %v9240
  %v9273 = vunpack.c.l.b16 %v9241
  %v9274 = vunpack.c.l.b16 %v9242
  %v9275 = vunpack.c.l.b16 %v9243
  %v9276 = vunpack.c.l.b16 %v9244
  %v9277 = vunpack.c.l.b16 %v9245
  %v9278 = vunpack.c.l.b16 %v9246
  %v9279 = vunpack.c.l.b16 %v9247
  %v9280 = vunpack.c.l.b16 %v9248
  %v9281 = vpack.c.b16 %v9266, %v9265
  %v9282 = vpack.c.b16 %v9268, %v9267
  %v9283 = vpack.c.b16 %v9270, %v9269
  %v9284 = vpack.c.b16 %v9272, %v9271
  %v9285 = vpack.c.b16 %v9274, %v9273
  %v9286 = vpack.c.b16 %v9276, %v9275
  %v9287 = vpack.c.b16 %v9278, %v9277
  %v9288 = vpack.c.b16 %v9280, %v9279
  %9297 = vmatprep.subr.bf16.mxu0 0
  %9298 = vmatpush1.bf16.msra.mxu0 %v9281
  %9299 = vmatprep.subr.bf16.mxu0 0
  %9300 = vmatpush1.bf16.msra.mxu0 %v9282
  %9301 = vmatprep.subr.bf16.mxu0 0
  %9302 = vmatpush1.bf16.msra.mxu0 %v9283
  %9303 = vmatprep.subr.bf16.mxu0 0
  %9304 = vmatpush1.bf16.msra.mxu0 %v9284
  %9305 = vmatprep.subr.bf16.mxu0 0
  %9306 = vmatpush1.bf16.msra.mxu0 %v9285
  %9307 = vmatprep.subr.bf16.mxu0 0
  %9308 = vmatpush1.bf16.msra.mxu0 %v9286
  %9309 = vmatprep.subr.bf16.mxu0 0
  %9310 = vmatpush1.bf16.msra.mxu0 %v9287
  %9311 = vmatprep.subr.bf16.mxu0 0
  %9312 = vmatpush1.bf16.msra.mxu0 %v9288
  %9313 = vmatprep.subr.bf16.mxu0 0
  %9314 = vmatpush1.bf16.msra.mxu0 0
  %9315 = vmatprep.subr.bf16.mxu0 0
  %9316 = vmatpush1.bf16.msra.mxu0 0
  %9317 = vmatprep.subr.bf16.mxu0 0
  %9318 = vmatpush1.bf16.msra.mxu0 0
  %9319 = vmatprep.subr.bf16.mxu0 0
  %9320 = vmatpush1.bf16.msra.mxu0 0
  %9321 = vmatprep.subr.bf16.mxu0 0
  %9322 = vmatpush1.bf16.msra.mxu0 0
  %9323 = vmatprep.subr.bf16.mxu0 0
  %9324 = vmatpush1.bf16.msra.mxu0 0
  %9325 = vmatprep.subr.bf16.mxu0 0
  %9326 = vmatpush1.bf16.msra.mxu0 0
  %9327 = vmatprep.subr.bf16.mxu0 0
  %9328 = vmatpush1.bf16.msra.mxu0 0
  %9329 = vmatprep.mubr.bf16.mxu0 0
  %9330 = vmatmul.mubr.bf16.gmra.mrb[0].mxu0 %v9200
  %v9331 = vpop.f32.mrb[0].mxu0
  %v9332 = vadd.f32 0.0, %v9331
  %v9333 = vpop.f32.mrb[0].mxu0
  %v9334 = vpop.f32.mrb[0].mxu0
  %v9335 = vadd.f32 0.0, %v9334
  %v9336 = vpop.f32.mrb[0].mxu0
  %9337 = vmatprep.mubr.bf16.mxu0 0
  %9338 = vmatmul.mubr.bf16.gmra.mrb[0].mxu0 %v9201
  %v9339 = vpop.f32.mrb[0].mxu0
  %v9340 = vadd.f32 0.0, %v9339
  %v9341 = vpop.f32.mrb[0].mxu0
  %v9342 = vpop.f32.mrb[0].mxu0
  %v9343 = vadd.f32 0.0, %v9342
  %v9344 = vpop.f32.mrb[0].mxu0
  %9345 = vmatprep.mubr.bf16.mxu0 0
  %9346 = vmatmul.mubr.bf16.gmra.mrb[0].mxu0 %v9202
  %v9347 = vpop.f32.mrb[0].mxu0
  %v9348 = vadd.f32 0.0, %v9347
  %v9349 = vpop.f32.mrb[0].mxu0
  %v9350 = vpop.f32.mrb[0].mxu0
  %v9351 = vadd.f32 0.0, %v9350
  %v9352 = vpop.f32.mrb[0].mxu0
  %9353 = vmatprep.mubr.bf16.mxu0 0
  %9354 = vmatmul.mubr.bf16.gmra.mrb[0].mxu0 %v9203
  %v9355 = vpop.f32.mrb[0].mxu0
  %v9356 = vadd.f32 0.0, %v9355
  %v9357 = vpop.f32.mrb[0].mxu0
  %v9358 = vpop.f32.mrb[0].mxu0
  %v9359 = vadd.f32 0.0, %v9358
  %v9360 = vpop.f32.mrb[0].mxu0
  %9361 = vmatprep.mubr.bf16.mxu0 0
  %9362 = vmatmul.mubr.bf16.gmra.mrb[0].mxu0 %v9204
  %v9363 = vpop.f32.mrb[0].mxu0
  %v9364 = vadd.f32 0.0, %v9363
  %v9365 = vpop.f32.mrb[0].mxu0
  %v9366 = vpop.f32.mrb[0].mxu0
  %v9367 = vadd.f32 0.0, %v9366
  %v9368 = vpop.f32.mrb[0].mxu0
  %9369 = vmatprep.mubr.bf16.mxu0 0
  %9370 = vmatmul.mubr.bf16.gmra.mrb[0].mxu0 %v9205
  %v9371 = vpop.f32.mrb[0].mxu0
  %v9372 = vadd.f32 0.0, %v9371
  %v9373 = vpop.f32.mrb[0].mxu0
  %v9374 = vpop.f32.mrb[0].mxu0
  %v9375 = vadd.f32 0.0, %v9374
  %v9376 = vpop.f32.mrb[0].mxu0
  %9377 = vmatprep.mubr.bf16.mxu0 0
  %9378 = vmatmul.mubr.bf16.gmra.mrb[0].mxu0 %v9206
  %v9379 = vpop.f32.mrb[0].mxu0
  %v9380 = vadd.f32 0.0, %v9379
  %v9381 = vpop.f32.mrb[0].mxu0
  %v9382 = vpop.f32.mrb[0].mxu0
  %v9383 = vadd.f32 0.0, %v9382
  %v9384 = vpop.f32.mrb[0].mxu0
  %9385 = vmatprep.mubr.bf16.mxu0 0
  %9386 = vmatmul.mubr.bf16.gmra.mrb[0].mxu0 %v9207
  %v9387 = vpop.f32.mrb[0].mxu0
  %v9388 = vadd.f32 0.0, %v9387
  %v9389 = vpop.f32.mrb[0].mxu0
  %v9390 = vpop.f32.mrb[0].mxu0
  %v9391 = vadd.f32 0.0, %v9390
  %v9392 = vpop.f32.mrb[0].mxu0
  %9393 = vmatprep.mubr.bf16.mxu0 0
  %9394 = vmatmul.mubr.bf16.gmra.mrb[0].mxu0 %v9208
  %v9395 = vpop.f32.mrb[0].mxu0
  %v9396 = vadd.f32 0.0, %v9395
  %v9397 = vpop.f32.mrb[0].mxu0
  %v9398 = vpop.f32.mrb[0].mxu0
  %v9399 = vadd.f32 0.0, %v9398
  %v9400 = vpop.f32.mrb[0].mxu0
  %9401 = vmatprep.mubr.bf16.mxu0 0
  %9402 = vmatmul.mubr.bf16.gmra.mrb[0].mxu0 %v9209
  %v9403 = vpop.f32.mrb[0].mxu0
  %v9404 = vadd.f32 0.0, %v9403
  %v9405 = vpop.f32.mrb[0].mxu0
  %v9406 = vpop.f32.mrb[0].mxu0
  %v9407 = vadd.f32 0.0, %v9406
  %v9408 = vpop.f32.mrb[0].mxu0
  %9409 = vmatprep.mubr.bf16.mxu0 0
  %9410 = vmatmul.mubr.bf16.gmra.mrb[0].mxu0 %v9210
  %v9411 = vpop.f32.mrb[0].mxu0
  %v9412 = vadd.f32 0.0, %v9411
  %v9413 = vpop.f32.mrb[0].mxu0
  %v9414 = vpop.f32.mrb[0].mxu0
  %v9415 = vadd.f32 0.0, %v9414
  %v9416 = vpop.f32.mrb[0].mxu0
  %9417 = vmatprep.mubr.bf16.mxu0 0
  %9418 = vmatmul.mubr.bf16.gmra.mrb[0].mxu0 %v9211
  %v9419 = vpop.f32.mrb[0].mxu0
  %v9420 = vadd.f32 0.0, %v9419
  %v9421 = vpop.f32.mrb[0].mxu0
  %v9422 = vpop.f32.mrb[0].mxu0
  %v9423 = vadd.f32 0.0, %v9422
  %v9424 = vpop.f32.mrb[0].mxu0
  %9425 = vmatprep.mubr.bf16.mxu0 0
  %9426 = vmatmul.mubr.bf16.gmra.mrb[0].mxu0 %v9212
  %v9427 = vpop.f32.mrb[0].mxu0
  %v9428 = vadd.f32 0.0, %v9427
  %v9429 = vpop.f32.mrb[0].mxu0
  %v9430 = vpop.f32.mrb[0].mxu0
  %v9431 = vadd.f32 0.0, %v9430
  %v9432 = vpop.f32.mrb[0].mxu0
  %9433 = vmatprep.mubr.bf16.mxu0 0
  %9434 = vmatmul.mubr.bf16.gmra.mrb[0].mxu0 %v9213
  %v9435 = vpop.f32.mrb[0].mxu0
  %v9436 = vadd.f32 0.0, %v9435
  %v9437 = vpop.f32.mrb[0].mxu0
  %v9438 = vpop.f32.mrb[0].mxu0
  %v9439 = vadd.f32 0.0, %v9438
  %v9440 = vpop.f32.mrb[0].mxu0
  %9441 = vmatprep.mubr.bf16.mxu0 0
  %9442 = vmatmul.mubr.bf16.gmra.mrb[0].mxu0 %v9214
  %v9443 = vpop.f32.mrb[0].mxu0
  %v9444 = vadd.f32 0.0, %v9443
  %v9445 = vpop.f32.mrb[0].mxu0
  %v9446 = vpop.f32.mrb[0].mxu0
  %v9447 = vadd.f32 0.0, %v9446
  %v9448 = vpop.f32.mrb[0].mxu0
  %9449 = vmatprep.mubr.bf16.mxu0 0
  %9450 = vmatmul.mubr.bf16.gmra.mrb[0].mxu0 %v9215
  %v9451 = vpop.f32.mrb[0].mxu0
  %v9452 = vadd.f32 0.0, %v9451
  %v9453 = vpop.f32.mrb[0].mxu0
  %v9454 = vpop.f32.mrb[0].mxu0
  %v9455 = vadd.f32 0.0, %v9454
  %v9456 = vpop.f32.mrb[0].mxu0
  %9457 = vmatprep.mubr.bf16.mxu0 0
  %9458 = vmatmul.mubr.bf16.gmra.mrb[0].mxu0 %v9216
  %v9459 = vpop.f32.mrb[0].mxu0
  %v9460 = vadd.f32 0.0, %v9459
  %v9461 = vpop.f32.mrb[0].mxu0
  %v9462 = vpop.f32.mrb[0].mxu0
  %v9463 = vadd.f32 0.0, %v9462
  %v9464 = vpop.f32.mrb[0].mxu0
  %9465 = vmatprep.mubr.bf16.mxu0 0
  %9466 = vmatmul.mubr.bf16.gmra.mrb[0].mxu0 %v9217
  %v9467 = vpop.f32.mrb[0].mxu0
  %v9468 = vadd.f32 0.0, %v9467
  %v9469 = vpop.f32.mrb[0].mxu0
  %v9470 = vpop.f32.mrb[0].mxu0
  %v9471 = vadd.f32 0.0, %v9470
  %v9472 = vpop.f32.mrb[0].mxu0
  %9473 = vmatprep.mubr.bf16.mxu0 0
  %9474 = vmatmul.mubr.bf16.gmra.mrb[0].mxu0 %v9218
  %v9475 = vpop.f32.mrb[0].mxu0
  %v9476 = vadd.f32 0.0, %v9475
  %v9477 = vpop.f32.mrb[0].mxu0
  %v9478 = vpop.f32.mrb[0].mxu0
  %v9479 = vadd.f32 0.0, %v9478
  %v9480 = vpop.f32.mrb[0].mxu0
  %9481 = vmatprep.mubr.bf16.mxu0 0
  %9482 = vmatmul.mubr.bf16.gmra.mrb[0].mxu0 %v9219
  %v9483 = vpop.f32.mrb[0].mxu0
  %v9484 = vadd.f32 0.0, %v9483
  %v9485 = vpop.f32.mrb[0].mxu0
  %v9486 = vpop.f32.mrb[0].mxu0
  %v9487 = vadd.f32 0.0, %v9486
  %v9488 = vpop.f32.mrb[0].mxu0
  %9489 = vmatprep.mubr.bf16.mxu0 0
  %9490 = vmatmul.mubr.bf16.gmra.mrb[0].mxu0 %v9220
  %v9491 = vpop.f32.mrb[0].mxu0
  %v9492 = vadd.f32 0.0, %v9491
  %v9493 = vpop.f32.mrb[0].mxu0
  %v9494 = vpop.f32.mrb[0].mxu0
  %v9495 = vadd.f32 0.0, %v9494
  %v9496 = vpop.f32.mrb[0].mxu0
  %9497 = vmatprep.mubr.bf16.mxu0 0
  %9498 = vmatmul.mubr.bf16.gmra.mrb[0].mxu0 %v9221
  %v9499 = vpop.f32.mrb[0].mxu0
  %v9500 = vadd.f32 0.0, %v9499
  %v9501 = vpop.f32.mrb[0].mxu0
  %v9502 = vpop.f32.mrb[0].mxu0
  %v9503 = vadd.f32 0.0, %v9502
  %v9504 = vpop.f32.mrb[0].mxu0
  %9505 = vmatprep.mubr.bf16.mxu0 0
  %9506 = vmatmul.mubr.bf16.gmra.mrb[0].mxu0 %v9222
  %v9507 = vpop.f32.mrb[0].mxu0
  %v9508 = vadd.f32 0.0, %v9507
  %v9509 = vpop.f32.mrb[0].mxu0
  %v9510 = vpop.f32.mrb[0].mxu0
  %v9511 = vadd.f32 0.0, %v9510
  %v9512 = vpop.f32.mrb[0].mxu0
  %9513 = vmatprep.mubr.bf16.mxu0 0
  %9514 = vmatmul.mubr.bf16.gmra.mrb[0].mxu0 %v9223
  %v9515 = vpop.f32.mrb[0].mxu0
  %v9516 = vadd.f32 0.0, %v9515
  %v9517 = vpop.f32.mrb[0].mxu0
  %v9518 = vpop.f32.mrb[0].mxu0
  %v9519 = vadd.f32 0.0, %v9518
  %v9520 = vpop.f32.mrb[0].mxu0
  %9521 = vmatprep.mubr.bf16.mxu0 0
  %9522 = vmatmul.mubr.bf16.gmra.mrb[0].mxu0 %v9224
  %v9523 = vpop.f32.mrb[0].mxu0
  %v9524 = vadd.f32 0.0, %v9523
  %v9525 = vpop.f32.mrb[0].mxu0
  %v9526 = vpop.f32.mrb[0].mxu0
  %v9527 = vadd.f32 0.0, %v9526
  %v9528 = vpop.f32.mrb[0].mxu0
  %9529 = vmatprep.mubr.bf16.mxu0 0
  %9530 = vmatmul.mubr.bf16.gmra.mrb[0].mxu0 %v9225
  %v9531 = vpop.f32.mrb[0].mxu0
  %v9532 = vadd.f32 0.0, %v9531
  %v9533 = vpop.f32.mrb[0].mxu0
  %v9534 = vpop.f32.mrb[0].mxu0
  %v9535 = vadd.f32 0.0, %v9534
  %v9536 = vpop.f32.mrb[0].mxu0
  %9537 = vmatprep.mubr.bf16.mxu0 0
  %9538 = vmatmul.mubr.bf16.gmra.mrb[0].mxu0 %v9226
  %v9539 = vpop.f32.mrb[0].mxu0
  %v9540 = vadd.f32 0.0, %v9539
  %v9541 = vpop.f32.mrb[0].mxu0
  %v9542 = vpop.f32.mrb[0].mxu0
  %v9543 = vadd.f32 0.0, %v9542
  %v9544 = vpop.f32.mrb[0].mxu0
  %9545 = vmatprep.mubr.bf16.mxu0 0
  %9546 = vmatmul.mubr.bf16.gmra.mrb[0].mxu0 %v9227
  %v9547 = vpop.f32.mrb[0].mxu0
  %v9548 = vadd.f32 0.0, %v9547
  %v9549 = vpop.f32.mrb[0].mxu0
  %v9550 = vpop.f32.mrb[0].mxu0
  %v9551 = vadd.f32 0.0, %v9550
  %v9552 = vpop.f32.mrb[0].mxu0
  %9553 = vmatprep.mubr.bf16.mxu0 0
  %9554 = vmatmul.mubr.bf16.gmra.mrb[0].mxu0 %v9228
  %v9555 = vpop.f32.mrb[0].mxu0
  %v9556 = vadd.f32 0.0, %v9555
  %v9557 = vpop.f32.mrb[0].mxu0
  %v9558 = vpop.f32.mrb[0].mxu0
  %v9559 = vadd.f32 0.0, %v9558
  %v9560 = vpop.f32.mrb[0].mxu0
  %9561 = vmatprep.mubr.bf16.mxu0 0
  %9562 = vmatmul.mubr.bf16.gmra.mrb[0].mxu0 %v9229
  %v9563 = vpop.f32.mrb[0].mxu0
  %v9564 = vadd.f32 0.0, %v9563
  %v9565 = vpop.f32.mrb[0].mxu0
  %v9566 = vpop.f32.mrb[0].mxu0
  %v9567 = vadd.f32 0.0, %v9566
  %v9568 = vpop.f32.mrb[0].mxu0
  %9569 = vmatprep.mubr.bf16.mxu0 0
  %9570 = vmatmul.mubr.bf16.gmra.mrb[0].mxu0 %v9230
  %v9571 = vpop.f32.mrb[0].mxu0
  %v9572 = vadd.f32 0.0, %v9571
  %v9573 = vpop.f32.mrb[0].mxu0
  %v9574 = vpop.f32.mrb[0].mxu0
  %v9575 = vadd.f32 0.0, %v9574
  %v9576 = vpop.f32.mrb[0].mxu0
  %9577 = vmatprep.mubr.bf16.mxu0 0
  %9578 = vmatmul.mubr.bf16.gmra.mrb[0].mxu0 %v9231
  %v9579 = vpop.f32.mrb[0].mxu0
  %v9580 = vadd.f32 0.0, %v9579
  %v9581 = vpop.f32.mrb[0].mxu0
  %v9582 = vpop.f32.mrb[0].mxu0
  %v9583 = vadd.f32 0.0, %v9582
  %v9584 = vpop.f32.mrb[0].mxu0
  %9585 = vdwg.mxu0
  %v9586 = vadd.f32 %v9072, %v9332
  %v9587 = vadd.f32 %v9073, %v9335
  %v9588 = vadd.f32 %v9074, %v9340
  %v9589 = vadd.f32 %v9075, %v9343
  %v9590 = vadd.f32 %v9076, %v9348
  %v9591 = vadd.f32 %v9077, %v9351
  %v9592 = vadd.f32 %v9078, %v9356
  %v9593 = vadd.f32 %v9079, %v9359
  %v9594 = vadd.f32 %v9080, %v9364
  %v9595 = vadd.f32 %v9081, %v9367
  %v9596 = vadd.f32 %v9082, %v9372
  %v9597 = vadd.f32 %v9083, %v9375
  %v9598 = vadd.f32 %v9084, %v9380
  %v9599 = vadd.f32 %v9085, %v9383
  %v9600 = vadd.f32 %v9086, %v9388
  %v9601 = vadd.f32 %v9087, %v9391
  %v9602 = vadd.f32 %v9088, %v9396
  %v9603 = vadd.f32 %v9089, %v9399
  %v9604 = vadd.f32 %v9090, %v9404
  %v9605 = vadd.f32 %v9091, %v9407
  %v9606 = vadd.f32 %v9092, %v9412
  %v9607 = vadd.f32 %v9093, %v9415
  %v9608 = vadd.f32 %v9094, %v9420
  %v9609 = vadd.f32 %v9095, %v9423
  %v9610 = vadd.f32 %v9096, %v9428
  %v9611 = vadd.f32 %v9097, %v9431
  %v9612 = vadd.f32 %v9098, %v9436
  %v9613 = vadd.f32 %v9099, %v9439
  %v9614 = vadd.f32 %v9100, %v9444
  %v9615 = vadd.f32 %v9101, %v9447
  %v9616 = vadd.f32 %v9102, %v9452
  %v9617 = vadd.f32 %v9103, %v9455
  %v9618 = vadd.f32 %v9104, %v9460
  %v9619 = vadd.f32 %v9105, %v9463
  %v9620 = vadd.f32 %v9106, %v9468
  %v9621 = vadd.f32 %v9107, %v9471
  %v9622 = vadd.f32 %v9108, %v9476
  %v9623 = vadd.f32 %v9109, %v9479
  %v9624 = vadd.f32 %v9110, %v9484
  %v9625 = vadd.f32 %v9111, %v9487
  %v9626 = vadd.f32 %v9112, %v9492
  %v9627 = vadd.f32 %v9113, %v9495
  %v9628 = vadd.f32 %v9114, %v9500
  %v9629 = vadd.f32 %v9115, %v9503
  %v9630 = vadd.f32 %v9116, %v9508
  %v9631 = vadd.f32 %v9117, %v9511
  %v9632 = vadd.f32 %v9118, %v9516
  %v9633 = vadd.f32 %v9119, %v9519
  %v9634 = vadd.f32 %v9120, %v9524
  %v9635 = vadd.f32 %v9121, %v9527
  %v9636 = vadd.f32 %v9122, %v9532
  %v9637 = vadd.f32 %v9123, %v9535
  %v9638 = vadd.f32 %v9124, %v9540
  %v9639 = vadd.f32 %v9125, %v9543
  %v9640 = vadd.f32 %v9126, %v9548
  %v9641 = vadd.f32 %v9127, %v9551
  %v9642 = vadd.f32 %v9128, %v9556
  %v9643 = vadd.f32 %v9129, %v9559
  %v9644 = vadd.f32 %v9130, %v9564
  %v9645 = vadd.f32 %v9131, %v9567
  %v9646 = vadd.f32 %v9132, %v9572
  %v9647 = vadd.f32 %v9133, %v9575
  %v9648 = vadd.f32 %v9134, %v9580
  %v9649 = vadd.f32 %v9135, %v9583
  %v9650 = vld [vmem:[%s5] sm:$0x1]
  %v9651 = vld [vmem:[%s6] sm:$0x1]
  %v9652 = vadd.f32 %v9586, %v9587
  %v9653 = vadd.f32 %v9652, %v9588
  %v9654 = vadd.f32 %v9653, %v9589
  %v9655 = vadd.f32 %v9654, %v9590
  %v9656 = vadd.f32 %v9655, %v9591
  %v9657 = vadd.f32 %v9656, %v9592
  %v9658 = vadd.f32 %v9657, %v9593
  %v9659 = vadd.f32 %v9658, %v9594
  %v9660 = vadd.f32 %v9659, %v9595
  %v9661 = vadd.f32 %v9660, %v9596
  %v9662 = vadd.f32 %v9661, %v9597
  %v9663 = vadd.f32 %v9662, %v9598
  %v9664 = vadd.f32 %v9663, %v9599
  %v9665 = vadd.f32 %v9664, %v9600
  %v9666 = vadd.f32 %v9665, %v9601
  %v9667 = vadd.f32 %v9666, %v9602
  %v9668 = vadd.f32 %v9667, %v9603
  %v9669 = vadd.f32 %v9668, %v9604
  %v9670 = vadd.f32 %v9669, %v9605
  %v9671 = vadd.f32 %v9670, %v9606
  %v9672 = vadd.f32 %v9671, %v9607
  %v9673 = vadd.f32 %v9672, %v9608
  %v9674 = vadd.f32 %v9673, %v9609
  %v9675 = vadd.f32 %v9674, %v9610
  %v9676 = vadd.f32 %v9675, %v9611
  %v9677 = vadd.f32 %v9676, %v9612
  %v9678 = vadd.f32 %v9677, %v9613
  %v9679 = vadd.f32 %v9678, %v9614
  %v9680 = vadd.f32 %v9679, %v9615
  %v9681 = vadd.f32 %v9680, %v9616
  %v9682 = vadd.f32 %v9681, %v9617
  %v9683 = vadd.f32 %v9682, %v9618
  %v9684 = vadd.f32 %v9683, %v9619
  %v9685 = vadd.f32 %v9684, %v9620
  %v9686 = vadd.f32 %v9685, %v9621
  %v9687 = vadd.f32 %v9686, %v9622
  %v9688 = vadd.f32 %v9687, %v9623
  %v9689 = vadd.f32 %v9688, %v9624
  %v9690 = vadd.f32 %v9689, %v9625
  %v9691 = vadd.f32 %v9690, %v9626
  %v9692 = vadd.f32 %v9691, %v9627
  %v9693 = vadd.f32 %v9692, %v9628
  %v9694 = vadd.f32 %v9693, %v9629
  %v9695 = vadd.f32 %v9694, %v9630
  %v9696 = vadd.f32 %v9695, %v9631
  %v9697 = vadd.f32 %v9696, %v9632
  %v9698 = vadd.f32 %v9697, %v9633
  %v9699 = vadd.f32 %v9698, %v9634
  %v9700 = vadd.f32 %v9699, %v9635
  %v9701 = vadd.f32 %v9700, %v9636
  %v9702 = vadd.f32 %v9701, %v9637
  %v9703 = vadd.f32 %v9702, %v9638
  %v9704 = vadd.f32 %v9703, %v9639
  %v9705 = vadd.f32 %v9704, %v9640
  %v9706 = vadd.f32 %v9705, %v9641
  %v9707 = vadd.f32 %v9706, %v9642
  %v9708 = vadd.f32 %v9707, %v9643
  %v9709 = vadd.f32 %v9708, %v9644
  %v9710 = vadd.f32 %v9709, %v9645
  %v9711 = vadd.f32 %v9710, %v9646
  %v9712 = vadd.f32 %v9711, %v9647
  %v9713 = vadd.f32 %v9712, %v9648
  %v9714 = vadd.f32 %v9713, %v9649
  %v9715 = vrot.slane %v9714, 4
  %v9716 = vadd.f32 %v9714, %v9715
  %v9717 = vrot.slane %v9716, 2
  %v9718 = vadd.f32 %v9716, %v9717
  %v9719 = vrot.slane %v9718, 1
  %v9720 = vadd.f32 %v9718, %v9719
  %v9721 = vmul.f32 %v9720, 0.001953125
  %v9722 = vmul.f32 %v9586, %v9586
  %v9723 = vmul.f32 %v9587, %v9587
  %v9724 = vmul.f32 %v9588, %v9588
  %v9725 = vmul.f32 %v9589, %v9589
  %v9726 = vmul.f32 %v9590, %v9590
  %v9727 = vmul.f32 %v9591, %v9591
  %v9728 = vmul.f32 %v9592, %v9592
  %v9729 = vmul.f32 %v9593, %v9593
  %v9730 = vmul.f32 %v9594, %v9594
  %v9731 = vmul.f32 %v9595, %v9595
  %v9732 = vmul.f32 %v9596, %v9596
  %v9733 = vmul.f32 %v9597, %v9597
  %v9734 = vmul.f32 %v9598, %v9598
  %v9735 = vmul.f32 %v9599, %v9599
  %v9736 = vmul.f32 %v9600, %v9600
  %v9737 = vmul.f32 %v9601, %v9601
  %v9738 = vmul.f32 %v9602, %v9602
  %v9739 = vmul.f32 %v9603, %v9603
  %v9740 = vmul.f32 %v9604, %v9604
  %v9741 = vmul.f32 %v9605, %v9605
  %v9742 = vmul.f32 %v9606, %v9606
  %v9743 = vmul.f32 %v9607, %v9607
  %v9744 = vmul.f32 %v9608, %v9608
  %v9745 = vmul.f32 %v9609, %v9609
  %v9746 = vmul.f32 %v9610, %v9610
  %v9747 = vmul.f32 %v9611, %v9611
  %v9748 = vmul.f32 %v9612, %v9612
  %v9749 = vmul.f32 %v9613, %v9613
  %v9750 = vmul.f32 %v9614, %v9614
  %v9751 = vmul.f32 %v9615, %v9615
  %v9752 = vmul.f32 %v9616, %v9616
  %v9753 = vmul.f32 %v9617, %v9617
  %v9754 = vmul.f32 %v9618, %v9618
  %v9755 = vmul.f32 %v9619, %v9619
  %v9756 = vmul.f32 %v9620, %v9620
  %v9757 = vmul.f32 %v9621, %v9621
  %v9758 = vmul.f32 %v9622, %v9622
  %v9759 = vmul.f32 %v9623, %v9623
  %v9760 = vmul.f32 %v9624, %v9624
  %v9761 = vmul.f32 %v9625, %v9625
  %v9762 = vmul.f32 %v9626, %v9626
  %v9763 = vmul.f32 %v9627, %v9627
  %v9764 = vmul.f32 %v9628, %v9628
  %v9765 = vmul.f32 %v9629, %v9629
  %v9766 = vmul.f32 %v9630, %v9630
  %v9767 = vmul.f32 %v9631, %v9631
  %v9768 = vmul.f32 %v9632, %v9632
  %v9769 = vmul.f32 %v9633, %v9633
  %v9770 = vmul.f32 %v9634, %v9634
  %v9771 = vmul.f32 %v9635, %v9635
  %v9772 = vmul.f32 %v9636, %v9636
  %v9773 = vmul.f32 %v9637, %v9637
  %v9774 = vmul.f32 %v9638, %v9638
  %v9775 = vmul.f32 %v9639, %v9639
  %v9776 = vmul.f32 %v9640, %v9640
  %v9777 = vmul.f32 %v9641, %v9641
  %v9778 = vmul.f32 %v9642, %v9642
  %v9779 = vmul.f32 %v9643, %v9643
  %v9780 = vmul.f32 %v9644, %v9644
  %v9781 = vmul.f32 %v9645, %v9645
  %v9782 = vmul.f32 %v9646, %v9646
  %v9783 = vmul.f32 %v9647, %v9647
  %v9784 = vmul.f32 %v9648, %v9648
  %v9785 = vmul.f32 %v9649, %v9649
  %v9786 = vadd.f32 %v9722, %v9723
  %v9787 = vadd.f32 %v9786, %v9724
  %v9788 = vadd.f32 %v9787, %v9725
  %v9789 = vadd.f32 %v9788, %v9726
  %v9790 = vadd.f32 %v9789, %v9727
  %v9791 = vadd.f32 %v9790, %v9728
  %v9792 = vadd.f32 %v9791, %v9729
  %v9793 = vadd.f32 %v9792, %v9730
  %v9794 = vadd.f32 %v9793, %v9731
  %v9795 = vadd.f32 %v9794, %v9732
  %v9796 = vadd.f32 %v9795, %v9733
  %v9797 = vadd.f32 %v9796, %v9734
  %v9798 = vadd.f32 %v9797, %v9735
  %v9799 = vadd.f32 %v9798, %v9736
  %v9800 = vadd.f32 %v9799, %v9737
  %v9801 = vadd.f32 %v9800, %v9738
  %v9802 = vadd.f32 %v9801, %v9739
  %v9803 = vadd.f32 %v9802, %v9740
  %v9804 = vadd.f32 %v9803, %v9741
  %v9805 = vadd.f32 %v9804, %v9742
  %v9806 = vadd.f32 %v9805, %v9743
  %v9807 = vadd.f32 %v9806, %v9744
  %v9808 = vadd.f32 %v9807, %v9745
  %v9809 = vadd.f32 %v9808, %v9746
  %v9810 = vadd.f32 %v9809, %v9747
  %v9811 = vadd.f32 %v9810, %v9748
  %v9812 = vadd.f32 %v9811, %v9749
  %v9813 = vadd.f32 %v9812, %v9750
  %v9814 = vadd.f32 %v9813, %v9751
  %v9815 = vadd.f32 %v9814, %v9752
  %v9816 = vadd.f32 %v9815, %v9753
  %v9817 = vadd.f32 %v9816, %v9754
  %v9818 = vadd.f32 %v9817, %v9755
  %v9819 = vadd.f32 %v9818, %v9756
  %v9820 = vadd.f32 %v9819, %v9757
  %v9821 = vadd.f32 %v9820, %v9758
  %v9822 = vadd.f32 %v9821, %v9759
  %v9823 = vadd.f32 %v9822, %v9760
  %v9824 = vadd.f32 %v9823, %v9761
  %v9825 = vadd.f32 %v9824, %v9762
  %v9826 = vadd.f32 %v9825, %v9763
  %v9827 = vadd.f32 %v9826, %v9764
  %v9828 = vadd.f32 %v9827, %v9765
  %v9829 = vadd.f32 %v9828, %v9766
  %v9830 = vadd.f32 %v9829, %v9767
  %v9831 = vadd.f32 %v9830, %v9768
  %v9832 = vadd.f32 %v9831, %v9769
  %v9833 = vadd.f32 %v9832, %v9770
  %v9834 = vadd.f32 %v9833, %v9771
  %v9835 = vadd.f32 %v9834, %v9772
  %v9836 = vadd.f32 %v9835, %v9773
  %v9837 = vadd.f32 %v9836, %v9774
  %v9838 = vadd.f32 %v9837, %v9775
  %v9839 = vadd.f32 %v9838, %v9776
  %v9840 = vadd.f32 %v9839, %v9777
  %v9841 = vadd.f32 %v9840, %v9778
  %v9842 = vadd.f32 %v9841, %v9779
  %v9843 = vadd.f32 %v9842, %v9780
  %v9844 = vadd.f32 %v9843, %v9781
  %v9845 = vadd.f32 %v9844, %v9782
  %v9846 = vadd.f32 %v9845, %v9783
  %v9847 = vadd.f32 %v9846, %v9784
  %v9848 = vadd.f32 %v9847, %v9785
  %v9849 = vrot.slane %v9848, 4
  %v9850 = vadd.f32 %v9848, %v9849
  %v9851 = vrot.slane %v9850, 2
  %v9852 = vadd.f32 %v9850, %v9851
  %v9853 = vrot.slane %v9852, 1
  %v9854 = vadd.f32 %v9852, %v9853
  %v9855 = vmul.f32 %v9854, 0.001953125
  %v9856 = vmul.f32 %v9721, %v9721
  %v9857 = vsub.f32 %v9855, %v9856
  %v9858 = vadd.f32 %v9857, 1e-05
  %v9859 = vrsqrt.pop %v9858
  %v9860 = vmul.f32 %v9650, %v9859
  %v9861 = vmul.f32 %v9721, %v9860
  %v9862 = vsub.f32 %v9651, %v9861
  %v9863 = vld [vmem:[%s1440 + $0x1] sm:$0xff]
  %v9864 = vld [vmem:[%s1440 + $0x9] sm:$0xff]
  %v9865 = vld [vmem:[%s1440 + $0x19] sm:$0xff]
  %v9866 = vld [vmem:[%s1440 + $0x21] sm:$0xff]
  %v9867 = vld [vmem:[%s1440 + $0x31] sm:$0xff]
  %v9868 = vld [vmem:[%s1440 + $0x39] sm:$0xff]
  %v9869 = vld [vmem:[%s1440 + $0x49] sm:$0xff]
  %v9870 = vld [vmem:[%s1440 + $0x51] sm:$0xff]
  %v9871 = vld [vmem:[%s1440 + $0x61] sm:$0xff]
  %v9872 = vld [vmem:[%s1440 + $0x69] sm:$0xff]
  %v9873 = vld [vmem:[%s1440 + $0x79] sm:$0xff]
  %v9874 = vld [vmem:[%s1440 + $0x81] sm:$0xff]
  %v9875 = vld [vmem:[%s1440 + $0x91] sm:$0xff]
  %v9876 = vld [vmem:[%s1440 + $0x99] sm:$0xff]
  %v9877 = vld [vmem:[%s1440 + $0xa9] sm:$0xff]
  %v9878 = vld [vmem:[%s1440 + $0xb1] sm:$0xff]
  %v9879 = vld [vmem:[%s1440 + $0xc1] sm:$0xff]
  %v9880 = vld [vmem:[%s1440 + $0xc9] sm:$0xff]
  %v9881 = vld [vmem:[%s1440 + $0xd9] sm:$0xff]
  %v9882 = vld [vmem:[%s1440 + $0xe1] sm:$0xff]
  %v9883 = vld [vmem:[%s1440 + $0xf1] sm:$0xff]
  %v9884 = vld [vmem:[%s1440 + $0xf9] sm:$0xff]
  %v9885 = vld [vmem:[%s1440 + $0x109] sm:$0xff]
  %v9886 = vld [vmem:[%s1440 + $0x111] sm:$0xff]
  %v9887 = vld [vmem:[%s1440 + $0x121] sm:$0xff]
  %v9888 = vld [vmem:[%s1440 + $0x129] sm:$0xff]
  %v9889 = vld [vmem:[%s1440 + $0x139] sm:$0xff]
  %v9890 = vld [vmem:[%s1440 + $0x141] sm:$0xff]
  %v9891 = vld [vmem:[%s1440 + $0x151] sm:$0xff]
  %v9892 = vld [vmem:[%s1440 + $0x159] sm:$0xff]
  %v9893 = vld [vmem:[%s1440 + $0x169] sm:$0xff]
  %v9894 = vld [vmem:[%s1440 + $0x171] sm:$0xff]
  %v9895 = vld [vmem:[%s1440 + $0x1b1] sm:$0xff]
  %v9896 = vld [vmem:[%s1440 + $0x1b9] sm:$0xff]
  %v9897 = vld [vmem:[%s1440 + $0x1c9] sm:$0xff]
  %v9898 = vld [vmem:[%s1440 + $0x1d1] sm:$0xff]
  %v9899 = vld [vmem:[%s1440 + $0x1e1] sm:$0xff]
  %v9900 = vld [vmem:[%s1440 + $0x1e9] sm:$0xff]
  %v9901 = vld [vmem:[%s1440 + $0x1f9] sm:$0xff]
  %v9902 = vld [vmem:[%s1440 + $0x201] sm:$0xff]
  %v9903 = vld [vmem:[%s1440 + $0x211] sm:$0xff]
  %v9904 = vld [vmem:[%s1440 + $0x219] sm:$0xff]
  %v9905 = vld [vmem:[%s1440 + $0x229] sm:$0xff]
  %v9906 = vld [vmem:[%s1440 + $0x231] sm:$0xff]
  %v9907 = vld [vmem:[%s1440 + $0x241] sm:$0xff]
  %v9908 = vld [vmem:[%s1440 + $0x249] sm:$0xff]
  %v9909 = vld [vmem:[%s1440 + $0x259] sm:$0xff]
  %v9910 = vld [vmem:[%s1440 + $0x261] sm:$0xff]
  %v9911 = vld [vmem:[%s1440 + $0x271] sm:$0xff]
  %v9912 = vld [vmem:[%s1440 + $0x279] sm:$0xff]
  %v9913 = vld [vmem:[%s1440 + $0x289] sm:$0xff]
  %v9914 = vld [vmem:[%s1440 + $0x291] sm:$0xff]
  %v9915 = vld [vmem:[%s1440 + $0x2a1] sm:$0xff]
  %v9916 = vld [vmem:[%s1440 + $0x2a9] sm:$0xff]
  %v9917 = vld [vmem:[%s1440 + $0x2b9] sm:$0xff]
  %v9918 = vld [vmem:[%s1440 + $0x2c1] sm:$0xff]
  %v9919 = vld [vmem:[%s1440 + $0x2d1] sm:$0xff]
  %v9920 = vld [vmem:[%s1440 + $0x2d9] sm:$0xff]
  %v9921 = vld [vmem:[%s1440 + $0x2e9] sm:$0xff]
  %v9922 = vld [vmem:[%s1440 + $0x2f1] sm:$0xff]
  %v9923 = vld [vmem:[%s1440 + $0x301] sm:$0xff]
  %v9924 = vld [vmem:[%s1440 + $0x309] sm:$0xff]
  %v9925 = vld [vmem:[%s1440 + $0x319] sm:$0xff]
  %v9926 = vld [vmem:[%s1440 + $0x321] sm:$0xff]
  %v9928 = vlaneseq
  %v9929 = vshrl.u32 %v9928, 7
  %v9930 = vsub.s32 0, %v9929
  %v9931 = vrot.slane %v9860, %v9930
  %v9933 = vmul.f32 %v9586, %v9931
  %v9934 = vmul.f32 %v9587, %v9931
  %v9935 = vmul.f32 %v9588, %v9931
  %v9936 = vmul.f32 %v9589, %v9931
  %v9937 = vmul.f32 %v9590, %v9931
  %v9938 = vmul.f32 %v9591, %v9931
  %v9939 = vmul.f32 %v9592, %v9931
  %v9940 = vmul.f32 %v9593, %v9931
  %v9941 = vmul.f32 %v9594, %v9931
  %v9942 = vmul.f32 %v9595, %v9931
  %v9943 = vmul.f32 %v9596, %v9931
  %v9944 = vmul.f32 %v9597, %v9931
  %v9945 = vmul.f32 %v9598, %v9931
  %v9946 = vmul.f32 %v9599, %v9931
  %v9947 = vmul.f32 %v9600, %v9931
  %v9948 = vmul.f32 %v9601, %v9931
  %v9949 = vmul.f32 %v9602, %v9931
  %v9950 = vmul.f32 %v9603, %v9931
  %v9951 = vmul.f32 %v9604, %v9931
  %v9952 = vmul.f32 %v9605, %v9931
  %v9953 = vmul.f32 %v9606, %v9931
  %v9954 = vmul.f32 %v9607, %v9931
  %v9955 = vmul.f32 %v9608, %v9931
  %v9956 = vmul.f32 %v9609, %v9931
  %v9957 = vmul.f32 %v9610, %v9931
  %v9958 = vmul.f32 %v9611, %v9931
  %v9959 = vmul.f32 %v9612, %v9931
  %v9960 = vmul.f32 %v9613, %v9931
  %v9961 = vmul.f32 %v9614, %v9931
  %v9962 = vmul.f32 %v9615, %v9931
  %v9963 = vmul.f32 %v9616, %v9931
  %v9964 = vmul.f32 %v9617, %v9931
  %v9965 = vmul.f32 %v9618, %v9931
  %v9966 = vmul.f32 %v9619, %v9931
  %v9967 = vmul.f32 %v9620, %v9931
  %v9968 = vmul.f32 %v9621, %v9931
  %v9969 = vmul.f32 %v9622, %v9931
  %v9970 = vmul.f32 %v9623, %v9931
  %v9971 = vmul.f32 %v9624, %v9931
  %v9972 = vmul.f32 %v9625, %v9931
  %v9973 = vmul.f32 %v9626, %v9931
  %v9974 = vmul.f32 %v9627, %v9931
  %v9975 = vmul.f32 %v9628, %v9931
  %v9976 = vmul.f32 %v9629, %v9931
  %v9977 = vmul.f32 %v9630, %v9931
  %v9978 = vmul.f32 %v9631, %v9931
  %v9979 = vmul.f32 %v9632, %v9931
  %v9980 = vmul.f32 %v9633, %v9931
  %v9981 = vmul.f32 %v9634, %v9931
  %v9982 = vmul.f32 %v9635, %v9931
  %v9983 = vmul.f32 %v9636, %v9931
  %v9984 = vmul.f32 %v9637, %v9931
  %v9985 = vmul.f32 %v9638, %v9931
  %v9986 = vmul.f32 %v9639, %v9931
  %v9987 = vmul.f32 %v9640, %v9931
  %v9988 = vmul.f32 %v9641, %v9931
  %v9989 = vmul.f32 %v9642, %v9931
  %v9990 = vmul.f32 %v9643, %v9931
  %v9991 = vmul.f32 %v9644, %v9931
  %v9992 = vmul.f32 %v9645, %v9931
  %v9993 = vmul.f32 %v9646, %v9931
  %v9994 = vmul.f32 %v9647, %v9931
  %v9995 = vmul.f32 %v9648, %v9931
  %v9996 = vmul.f32 %v9649, %v9931
  %v9998 = vlaneseq
  %v9999 = vshrl.u32 %v9998, 7
  %v10000 = vsub.s32 0, %v9999
  %v10001 = vrot.slane %v9862, %v10000
  %v10003 = vadd.f32 %v9933, %v10001
  %v10004 = vadd.f32 %v9934, %v10001
  %v10005 = vadd.f32 %v9935, %v10001
  %v10006 = vadd.f32 %v9936, %v10001
  %v10007 = vadd.f32 %v9937, %v10001
  %v10008 = vadd.f32 %v9938, %v10001
  %v10009 = vadd.f32 %v9939, %v10001
  %v10010 = vadd.f32 %v9940, %v10001
  %v10011 = vadd.f32 %v9941, %v10001
  %v10012 = vadd.f32 %v9942, %v10001
  %v10013 = vadd.f32 %v9943, %v10001
  %v10014 = vadd.f32 %v9944, %v10001
  %v10015 = vadd.f32 %v9945, %v10001
  %v10016 = vadd.f32 %v9946, %v10001
  %v10017 = vadd.f32 %v9947, %v10001
  %v10018 = vadd.f32 %v9948, %v10001
  %v10019 = vadd.f32 %v9949, %v10001
  %v10020 = vadd.f32 %v9950, %v10001
  %v10021 = vadd.f32 %v9951, %v10001
  %v10022 = vadd.f32 %v9952, %v10001
  %v10023 = vadd.f32 %v9953, %v10001
  %v10024 = vadd.f32 %v9954, %v10001
  %v10025 = vadd.f32 %v9955, %v10001
  %v10026 = vadd.f32 %v9956, %v10001
  %v10027 = vadd.f32 %v9957, %v10001
  %v10028 = vadd.f32 %v9958, %v10001
  %v10029 = vadd.f32 %v9959, %v10001
  %v10030 = vadd.f32 %v9960, %v10001
  %v10031 = vadd.f32 %v9961, %v10001
  %v10032 = vadd.f32 %v9962, %v10001
  %v10033 = vadd.f32 %v9963, %v10001
  %v10034 = vadd.f32 %v9964, %v10001
  %v10035 = vadd.f32 %v9965, %v10001
  %v10036 = vadd.f32 %v9966, %v10001
  %v10037 = vadd.f32 %v9967, %v10001
  %v10038 = vadd.f32 %v9968, %v10001
  %v10039 = vadd.f32 %v9969, %v10001
  %v10040 = vadd.f32 %v9970, %v10001
  %v10041 = vadd.f32 %v9971, %v10001
  %v10042 = vadd.f32 %v9972, %v10001
  %v10043 = vadd.f32 %v9973, %v10001
  %v10044 = vadd.f32 %v9974, %v10001
  %v10045 = vadd.f32 %v9975, %v10001
  %v10046 = vadd.f32 %v9976, %v10001
  %v10047 = vadd.f32 %v9977, %v10001
  %v10048 = vadd.f32 %v9978, %v10001
  %v10049 = vadd.f32 %v9979, %v10001
  %v10050 = vadd.f32 %v9980, %v10001
  %v10051 = vadd.f32 %v9981, %v10001
  %v10052 = vadd.f32 %v9982, %v10001
  %v10053 = vadd.f32 %v9983, %v10001
  %v10054 = vadd.f32 %v9984, %v10001
  %v10055 = vadd.f32 %v9985, %v10001
  %v10056 = vadd.f32 %v9986, %v10001
  %v10057 = vadd.f32 %v9987, %v10001
  %v10058 = vadd.f32 %v9988, %v10001
  %v10059 = vadd.f32 %v9989, %v10001
  %v10060 = vadd.f32 %v9990, %v10001
  %v10061 = vadd.f32 %v9991, %v10001
  %v10062 = vadd.f32 %v9992, %v10001
  %v10063 = vadd.f32 %v9993, %v10001
  %v10064 = vadd.f32 %v9994, %v10001
  %v10065 = vadd.f32 %v9995, %v10001
  %v10066 = vadd.f32 %v9996, %v10001
  %v10067 = vadd.f32 %v10003, %v9863
  %v10068 = vadd.f32 %v10004, %v9864
  %v10069 = vadd.f32 %v10005, %v9865
  %v10070 = vadd.f32 %v10006, %v9866
  %v10071 = vadd.f32 %v10007, %v9867
  %v10072 = vadd.f32 %v10008, %v9868
  %v10073 = vadd.f32 %v10009, %v9869
  %v10074 = vadd.f32 %v10010, %v9870
  %v10075 = vadd.f32 %v10011, %v9871
  %v10076 = vadd.f32 %v10012, %v9872
  %v10077 = vadd.f32 %v10013, %v9873
  %v10078 = vadd.f32 %v10014, %v9874
  %v10079 = vadd.f32 %v10015, %v9875
  %v10080 = vadd.f32 %v10016, %v9876
  %v10081 = vadd.f32 %v10017, %v9877
  %v10082 = vadd.f32 %v10018, %v9878
  %v10083 = vadd.f32 %v10019, %v9879
  %v10084 = vadd.f32 %v10020, %v9880
  %v10085 = vadd.f32 %v10021, %v9881
  %v10086 = vadd.f32 %v10022, %v9882
  %v10087 = vadd.f32 %v10023, %v9883
  %v10088 = vadd.f32 %v10024, %v9884
  %v10089 = vadd.f32 %v10025, %v9885
  %v10090 = vadd.f32 %v10026, %v9886
  %v10091 = vadd.f32 %v10027, %v9887
  %v10092 = vadd.f32 %v10028, %v9888
  %v10093 = vadd.f32 %v10029, %v9889
  %v10094 = vadd.f32 %v10030, %v9890
  %v10095 = vadd.f32 %v10031, %v9891
  %v10096 = vadd.f32 %v10032, %v9892
  %v10097 = vadd.f32 %v10033, %v9893
  %v10098 = vadd.f32 %v10034, %v9894
  %v10099 = vadd.f32 %v10035, %v9895
  %v10100 = vadd.f32 %v10036, %v9896
  %v10101 = vadd.f32 %v10037, %v9897
  %v10102 = vadd.f32 %v10038, %v9898
  %v10103 = vadd.f32 %v10039, %v9899
  %v10104 = vadd.f32 %v10040, %v9900
  %v10105 = vadd.f32 %v10041, %v9901
  %v10106 = vadd.f32 %v10042, %v9902
  %v10107 = vadd.f32 %v10043, %v9903
  %v10108 = vadd.f32 %v10044, %v9904
  %v10109 = vadd.f32 %v10045, %v9905
  %v10110 = vadd.f32 %v10046, %v9906
  %v10111 = vadd.f32 %v10047, %v9907
  %v10112 = vadd.f32 %v10048, %v9908
  %v10113 = vadd.f32 %v10049, %v9909
  %v10114 = vadd.f32 %v10050, %v9910
  %v10115 = vadd.f32 %v10051, %v9911
  %v10116 = vadd.f32 %v10052, %v9912
  %v10117 = vadd.f32 %v10053, %v9913
  %v10118 = vadd.f32 %v10054, %v9914
  %v10119 = vadd.f32 %v10055, %v9915
  %v10120 = vadd.f32 %v10056, %v9916
  %v10121 = vadd.f32 %v10057, %v9917
  %v10122 = vadd.f32 %v10058, %v9918
  %v10123 = vadd.f32 %v10059, %v9919
  %v10124 = vadd.f32 %v10060, %v9920
  %v10125 = vadd.f32 %v10061, %v9921
  %v10126 = vadd.f32 %v10062, %v9922
  %v10127 = vadd.f32 %v10063, %v9923
  %v10128 = vadd.f32 %v10064, %v9924
  %v10129 = vadd.f32 %v10065, %v9925
  %v10130 = vadd.f32 %v10066, %v9926
  %v10131 = vmax.f32 %v10067, 0.0
  %v10132 = vmax.f32 %v10068, 0.0
  %v10133 = vmax.f32 %v10069, 0.0
  %v10134 = vmax.f32 %v10070, 0.0
  %v10135 = vmax.f32 %v10071, 0.0
  %v10136 = vmax.f32 %v10072, 0.0
  %v10137 = vmax.f32 %v10073, 0.0
  %v10138 = vmax.f32 %v10074, 0.0
  %v10139 = vmax.f32 %v10075, 0.0
  %v10140 = vmax.f32 %v10076, 0.0
  %v10141 = vmax.f32 %v10077, 0.0
  %v10142 = vmax.f32 %v10078, 0.0
  %v10143 = vmax.f32 %v10079, 0.0
  %v10144 = vmax.f32 %v10080, 0.0
  %v10145 = vmax.f32 %v10081, 0.0
  %v10146 = vmax.f32 %v10082, 0.0
  %v10147 = vmax.f32 %v10083, 0.0
  %v10148 = vmax.f32 %v10084, 0.0
  %v10149 = vmax.f32 %v10085, 0.0
  %v10150 = vmax.f32 %v10086, 0.0
  %v10151 = vmax.f32 %v10087, 0.0
  %v10152 = vmax.f32 %v10088, 0.0
  %v10153 = vmax.f32 %v10089, 0.0
  %v10154 = vmax.f32 %v10090, 0.0
  %v10155 = vmax.f32 %v10091, 0.0
  %v10156 = vmax.f32 %v10092, 0.0
  %v10157 = vmax.f32 %v10093, 0.0
  %v10158 = vmax.f32 %v10094, 0.0
  %v10159 = vmax.f32 %v10095, 0.0
  %v10160 = vmax.f32 %v10096, 0.0
  %v10161 = vmax.f32 %v10097, 0.0
  %v10162 = vmax.f32 %v10098, 0.0
  %v10163 = vmax.f32 %v10099, 0.0
  %v10164 = vmax.f32 %v10100, 0.0
  %v10165 = vmax.f32 %v10101, 0.0
  %v10166 = vmax.f32 %v10102, 0.0
  %v10167 = vmax.f32 %v10103, 0.0
  %v10168 = vmax.f32 %v10104, 0.0
  %v10169 = vmax.f32 %v10105, 0.0
  %v10170 = vmax.f32 %v10106, 0.0
  %v10171 = vmax.f32 %v10107, 0.0
  %v10172 = vmax.f32 %v10108, 0.0
  %v10173 = vmax.f32 %v10109, 0.0
  %v10174 = vmax.f32 %v10110, 0.0
  %v10175 = vmax.f32 %v10111, 0.0
  %v10176 = vmax.f32 %v10112, 0.0
  %v10177 = vmax.f32 %v10113, 0.0
  %v10178 = vmax.f32 %v10114, 0.0
  %v10179 = vmax.f32 %v10115, 0.0
  %v10180 = vmax.f32 %v10116, 0.0
  %v10181 = vmax.f32 %v10117, 0.0
  %v10182 = vmax.f32 %v10118, 0.0
  %v10183 = vmax.f32 %v10119, 0.0
  %v10184 = vmax.f32 %v10120, 0.0
  %v10185 = vmax.f32 %v10121, 0.0
  %v10186 = vmax.f32 %v10122, 0.0
  %v10187 = vmax.f32 %v10123, 0.0
  %v10188 = vmax.f32 %v10124, 0.0
  %v10189 = vmax.f32 %v10125, 0.0
  %v10190 = vmax.f32 %v10126, 0.0
  %v10191 = vmax.f32 %v10127, 0.0
  %v10192 = vmax.f32 %v10128, 0.0
  %v10193 = vmax.f32 %v10129, 0.0
  %v10194 = vmax.f32 %v10130, 0.0
  %10195 = vst [vmem:[%s7] sm:$0xff] %v10131
  %10196 = vst [vmem:[%s7 + $0x8] sm:$0xff] %v10132
  %10197 = vst [vmem:[%s7 + $0x10] sm:$0xff] %v10133
  %10198 = vst [vmem:[%s7 + $0x18] sm:$0xff] %v10134
  %10199 = vst [vmem:[%s7 + $0x20] sm:$0xff] %v10135
  %10200 = vst [vmem:[%s7 + $0x28] sm:$0xff] %v10136
  %10201 = vst [vmem:[%s7 + $0x30] sm:$0xff] %v10137
  %10202 = vst [vmem:[%s7 + $0x38] sm:$0xff] %v10138
  %10203 = vst [vmem:[%s7 + $0x40] sm:$0xff] %v10139
  %10204 = vst [vmem:[%s7 + $0x48] sm:$0xff] %v10140
  %10205 = vst [vmem:[%s7 + $0x50] sm:$0xff] %v10141
  %10206 = vst [vmem:[%s7 + $0x58] sm:$0xff] %v10142
  %10207 = vst [vmem:[%s7 + $0x60] sm:$0xff] %v10143
  %10208 = vst [vmem:[%s7 + $0x68] sm:$0xff] %v10144
  %10209 = vst [vmem:[%s7 + $0x70] sm:$0xff] %v10145
  %10210 = vst [vmem:[%s7 + $0x78] sm:$0xff] %v10146
  %10211 = vst [vmem:[%s7 + $0x80] sm:$0xff] %v10147
  %10212 = vst [vmem:[%s7 + $0x88] sm:$0xff] %v10148
  %10213 = vst [vmem:[%s7 + $0x90] sm:$0xff] %v10149
  %10214 = vst [vmem:[%s7 + $0x98] sm:$0xff] %v10150
  %10215 = vst [vmem:[%s7 + $0xa0] sm:$0xff] %v10151
  %10216 = vst [vmem:[%s7 + $0xa8] sm:$0xff] %v10152
  %10217 = vst [vmem:[%s7 + $0xb0] sm:$0xff] %v10153
  %10218 = vst [vmem:[%s7 + $0xb8] sm:$0xff] %v10154
  %10219 = vst [vmem:[%s7 + $0xc0] sm:$0xff] %v10155
  %10220 = vst [vmem:[%s7 + $0xc8] sm:$0xff] %v10156
  %10221 = vst [vmem:[%s7 + $0xd0] sm:$0xff] %v10157
  %10222 = vst [vmem:[%s7 + $0xd8] sm:$0xff] %v10158
  %10223 = vst [vmem:[%s7 + $0xe0] sm:$0xff] %v10159
  %10224 = vst [vmem:[%s7 + $0xe8] sm:$0xff] %v10160
  %10225 = vst [vmem:[%s7 + $0xf0] sm:$0xff] %v10161
  %10226 = vst [vmem:[%s7 + $0xf8] sm:$0xff] %v10162
  %10227 = vst [vmem:[%s7 + $0x100] sm:$0xff] %v10163
  %10228 = vst [vmem:[%s7 + $0x108] sm:$0xff] %v10164
  %10229 = vst [vmem:[%s7 + $0x110] sm:$0xff] %v10165
  %10230 = vst [vmem:[%s7 + $0x118] sm:$0xff] %v10166
  %10231 = vst [vmem:[%s7 + $0x120] sm:$0xff] %v10167
  %10232 = vst [vmem:[%s7 + $0x128] sm:$0xff] %v10168
  %10233 = vst [vmem:[%s7 + $0x130] sm:$0xff] %v10169
  %10234 = vst [vmem:[%s7 + $0x138] sm:$0xff] %v10170
  %10235 = vst [vmem:[%s7 + $0x140] sm:$0xff] %v10171
  %10236 = vst [vmem:[%s7 + $0x148] sm:$0xff] %v10172
  %10237 = vst [vmem:[%s7 + $0x150] sm:$0xff] %v10173
  %10238 = vst [vmem:[%s7 + $0x158] sm:$0xff] %v10174
  %10239 = vst [vmem:[%s7 + $0x160] sm:$0xff] %v10175
  %10240 = vst [vmem:[%s7 + $0x168] sm:$0xff] %v10176
  %10241 = vst [vmem:[%s7 + $0x170] sm:$0xff] %v10177
  %10242 = vst [vmem:[%s7 + $0x178] sm:$0xff] %v10178
  %10243 = vst [vmem:[%s7 + $0x180] sm:$0xff] %v10179
  %10244 = vst [vmem:[%s7 + $0x188] sm:$0xff] %v10180
  %10245 = vst [vmem:[%s7 + $0x190] sm:$0xff] %v10181
  %10246 = vst [vmem:[%s7 + $0x198] sm:$0xff] %v10182
  %10247 = vst [vmem:[%s7 + $0x1a0] sm:$0xff] %v10183
  %10248 = vst [vmem:[%s7 + $0x1a8] sm:$0xff] %v10184
  %10249 = vst [vmem:[%s7 + $0x1b0] sm:$0xff] %v10185
  %10250 = vst [vmem:[%s7 + $0x1b8] sm:$0xff] %v10186
  %10251 = vst [vmem:[%s7 + $0x1c0] sm:$0xff] %v10187
  %10252 = vst [vmem:[%s7 + $0x1c8] sm:$0xff] %v10188
  %10253 = vst [vmem:[%s7 + $0x1d0] sm:$0xff] %v10189
  %10254 = vst [vmem:[%s7 + $0x1d8] sm:$0xff] %v10190
  %10255 = vst [vmem:[%s7 + $0x1e0] sm:$0xff] %v10191
  %10256 = vst [vmem:[%s7 + $0x1e8] sm:$0xff] %v10192
  %10257 = vst [vmem:[%s7 + $0x1f0] sm:$0xff] %v10193
  %10258 = vst [vmem:[%s7 + $0x1f8] sm:$0xff] %v10194
  // Predicated region
  $region30: #{basic_block_forward.1} parent=0 // pred_check
    _
  $region31: #{basic_block_forward.1} parent=0 // pred_check_branch
    %10260 = sbr.rel (0) target = $region33
  $region32: #{basic_block_forward.1} parent=0 // pred_region
    _
  $region33: #{basic_block_forward.1} parent=0 // pred_fallthru
    _
  // Predicated region
  $region34: #{basic_block_forward.1} parent=0 // pred_check
    _
  $region35: #{basic_block_forward.1} parent=0 // pred_check_branch
    %10262 = sbr.rel (0) target = $region37
  $region36: #{basic_block_forward.1} parent=0 // pred_region
    _
  $region37: #{basic_block_forward.1} parent=0 // pred_fallthru
    _

</llo_original>
